<compile_context>
chip_gen: v6e
topology: v6e:2x2x1
jax: 0.10.0
libtpu: 0.0.40
codegen_flags: <defaults>
</compile_context>

<pallas_src>
import jax
import jax.numpy as jnp
from jax.experimental import pallas as pl
from jax.experimental.pallas import tpu as pltpu


# --------------------------------------------------------------------------
# activations (static-python selected, traced into the kernel)
# --------------------------------------------------------------------------
def _act(y, activation):
    if activation == "relu":          # nn.ReLU6
        return jnp.clip(y, 0.0, 6.0)
    if activation == "hswish":        # HSwish: x * relu6(x + 3) / 6
        return y * (jnp.clip(y + 3.0, 0.0, 6.0) * (1.0 / 6.0))
    if activation is None:
        return y
    raise ValueError(activation)


# --------------------------------------------------------------------------
# single fused MBConv kernel (per batch sample)
# --------------------------------------------------------------------------
def _make_fused_kernel(*, H, W, Ho, Wo, cin, mid, cout, cg, kernels, stride, P,
                       activation, has_pw, se, use_res):
    n_splits = len(kernels)

    def kernel(*refs):
        it = iter(refs)
        x_ref = next(it)
        if has_pw:
            w_pw_ref, pw_s_ref, pw_b_ref = next(it), next(it), next(it)
        dw_w_refs = [next(it) for _ in range(n_splits)]
        dw_s_ref, dw_b_ref = next(it), next(it)
        if se:
            se_w1_ref, se_b1_ref, se_w2_ref, se_b2_ref = (
                next(it), next(it), next(it), next(it))
        w_pw1_ref, pw1_s_ref, pw1_b_ref = next(it), next(it), next(it)
        o_ref = next(it)
        pad_ref = next(it)        # (H+2P, W+2P, mid) padded activation scratch
        act_ref = next(it)        # (Ho, Wo, mid)     post-depthwise activation

        # ---- stage 1: 1x1 expand + folded BN + activation (MXU) ----
        x2 = x_ref[0].astype(jnp.float32).reshape(H * W, cin)
        if has_pw:
            y2 = jnp.dot(x2, w_pw_ref[...], preferred_element_type=jnp.float32)
            y2 = _act(y2 * pw_s_ref[...] + pw_b_ref[...], activation)
        else:
            y2 = x2                                        # mid == cin

        # ---- stage 2: mixed-kernel depthwise conv + folded BN + act (VPU) ----
        # Halo padding lives entirely in VMEM; the interior is stored at a
        # sublane-aligned offset P so the store is unmasked/aligned.
        pad_ref[...] = jnp.zeros(pad_ref.shape, pad_ref.dtype)
        pad_ref[P:P + H, P:P + W, :] = y2.reshape(H, W, mid)
        xp = pad_ref[...]                                  # (H+2P, W+2P, mid)

        s = stride
        for b, k in enumerate(kernels):                    # static python loops
            p = k // 2
            c0 = b * cg
            xpb = xp[:, :, c0:c0 + cg]
            wb = dw_w_refs[b][...]                         # (k, k, cg)
            acc = jnp.zeros((Ho, Wo, cg), jnp.float32)
            for i in range(k):
                # hoist the strided row window once per i, reuse across j
                rows = jax.lax.slice(
                    xpb,
                    (P - p + i, 0, 0),
                    (P - p + i + (Ho - 1) * s + 1, xpb.shape[1], cg),
                    (s, 1, 1))                             # (Ho, W+2P, cg)
                for j in range(k):
                    patch = jax.lax.slice(
                        rows,
                        (0, P - p + j, 0),
                        (Ho, P - p + j + (Wo - 1) * s + 1, cg),
                        (1, s, 1))                         # (Ho, Wo, cg)
                    acc = acc + patch * wb[i, j, :]
            yb = acc * dw_s_ref[:, c0:c0 + cg] + dw_b_ref[:, c0:c0 + cg]
            act_ref[:, :, c0:c0 + cg] = _act(yb, activation)

        y2d = act_ref[...].reshape(Ho * Wo, mid)

        # ---- stage 3: squeeze-excite gate, folded into the projection ----
        if se:
            pooled = jnp.mean(y2d, axis=0, keepdims=True)             # (1, mid)
            s1 = jnp.dot(pooled, se_w1_ref[...],
                         preferred_element_type=jnp.float32) + se_b1_ref[...]
            s1 = jnp.maximum(s1, 0.0)                                 # nn.ReLU
            s2 = jnp.dot(s1, se_w2_ref[...],
                         preferred_element_type=jnp.float32) + se_b2_ref[...]
            gate = jnp.clip(s2 + 3.0, 0.0, 6.0) * (1.0 / 6.0)         # HSigmoid
            y2d = y2d * gate

        # ---- stage 4: 1x1 project + folded BN (+ residual) (MXU) ----
        out2 = jnp.dot(y2d, w_pw1_ref[...], preferred_element_type=jnp.float32)
        out2 = out2 * pw1_s_ref[...] + pw1_b_ref[...]
        if use_res:
            out2 = out2 + x2
        o_ref[0] = out2.reshape(Ho, Wo, cout).astype(o_ref.dtype)

    return kernel


# --------------------------------------------------------------------------
# parameter setup / wrapper
# --------------------------------------------------------------------------
def _fold_bn(gamma, beta, mean, var, eps=1e-5):
    scale = gamma / jnp.sqrt(var + eps)
    shift = beta - mean * scale
    return scale.reshape(1, -1), shift.reshape(1, -1)


def _bn_params(key, c):
    k1, k2, k3, k4 = jax.random.split(key, 4)
    gamma = jax.random.uniform(k1, (c,), minval=0.5, maxval=1.5)
    beta = jax.random.normal(k2, (c,)) * 0.1
    mean = jax.random.normal(k3, (c,)) * 0.1
    var = jax.random.uniform(k4, (c,), minval=0.5, maxval=1.5)
    return _fold_bn(gamma, beta, mean, var)


class MBConvPallas:
    def __init__(self, input_channel, output_channel, expansion, kernels, stride,
                 activation, se=False, group=1, key=None):
        assert group == 1      # TODO(synk): grouped 1x1 conv not implemented
        assert stride in (1, 2)
        self.stride = stride
        self.activation = activation
        self.cin = input_channel
        self.cout = output_channel
        self.expansion = int(expansion)
        self.mid = int(input_channel * expansion)
        self.use_res = (stride == 1 and input_channel == output_channel)
        self.has_pw = (input_channel != self.mid)
        self.se = se
        assert len(kernels) >= self.expansion, "need one kernel size per split"
        self.kernels = list(kernels)[: self.expansion]
        self.kmax = max(self.kernels)
        assert self.mid % self.expansion == 0

        keys = jax.random.split(key, 24)
        ki = iter(keys)

        # point_wise: 1x1 conv (Cin -> Cmid), BN, activation
        if self.has_pw:
            self.w_pw = jax.random.normal(next(ki), (self.cin, self.mid)) * 0.1
            self.pw_scale, self.pw_shift = _bn_params(next(ki), self.mid)

        # depthwise MPD block: per-split depthwise convs, different kernel sizes
        cg = self.mid // self.expansion
        self.cg = cg
        self.dw_weights = [jax.random.normal(next(ki), (k, k, cg)) * 0.1
                           for k in self.kernels]
        self.dw_scale, self.dw_shift = _bn_params(next(ki), self.mid)

        # SE module (reduction=4)
        if self.se:
            cr = self.mid // 4
            self.se_w1 = jax.random.normal(next(ki), (self.mid, cr)) * 0.1
            self.se_b1 = (jax.random.normal(next(ki), (cr,)) * 0.1).reshape(1, cr)
            self.se_w2 = jax.random.normal(next(ki), (cr, self.mid)) * 0.1
            self.se_b2 = (jax.random.normal(next(ki), (self.mid,)) * 0.1).reshape(1, self.mid)

        # point_wise_1: 1x1 conv (Cmid -> Cout), BN, no activation
        self.w_pw1 = jax.random.normal(next(ki), (self.mid, self.cout)) * 0.1
        self.pw1_scale, self.pw1_shift = _bn_params(next(ki), self.cout)

    def __call__(self, x_nchw):
        N, Cin, H, W = x_nchw.shape
        assert Cin == self.cin
        xh = jnp.transpose(x_nchw, (0, 2, 3, 1)).astype(jnp.float32)   # NHWC
        Ho = (H - 1) // self.stride + 1
        Wo = (W - 1) // self.stride + 1

        pmax = self.kmax // 2
        P = 8 * ((pmax + 7) // 8)          # sublane-aligned halo inside scratch
        Hp, Wp = H + 2 * P, W + 2 * P

        inputs = [xh]
        in_specs = [pl.BlockSpec((1, H, W, Cin), lambda n: (n, 0, 0, 0))]

        def _full(arr):
            nd = arr.ndim
            inputs.append(arr)
            in_specs.append(pl.BlockSpec(arr.shape, lambda n: (0,) * nd))

        if self.has_pw:
            _full(self.w_pw); _full(self.pw_scale); _full(self.pw_shift)
        for wb in self.dw_weights:
            _full(wb)
        _full(self.dw_scale); _full(self.dw_shift)
        if self.se:
            _full(self.se_w1); _full(self.se_b1)
            _full(self.se_w2); _full(self.se_b2)
        _full(self.w_pw1); _full(self.pw1_scale); _full(self.pw1_shift)

        kernel = _make_fused_kernel(
            H=H, W=W, Ho=Ho, Wo=Wo, cin=Cin, mid=self.mid, cout=self.cout,
            cg=self.cg, kernels=tuple(self.kernels), stride=self.stride, P=P,
            activation=self.activation, has_pw=self.has_pw, se=self.se,
            use_res=self.use_res)

        out_nhwc = pl.pallas_call(
            kernel,
            out_shape=jax.ShapeDtypeStruct((N, Ho, Wo, self.cout), jnp.float32),
            grid=(N,),
            in_specs=in_specs,
            out_specs=pl.BlockSpec((1, Ho, Wo, self.cout), lambda n: (n, 0, 0, 0)),
            scratch_shapes=[pltpu.VMEM((Hp, Wp, self.mid), jnp.float32),
                            pltpu.VMEM((Ho, Wo, self.mid), jnp.float32)],
            compiler_params=pltpu.CompilerParams(
                dimension_semantics=("parallel",),
                vmem_limit_bytes=32 * 1024 * 1024),
        )(*inputs)
        return jnp.transpose(out_nhwc, (0, 3, 1, 2))                   # NCHW


# --------------------------------------------------------------------------
# pure-JAX reference (for correctness check)
# --------------------------------------------------------------------------
def mbconv_reference(m, x_nchw):
    xh = jnp.transpose(x_nchw, (0, 2, 3, 1)).astype(jnp.float32)
    if m.has_pw:
        y = jnp.einsum("nhwi,io->nhwo", xh, m.w_pw)
        y = _act(y * m.pw_scale.reshape(1, 1, 1, -1) + m.pw_shift.reshape(1, 1, 1, -1),
                 m.activation)
    else:
        y = xh
    outs = []
    for b, k in enumerate(m.kernels):
        xb = y[..., b * m.cg:(b + 1) * m.cg]
        rhs = m.dw_weights[b].reshape(k, k, 1, m.cg)
        ob = jax.lax.conv_general_dilated(
            xb, rhs, window_strides=(m.stride, m.stride),
            padding=[(k // 2, k // 2), (k // 2, k // 2)],
            dimension_numbers=("NHWC", "HWIO", "NHWC"),
            feature_group_count=m.cg)
        outs.append(ob)
    y = jnp.concatenate(outs, axis=-1)
    y = _act(y * m.dw_scale.reshape(1, 1, 1, -1) + m.dw_shift.reshape(1, 1, 1, -1),
             m.activation)
    if m.se:
        pooled = jnp.mean(y, axis=(1, 2))
        s1 = jnp.maximum(pooled @ m.se_w1 + m.se_b1, 0.0)
        gate = jnp.clip(s1 @ m.se_w2 + m.se_b2 + 3.0, 0.0, 6.0) / 6.0
        y = y * gate[:, None, None, :]
    out = jnp.einsum("nhwi,io->nhwo", y, m.w_pw1)
    out = out * m.pw1_scale.reshape(1, 1, 1, -1) + m.pw1_shift.reshape(1, 1, 1, -1)
    if m.use_res:
        out = out + xh
    return jnp.transpose(out, (0, 3, 1, 2))


# --------------------------------------------------------------------------
if __name__ == "__main__":
    key = jax.random.PRNGKey(0)
    kx1, kx2, kp1, kp2 = jax.random.split(key, 4)

    # config A: expansion + mixed kernels [3,5] + SE + residual, ReLU6
    x1 = jax.random.normal(kx1, (2, 8, 16, 16), jnp.float32)     # NCHW
    mb1 = MBConvPallas(input_channel=8, output_channel=8, expansion=2,
                       kernels=[3, 5], stride=1, activation="relu",
                       se=True, group=1, key=kp1)
    out1 = jax.block_until_ready(mb1(x1))
    assert out1.shape == (2, 8, 16, 16), out1.shape
    ref1 = jax.block_until_ready(mbconv_reference(mb1, x1))
    err1 = float(jnp.max(jnp.abs(out1 - ref1)))
    assert err1 < 2e-3, f"config A max abs err {err1}"

    # config B: identity expand (no 1x1 expand), HSwish, no SE, no residual
    x2 = jax.random.normal(kx2, (2, 16, 16, 16), jnp.float32)    # NCHW
    mb2 = MBConvPallas(input_channel=16, output_channel=24, expansion=1,
                       kernels=[3], stride=1, activation="hswish",
                       se=False, group=1, key=kp2)
    out2 = jax.block_until_ready(mb2(x2))
    assert out2.shape == (2, 24, 16, 16), out2.shape
    ref2 = jax.block_until_ready(mbconv_reference(mb2, x2))
    err2 = float(jnp.max(jnp.abs(out2 - ref2)))
    assert err2 < 2e-3, f"config B max abs err {err2}"

    print("KERNEL_OK")
</pallas_src>

<mosaic_0001>
module attributes {stable_mosaic.version = 11 : i64} {
  func.func @kernel(%arg0: i32, %arg1: memref<1x16x16x8xf32, #tpu.memory_space<vmem>>, %arg2: memref<8x16xf32, #tpu.memory_space<vmem>>, %arg3: memref<1x16xf32, #tpu.memory_space<vmem>>, %arg4: memref<1x16xf32, #tpu.memory_space<vmem>>, %arg5: memref<3x3x8xf32, #tpu.memory_space<vmem>>, %arg6: memref<5x5x8xf32, #tpu.memory_space<vmem>>, %arg7: memref<1x16xf32, #tpu.memory_space<vmem>>, %arg8: memref<1x16xf32, #tpu.memory_space<vmem>>, %arg9: memref<16x4xf32, #tpu.memory_space<vmem>>, %arg10: memref<1x4xf32, #tpu.memory_space<vmem>>, %arg11: memref<4x16xf32, #tpu.memory_space<vmem>>, %arg12: memref<1x16xf32, #tpu.memory_space<vmem>>, %arg13: memref<16x8xf32, #tpu.memory_space<vmem>>, %arg14: memref<1x8xf32, #tpu.memory_space<vmem>>, %arg15: memref<1x8xf32, #tpu.memory_space<vmem>>, %arg16: memref<1x16x16x8xf32, #tpu.memory_space<vmem>>, %arg17: memref<32x32x16xf32, #tpu.memory_space<vmem>>, %arg18: memref<16x16x16xf32, #tpu.memory_space<vmem>>) attributes {dimension_semantics = [#tpu.dimension_semantics<parallel>], iteration_bounds = array<i64: 2>, scalar_prefetch = 0 : i64, scratch_operands = 2 : i64, tpu.core_type = #tpu.core_type<tc>, window_params = [{transform_indices = @transform_0, window_bounds = array<i64: 1, 16, 16, 8>}, {pipeline_mode = #tpu.pipeline_mode<synchronous>, transform_indices = @transform_1, window_bounds = array<i64: 8, 16>}, {pipeline_mode = #tpu.pipeline_mode<synchronous>, transform_indices = @transform_2, window_bounds = array<i64: 1, 16>}, {pipeline_mode = #tpu.pipeline_mode<synchronous>, transform_indices = @transform_3, window_bounds = array<i64: 1, 16>}, {pipeline_mode = #tpu.pipeline_mode<synchronous>, transform_indices = @transform_4, window_bounds = array<i64: 3, 3, 8>}, {pipeline_mode = #tpu.pipeline_mode<synchronous>, transform_indices = @transform_5, window_bounds = array<i64: 5, 5, 8>}, {pipeline_mode = #tpu.pipeline_mode<synchronous>, transform_indices = @transform_6, window_bounds = array<i64: 1, 16>}, {pipeline_mode = #tpu.pipeline_mode<synchronous>, transform_indices = @transform_7, window_bounds = array<i64: 1, 16>}, {pipeline_mode = #tpu.pipeline_mode<synchronous>, transform_indices = @transform_8, window_bounds = array<i64: 16, 4>}, {pipeline_mode = #tpu.pipeline_mode<synchronous>, transform_indices = @transform_9, window_bounds = array<i64: 1, 4>}, {pipeline_mode = #tpu.pipeline_mode<synchronous>, transform_indices = @transform_10, window_bounds = array<i64: 4, 16>}, {pipeline_mode = #tpu.pipeline_mode<synchronous>, transform_indices = @transform_11, window_bounds = array<i64: 1, 16>}, {pipeline_mode = #tpu.pipeline_mode<synchronous>, transform_indices = @transform_12, window_bounds = array<i64: 16, 8>}, {pipeline_mode = #tpu.pipeline_mode<synchronous>, transform_indices = @transform_13, window_bounds = array<i64: 1, 8>}, {pipeline_mode = #tpu.pipeline_mode<synchronous>, transform_indices = @transform_14, window_bounds = array<i64: 1, 8>}, {transform_indices = @transform_15, window_bounds = array<i64: 1, 16, 16, 8>}]} {
    %c0 = arith.constant 0 : index
    %c0_0 = arith.constant 0 : index
    %c0_1 = arith.constant 0 : index
    %c0_2 = arith.constant 0 : index
    %0 = vector.load %arg1[%c0, %c0_0, %c0_1, %c0_2] : memref<1x16x16x8xf32, #tpu.memory_space<vmem>>, vector<1x16x16x8xf32>
    %1 = vector.shape_cast %0 : vector<1x16x16x8xf32> to vector<16x16x8xf32>
    %2 = vector.shape_cast %1 : vector<16x16x8xf32> to vector<256x8xf32>
    %c0_3 = arith.constant 0 : index
    %c0_4 = arith.constant 0 : index
    %3 = vector.load %arg2[%c0_3, %c0_4] : memref<8x16xf32, #tpu.memory_space<vmem>>, vector<8x16xf32>
    %cst = arith.constant dense<0.000000e+00> : vector<256x16xf32>
    %4 = tpu.matmul %2, %3, %cst {dimension_numbers = #tpu.dot_dimension_numbers<[1], [0], [0], [1], [0, 0, 1, 1], [], []>} : vector<256x8xf32>, vector<8x16xf32>, vector<256x16xf32> -> vector<256x16xf32>
    %c0_5 = arith.constant 0 : index
    %c0_6 = arith.constant 0 : index
    %5 = vector.load %arg3[%c0_5, %c0_6] : memref<1x16xf32, #tpu.memory_space<vmem>>, vector<1x16xf32>
    %6 = vector.broadcast %5 : vector<1x16xf32> to vector<256x16xf32>
    %7 = arith.mulf %4, %6 : vector<256x16xf32>
    %c0_7 = arith.constant 0 : index
    %c0_8 = arith.constant 0 : index
    %8 = vector.load %arg4[%c0_7, %c0_8] : memref<1x16xf32, #tpu.memory_space<vmem>>, vector<1x16xf32>
    %9 = vector.broadcast %8 : vector<1x16xf32> to vector<256x16xf32>
    %10 = arith.addf %7, %9 : vector<256x16xf32>
    %cst_9 = arith.constant 0.000000e+00 : f32
    %cst_10 = arith.constant 6.000000e+00 : f32
    %11 = vector.broadcast %cst_9 : f32 to vector<256x16xf32>
    %12 = arith.maximumf %11, %10 : vector<256x16xf32>
    %13 = vector.broadcast %cst_10 : f32 to vector<256x16xf32>
    %14 = arith.minimumf %13, %12 : vector<256x16xf32>
    %cst_11 = arith.constant 0.000000e+00 : f32
    %15 = vector.broadcast %cst_11 : f32 to vector<32x32x16xf32>
    %c0_12 = arith.constant 0 : index
    %c0_13 = arith.constant 0 : index
    %c0_14 = arith.constant 0 : index
    %16 = vector.load %arg17[%c0_12, %c0_13, %c0_14] : memref<32x32x16xf32, #tpu.memory_space<vmem>>, vector<32x32x16xf32>
    tpu.vector_store %arg17[%c0_12, %c0_13, %c0_14], %15 {strides = array<i32>} : memref<32x32x16xf32, #tpu.memory_space<vmem>>, vector<32x32x16xf32>,
    %17 = vector.shape_cast %14 : vector<256x16xf32> to vector<16x16x16xf32>
    %c8 = arith.constant 8 : index
    %c8_15 = arith.constant 8 : index
    %c0_16 = arith.constant 0 : index
    %18 = vector.load %arg17[%c8, %c8_15, %c0_16] : memref<32x32x16xf32, #tpu.memory_space<vmem>>, vector<16x16x16xf32>
    tpu.vector_store %arg17[%c8, %c8_15, %c0_16], %17 {strides = array<i32>} : memref<32x32x16xf32, #tpu.memory_space<vmem>>, vector<16x16x16xf32>,
    %c0_17 = arith.constant 0 : index
    %c0_18 = arith.constant 0 : index
    %c0_19 = arith.constant 0 : index
    %19 = vector.load %arg17[%c0_17, %c0_18, %c0_19] : memref<32x32x16xf32, #tpu.memory_space<vmem>>, vector<32x32x16xf32>
    %20 = vector.extract_strided_slice %19 {offsets = [0, 0, 0], sizes = [32, 32, 8], strides = [1, 1, 1]} : vector<32x32x16xf32> to vector<32x32x8xf32>
    %c0_20 = arith.constant 0 : index
    %c0_21 = arith.constant 0 : index
    %c0_22 = arith.constant 0 : index
    %21 = vector.load %arg5[%c0_20, %c0_21, %c0_22] : memref<3x3x8xf32, #tpu.memory_space<vmem>>, vector<3x3x8xf32>
    %cst_23 = arith.constant 0.000000e+00 : f32
    %22 = vector.broadcast %cst_23 : f32 to vector<16x16x8xf32>
    %23 = vector.extract_strided_slice %20 {offsets = [7, 0, 0], sizes = [16, 32, 8], strides = [1, 1, 1]} : vector<32x32x8xf32> to vector<16x32x8xf32>
    %24 = vector.extract_strided_slice %23 {offsets = [0, 7, 0], sizes = [16, 16, 8], strides = [1, 1, 1]} : vector<16x32x8xf32> to vector<16x16x8xf32>
    %25 = vector.extract_strided_slice %21 {offsets = [0, 0, 0], sizes = [1, 1, 8], strides = [1, 1, 1]} : vector<3x3x8xf32> to vector<1x1x8xf32>
    %26 = vector.shape_cast %25 : vector<1x1x8xf32> to vector<8xf32>
    %27 = vector.shape_cast %26 : vector<8xf32> to vector<1x1x8xf32>
    %28 = vector.broadcast %27 : vector<1x1x8xf32> to vector<16x16x8xf32>
    %29 = arith.mulf %24, %28 : vector<16x16x8xf32>
    %30 = arith.addf %22, %29 : vector<16x16x8xf32>
    %31 = vector.extract_strided_slice %23 {offsets = [0, 8, 0], sizes = [16, 16, 8], strides = [1, 1, 1]} : vector<16x32x8xf32> to vector<16x16x8xf32>
    %32 = vector.extract_strided_slice %21 {offsets = [0, 1, 0], sizes = [1, 1, 8], strides = [1, 1, 1]} : vector<3x3x8xf32> to vector<1x1x8xf32>
    %33 = vector.shape_cast %32 : vector<1x1x8xf32> to vector<8xf32>
    %34 = vector.shape_cast %33 : vector<8xf32> to vector<1x1x8xf32>
    %35 = vector.broadcast %34 : vector<1x1x8xf32> to vector<16x16x8xf32>
    %36 = arith.mulf %31, %35 : vector<16x16x8xf32>
    %37 = arith.addf %30, %36 : vector<16x16x8xf32>
    %38 = vector.extract_strided_slice %23 {offsets = [0, 9, 0], sizes = [16, 16, 8], strides = [1, 1, 1]} : vector<16x32x8xf32> to vector<16x16x8xf32>
    %39 = vector.extract_strided_slice %21 {offsets = [0, 2, 0], sizes = [1, 1, 8], strides = [1, 1, 1]} : vector<3x3x8xf32> to vector<1x1x8xf32>
    %40 = vector.shape_cast %39 : vector<1x1x8xf32> to vector<8xf32>
    %41 = vector.shape_cast %40 : vector<8xf32> to vector<1x1x8xf32>
    %42 = vector.broadcast %41 : vector<1x1x8xf32> to vector<16x16x8xf32>
    %43 = arith.mulf %38, %42 : vector<16x16x8xf32>
    %44 = arith.addf %37, %43 : vector<16x16x8xf32>
    %45 = vector.extract_strided_slice %20 {offsets = [8, 0, 0], sizes = [16, 32, 8], strides = [1, 1, 1]} : vector<32x32x8xf32> to vector<16x32x8xf32>
    %46 = vector.extract_strided_slice %45 {offsets = [0, 7, 0], sizes = [16, 16, 8], strides = [1, 1, 1]} : vector<16x32x8xf32> to vector<16x16x8xf32>
    %47 = vector.extract_strided_slice %21 {offsets = [1, 0, 0], sizes = [1, 1, 8], strides = [1, 1, 1]} : vector<3x3x8xf32> to vector<1x1x8xf32>
    %48 = vector.shape_cast %47 : vector<1x1x8xf32> to vector<8xf32>
    %49 = vector.shape_cast %48 : vector<8xf32> to vector<1x1x8xf32>
    %50 = vector.broadcast %49 : vector<1x1x8xf32> to vector<16x16x8xf32>
    %51 = arith.mulf %46, %50 : vector<16x16x8xf32>
    %52 = arith.addf %44, %51 : vector<16x16x8xf32>
    %53 = vector.extract_strided_slice %45 {offsets = [0, 8, 0], sizes = [16, 16, 8], strides = [1, 1, 1]} : vector<16x32x8xf32> to vector<16x16x8xf32>
    %54 = vector.extract_strided_slice %21 {offsets = [1, 1, 0], sizes = [1, 1, 8], strides = [1, 1, 1]} : vector<3x3x8xf32> to vector<1x1x8xf32>
    %55 = vector.shape_cast %54 : vector<1x1x8xf32> to vector<8xf32>
    %56 = vector.shape_cast %55 : vector<8xf32> to vector<1x1x8xf32>
    %57 = vector.broadcast %56 : vector<1x1x8xf32> to vector<16x16x8xf32>
    %58 = arith.mulf %53, %57 : vector<16x16x8xf32>
    %59 = arith.addf %52, %58 : vector<16x16x8xf32>
    %60 = vector.extract_strided_slice %45 {offsets = [0, 9, 0], sizes = [16, 16, 8], strides = [1, 1, 1]} : vector<16x32x8xf32> to vector<16x16x8xf32>
    %61 = vector.extract_strided_slice %21 {offsets = [1, 2, 0], sizes = [1, 1, 8], strides = [1, 1, 1]} : vector<3x3x8xf32> to vector<1x1x8xf32>
    %62 = vector.shape_cast %61 : vector<1x1x8xf32> to vector<8xf32>
    %63 = vector.shape_cast %62 : vector<8xf32> to vector<1x1x8xf32>
    %64 = vector.broadcast %63 : vector<1x1x8xf32> to vector<16x16x8xf32>
    %65 = arith.mulf %60, %64 : vector<16x16x8xf32>
    %66 = arith.addf %59, %65 : vector<16x16x8xf32>
    %67 = vector.extract_strided_slice %20 {offsets = [9, 0, 0], sizes = [16, 32, 8], strides = [1, 1, 1]} : vector<32x32x8xf32> to vector<16x32x8xf32>
    %68 = vector.extract_strided_slice %67 {offsets = [0, 7, 0], sizes = [16, 16, 8], strides = [1, 1, 1]} : vector<16x32x8xf32> to vector<16x16x8xf32>
    %69 = vector.extract_strided_slice %21 {offsets = [2, 0, 0], sizes = [1, 1, 8], strides = [1, 1, 1]} : vector<3x3x8xf32> to vector<1x1x8xf32>
    %70 = vector.shape_cast %69 : vector<1x1x8xf32> to vector<8xf32>
    %71 = vector.shape_cast %70 : vector<8xf32> to vector<1x1x8xf32>
    %72 = vector.broadcast %71 : vector<1x1x8xf32> to vector<16x16x8xf32>
    %73 = arith.mulf %68, %72 : vector<16x16x8xf32>
    %74 = arith.addf %66, %73 : vector<16x16x8xf32>
    %75 = vector.extract_strided_slice %67 {offsets = [0, 8, 0], sizes = [16, 16, 8], strides = [1, 1, 1]} : vector<16x32x8xf32> to vector<16x16x8xf32>
    %76 = vector.extract_strided_slice %21 {offsets = [2, 1, 0], sizes = [1, 1, 8], strides = [1, 1, 1]} : vector<3x3x8xf32> to vector<1x1x8xf32>
    %77 = vector.shape_cast %76 : vector<1x1x8xf32> to vector<8xf32>
    %78 = vector.shape_cast %77 : vector<8xf32> to vector<1x1x8xf32>
    %79 = vector.broadcast %78 : vector<1x1x8xf32> to vector<16x16x8xf32>
    %80 = arith.mulf %75, %79 : vector<16x16x8xf32>
    %81 = arith.addf %74, %80 : vector<16x16x8xf32>
    %82 = vector.extract_strided_slice %67 {offsets = [0, 9, 0], sizes = [16, 16, 8], strides = [1, 1, 1]} : vector<16x32x8xf32> to vector<16x16x8xf32>
    %83 = vector.extract_strided_slice %21 {offsets = [2, 2, 0], sizes = [1, 1, 8], strides = [1, 1, 1]} : vector<3x3x8xf32> to vector<1x1x8xf32>
    %84 = vector.shape_cast %83 : vector<1x1x8xf32> to vector<8xf32>
    %85 = vector.shape_cast %84 : vector<8xf32> to vector<1x1x8xf32>
    %86 = vector.broadcast %85 : vector<1x1x8xf32> to vector<16x16x8xf32>
    %87 = arith.mulf %82, %86 : vector<16x16x8xf32>
    %88 = arith.addf %81, %87 : vector<16x16x8xf32>
    %c0_24 = arith.constant 0 : index
    %c0_25 = arith.constant 0 : index
    %89 = vector.load %arg7[%c0_24, %c0_25] : memref<1x16xf32, #tpu.memory_space<vmem>>, vector<1x8xf32>
    %90 = vector.shape_cast %89 : vector<1x8xf32> to vector<1x1x8xf32>
    %91 = vector.broadcast %90 : vector<1x1x8xf32> to vector<16x16x8xf32>
    %92 = arith.mulf %88, %91 : vector<16x16x8xf32>
    %c0_26 = arith.constant 0 : index
    %c0_27 = arith.constant 0 : index
    %93 = vector.load %arg8[%c0_26, %c0_27] : memref<1x16xf32, #tpu.memory_space<vmem>>, vector<1x8xf32>
    %94 = vector.shape_cast %93 : vector<1x8xf32> to vector<1x1x8xf32>
    %95 = vector.broadcast %94 : vector<1x1x8xf32> to vector<16x16x8xf32>
    %96 = arith.addf %92, %95 : vector<16x16x8xf32>
    %cst_28 = arith.constant 0.000000e+00 : f32
    %cst_29 = arith.constant 6.000000e+00 : f32
    %97 = vector.broadcast %cst_28 : f32 to vector<16x16x8xf32>
    %98 = arith.maximumf %97, %96 : vector<16x16x8xf32>
    %99 = vector.broadcast %cst_29 : f32 to vector<16x16x8xf32>
    %100 = arith.minimumf %99, %98 : vector<16x16x8xf32>
    %c0_30 = arith.constant 0 : index
    %c0_31 = arith.constant 0 : index
    %c0_32 = arith.constant 0 : index
    %101 = vector.load %arg18[%c0_30, %c0_31, %c0_32] : memref<16x16x16xf32, #tpu.memory_space<vmem>>, vector<16x16x8xf32>
    tpu.vector_store %arg18[%c0_30, %c0_31, %c0_32], %100 {strides = array<i32>} : memref<16x16x16xf32, #tpu.memory_space<vmem>>, vector<16x16x8xf32>,
    %102 = vector.extract_strided_slice %19 {offsets = [0, 0, 8], sizes = [32, 32, 8], strides = [1, 1, 1]} : vector<32x32x16xf32> to vector<32x32x8xf32>
    %c0_33 = arith.constant 0 : index
    %c0_34 = arith.constant 0 : index
    %c0_35 = arith.constant 0 : index
    %103 = vector.load %arg6[%c0_33, %c0_34, %c0_35] : memref<5x5x8xf32, #tpu.memory_space<vmem>>, vector<5x5x8xf32>
    %cst_36 = arith.constant 0.000000e+00 : f32
    %104 = vector.broadcast %cst_36 : f32 to vector<16x16x8xf32>
    %105 = vector.extract_strided_slice %102 {offsets = [6, 0, 0], sizes = [16, 32, 8], strides = [1, 1, 1]} : vector<32x32x8xf32> to vector<16x32x8xf32>
    %106 = vector.extract_strided_slice %105 {offsets = [0, 6, 0], sizes = [16, 16, 8], strides = [1, 1, 1]} : vector<16x32x8xf32> to vector<16x16x8xf32>
    %107 = vector.extract_strided_slice %103 {offsets = [0, 0, 0], sizes = [1, 1, 8], strides = [1, 1, 1]} : vector<5x5x8xf32> to vector<1x1x8xf32>
    %108 = vector.shape_cast %107 : vector<1x1x8xf32> to vector<8xf32>
    %109 = vector.shape_cast %108 : vector<8xf32> to vector<1x1x8xf32>
    %110 = vector.broadcast %109 : vector<1x1x8xf32> to vector<16x16x8xf32>
    %111 = arith.mulf %106, %110 : vector<16x16x8xf32>
    %112 = arith.addf %104, %111 : vector<16x16x8xf32>
    %113 = vector.extract_strided_slice %105 {offsets = [0, 7, 0], sizes = [16, 16, 8], strides = [1, 1, 1]} : vector<16x32x8xf32> to vector<16x16x8xf32>
    %114 = vector.extract_strided_slice %103 {offsets = [0, 1, 0], sizes = [1, 1, 8], strides = [1, 1, 1]} : vector<5x5x8xf32> to vector<1x1x8xf32>
    %115 = vector.shape_cast %114 : vector<1x1x8xf32> to vector<8xf32>
    %116 = vector.shape_cast %115 : vector<8xf32> to vector<1x1x8xf32>
    %117 = vector.broadcast %116 : vector<1x1x8xf32> to vector<16x16x8xf32>
    %118 = arith.mulf %113, %117 : vector<16x16x8xf32>
    %119 = arith.addf %112, %118 : vector<16x16x8xf32>
    %120 = vector.extract_strided_slice %105 {offsets = [0, 8, 0], sizes = [16, 16, 8], strides = [1, 1, 1]} : vector<16x32x8xf32> to vector<16x16x8xf32>
    %121 = vector.extract_strided_slice %103 {offsets = [0, 2, 0], sizes = [1, 1, 8], strides = [1, 1, 1]} : vector<5x5x8xf32> to vector<1x1x8xf32>
    %122 = vector.shape_cast %121 : vector<1x1x8xf32> to vector<8xf32>
    %123 = vector.shape_cast %122 : vector<8xf32> to vector<1x1x8xf32>
    %124 = vector.broadcast %123 : vector<1x1x8xf32> to vector<16x16x8xf32>
    %125 = arith.mulf %120, %124 : vector<16x16x8xf32>
    %126 = arith.addf %119, %125 : vector<16x16x8xf32>
    %127 = vector.extract_strided_slice %105 {offsets = [0, 9, 0], sizes = [16, 16, 8], strides = [1, 1, 1]} : vector<16x32x8xf32> to vector<16x16x8xf32>
    %128 = vector.extract_strided_slice %103 {offsets = [0, 3, 0], sizes = [1, 1, 8], strides = [1, 1, 1]} : vector<5x5x8xf32> to vector<1x1x8xf32>
    %129 = vector.shape_cast %128 : vector<1x1x8xf32> to vector<8xf32>
    %130 = vector.shape_cast %129 : vector<8xf32> to vector<1x1x8xf32>
    %131 = vector.broadcast %130 : vector<1x1x8xf32> to vector<16x16x8xf32>
    %132 = arith.mulf %127, %131 : vector<16x16x8xf32>
    %133 = arith.addf %126, %132 : vector<16x16x8xf32>
    %134 = vector.extract_strided_slice %105 {offsets = [0, 10, 0], sizes = [16, 16, 8], strides = [1, 1, 1]} : vector<16x32x8xf32> to vector<16x16x8xf32>
    %135 = vector.extract_strided_slice %103 {offsets = [0, 4, 0], sizes = [1, 1, 8], strides = [1, 1, 1]} : vector<5x5x8xf32> to vector<1x1x8xf32>
    %136 = vector.shape_cast %135 : vector<1x1x8xf32> to vector<8xf32>
    %137 = vector.shape_cast %136 : vector<8xf32> to vector<1x1x8xf32>
    %138 = vector.broadcast %137 : vector<1x1x8xf32> to vector<16x16x8xf32>
    %139 = arith.mulf %134, %138 : vector<16x16x8xf32>
    %140 = arith.addf %133, %139 : vector<16x16x8xf32>
    %141 = vector.extract_strided_slice %102 {offsets = [7, 0, 0], sizes = [16, 32, 8], strides = [1, 1, 1]} : vector<32x32x8xf32> to vector<16x32x8xf32>
    %142 = vector.extract_strided_slice %141 {offsets = [0, 6, 0], sizes = [16, 16, 8], strides = [1, 1, 1]} : vector<16x32x8xf32> to vector<16x16x8xf32>
    %143 = vector.extract_strided_slice %103 {offsets = [1, 0, 0], sizes = [1, 1, 8], strides = [1, 1, 1]} : vector<5x5x8xf32> to vector<1x1x8xf32>
    %144 = vector.shape_cast %143 : vector<1x1x8xf32> to vector<8xf32>
    %145 = vector.shape_cast %144 : vector<8xf32> to vector<1x1x8xf32>
    %146 = vector.broadcast %145 : vector<1x1x8xf32> to vector<16x16x8xf32>
    %147 = arith.mulf %142, %146 : vector<16x16x8xf32>
    %148 = arith.addf %140, %147 : vector<16x16x8xf32>
    %149 = vector.extract_strided_slice %141 {offsets = [0, 7, 0], sizes = [16, 16, 8], strides = [1, 1, 1]} : vector<16x32x8xf32> to vector<16x16x8xf32>
    %150 = vector.extract_strided_slice %103 {offsets = [1, 1, 0], sizes = [1, 1, 8], strides = [1, 1, 1]} : vector<5x5x8xf32> to vector<1x1x8xf32>
    %151 = vector.shape_cast %150 : vector<1x1x8xf32> to vector<8xf32>
    %152 = vector.shape_cast %151 : vector<8xf32> to vector<1x1x8xf32>
    %153 = vector.broadcast %152 : vector<1x1x8xf32> to vector<16x16x8xf32>
    %154 = arith.mulf %149, %153 : vector<16x16x8xf32>
    %155 = arith.addf %148, %154 : vector<16x16x8xf32>
    %156 = vector.extract_strided_slice %141 {offsets = [0, 8, 0], sizes = [16, 16, 8], strides = [1, 1, 1]} : vector<16x32x8xf32> to vector<16x16x8xf32>
    %157 = vector.extract_strided_slice %103 {offsets = [1, 2, 0], sizes = [1, 1, 8], strides = [1, 1, 1]} : vector<5x5x8xf32> to vector<1x1x8xf32>
    %158 = vector.shape_cast %157 : vector<1x1x8xf32> to vector<8xf32>
    %159 = vector.shape_cast %158 : vector<8xf32> to vector<1x1x8xf32>
    %160 = vector.broadcast %159 : vector<1x1x8xf32> to vector<16x16x8xf32>
    %161 = arith.mulf %156, %160 : vector<16x16x8xf32>
    %162 = arith.addf %155, %161 : vector<16x16x8xf32>
    %163 = vector.extract_strided_slice %141 {offsets = [0, 9, 0], sizes = [16, 16, 8], strides = [1, 1, 1]} : vector<16x32x8xf32> to vector<16x16x8xf32>
    %164 = vector.extract_strided_slice %103 {offsets = [1, 3, 0], sizes = [1, 1, 8], strides = [1, 1, 1]} : vector<5x5x8xf32> to vector<1x1x8xf32>
    %165 = vector.shape_cast %164 : vector<1x1x8xf32> to vector<8xf32>
    %166 = vector.shape_cast %165 : vector<8xf32> to vector<1x1x8xf32>
    %167 = vector.broadcast %166 : vector<1x1x8xf32> to vector<16x16x8xf32>
    %168 = arith.mulf %163, %167 : vector<16x16x8xf32>
    %169 = arith.addf %162, %168 : vector<16x16x8xf32>
    %170 = vector.extract_strided_slice %141 {offsets = [0, 10, 0], sizes = [16, 16, 8], strides = [1, 1, 1]} : vector<16x32x8xf32> to vector<16x16x8xf32>
    %171 = vector.extract_strided_slice %103 {offsets = [1, 4, 0], sizes = [1, 1, 8], strides = [1, 1, 1]} : vector<5x5x8xf32> to vector<1x1x8xf32>
    %172 = vector.shape_cast %171 : vector<1x1x8xf32> to vector<8xf32>
    %173 = vector.shape_cast %172 : vector<8xf32> to vector<1x1x8xf32>
    %174 = vector.broadcast %173 : vector<1x1x8xf32> to vector<16x16x8xf32>
    %175 = arith.mulf %170, %174 : vector<16x16x8xf32>
    %176 = arith.addf %169, %175 : vector<16x16x8xf32>
    %177 = vector.extract_strided_slice %102 {offsets = [8, 0, 0], sizes = [16, 32, 8], strides = [1, 1, 1]} : vector<32x32x8xf32> to vector<16x32x8xf32>
    %178 = vector.extract_strided_slice %177 {offsets = [0, 6, 0], sizes = [16, 16, 8], strides = [1, 1, 1]} : vector<16x32x8xf32> to vector<16x16x8xf32>
    %179 = vector.extract_strided_slice %103 {offsets = [2, 0, 0], sizes = [1, 1, 8], strides = [1, 1, 1]} : vector<5x5x8xf32> to vector<1x1x8xf32>
    %180 = vector.shape_cast %179 : vector<1x1x8xf32> to vector<8xf32>
    %181 = vector.shape_cast %180 : vector<8xf32> to vector<1x1x8xf32>
    %182 = vector.broadcast %181 : vector<1x1x8xf32> to vector<16x16x8xf32>
    %183 = arith.mulf %178, %182 : vector<16x16x8xf32>
    %184 = arith.addf %176, %183 : vector<16x16x8xf32>
    %185 = vector.extract_strided_slice %177 {offsets = [0, 7, 0], sizes = [16, 16, 8], strides = [1, 1, 1]} : vector<16x32x8xf32> to vector<16x16x8xf32>
    %186 = vector.extract_strided_slice %103 {offsets = [2, 1, 0], sizes = [1, 1, 8], strides = [1, 1, 1]} : vector<5x5x8xf32> to vector<1x1x8xf32>
    %187 = vector.shape_cast %186 : vector<1x1x8xf32> to vector<8xf32>
    %188 = vector.shape_cast %187 : vector<8xf32> to vector<1x1x8xf32>
    %189 = vector.broadcast %188 : vector<1x1x8xf32> to vector<16x16x8xf32>
    %190 = arith.mulf %185, %189 : vector<16x16x8xf32>
    %191 = arith.addf %184, %190 : vector<16x16x8xf32>
    %192 = vector.extract_strided_slice %177 {offsets = [0, 8, 0], sizes = [16, 16, 8], strides = [1, 1, 1]} : vector<16x32x8xf32> to vector<16x16x8xf32>
    %193 = vector.extract_strided_slice %103 {offsets = [2, 2, 0], sizes = [1, 1, 8], strides = [1, 1, 1]} : vector<5x5x8xf32> to vector<1x1x8xf32>
    %194 = vector.shape_cast %193 : vector<1x1x8xf32> to vector<8xf32>
    %195 = vector.shape_cast %194 : vector<8xf32> to vector<1x1x8xf32>
    %196 = vector.broadcast %195 : vector<1x1x8xf32> to vector<16x16x8xf32>
    %197 = arith.mulf %192, %196 : vector<16x16x8xf32>
    %198 = arith.addf %191, %197 : vector<16x16x8xf32>
    %199 = vector.extract_strided_slice %177 {offsets = [0, 9, 0], sizes = [16, 16, 8], strides = [1, 1, 1]} : vector<16x32x8xf32> to vector<16x16x8xf32>
    %200 = vector.extract_strided_slice %103 {offsets = [2, 3, 0], sizes = [1, 1, 8], strides = [1, 1, 1]} : vector<5x5x8xf32> to vector<1x1x8xf32>
    %201 = vector.shape_cast %200 : vector<1x1x8xf32> to vector<8xf32>
    %202 = vector.shape_cast %201 : vector<8xf32> to vector<1x1x8xf32>
    %203 = vector.broadcast %202 : vector<1x1x8xf32> to vector<16x16x8xf32>
    %204 = arith.mulf %199, %203 : vector<16x16x8xf32>
    %205 = arith.addf %198, %204 : vector<16x16x8xf32>
    %206 = vector.extract_strided_slice %177 {offsets = [0, 10, 0], sizes = [16, 16, 8], strides = [1, 1, 1]} : vector<16x32x8xf32> to vector<16x16x8xf32>
    %207 = vector.extract_strided_slice %103 {offsets = [2, 4, 0], sizes = [1, 1, 8], strides = [1, 1, 1]} : vector<5x5x8xf32> to vector<1x1x8xf32>
    %208 = vector.shape_cast %207 : vector<1x1x8xf32> to vector<8xf32>
    %209 = vector.shape_cast %208 : vector<8xf32> to vector<1x1x8xf32>
    %210 = vector.broadcast %209 : vector<1x1x8xf32> to vector<16x16x8xf32>
    %211 = arith.mulf %206, %210 : vector<16x16x8xf32>
    %212 = arith.addf %205, %211 : vector<16x16x8xf32>
    %213 = vector.extract_strided_slice %102 {offsets = [9, 0, 0], sizes = [16, 32, 8], strides = [1, 1, 1]} : vector<32x32x8xf32> to vector<16x32x8xf32>
    %214 = vector.extract_strided_slice %213 {offsets = [0, 6, 0], sizes = [16, 16, 8], strides = [1, 1, 1]} : vector<16x32x8xf32> to vector<16x16x8xf32>
    %215 = vector.extract_strided_slice %103 {offsets = [3, 0, 0], sizes = [1, 1, 8], strides = [1, 1, 1]} : vector<5x5x8xf32> to vector<1x1x8xf32>
    %216 = vector.shape_cast %215 : vector<1x1x8xf32> to vector<8xf32>
    %217 = vector.shape_cast %216 : vector<8xf32> to vector<1x1x8xf32>
    %218 = vector.broadcast %217 : vector<1x1x8xf32> to vector<16x16x8xf32>
    %219 = arith.mulf %214, %218 : vector<16x16x8xf32>
    %220 = arith.addf %212, %219 : vector<16x16x8xf32>
    %221 = vector.extract_strided_slice %213 {offsets = [0, 7, 0], sizes = [16, 16, 8], strides = [1, 1, 1]} : vector<16x32x8xf32> to vector<16x16x8xf32>
    %222 = vector.extract_strided_slice %103 {offsets = [3, 1, 0], sizes = [1, 1, 8], strides = [1, 1, 1]} : vector<5x5x8xf32> to vector<1x1x8xf32>
    %223 = vector.shape_cast %222 : vector<1x1x8xf32> to vector<8xf32>
    %224 = vector.shape_cast %223 : vector<8xf32> to vector<1x1x8xf32>
    %225 = vector.broadcast %224 : vector<1x1x8xf32> to vector<16x16x8xf32>
    %226 = arith.mulf %221, %225 : vector<16x16x8xf32>
    %227 = arith.addf %220, %226 : vector<16x16x8xf32>
    %228 = vector.extract_strided_slice %213 {offsets = [0, 8, 0], sizes = [16, 16, 8], strides = [1, 1, 1]} : vector<16x32x8xf32> to vector<16x16x8xf32>
    %229 = vector.extract_strided_slice %103 {offsets = [3, 2, 0], sizes = [1, 1, 8], strides = [1, 1, 1]} : vector<5x5x8xf32> to vector<1x1x8xf32>
    %230 = vector.shape_cast %229 : vector<1x1x8xf32> to vector<8xf32>
    %231 = vector.shape_cast %230 : vector<8xf32> to vector<1x1x8xf32>
    %232 = vector.broadcast %231 : vector<1x1x8xf32> to vector<16x16x8xf32>
    %233 = arith.mulf %228, %232 : vector<16x16x8xf32>
    %234 = arith.addf %227, %233 : vector<16x16x8xf32>
    %235 = vector.extract_strided_slice %213 {offsets = [0, 9, 0], sizes = [16, 16, 8], strides = [1, 1, 1]} : vector<16x32x8xf32> to vector<16x16x8xf32>
    %236 = vector.extract_strided_slice %103 {offsets = [3, 3, 0], sizes = [1, 1, 8], strides = [1, 1, 1]} : vector<5x5x8xf32> to vector<1x1x8xf32>
    %237 = vector.shape_cast %236 : vector<1x1x8xf32> to vector<8xf32>
    %238 = vector.shape_cast %237 : vector<8xf32> to vector<1x1x8xf32>
    %239 = vector.broadcast %238 : vector<1x1x8xf32> to vector<16x16x8xf32>
    %240 = arith.mulf %235, %239 : vector<16x16x8xf32>
    %241 = arith.addf %234, %240 : vector<16x16x8xf32>
    %242 = vector.extract_strided_slice %213 {offsets = [0, 10, 0], sizes = [16, 16, 8], strides = [1, 1, 1]} : vector<16x32x8xf32> to vector<16x16x8xf32>
    %243 = vector.extract_strided_slice %103 {offsets = [3, 4, 0], sizes = [1, 1, 8], strides = [1, 1, 1]} : vector<5x5x8xf32> to vector<1x1x8xf32>
    %244 = vector.shape_cast %243 : vector<1x1x8xf32> to vector<8xf32>
    %245 = vector.shape_cast %244 : vector<8xf32> to vector<1x1x8xf32>
    %246 = vector.broadcast %245 : vector<1x1x8xf32> to vector<16x16x8xf32>
    %247 = arith.mulf %242, %246 : vector<16x16x8xf32>
    %248 = arith.addf %241, %247 : vector<16x16x8xf32>
    %249 = vector.extract_strided_slice %102 {offsets = [10, 0, 0], sizes = [16, 32, 8], strides = [1, 1, 1]} : vector<32x32x8xf32> to vector<16x32x8xf32>
    %250 = vector.extract_strided_slice %249 {offsets = [0, 6, 0], sizes = [16, 16, 8], strides = [1, 1, 1]} : vector<16x32x8xf32> to vector<16x16x8xf32>
    %251 = vector.extract_strided_slice %103 {offsets = [4, 0, 0], sizes = [1, 1, 8], strides = [1, 1, 1]} : vector<5x5x8xf32> to vector<1x1x8xf32>
    %252 = vector.shape_cast %251 : vector<1x1x8xf32> to vector<8xf32>
    %253 = vector.shape_cast %252 : vector<8xf32> to vector<1x1x8xf32>
    %254 = vector.broadcast %253 : vector<1x1x8xf32> to vector<16x16x8xf32>
    %255 = arith.mulf %250, %254 : vector<16x16x8xf32>
    %256 = arith.addf %248, %255 : vector<16x16x8xf32>
    %257 = vector.extract_strided_slice %249 {offsets = [0, 7, 0], sizes = [16, 16, 8], strides = [1, 1, 1]} : vector<16x32x8xf32> to vector<16x16x8xf32>
    %258 = vector.extract_strided_slice %103 {offsets = [4, 1, 0], sizes = [1, 1, 8], strides = [1, 1, 1]} : vector<5x5x8xf32> to vector<1x1x8xf32>
    %259 = vector.shape_cast %258 : vector<1x1x8xf32> to vector<8xf32>
    %260 = vector.shape_cast %259 : vector<8xf32> to vector<1x1x8xf32>
    %261 = vector.broadcast %260 : vector<1x1x8xf32> to vector<16x16x8xf32>
    %262 = arith.mulf %257, %261 : vector<16x16x8xf32>
    %263 = arith.addf %256, %262 : vector<16x16x8xf32>
    %264 = vector.extract_strided_slice %249 {offsets = [0, 8, 0], sizes = [16, 16, 8], strides = [1, 1, 1]} : vector<16x32x8xf32> to vector<16x16x8xf32>
    %265 = vector.extract_strided_slice %103 {offsets = [4, 2, 0], sizes = [1, 1, 8], strides = [1, 1, 1]} : vector<5x5x8xf32> to vector<1x1x8xf32>
    %266 = vector.shape_cast %265 : vector<1x1x8xf32> to vector<8xf32>
    %267 = vector.shape_cast %266 : vector<8xf32> to vector<1x1x8xf32>
    %268 = vector.broadcast %267 : vector<1x1x8xf32> to vector<16x16x8xf32>
    %269 = arith.mulf %264, %268 : vector<16x16x8xf32>
    %270 = arith.addf %263, %269 : vector<16x16x8xf32>
    %271 = vector.extract_strided_slice %249 {offsets = [0, 9, 0], sizes = [16, 16, 8], strides = [1, 1, 1]} : vector<16x32x8xf32> to vector<16x16x8xf32>
    %272 = vector.extract_strided_slice %103 {offsets = [4, 3, 0], sizes = [1, 1, 8], strides = [1, 1, 1]} : vector<5x5x8xf32> to vector<1x1x8xf32>
    %273 = vector.shape_cast %272 : vector<1x1x8xf32> to vector<8xf32>
    %274 = vector.shape_cast %273 : vector<8xf32> to vector<1x1x8xf32>
    %275 = vector.broadcast %274 : vector<1x1x8xf32> to vector<16x16x8xf32>
    %276 = arith.mulf %271, %275 : vector<16x16x8xf32>
    %277 = arith.addf %270, %276 : vector<16x16x8xf32>
    %278 = vector.extract_strided_slice %249 {offsets = [0, 10, 0], sizes = [16, 16, 8], strides = [1, 1, 1]} : vector<16x32x8xf32> to vector<16x16x8xf32>
    %279 = vector.extract_strided_slice %103 {offsets = [4, 4, 0], sizes = [1, 1, 8], strides = [1, 1, 1]} : vector<5x5x8xf32> to vector<1x1x8xf32>
    %280 = vector.shape_cast %279 : vector<1x1x8xf32> to vector<8xf32>
    %281 = vector.shape_cast %280 : vector<8xf32> to vector<1x1x8xf32>
    %282 = vector.broadcast %281 : vector<1x1x8xf32> to vector<16x16x8xf32>
    %283 = arith.mulf %278, %282 : vector<16x16x8xf32>
    %284 = arith.addf %277, %283 : vector<16x16x8xf32>
    %c0_37 = arith.constant 0 : index
    %c8_38 = arith.constant 8 : index
    %285 = vector.load %arg7[%c0_37, %c8_38] : memref<1x16xf32, #tpu.memory_space<vmem>>, vector<1x8xf32>
    %286 = vector.shape_cast %285 : vector<1x8xf32> to vector<1x1x8xf32>
    %287 = vector.broadcast %286 : vector<1x1x8xf32> to vector<16x16x8xf32>
    %288 = arith.mulf %284, %287 : vector<16x16x8xf32>
    %c0_39 = arith.constant 0 : index
    %c8_40 = arith.constant 8 : index
    %289 = vector.load %arg8[%c0_39, %c8_40] : memref<1x16xf32, #tpu.memory_space<vmem>>, vector<1x8xf32>
    %290 = vector.shape_cast %289 : vector<1x8xf32> to vector<1x1x8xf32>
    %291 = vector.broadcast %290 : vector<1x1x8xf32> to vector<16x16x8xf32>
    %292 = arith.addf %288, %291 : vector<16x16x8xf32>
    %cst_41 = arith.constant 0.000000e+00 : f32
    %cst_42 = arith.constant 6.000000e+00 : f32
    %293 = vector.broadcast %cst_41 : f32 to vector<16x16x8xf32>
    %294 = arith.maximumf %293, %292 : vector<16x16x8xf32>
    %295 = vector.broadcast %cst_42 : f32 to vector<16x16x8xf32>
    %296 = arith.minimumf %295, %294 : vector<16x16x8xf32>
    %c0_43 = arith.constant 0 : index
    %c0_44 = arith.constant 0 : index
    %c8_45 = arith.constant 8 : index
    %297 = vector.load %arg18[%c0_43, %c0_44, %c8_45] : memref<16x16x16xf32, #tpu.memory_space<vmem>>, vector<16x16x8xf32>
    tpu.vector_store %arg18[%c0_43, %c0_44, %c8_45], %296 {strides = array<i32>} : memref<16x16x16xf32, #tpu.memory_space<vmem>>, vector<16x16x8xf32>,
    %c0_46 = arith.constant 0 : index
    %c0_47 = arith.constant 0 : index
    %c0_48 = arith.constant 0 : index
    %298 = vector.load %arg18[%c0_46, %c0_47, %c0_48] : memref<16x16x16xf32, #tpu.memory_space<vmem>>, vector<16x16x16xf32>
    %299 = vector.shape_cast %298 : vector<16x16x16xf32> to vector<256x16xf32>
    %cst_49 = arith.constant dense<0.000000e+00> : vector<16xf32>
    %300 = vector.multi_reduction <add>, %299, %cst_49 [0] : vector<256x16xf32> to vector<16xf32>
    %301 = vector.shape_cast %300 : vector<16xf32> to vector<1x16xf32>
    %cst_50 = arith.constant 2.560000e+02 : f32
    %302 = vector.broadcast %cst_50 : f32 to vector<1x16xf32>
    %303 = arith.divf %301, %302 : vector<1x16xf32>
    %c0_51 = arith.constant 0 : index
    %c0_52 = arith.constant 0 : index
    %304 = vector.load %arg9[%c0_51, %c0_52] : memref<16x4xf32, #tpu.memory_space<vmem>>, vector<16x4xf32>
    %cst_53 = arith.constant dense<0.000000e+00> : vector<1x4xf32>
    %305 = tpu.matmul %303, %304, %cst_53 {dimension_numbers = #tpu.dot_dimension_numbers<[1], [0], [0], [1], [0, 0, 1, 1], [], []>} : vector<1x16xf32>, vector<16x4xf32>, vector<1x4xf32> -> vector<1x4xf32>
    %c0_54 = arith.constant 0 : index
    %c0_55 = arith.constant 0 : index
    %306 = vector.load %arg10[%c0_54, %c0_55] : memref<1x4xf32, #tpu.memory_space<vmem>>, vector<1x4xf32>
    %307 = arith.addf %305, %306 : vector<1x4xf32>
    %cst_56 = arith.constant 0.000000e+00 : f32
    %308 = vector.broadcast %cst_56 : f32 to vector<1x4xf32>
    %309 = arith.maximumf %307, %308 : vector<1x4xf32>
    %c0_57 = arith.constant 0 : index
    %c0_58 = arith.constant 0 : index
    %310 = vector.load %arg11[%c0_57, %c0_58] : memref<4x16xf32, #tpu.memory_space<vmem>>, vector<4x16xf32>
    %cst_59 = arith.constant dense<0.000000e+00> : vector<1x16xf32>
    %311 = tpu.matmul %309, %310, %cst_59 {dimension_numbers = #tpu.dot_dimension_numbers<[1], [0], [0], [1], [0, 0, 1, 1], [], []>} : vector<1x4xf32>, vector<4x16xf32>, vector<1x16xf32> -> vector<1x16xf32>
    %c0_60 = arith.constant 0 : index
    %c0_61 = arith.constant 0 : index
    %312 = vector.load %arg12[%c0_60, %c0_61] : memref<1x16xf32, #tpu.memory_space<vmem>>, vector<1x16xf32>
    %313 = arith.addf %311, %312 : vector<1x16xf32>
    %cst_62 = arith.constant 3.000000e+00 : f32
    %314 = vector.broadcast %cst_62 : f32 to vector<1x16xf32>
    %315 = arith.addf %313, %314 : vector<1x16xf32>
    %cst_63 = arith.constant 0.000000e+00 : f32
    %cst_64 = arith.constant 6.000000e+00 : f32
    %316 = vector.broadcast %cst_63 : f32 to vector<1x16xf32>
    %317 = arith.maximumf %316, %315 : vector<1x16xf32>
    %318 = vector.broadcast %cst_64 : f32 to vector<1x16xf32>
    %319 = arith.minimumf %318, %317 : vector<1x16xf32>
    %cst_65 = arith.constant 0.166666672 : f32
    %320 = vector.broadcast %cst_65 : f32 to vector<1x16xf32>
    %321 = arith.mulf %319, %320 : vector<1x16xf32>
    %322 = vector.broadcast %321 : vector<1x16xf32> to vector<256x16xf32>
    %323 = arith.mulf %299, %322 : vector<256x16xf32>
    %c0_66 = arith.constant 0 : index
    %c0_67 = arith.constant 0 : index
    %324 = vector.load %arg13[%c0_66, %c0_67] : memref<16x8xf32, #tpu.memory_space<vmem>>, vector<16x8xf32>
    %cst_68 = arith.constant dense<0.000000e+00> : vector<256x8xf32>
    %325 = tpu.matmul %323, %324, %cst_68 {dimension_numbers = #tpu.dot_dimension_numbers<[1], [0], [0], [1], [0, 0, 1, 1], [], []>} : vector<256x16xf32>, vector<16x8xf32>, vector<256x8xf32> -> vector<256x8xf32>
    %c0_69 = arith.constant 0 : index
    %c0_70 = arith.constant 0 : index
    %326 = vector.load %arg14[%c0_69, %c0_70] : memref<1x8xf32, #tpu.memory_space<vmem>>, vector<1x8xf32>
    %327 = vector.broadcast %326 : vector<1x8xf32> to vector<256x8xf32>
    %328 = arith.mulf %325, %327 : vector<256x8xf32>
    %c0_71 = arith.constant 0 : index
    %c0_72 = arith.constant 0 : index
    %329 = vector.load %arg15[%c0_71, %c0_72] : memref<1x8xf32, #tpu.memory_space<vmem>>, vector<1x8xf32>
    %330 = vector.broadcast %329 : vector<1x8xf32> to vector<256x8xf32>
    %331 = arith.addf %328, %330 : vector<256x8xf32>
    %332 = arith.addf %331, %2 : vector<256x8xf32>
    %333 = vector.shape_cast %332 : vector<256x8xf32> to vector<16x16x8xf32>
    %c0_73 = arith.constant 0 : index
    %c0_74 = arith.constant 0 : index
    %c0_75 = arith.constant 0 : index
    %c0_76 = arith.constant 0 : index
    %334 = vector.load %arg16[%c0_73, %c0_74, %c0_75, %c0_76] : memref<1x16x16x8xf32, #tpu.memory_space<vmem>>, vector<1x16x16x8xf32>
    %335 = vector.shape_cast %334 : vector<1x16x16x8xf32> to vector<16x16x8xf32>
    %336 = vector.shape_cast %333 : vector<16x16x8xf32> to vector<1x16x16x8xf32>
    tpu.vector_store %arg16[%c0_73, %c0_74, %c0_75, %c0_76], %336 {strides = array<i32>} : memref<1x16x16x8xf32, #tpu.memory_space<vmem>>, vector<1x16x16x8xf32>,
    return
  }
  func.func @transform_0(%arg0: i32) -> (i32, i32, i32, i32) {
    %c0_i32 = arith.constant 0 : i32
    %c0_i32_0 = arith.constant 0 : i32
    %c0_i32_1 = arith.constant 0 : i32
    %c0_i32_2 = arith.constant 0 : i32
    return %arg0, %c0_i32, %c0_i32_0, %c0_i32_1 : i32, i32, i32, i32
  }
  func.func @transform_1(%arg0: i32) -> (i32, i32) {
    %c0_i32 = arith.constant 0 : i32
    %c0_i32_0 = arith.constant 0 : i32
    %c0_i32_1 = arith.constant 0 : i32
    return %c0_i32, %c0_i32_0 : i32, i32
  }
  func.func @transform_2(%arg0: i32) -> (i32, i32) {
    %c0_i32 = arith.constant 0 : i32
    %c0_i32_0 = arith.constant 0 : i32
    %c0_i32_1 = arith.constant 0 : i32
    return %c0_i32, %c0_i32_0 : i32, i32
  }
  func.func @transform_3(%arg0: i32) -> (i32, i32) {
    %c0_i32 = arith.constant 0 : i32
    %c0_i32_0 = arith.constant 0 : i32
    %c0_i32_1 = arith.constant 0 : i32
    return %c0_i32, %c0_i32_0 : i32, i32
  }
  func.func @transform_4(%arg0: i32) -> (i32, i32, i32) {
    %c0_i32 = arith.constant 0 : i32
    %c0_i32_0 = arith.constant 0 : i32
    %c0_i32_1 = arith.constant 0 : i32
    %c0_i32_2 = arith.constant 0 : i32
    return %c0_i32, %c0_i32_0, %c0_i32_1 : i32, i32, i32
  }
  func.func @transform_5(%arg0: i32) -> (i32, i32, i32) {
    %c0_i32 = arith.constant 0 : i32
    %c0_i32_0 = arith.constant 0 : i32
    %c0_i32_1 = arith.constant 0 : i32
    %c0_i32_2 = arith.constant 0 : i32
    return %c0_i32, %c0_i32_0, %c0_i32_1 : i32, i32, i32
  }
  func.func @transform_6(%arg0: i32) -> (i32, i32) {
    %c0_i32 = arith.constant 0 : i32
    %c0_i32_0 = arith.constant 0 : i32
    %c0_i32_1 = arith.constant 0 : i32
    return %c0_i32, %c0_i32_0 : i32, i32
  }
  func.func @transform_7(%arg0: i32) -> (i32, i32) {
    %c0_i32 = arith.constant 0 : i32
    %c0_i32_0 = arith.constant 0 : i32
    %c0_i32_1 = arith.constant 0 : i32
    return %c0_i32, %c0_i32_0 : i32, i32
  }
  func.func @transform_8(%arg0: i32) -> (i32, i32) {
    %c0_i32 = arith.constant 0 : i32
    %c0_i32_0 = arith.constant 0 : i32
    %c0_i32_1 = arith.constant 0 : i32
    return %c0_i32, %c0_i32_0 : i32, i32
  }
  func.func @transform_9(%arg0: i32) -> (i32, i32) {
    %c0_i32 = arith.constant 0 : i32
    %c0_i32_0 = arith.constant 0 : i32
    %c0_i32_1 = arith.constant 0 : i32
    return %c0_i32, %c0_i32_0 : i32, i32
  }
  func.func @transform_10(%arg0: i32) -> (i32, i32) {
    %c0_i32 = arith.constant 0 : i32
    %c0_i32_0 = arith.constant 0 : i32
    %c0_i32_1 = arith.constant 0 : i32
    return %c0_i32, %c0_i32_0 : i32, i32
  }
  func.func @transform_11(%arg0: i32) -> (i32, i32) {
    %c0_i32 = arith.constant 0 : i32
    %c0_i32_0 = arith.constant 0 : i32
    %c0_i32_1 = arith.constant 0 : i32
    return %c0_i32, %c0_i32_0 : i32, i32
  }
  func.func @transform_12(%arg0: i32) -> (i32, i32) {
    %c0_i32 = arith.constant 0 : i32
    %c0_i32_0 = arith.constant 0 : i32
    %c0_i32_1 = arith.constant 0 : i32
    return %c0_i32, %c0_i32_0 : i32, i32
  }
  func.func @transform_13(%arg0: i32) -> (i32, i32) {
    %c0_i32 = arith.constant 0 : i32
    %c0_i32_0 = arith.constant 0 : i32
    %c0_i32_1 = arith.constant 0 : i32
    return %c0_i32, %c0_i32_0 : i32, i32
  }
  func.func @transform_14(%arg0: i32) -> (i32, i32) {
    %c0_i32 = arith.constant 0 : i32
    %c0_i32_0 = arith.constant 0 : i32
    %c0_i32_1 = arith.constant 0 : i32
    return %c0_i32, %c0_i32_0 : i32, i32
  }
  func.func @transform_15(%arg0: i32) -> (i32, i32, i32, i32) {
    %c0_i32 = arith.constant 0 : i32
    %c0_i32_0 = arith.constant 0 : i32
    %c0_i32_1 = arith.constant 0 : i32
    %c0_i32_2 = arith.constant 0 : i32
    return %arg0, %c0_i32, %c0_i32_0, %c0_i32_1 : i32, i32, i32, i32
  }
}

</mosaic_0001>

<llo_original>
// kernel: tpu_custom_call.1
$region0: #{tpu_custom_call.1}
  #allocation0 [shape = 'u32[]', space=smem, size = 0x4, offset = 0x4, fixed_abs, tag = 'smem constant byte address 0x4 - core index']
  #allocation1 [shape = 'u32[144,128]{1,0:T(1,128)}', space=vmem, size = 0x12000, scoped, tag = 'internal scratch']
  #allocation2 [shape = 'f32[32,32,16]{2,1,0:T(8,128)}', space=vmem, size = 0x80000, scoped, tag = 'scratch operand']
  #allocation3 [shape = 'f32[16,16,16]{2,1,0:T(8,128)}', space=vmem, size = 0x20000, scoped, tag = 'scratch operand']
  %s0 = inlined_call_operand.vmem [shape: f32[2,16,16,8], index: 0, kind: input, shape index: {}]
  %s1 = inlined_call_operand.vmem [shape: f32[8,16], index: 1, kind: input, shape index: {}]
  %s2 = inlined_call_operand.vmem [shape: f32[1,16], index: 2, kind: input, shape index: {}]
  %s3 = inlined_call_operand.vmem [shape: f32[1,16], index: 3, kind: input, shape index: {}]
  %s4 = inlined_call_operand.vmem [shape: f32[3,3,8], index: 4, kind: input, shape index: {}]
  %s5 = inlined_call_operand.vmem [shape: f32[5,5,8], index: 5, kind: input, shape index: {}]
  %s6 = inlined_call_operand.vmem [shape: f32[1,16], index: 6, kind: input, shape index: {}]
  %s7 = inlined_call_operand.vmem [shape: f32[1,16], index: 7, kind: input, shape index: {}]
  %s8 = inlined_call_operand.vmem [shape: f32[16,4], index: 8, kind: input, shape index: {}]
  %s9 = inlined_call_operand.vmem [shape: f32[1,4], index: 9, kind: input, shape index: {}]
  %s10 = inlined_call_operand.vmem [shape: f32[4,16], index: 10, kind: input, shape index: {}]
  %s11 = inlined_call_operand.vmem [shape: f32[1,16], index: 11, kind: input, shape index: {}]
  %s12 = inlined_call_operand.vmem [shape: f32[16,8], index: 12, kind: input, shape index: {}]
  %s13 = inlined_call_operand.vmem [shape: f32[1,8], index: 13, kind: input, shape index: {}]
  %s14 = inlined_call_operand.vmem [shape: f32[1,8], index: 14, kind: input, shape index: {}]
  %s15 = inlined_call_operand.vmem [shape: f32[2,16,16,8], index: 15, kind: output, shape index: {}]
  %s16 = sld [smem:[#allocation0]]
  $region93: #{tpu_custom_call.1} parent=0
    _
  %s18 = ssub.s32 1, %s16
  %s19 = scalar_select 0, %s18, %s16
  loop: start=0, step=1, limit=4
  $region2: #{tpu_custom_call.1} parent=0 // loop_pre_header
    _
  $region3: #{tpu_custom_call.1} parent=0 // loop_header
    %s21 = sphi 0, %s25
    %p22 = scmp.ge.s32.totalorder %s21, 4
    %s31 = sphi 0, %s33
    %s34 = sphi 0, %s31
    %s35 = sphi 0, %s34
    %s51 = sphi 0, %s35
    %s55 = sphi 0, %s55
    %s57 = sphi 0, %s55
    %s58 = sphi 0, %s57
    %s72 = sphi 0, %s58
    %s76 = sphi 0, %s76
    %s78 = sphi 0, %s76
    %s79 = sphi 0, %s78
    %s93 = sphi 0, %s79
    %s97 = sphi 0, %s97
    %s99 = sphi 0, %s97
    %s100 = sphi 0, %s99
    %s114 = sphi 0, %s100
    %s118 = sphi 0, %s118
    %s120 = sphi 0, %s118
    %s121 = sphi 0, %s120
    %s135 = sphi 0, %s121
    %s139 = sphi 0, %s139
    %s141 = sphi 0, %s139
    %s142 = sphi 0, %s141
    %s156 = sphi 0, %s142
    %s160 = sphi 0, %s160
    %s162 = sphi 0, %s160
    %s163 = sphi 0, %s162
    %s177 = sphi 0, %s163
    %s181 = sphi 0, %s181
    %s183 = sphi 0, %s181
    %s184 = sphi 0, %s183
    %s198 = sphi 0, %s184
    %s202 = sphi 0, %s202
    %s204 = sphi 0, %s202
    %s205 = sphi 0, %s204
    %s219 = sphi 0, %s205
    %s223 = sphi 0, %s223
    %s225 = sphi 0, %s223
    %s226 = sphi 0, %s225
    %s240 = sphi 0, %s226
    %s244 = sphi 0, %s244
    %s246 = sphi 0, %s244
    %s247 = sphi 0, %s246
    %s261 = sphi 0, %s247
    %s265 = sphi 0, %s265
    %s267 = sphi 0, %s265
    %s268 = sphi 0, %s267
    %s282 = sphi 0, %s268
    %s286 = sphi 0, %s286
    %s288 = sphi 0, %s286
    %s289 = sphi 0, %s288
    %s303 = sphi 0, %s289
    %s307 = sphi 0, %s307
    %s309 = sphi 0, %s307
    %s310 = sphi 0, %s309
    %s324 = sphi 0, %s310
    %s328 = sphi 0, %s328
    %s330 = sphi 0, %s328
    %s331 = sphi 0, %s330
    %s345 = sphi 0, %s331
    %s351 = sphi 0, %s353
    %s354 = sphi 0, %s351
    %s355 = sphi 0, %s354
    %s371 = sphi 0, %s355
  $region4: #{tpu_custom_call.1} parent=0 // loop_header_branch
    %24 = sbr.rel (%p22) target = $region8
  $region5: #{tpu_custom_call.1} parent=0 // loop_body
    %s26 = ssub.s32 %s21, 1
    %s27 = ssub.s32 %s21, 2
    %s28 = sadd.s32 %s21, 1
    %s29 = ssub.s32 %s21, %s28
    %p30 = scmp.eq.s32.totalorder %s29, 0
    %s32 = sadd.s32 %s31, 1
    %s33 = scalar_select %p30, %s31, %s32
    %p36 = pneg %p30
    %p37 = scmp.eq.s32.totalorder %s21, 1
    %p38 = por %p36, %p37
    %p39 = scmp.ne.s32.totalorder %s31, %s34
    %p40 = scmp.eq.s32.totalorder %s21, 0
    %p41 = por %p39, %p40
    %p42 = scmp.ne.s32.totalorder %s31, %s34
    %p43 = scmp.eq.s32.totalorder %s26, 1
    %p44 = por %p42, %p43
    %p45 = scmp.ne.s32.totalorder %s34, %s35
    %p46 = scmp.eq.s32.totalorder %s26, 0
    %p47 = por %p45, %p46
    %p48 = scmp.ne.s32.totalorder %s34, %s35
    %p49 = scmp.eq.s32.totalorder %s27, 1
    %p50 = por %p48, %p49
    %p52 = scmp.ne.s32.totalorder %s35, %s51
    %p53 = scmp.eq.s32.totalorder %s27, 0
    %p54 = por %p52, %p53
    %s56 = sadd.s32 %s55, 1
    %p59 = scmp.eq.s32.totalorder %s21, 1
    %p60 = scmp.ne.s32.totalorder %s55, %s57
    %p61 = scmp.eq.s32.totalorder %s21, 0
    %p62 = por %p60, %p61
    %p63 = scmp.ne.s32.totalorder %s55, %s57
    %p64 = scmp.eq.s32.totalorder %s26, 1
    %p65 = por %p63, %p64
    %p66 = scmp.ne.s32.totalorder %s57, %s58
    %p67 = scmp.eq.s32.totalorder %s26, 0
    %p68 = por %p66, %p67
    %p69 = scmp.ne.s32.totalorder %s57, %s58
    %p70 = scmp.eq.s32.totalorder %s27, 1
    %p71 = por %p69, %p70
    %p73 = scmp.ne.s32.totalorder %s58, %s72
    %p74 = scmp.eq.s32.totalorder %s27, 0
    %p75 = por %p73, %p74
    %s77 = sadd.s32 %s76, 1
    %p80 = scmp.eq.s32.totalorder %s21, 1
    %p81 = scmp.ne.s32.totalorder %s76, %s78
    %p82 = scmp.eq.s32.totalorder %s21, 0
    %p83 = por %p81, %p82
    %p84 = scmp.ne.s32.totalorder %s76, %s78
    %p85 = scmp.eq.s32.totalorder %s26, 1
    %p86 = por %p84, %p85
    %p87 = scmp.ne.s32.totalorder %s78, %s79
    %p88 = scmp.eq.s32.totalorder %s26, 0
    %p89 = por %p87, %p88
    %p90 = scmp.ne.s32.totalorder %s78, %s79
    %p91 = scmp.eq.s32.totalorder %s27, 1
    %p92 = por %p90, %p91
    %p94 = scmp.ne.s32.totalorder %s79, %s93
    %p95 = scmp.eq.s32.totalorder %s27, 0
    %p96 = por %p94, %p95
    %s98 = sadd.s32 %s97, 1
    %p101 = scmp.eq.s32.totalorder %s21, 1
    %p102 = scmp.ne.s32.totalorder %s97, %s99
    %p103 = scmp.eq.s32.totalorder %s21, 0
    %p104 = por %p102, %p103
    %p105 = scmp.ne.s32.totalorder %s97, %s99
    %p106 = scmp.eq.s32.totalorder %s26, 1
    %p107 = por %p105, %p106
    %p108 = scmp.ne.s32.totalorder %s99, %s100
    %p109 = scmp.eq.s32.totalorder %s26, 0
    %p110 = por %p108, %p109
    %p111 = scmp.ne.s32.totalorder %s99, %s100
    %p112 = scmp.eq.s32.totalorder %s27, 1
    %p113 = por %p111, %p112
    %p115 = scmp.ne.s32.totalorder %s100, %s114
    %p116 = scmp.eq.s32.totalorder %s27, 0
    %p117 = por %p115, %p116
    %s119 = sadd.s32 %s118, 1
    %p122 = scmp.eq.s32.totalorder %s21, 1
    %p123 = scmp.ne.s32.totalorder %s118, %s120
    %p124 = scmp.eq.s32.totalorder %s21, 0
    %p125 = por %p123, %p124
    %p126 = scmp.ne.s32.totalorder %s118, %s120
    %p127 = scmp.eq.s32.totalorder %s26, 1
    %p128 = por %p126, %p127
    %p129 = scmp.ne.s32.totalorder %s120, %s121
    %p130 = scmp.eq.s32.totalorder %s26, 0
    %p131 = por %p129, %p130
    %p132 = scmp.ne.s32.totalorder %s120, %s121
    %p133 = scmp.eq.s32.totalorder %s27, 1
    %p134 = por %p132, %p133
    %p136 = scmp.ne.s32.totalorder %s121, %s135
    %p137 = scmp.eq.s32.totalorder %s27, 0
    %p138 = por %p136, %p137
    %s140 = sadd.s32 %s139, 1
    %p143 = scmp.eq.s32.totalorder %s21, 1
    %p144 = scmp.ne.s32.totalorder %s139, %s141
    %p145 = scmp.eq.s32.totalorder %s21, 0
    %p146 = por %p144, %p145
    %p147 = scmp.ne.s32.totalorder %s139, %s141
    %p148 = scmp.eq.s32.totalorder %s26, 1
    %p149 = por %p147, %p148
    %p150 = scmp.ne.s32.totalorder %s141, %s142
    %p151 = scmp.eq.s32.totalorder %s26, 0
    %p152 = por %p150, %p151
    %p153 = scmp.ne.s32.totalorder %s141, %s142
    %p154 = scmp.eq.s32.totalorder %s27, 1
    %p155 = por %p153, %p154
    %p157 = scmp.ne.s32.totalorder %s142, %s156
    %p158 = scmp.eq.s32.totalorder %s27, 0
    %p159 = por %p157, %p158
    %s161 = sadd.s32 %s160, 1
    %p164 = scmp.eq.s32.totalorder %s21, 1
    %p165 = scmp.ne.s32.totalorder %s160, %s162
    %p166 = scmp.eq.s32.totalorder %s21, 0
    %p167 = por %p165, %p166
    %p168 = scmp.ne.s32.totalorder %s160, %s162
    %p169 = scmp.eq.s32.totalorder %s26, 1
    %p170 = por %p168, %p169
    %p171 = scmp.ne.s32.totalorder %s162, %s163
    %p172 = scmp.eq.s32.totalorder %s26, 0
    %p173 = por %p171, %p172
    %p174 = scmp.ne.s32.totalorder %s162, %s163
    %p175 = scmp.eq.s32.totalorder %s27, 1
    %p176 = por %p174, %p175
    %p178 = scmp.ne.s32.totalorder %s163, %s177
    %p179 = scmp.eq.s32.totalorder %s27, 0
    %p180 = por %p178, %p179
    %s182 = sadd.s32 %s181, 1
    %p185 = scmp.eq.s32.totalorder %s21, 1
    %p186 = scmp.ne.s32.totalorder %s181, %s183
    %p187 = scmp.eq.s32.totalorder %s21, 0
    %p188 = por %p186, %p187
    %p189 = scmp.ne.s32.totalorder %s181, %s183
    %p190 = scmp.eq.s32.totalorder %s26, 1
    %p191 = por %p189, %p190
    %p192 = scmp.ne.s32.totalorder %s183, %s184
    %p193 = scmp.eq.s32.totalorder %s26, 0
    %p194 = por %p192, %p193
    %p195 = scmp.ne.s32.totalorder %s183, %s184
    %p196 = scmp.eq.s32.totalorder %s27, 1
    %p197 = por %p195, %p196
    %p199 = scmp.ne.s32.totalorder %s184, %s198
    %p200 = scmp.eq.s32.totalorder %s27, 0
    %p201 = por %p199, %p200
    %s203 = sadd.s32 %s202, 1
    %p206 = scmp.eq.s32.totalorder %s21, 1
    %p207 = scmp.ne.s32.totalorder %s202, %s204
    %p208 = scmp.eq.s32.totalorder %s21, 0
    %p209 = por %p207, %p208
    %p210 = scmp.ne.s32.totalorder %s202, %s204
    %p211 = scmp.eq.s32.totalorder %s26, 1
    %p212 = por %p210, %p211
    %p213 = scmp.ne.s32.totalorder %s204, %s205
    %p214 = scmp.eq.s32.totalorder %s26, 0
    %p215 = por %p213, %p214
    %p216 = scmp.ne.s32.totalorder %s204, %s205
    %p217 = scmp.eq.s32.totalorder %s27, 1
    %p218 = por %p216, %p217
    %p220 = scmp.ne.s32.totalorder %s205, %s219
    %p221 = scmp.eq.s32.totalorder %s27, 0
    %p222 = por %p220, %p221
    %s224 = sadd.s32 %s223, 1
    %p227 = scmp.eq.s32.totalorder %s21, 1
    %p228 = scmp.ne.s32.totalorder %s223, %s225
    %p229 = scmp.eq.s32.totalorder %s21, 0
    %p230 = por %p228, %p229
    %p231 = scmp.ne.s32.totalorder %s223, %s225
    %p232 = scmp.eq.s32.totalorder %s26, 1
    %p233 = por %p231, %p232
    %p234 = scmp.ne.s32.totalorder %s225, %s226
    %p235 = scmp.eq.s32.totalorder %s26, 0
    %p236 = por %p234, %p235
    %p237 = scmp.ne.s32.totalorder %s225, %s226
    %p238 = scmp.eq.s32.totalorder %s27, 1
    %p239 = por %p237, %p238
    %p241 = scmp.ne.s32.totalorder %s226, %s240
    %p242 = scmp.eq.s32.totalorder %s27, 0
    %p243 = por %p241, %p242
    %s245 = sadd.s32 %s244, 1
    %p248 = scmp.eq.s32.totalorder %s21, 1
    %p249 = scmp.ne.s32.totalorder %s244, %s246
    %p250 = scmp.eq.s32.totalorder %s21, 0
    %p251 = por %p249, %p250
    %p252 = scmp.ne.s32.totalorder %s244, %s246
    %p253 = scmp.eq.s32.totalorder %s26, 1
    %p254 = por %p252, %p253
    %p255 = scmp.ne.s32.totalorder %s246, %s247
    %p256 = scmp.eq.s32.totalorder %s26, 0
    %p257 = por %p255, %p256
    %p258 = scmp.ne.s32.totalorder %s246, %s247
    %p259 = scmp.eq.s32.totalorder %s27, 1
    %p260 = por %p258, %p259
    %p262 = scmp.ne.s32.totalorder %s247, %s261
    %p263 = scmp.eq.s32.totalorder %s27, 0
    %p264 = por %p262, %p263
    %s266 = sadd.s32 %s265, 1
    %p269 = scmp.eq.s32.totalorder %s21, 1
    %p270 = scmp.ne.s32.totalorder %s265, %s267
    %p271 = scmp.eq.s32.totalorder %s21, 0
    %p272 = por %p270, %p271
    %p273 = scmp.ne.s32.totalorder %s265, %s267
    %p274 = scmp.eq.s32.totalorder %s26, 1
    %p275 = por %p273, %p274
    %p276 = scmp.ne.s32.totalorder %s267, %s268
    %p277 = scmp.eq.s32.totalorder %s26, 0
    %p278 = por %p276, %p277
    %p279 = scmp.ne.s32.totalorder %s267, %s268
    %p280 = scmp.eq.s32.totalorder %s27, 1
    %p281 = por %p279, %p280
    %p283 = scmp.ne.s32.totalorder %s268, %s282
    %p284 = scmp.eq.s32.totalorder %s27, 0
    %p285 = por %p283, %p284
    %s287 = sadd.s32 %s286, 1
    %p290 = scmp.eq.s32.totalorder %s21, 1
    %p291 = scmp.ne.s32.totalorder %s286, %s288
    %p292 = scmp.eq.s32.totalorder %s21, 0
    %p293 = por %p291, %p292
    %p294 = scmp.ne.s32.totalorder %s286, %s288
    %p295 = scmp.eq.s32.totalorder %s26, 1
    %p296 = por %p294, %p295
    %p297 = scmp.ne.s32.totalorder %s288, %s289
    %p298 = scmp.eq.s32.totalorder %s26, 0
    %p299 = por %p297, %p298
    %p300 = scmp.ne.s32.totalorder %s288, %s289
    %p301 = scmp.eq.s32.totalorder %s27, 1
    %p302 = por %p300, %p301
    %p304 = scmp.ne.s32.totalorder %s289, %s303
    %p305 = scmp.eq.s32.totalorder %s27, 0
    %p306 = por %p304, %p305
    %s308 = sadd.s32 %s307, 1
    %p311 = scmp.eq.s32.totalorder %s21, 1
    %p312 = scmp.ne.s32.totalorder %s307, %s309
    %p313 = scmp.eq.s32.totalorder %s21, 0
    %p314 = por %p312, %p313
    %p315 = scmp.ne.s32.totalorder %s307, %s309
    %p316 = scmp.eq.s32.totalorder %s26, 1
    %p317 = por %p315, %p316
    %p318 = scmp.ne.s32.totalorder %s309, %s310
    %p319 = scmp.eq.s32.totalorder %s26, 0
    %p320 = por %p318, %p319
    %p321 = scmp.ne.s32.totalorder %s309, %s310
    %p322 = scmp.eq.s32.totalorder %s27, 1
    %p323 = por %p321, %p322
    %p325 = scmp.ne.s32.totalorder %s310, %s324
    %p326 = scmp.eq.s32.totalorder %s27, 0
    %p327 = por %p325, %p326
    %s329 = sadd.s32 %s328, 1
    %p332 = scmp.eq.s32.totalorder %s21, 1
    %p333 = scmp.ne.s32.totalorder %s328, %s330
    %p334 = scmp.eq.s32.totalorder %s21, 0
    %p335 = por %p333, %p334
    %p336 = scmp.ne.s32.totalorder %s328, %s330
    %p337 = scmp.eq.s32.totalorder %s26, 1
    %p338 = por %p336, %p337
    %p339 = scmp.ne.s32.totalorder %s330, %s331
    %p340 = scmp.eq.s32.totalorder %s26, 0
    %p341 = por %p339, %p340
    %p342 = scmp.ne.s32.totalorder %s330, %s331
    %p343 = scmp.eq.s32.totalorder %s27, 1
    %p344 = por %p342, %p343
    %p346 = scmp.ne.s32.totalorder %s331, %s345
    %p347 = scmp.eq.s32.totalorder %s27, 0
    %p348 = por %p346, %p347
    %s349 = ssub.s32 %s21, %s28
    %p350 = scmp.eq.s32.totalorder %s349, 0
    %s352 = sadd.s32 %s351, 1
    %s353 = scalar_select %p350, %s351, %s352
    %p356 = pneg %p350
    %p357 = scmp.eq.s32.totalorder %s21, 1
    %p358 = por %p356, %p357
    %p359 = scmp.ne.s32.totalorder %s351, %s354
    %p360 = scmp.eq.s32.totalorder %s21, 0
    %p361 = por %p359, %p360
    %p362 = scmp.ne.s32.totalorder %s351, %s354
    %p363 = scmp.eq.s32.totalorder %s26, 1
    %p364 = por %p362, %p363
    %p365 = scmp.ne.s32.totalorder %s354, %s355
    %p366 = scmp.eq.s32.totalorder %s26, 0
    %p367 = por %p365, %p366
    %p368 = scmp.ne.s32.totalorder %s354, %s355
    %p369 = scmp.eq.s32.totalorder %s27, 1
    %p370 = por %p368, %p369
    %p372 = scmp.ne.s32.totalorder %s355, %s371
    %p373 = scmp.eq.s32.totalorder %s27, 0
    %p374 = por %p372, %p373
    %p375 = scmp.le.s32.totalorder 1, %s21
    %p376 = scmp.lt.s32.totalorder %s21, 3
    %p377 = pnand %p375, %p376
    %p378 = pneg %p377
    // Predicated region
    $region9: #{tpu_custom_call.1} parent=5 // pred_check
      _
    $region10: #{tpu_custom_call.1} parent=5 // pred_check_branch
      %380 = sbr.rel (%p377) target = $region12
    $region11: #{tpu_custom_call.1} parent=5 // pred_region
      %s381 = ssub.s32 %s21, 1
      // Predicated region
      $region13: #{tpu_custom_call.1} parent=11 // pred_check
        %p382 = pneg %p68
      $region14: #{tpu_custom_call.1} parent=11 // pred_check_branch
        %384 = sbr.rel (%p382) target = $region16
      $region15: #{tpu_custom_call.1} parent=11 // pred_region
        _
      $region16: #{tpu_custom_call.1} parent=11 // pred_fallthru
        _
      // Predicated region
      $region17: #{tpu_custom_call.1} parent=11 // pred_check
        %p385 = pneg %p89
      $region18: #{tpu_custom_call.1} parent=11 // pred_check_branch
        %387 = sbr.rel (%p385) target = $region20
      $region19: #{tpu_custom_call.1} parent=11 // pred_region
        _
      $region20: #{tpu_custom_call.1} parent=11 // pred_fallthru
        _
      // Predicated region
      $region21: #{tpu_custom_call.1} parent=11 // pred_check
        %p388 = pneg %p110
      $region22: #{tpu_custom_call.1} parent=11 // pred_check_branch
        %390 = sbr.rel (%p388) target = $region24
      $region23: #{tpu_custom_call.1} parent=11 // pred_region
        _
      $region24: #{tpu_custom_call.1} parent=11 // pred_fallthru
        _
      // Predicated region
      $region25: #{tpu_custom_call.1} parent=11 // pred_check
        %p391 = pneg %p131
      $region26: #{tpu_custom_call.1} parent=11 // pred_check_branch
        %393 = sbr.rel (%p391) target = $region28
      $region27: #{tpu_custom_call.1} parent=11 // pred_region
        _
      $region28: #{tpu_custom_call.1} parent=11 // pred_fallthru
        _
      // Predicated region
      $region29: #{tpu_custom_call.1} parent=11 // pred_check
        %p394 = pneg %p152
      $region30: #{tpu_custom_call.1} parent=11 // pred_check_branch
        %396 = sbr.rel (%p394) target = $region32
      $region31: #{tpu_custom_call.1} parent=11 // pred_region
        _
      $region32: #{tpu_custom_call.1} parent=11 // pred_fallthru
        _
      // Predicated region
      $region33: #{tpu_custom_call.1} parent=11 // pred_check
        %p397 = pneg %p173
      $region34: #{tpu_custom_call.1} parent=11 // pred_check_branch
        %399 = sbr.rel (%p397) target = $region36
      $region35: #{tpu_custom_call.1} parent=11 // pred_region
        _
      $region36: #{tpu_custom_call.1} parent=11 // pred_fallthru
        _
      // Predicated region
      $region37: #{tpu_custom_call.1} parent=11 // pred_check
        %p400 = pneg %p194
      $region38: #{tpu_custom_call.1} parent=11 // pred_check_branch
        %402 = sbr.rel (%p400) target = $region40
      $region39: #{tpu_custom_call.1} parent=11 // pred_region
        _
      $region40: #{tpu_custom_call.1} parent=11 // pred_fallthru
        _
      // Predicated region
      $region41: #{tpu_custom_call.1} parent=11 // pred_check
        %p403 = pneg %p215
      $region42: #{tpu_custom_call.1} parent=11 // pred_check_branch
        %405 = sbr.rel (%p403) target = $region44
      $region43: #{tpu_custom_call.1} parent=11 // pred_region
        _
      $region44: #{tpu_custom_call.1} parent=11 // pred_fallthru
        _
      // Predicated region
      $region45: #{tpu_custom_call.1} parent=11 // pred_check
        %p406 = pneg %p236
      $region46: #{tpu_custom_call.1} parent=11 // pred_check_branch
        %408 = sbr.rel (%p406) target = $region48
      $region47: #{tpu_custom_call.1} parent=11 // pred_region
        _
      $region48: #{tpu_custom_call.1} parent=11 // pred_fallthru
        _
      // Predicated region
      $region49: #{tpu_custom_call.1} parent=11 // pred_check
        %p409 = pneg %p257
      $region50: #{tpu_custom_call.1} parent=11 // pred_check_branch
        %411 = sbr.rel (%p409) target = $region52
      $region51: #{tpu_custom_call.1} parent=11 // pred_region
        _
      $region52: #{tpu_custom_call.1} parent=11 // pred_fallthru
        _
      // Predicated region
      $region53: #{tpu_custom_call.1} parent=11 // pred_check
        %p412 = pneg %p278
      $region54: #{tpu_custom_call.1} parent=11 // pred_check_branch
        %414 = sbr.rel (%p412) target = $region56
      $region55: #{tpu_custom_call.1} parent=11 // pred_region
        _
      $region56: #{tpu_custom_call.1} parent=11 // pred_fallthru
        _
      // Predicated region
      $region57: #{tpu_custom_call.1} parent=11 // pred_check
        %p415 = pneg %p299
      $region58: #{tpu_custom_call.1} parent=11 // pred_check_branch
        %417 = sbr.rel (%p415) target = $region60
      $region59: #{tpu_custom_call.1} parent=11 // pred_region
        _
      $region60: #{tpu_custom_call.1} parent=11 // pred_fallthru
        _
      // Predicated region
      $region61: #{tpu_custom_call.1} parent=11 // pred_check
        %p418 = pneg %p320
      $region62: #{tpu_custom_call.1} parent=11 // pred_check_branch
        %420 = sbr.rel (%p418) target = $region64
      $region63: #{tpu_custom_call.1} parent=11 // pred_region
        _
      $region64: #{tpu_custom_call.1} parent=11 // pred_fallthru
        _
      // Predicated region
      $region65: #{tpu_custom_call.1} parent=11 // pred_check
        %p421 = pneg %p341
      $region66: #{tpu_custom_call.1} parent=11 // pred_check_branch
        %423 = sbr.rel (%p421) target = $region68
      $region67: #{tpu_custom_call.1} parent=11 // pred_region
        _
      $region68: #{tpu_custom_call.1} parent=11 // pred_fallthru
        _
    $region12: #{tpu_custom_call.1} parent=5 // pred_fallthru
      _
    %p424 = scmp.lt.s32.totalorder %s21, 2
    // Predicated region
    $region69: #{tpu_custom_call.1} parent=5 // pred_check
      %p425 = pneg %p424
    $region70: #{tpu_custom_call.1} parent=5 // pred_check_branch
      %427 = sbr.rel (%p425) target = $region72
    $region71: #{tpu_custom_call.1} parent=5 // pred_region
      // Predicated region
      $region73: #{tpu_custom_call.1} parent=71 // pred_check
        %p428 = pneg %p41
      $region74: #{tpu_custom_call.1} parent=71 // pred_check_branch
        %430 = sbr.rel (%p428) target = $region76
      $region75: #{tpu_custom_call.1} parent=71 // pred_region
        %p431 = scmp.lt.s32.totalorder %s21, 1
        %s432 = scalar_select %p431, %s21, 1
        %s433 = smul.addr %s432, 32
        %s434 = smul.addr %s433, 8
        %s435 = scalar_lea.vmem %s0, %s434
      $region76: #{tpu_custom_call.1} parent=71 // pred_fallthru
        _
    $region72: #{tpu_custom_call.1} parent=5 // pred_fallthru
      _
    %p436 = scmp.le.s32.totalorder 1, %s21
    %p437 = scmp.lt.s32.totalorder %s21, 3
    %p438 = pnand %p436, %p437
    %p439 = pneg %p438
    // Predicated region
    $region77: #{tpu_custom_call.1} parent=5 // pred_check
      _
    $region78: #{tpu_custom_call.1} parent=5 // pred_check_branch
      %441 = sbr.rel (%p438) target = $region80
    $region79: #{tpu_custom_call.1} parent=5 // pred_region
      %s442 = ssub.s32 %s21, 1
      %p443 = scmp.lt.s32.totalorder %s26, 1
      %s444 = scalar_select %p443, %s26, 1
      %s445 = smul.addr %s444, 32
      %s446 = smul.addr %s445, 8
      %s447 = scalar_lea.vmem %s0, %s446
      %p448 = pneg %p47
      %p449 = pneg %p44
      %p450 = pneg %p68
      %p451 = pneg %p65
      %p452 = pneg %p89
      %p453 = pneg %p86
      %p454 = pneg %p110
      %p455 = pneg %p107
      %p456 = pneg %p131
      %p457 = pneg %p128
      %p458 = pneg %p152
      %p459 = pneg %p149
      %p460 = pneg %p173
      %p461 = pneg %p170
      %p462 = pneg %p194
      %p463 = pneg %p191
      %p464 = pneg %p215
      %p465 = pneg %p212
      %p466 = pneg %p236
      %p467 = pneg %p233
      %p468 = pneg %p257
      %p469 = pneg %p254
      %p470 = pneg %p278
      %p471 = pneg %p275
      %p472 = pneg %p299
      %p473 = pneg %p296
      %p474 = pneg %p320
      %p475 = pneg %p317
      %p476 = pneg %p341
      %p477 = pneg %p338
      %p478 = pneg %p367
      %p479 = pneg %p364
      %p480 = scmp.lt.s32.totalorder %s26, 1
      %s481 = scalar_select %p480, %s26, 1
      %s482 = smul.addr %s481, 32
      %s483 = smul.addr %s482, 8
      %s484 = scalar_lea.vmem %s15, %s483
      %p485 = scmp.lt.s32.totalorder %s26, 1
      %s486 = scalar_select %p485, %s26, 1
      %s487 = smul.addr %s486, 32
      %s488 = smul.addr %s487, 8
      %s489 = scalar_lea.vmem %s0, %s488
      %p490 = scmp.lt.s32.totalorder %s26, 1
      %s491 = scalar_select %p490, %s26, 1
      %s492 = smul.addr %s491, 32
      %s493 = smul.addr %s492, 8
      %s494 = scalar_lea.vmem %s15, %s493
      %v495 = vld [vmem:[%s489] sm:$0xff]
      %v496 = vld [vmem:[%s489 + $0x8] sm:$0xff]
      %v497 = vld [vmem:[%s489 + $0x10] sm:$0xff]
      %v498 = vld [vmem:[%s489 + $0x18] sm:$0xff]
      %v499 = vld [vmem:[%s489 + $0x20] sm:$0xff]
      %v500 = vld [vmem:[%s489 + $0x28] sm:$0xff]
      %v501 = vld [vmem:[%s489 + $0x30] sm:$0xff]
      %v502 = vld [vmem:[%s489 + $0x38] sm:$0xff]
      %v503 = vld [vmem:[%s489 + $0x40] sm:$0xff]
      %v504 = vld [vmem:[%s489 + $0x48] sm:$0xff]
      %v505 = vld [vmem:[%s489 + $0x50] sm:$0xff]
      %v506 = vld [vmem:[%s489 + $0x58] sm:$0xff]
      %v507 = vld [vmem:[%s489 + $0x60] sm:$0xff]
      %v508 = vld [vmem:[%s489 + $0x68] sm:$0xff]
      %v509 = vld [vmem:[%s489 + $0x70] sm:$0xff]
      %v510 = vld [vmem:[%s489 + $0x78] sm:$0xff]
      %v511 = vld [vmem:[%s489 + $0x80] sm:$0xff]
      %v512 = vld [vmem:[%s489 + $0x88] sm:$0xff]
      %v513 = vld [vmem:[%s489 + $0x90] sm:$0xff]
      %v514 = vld [vmem:[%s489 + $0x98] sm:$0xff]
      %v515 = vld [vmem:[%s489 + $0xa0] sm:$0xff]
      %v516 = vld [vmem:[%s489 + $0xa8] sm:$0xff]
      %v517 = vld [vmem:[%s489 + $0xb0] sm:$0xff]
      %v518 = vld [vmem:[%s489 + $0xb8] sm:$0xff]
      %v519 = vld [vmem:[%s489 + $0xc0] sm:$0xff]
      %v520 = vld [vmem:[%s489 + $0xc8] sm:$0xff]
      %v521 = vld [vmem:[%s489 + $0xd0] sm:$0xff]
      %v522 = vld [vmem:[%s489 + $0xd8] sm:$0xff]
      %v523 = vld [vmem:[%s489 + $0xe0] sm:$0xff]
      %v524 = vld [vmem:[%s489 + $0xe8] sm:$0xff]
      %v525 = vld [vmem:[%s489 + $0xf0] sm:$0xff]
      %v526 = vld [vmem:[%s489 + $0xf8] sm:$0xff]
      %v527 = vld [vmem:[%s1] sm:$0xff]
      %vm528 = vcmask 64512
      %v530 = vsel %vm528, %v495, 0
      %v533 = vsel %vm528, %v496, 0
      %v536 = vsel %vm528, %v497, 0
      %v539 = vsel %vm528, %v498, 0
      %v542 = vsel %vm528, %v499, 0
      %v545 = vsel %vm528, %v500, 0
      %v548 = vsel %vm528, %v501, 0
      %v551 = vsel %vm528, %v502, 0
      %v554 = vsel %vm528, %v503, 0
      %v557 = vsel %vm528, %v504, 0
      %v560 = vsel %vm528, %v505, 0
      %v563 = vsel %vm528, %v506, 0
      %v566 = vsel %vm528, %v507, 0
      %v569 = vsel %vm528, %v508, 0
      %v572 = vsel %vm528, %v509, 0
      %v575 = vsel %vm528, %v510, 0
      %v578 = vsel %vm528, %v511, 0
      %v581 = vsel %vm528, %v512, 0
      %v584 = vsel %vm528, %v513, 0
      %v587 = vsel %vm528, %v514, 0
      %v590 = vsel %vm528, %v515, 0
      %v593 = vsel %vm528, %v516, 0
      %v596 = vsel %vm528, %v517, 0
      %v599 = vsel %vm528, %v518, 0
      %v602 = vsel %vm528, %v519, 0
      %v605 = vsel %vm528, %v520, 0
      %v608 = vsel %vm528, %v521, 0
      %v611 = vsel %vm528, %v522, 0
      %v614 = vsel %vm528, %v523, 0
      %v617 = vsel %vm528, %v524, 0
      %v620 = vsel %vm528, %v525, 0
      %v623 = vsel %vm528, %v526, 0
      %625 = vmatprep.subr.mxu0 0.0
      %626 = vmatpush1.msra.mxu0 0.0
      %627 = vmatprep.subr.mxu0 0.0
      %628 = vmatpush1.msra.mxu0 0.0
      %629 = vmatprep.subr.mxu0 0.0
      %630 = vmatpush1.msra.mxu0 0.0
      %631 = vmatprep.subr.mxu0 0.0
      %632 = vmatpush1.msra.mxu0 0.0
      %633 = vmatprep.subr.mxu0 0.0
      %634 = vmatpush1.msra.mxu0 0.0
      %635 = vmatprep.subr.mxu0 0.0
      %636 = vmatpush1.msra.mxu0 0.0
      %637 = vmatprep.subr.mxu0 0.0
      %638 = vmatpush1.msra.mxu0 0.0
      %639 = vmatprep.subr.mxu0 0.0
      %640 = vmatpush1.msra.mxu0 0.0
      %641 = vmatprep.subr.mxu0 0.0
      %642 = vmatpush1.msra.mxu0 0.0
      %643 = vmatprep.subr.mxu0 0.0
      %644 = vmatpush1.msra.mxu0 0.0
      %645 = vmatprep.subr.mxu0 0.0
      %646 = vmatpush1.msra.mxu0 0.0
      %647 = vmatprep.subr.mxu0 0.0
      %648 = vmatpush1.msra.mxu0 0.0
      %649 = vmatprep.subr.mxu0 0.0
      %650 = vmatpush1.msra.mxu0 0.0
      %651 = vmatprep.subr.mxu0 0.0
      %652 = vmatpush1.msra.mxu0 0.0
      %653 = vmatprep.subr.mxu0 0.0
      %654 = vmatpush1.msra.mxu0 0.0
      %655 = vmatprep.subr.mxu0 0.0
      %656 = vmatpush1.msra.mxu0 %v527
      %657 = vmatprep.subr.mxu0 0.0
      %658 = vmatpush2.msra.mxu0 0.0
      %659 = vmatprep.subr.mxu0 0.0
      %660 = vmatpush2.msra.mxu0 0.0
      %661 = vmatprep.subr.mxu0 0.0
      %662 = vmatpush2.msra.mxu0 0.0
      %663 = vmatprep.subr.mxu0 0.0
      %664 = vmatpush2.msra.mxu0 0.0
      %665 = vmatprep.subr.mxu0 0.0
      %666 = vmatpush2.msra.mxu0 0.0
      %667 = vmatprep.subr.mxu0 0.0
      %668 = vmatpush2.msra.mxu0 0.0
      %669 = vmatprep.subr.mxu0 0.0
      %670 = vmatpush2.msra.mxu0 0.0
      %671 = vmatprep.subr.mxu0 0.0
      %672 = vmatpush2.msra.mxu0 0.0
      %673 = vmatprep.subr.mxu0 0.0
      %674 = vmatpush2.msra.mxu0 0.0
      %675 = vmatprep.subr.mxu0 0.0
      %676 = vmatpush2.msra.mxu0 0.0
      %677 = vmatprep.subr.mxu0 0.0
      %678 = vmatpush2.msra.mxu0 0.0
      %679 = vmatprep.subr.mxu0 0.0
      %680 = vmatpush2.msra.mxu0 0.0
      %681 = vmatprep.subr.mxu0 0.0
      %682 = vmatpush2.msra.mxu0 0.0
      %683 = vmatprep.subr.mxu0 0.0
      %684 = vmatpush2.msra.mxu0 0.0
      %685 = vmatprep.subr.mxu0 0.0
      %686 = vmatpush2.msra.mxu0 0.0
      %687 = vmatprep.subr.mxu0 0.0
      %688 = vmatpush2.msra.mxu0 0.0
      %689 = vmatprep.mubr.f32.mxu0 0.0
      %690 = vmatmul.mubr.f32.gmra.mxu0 %v530
      %v691 = vpop.f32.mrf.mxu0
      %v692 = vadd.f32 0.0, %v691
      %v693 = vpop.f32.mrf.mxu0
      %694 = vmatprep.mubr.f32.mxu0 0.0
      %695 = vmatmul.mubr.f32.gmra.mxu0 %v533
      %v696 = vpop.f32.mrf.mxu0
      %v697 = vadd.f32 0.0, %v696
      %v698 = vpop.f32.mrf.mxu0
      %699 = vmatprep.mubr.f32.mxu0 0.0
      %700 = vmatmul.mubr.f32.gmra.mxu0 %v536
      %v701 = vpop.f32.mrf.mxu0
      %v702 = vadd.f32 0.0, %v701
      %v703 = vpop.f32.mrf.mxu0
      %704 = vmatprep.mubr.f32.mxu0 0.0
      %705 = vmatmul.mubr.f32.gmra.mxu0 %v539
      %v706 = vpop.f32.mrf.mxu0
      %v707 = vadd.f32 0.0, %v706
      %v708 = vpop.f32.mrf.mxu0
      %709 = vmatprep.mubr.f32.mxu0 0.0
      %710 = vmatmul.mubr.f32.gmra.mxu0 %v542
      %v711 = vpop.f32.mrf.mxu0
      %v712 = vadd.f32 0.0, %v711
      %v713 = vpop.f32.mrf.mxu0
      %714 = vmatprep.mubr.f32.mxu0 0.0
      %715 = vmatmul.mubr.f32.gmra.mxu0 %v545
      %v716 = vpop.f32.mrf.mxu0
      %v717 = vadd.f32 0.0, %v716
      %v718 = vpop.f32.mrf.mxu0
      %719 = vmatprep.mubr.f32.mxu0 0.0
      %720 = vmatmul.mubr.f32.gmra.mxu0 %v548
      %v721 = vpop.f32.mrf.mxu0
      %v722 = vadd.f32 0.0, %v721
      %v723 = vpop.f32.mrf.mxu0
      %724 = vmatprep.mubr.f32.mxu0 0.0
      %725 = vmatmul.mubr.f32.gmra.mxu0 %v551
      %v726 = vpop.f32.mrf.mxu0
      %v727 = vadd.f32 0.0, %v726
      %v728 = vpop.f32.mrf.mxu0
      %729 = vmatprep.mubr.f32.mxu0 0.0
      %730 = vmatmul.mubr.f32.gmra.mxu0 %v554
      %v731 = vpop.f32.mrf.mxu0
      %v732 = vadd.f32 0.0, %v731
      %v733 = vpop.f32.mrf.mxu0
      %734 = vmatprep.mubr.f32.mxu0 0.0
      %735 = vmatmul.mubr.f32.gmra.mxu0 %v557
      %v736 = vpop.f32.mrf.mxu0
      %v737 = vadd.f32 0.0, %v736
      %v738 = vpop.f32.mrf.mxu0
      %739 = vmatprep.mubr.f32.mxu0 0.0
      %740 = vmatmul.mubr.f32.gmra.mxu0 %v560
      %v741 = vpop.f32.mrf.mxu0
      %v742 = vadd.f32 0.0, %v741
      %v743 = vpop.f32.mrf.mxu0
      %744 = vmatprep.mubr.f32.mxu0 0.0
      %745 = vmatmul.mubr.f32.gmra.mxu0 %v563
      %v746 = vpop.f32.mrf.mxu0
      %v747 = vadd.f32 0.0, %v746
      %v748 = vpop.f32.mrf.mxu0
      %749 = vmatprep.mubr.f32.mxu0 0.0
      %750 = vmatmul.mubr.f32.gmra.mxu0 %v566
      %v751 = vpop.f32.mrf.mxu0
      %v752 = vadd.f32 0.0, %v751
      %v753 = vpop.f32.mrf.mxu0
      %754 = vmatprep.mubr.f32.mxu0 0.0
      %755 = vmatmul.mubr.f32.gmra.mxu0 %v569
      %v756 = vpop.f32.mrf.mxu0
      %v757 = vadd.f32 0.0, %v756
      %v758 = vpop.f32.mrf.mxu0
      %759 = vmatprep.mubr.f32.mxu0 0.0
      %760 = vmatmul.mubr.f32.gmra.mxu0 %v572
      %v761 = vpop.f32.mrf.mxu0
      %v762 = vadd.f32 0.0, %v761
      %v763 = vpop.f32.mrf.mxu0
      %764 = vmatprep.mubr.f32.mxu0 0.0
      %765 = vmatmul.mubr.f32.gmra.mxu0 %v575
      %v766 = vpop.f32.mrf.mxu0
      %v767 = vadd.f32 0.0, %v766
      %v768 = vpop.f32.mrf.mxu0
      %769 = vmatprep.mubr.f32.mxu0 0.0
      %770 = vmatmul.mubr.f32.gmra.mxu0 %v578
      %v771 = vpop.f32.mrf.mxu0
      %v772 = vadd.f32 0.0, %v771
      %v773 = vpop.f32.mrf.mxu0
      %774 = vmatprep.mubr.f32.mxu0 0.0
      %775 = vmatmul.mubr.f32.gmra.mxu0 %v581
      %v776 = vpop.f32.mrf.mxu0
      %v777 = vadd.f32 0.0, %v776
      %v778 = vpop.f32.mrf.mxu0
      %779 = vmatprep.mubr.f32.mxu0 0.0
      %780 = vmatmul.mubr.f32.gmra.mxu0 %v584
      %v781 = vpop.f32.mrf.mxu0
      %v782 = vadd.f32 0.0, %v781
      %v783 = vpop.f32.mrf.mxu0
      %784 = vmatprep.mubr.f32.mxu0 0.0
      %785 = vmatmul.mubr.f32.gmra.mxu0 %v587
      %v786 = vpop.f32.mrf.mxu0
      %v787 = vadd.f32 0.0, %v786
      %v788 = vpop.f32.mrf.mxu0
      %789 = vmatprep.mubr.f32.mxu0 0.0
      %790 = vmatmul.mubr.f32.gmra.mxu0 %v590
      %v791 = vpop.f32.mrf.mxu0
      %v792 = vadd.f32 0.0, %v791
      %v793 = vpop.f32.mrf.mxu0
      %794 = vmatprep.mubr.f32.mxu0 0.0
      %795 = vmatmul.mubr.f32.gmra.mxu0 %v593
      %v796 = vpop.f32.mrf.mxu0
      %v797 = vadd.f32 0.0, %v796
      %v798 = vpop.f32.mrf.mxu0
      %799 = vmatprep.mubr.f32.mxu0 0.0
      %800 = vmatmul.mubr.f32.gmra.mxu0 %v596
      %v801 = vpop.f32.mrf.mxu0
      %v802 = vadd.f32 0.0, %v801
      %v803 = vpop.f32.mrf.mxu0
      %804 = vmatprep.mubr.f32.mxu0 0.0
      %805 = vmatmul.mubr.f32.gmra.mxu0 %v599
      %v806 = vpop.f32.mrf.mxu0
      %v807 = vadd.f32 0.0, %v806
      %v808 = vpop.f32.mrf.mxu0
      %809 = vmatprep.mubr.f32.mxu0 0.0
      %810 = vmatmul.mubr.f32.gmra.mxu0 %v602
      %v811 = vpop.f32.mrf.mxu0
      %v812 = vadd.f32 0.0, %v811
      %v813 = vpop.f32.mrf.mxu0
      %814 = vmatprep.mubr.f32.mxu0 0.0
      %815 = vmatmul.mubr.f32.gmra.mxu0 %v605
      %v816 = vpop.f32.mrf.mxu0
      %v817 = vadd.f32 0.0, %v816
      %v818 = vpop.f32.mrf.mxu0
      %819 = vmatprep.mubr.f32.mxu0 0.0
      %820 = vmatmul.mubr.f32.gmra.mxu0 %v608
      %v821 = vpop.f32.mrf.mxu0
      %v822 = vadd.f32 0.0, %v821
      %v823 = vpop.f32.mrf.mxu0
      %824 = vmatprep.mubr.f32.mxu0 0.0
      %825 = vmatmul.mubr.f32.gmra.mxu0 %v611
      %v826 = vpop.f32.mrf.mxu0
      %v827 = vadd.f32 0.0, %v826
      %v828 = vpop.f32.mrf.mxu0
      %829 = vmatprep.mubr.f32.mxu0 0.0
      %830 = vmatmul.mubr.f32.gmra.mxu0 %v614
      %v831 = vpop.f32.mrf.mxu0
      %v832 = vadd.f32 0.0, %v831
      %v833 = vpop.f32.mrf.mxu0
      %834 = vmatprep.mubr.f32.mxu0 0.0
      %835 = vmatmul.mubr.f32.gmra.mxu0 %v617
      %v836 = vpop.f32.mrf.mxu0
      %v837 = vadd.f32 0.0, %v836
      %v838 = vpop.f32.mrf.mxu0
      %839 = vmatprep.mubr.f32.mxu0 0.0
      %840 = vmatmul.mubr.f32.gmra.mxu0 %v620
      %v841 = vpop.f32.mrf.mxu0
      %v842 = vadd.f32 0.0, %v841
      %v843 = vpop.f32.mrf.mxu0
      %844 = vmatprep.mubr.f32.mxu0 0.0
      %845 = vmatmul.mubr.f32.gmra.mxu0 %v623
      %v846 = vpop.f32.mrf.mxu0
      %v847 = vadd.f32 0.0, %v846
      %v848 = vpop.f32.mrf.mxu0
      %849 = vdwg.mxu0
      %v850 = vld [vmem:[%s2] sm:$0x1]
      %v852 = vlaneseq
      %v853 = vshrl.u32 %v852, 7
      %v854 = vsub.s32 0, %v853
      %v855 = vrot.slane %v850, %v854
      %v857 = vmul.f32 %v692, %v855
      %v858 = vmul.f32 %v697, %v855
      %v859 = vmul.f32 %v702, %v855
      %v860 = vmul.f32 %v707, %v855
      %v861 = vmul.f32 %v712, %v855
      %v862 = vmul.f32 %v717, %v855
      %v863 = vmul.f32 %v722, %v855
      %v864 = vmul.f32 %v727, %v855
      %v865 = vmul.f32 %v732, %v855
      %v866 = vmul.f32 %v737, %v855
      %v867 = vmul.f32 %v742, %v855
      %v868 = vmul.f32 %v747, %v855
      %v869 = vmul.f32 %v752, %v855
      %v870 = vmul.f32 %v757, %v855
      %v871 = vmul.f32 %v762, %v855
      %v872 = vmul.f32 %v767, %v855
      %v873 = vmul.f32 %v772, %v855
      %v874 = vmul.f32 %v777, %v855
      %v875 = vmul.f32 %v782, %v855
      %v876 = vmul.f32 %v787, %v855
      %v877 = vmul.f32 %v792, %v855
      %v878 = vmul.f32 %v797, %v855
      %v879 = vmul.f32 %v802, %v855
      %v880 = vmul.f32 %v807, %v855
      %v881 = vmul.f32 %v812, %v855
      %v882 = vmul.f32 %v817, %v855
      %v883 = vmul.f32 %v822, %v855
      %v884 = vmul.f32 %v827, %v855
      %v885 = vmul.f32 %v832, %v855
      %v886 = vmul.f32 %v837, %v855
      %v887 = vmul.f32 %v842, %v855
      %v888 = vmul.f32 %v847, %v855
      %v889 = vld [vmem:[%s3] sm:$0x1]
      %v891 = vlaneseq
      %v892 = vshrl.u32 %v891, 7
      %v893 = vsub.s32 0, %v892
      %v894 = vrot.slane %v889, %v893
      %v896 = vadd.f32 %v857, %v894
      %v897 = vadd.f32 %v858, %v894
      %v898 = vadd.f32 %v859, %v894
      %v899 = vadd.f32 %v860, %v894
      %v900 = vadd.f32 %v861, %v894
      %v901 = vadd.f32 %v862, %v894
      %v902 = vadd.f32 %v863, %v894
      %v903 = vadd.f32 %v864, %v894
      %v904 = vadd.f32 %v865, %v894
      %v905 = vadd.f32 %v866, %v894
      %v906 = vadd.f32 %v867, %v894
      %v907 = vadd.f32 %v868, %v894
      %v908 = vadd.f32 %v869, %v894
      %v909 = vadd.f32 %v870, %v894
      %v910 = vadd.f32 %v871, %v894
      %v911 = vadd.f32 %v872, %v894
      %v912 = vadd.f32 %v873, %v894
      %v913 = vadd.f32 %v874, %v894
      %v914 = vadd.f32 %v875, %v894
      %v915 = vadd.f32 %v876, %v894
      %v916 = vadd.f32 %v877, %v894
      %v917 = vadd.f32 %v878, %v894
      %v918 = vadd.f32 %v879, %v894
      %v919 = vadd.f32 %v880, %v894
      %v920 = vadd.f32 %v881, %v894
      %v921 = vadd.f32 %v882, %v894
      %v922 = vadd.f32 %v883, %v894
      %v923 = vadd.f32 %v884, %v894
      %v924 = vadd.f32 %v885, %v894
      %v925 = vadd.f32 %v886, %v894
      %v926 = vadd.f32 %v887, %v894
      %v927 = vadd.f32 %v888, %v894
      %v928 = vmax.f32 %v896, 0.0
      %v929 = vmax.f32 %v897, 0.0
      %v930 = vmax.f32 %v898, 0.0
      %v931 = vmax.f32 %v899, 0.0
      %v932 = vmax.f32 %v900, 0.0
      %v933 = vmax.f32 %v901, 0.0
      %v934 = vmax.f32 %v902, 0.0
      %v935 = vmax.f32 %v903, 0.0
      %v936 = vmax.f32 %v904, 0.0
      %v937 = vmax.f32 %v905, 0.0
      %v938 = vmax.f32 %v906, 0.0
      %v939 = vmax.f32 %v907, 0.0
      %v940 = vmax.f32 %v908, 0.0
      %v941 = vmax.f32 %v909, 0.0
      %v942 = vmax.f32 %v910, 0.0
      %v943 = vmax.f32 %v911, 0.0
      %v944 = vmax.f32 %v912, 0.0
      %v945 = vmax.f32 %v913, 0.0
      %v946 = vmax.f32 %v914, 0.0
      %v947 = vmax.f32 %v915, 0.0
      %v948 = vmax.f32 %v916, 0.0
      %v949 = vmax.f32 %v917, 0.0
      %v950 = vmax.f32 %v918, 0.0
      %v951 = vmax.f32 %v919, 0.0
      %v952 = vmax.f32 %v920, 0.0
      %v953 = vmax.f32 %v921, 0.0
      %v954 = vmax.f32 %v922, 0.0
      %v955 = vmax.f32 %v923, 0.0
      %v956 = vmax.f32 %v924, 0.0
      %v957 = vmax.f32 %v925, 0.0
      %v958 = vmax.f32 %v926, 0.0
      %v959 = vmax.f32 %v927, 0.0
      %v960 = vmin.f32 %v928, 6.0
      %v961 = vmin.f32 %v929, 6.0
      %v962 = vmin.f32 %v930, 6.0
      %v963 = vmin.f32 %v931, 6.0
      %v964 = vmin.f32 %v932, 6.0
      %v965 = vmin.f32 %v933, 6.0
      %v966 = vmin.f32 %v934, 6.0
      %v967 = vmin.f32 %v935, 6.0
      %v968 = vmin.f32 %v936, 6.0
      %v969 = vmin.f32 %v937, 6.0
      %v970 = vmin.f32 %v938, 6.0
      %v971 = vmin.f32 %v939, 6.0
      %v972 = vmin.f32 %v940, 6.0
      %v973 = vmin.f32 %v941, 6.0
      %v974 = vmin.f32 %v942, 6.0
      %v975 = vmin.f32 %v943, 6.0
      %v976 = vmin.f32 %v944, 6.0
      %v977 = vmin.f32 %v945, 6.0
      %v978 = vmin.f32 %v946, 6.0
      %v979 = vmin.f32 %v947, 6.0
      %v980 = vmin.f32 %v948, 6.0
      %v981 = vmin.f32 %v949, 6.0
      %v982 = vmin.f32 %v950, 6.0
      %v983 = vmin.f32 %v951, 6.0
      %v984 = vmin.f32 %v952, 6.0
      %v985 = vmin.f32 %v953, 6.0
      %v986 = vmin.f32 %v954, 6.0
      %v987 = vmin.f32 %v955, 6.0
      %v988 = vmin.f32 %v956, 6.0
      %v989 = vmin.f32 %v957, 6.0
      %v990 = vmin.f32 %v958, 6.0
      %v991 = vmin.f32 %v959, 6.0
      %vm992 = vcmask 130048
      %993 = vst.msk [vmem:[#allocation2] sm:$0xff] %vm992, 0.0
      %994 = vst.msk [vmem:[#allocation2 + $0x8] sm:$0xff] %vm992, 0.0
      %995 = vst.msk [vmem:[#allocation2 + $0x10] sm:$0xff] %vm992, 0.0
      %996 = vst.msk [vmem:[#allocation2 + $0x18] sm:$0xff] %vm992, 0.0
      %997 = vst.msk [vmem:[#allocation2 + $0x20] sm:$0xff] %vm992, 0.0
      %998 = vst.msk [vmem:[#allocation2 + $0x28] sm:$0xff] %vm992, 0.0
      %999 = vst.msk [vmem:[#allocation2 + $0x30] sm:$0xff] %vm992, 0.0
      %1000 = vst.msk [vmem:[#allocation2 + $0x38] sm:$0xff] %vm992, 0.0
      %1001 = vst.msk [vmem:[#allocation2 + $0x40] sm:$0xff] %vm992, 0.0
      %1002 = vst.msk [vmem:[#allocation2 + $0x48] sm:$0xff] %vm992, 0.0
      %1003 = vst.msk [vmem:[#allocation2 + $0x50] sm:$0xff] %vm992, 0.0
      %1004 = vst.msk [vmem:[#allocation2 + $0x58] sm:$0xff] %vm992, 0.0
      %1005 = vst.msk [vmem:[#allocation2 + $0x60] sm:$0xff] %vm992, 0.0
      %1006 = vst.msk [vmem:[#allocation2 + $0x68] sm:$0xff] %vm992, 0.0
      %1007 = vst.msk [vmem:[#allocation2 + $0x70] sm:$0xff] %vm992, 0.0
      %1008 = vst.msk [vmem:[#allocation2 + $0x78] sm:$0xff] %vm992, 0.0
      %1009 = vst.msk [vmem:[#allocation2 + $0x80] sm:$0xff] %vm992, 0.0
      %1010 = vst.msk [vmem:[#allocation2 + $0x88] sm:$0xff] %vm992, 0.0
      %1011 = vst.msk [vmem:[#allocation2 + $0x90] sm:$0xff] %vm992, 0.0
      %1012 = vst.msk [vmem:[#allocation2 + $0x98] sm:$0xff] %vm992, 0.0
      %1013 = vst.msk [vmem:[#allocation2 + $0xa0] sm:$0xff] %vm992, 0.0
      %1014 = vst.msk [vmem:[#allocation2 + $0xa8] sm:$0xff] %vm992, 0.0
      %1015 = vst.msk [vmem:[#allocation2 + $0xb0] sm:$0xff] %vm992, 0.0
      %1016 = vst.msk [vmem:[#allocation2 + $0xb8] sm:$0xff] %vm992, 0.0
      %1017 = vst.msk [vmem:[#allocation2 + $0xc0] sm:$0xff] %vm992, 0.0
      %1018 = vst.msk [vmem:[#allocation2 + $0xc8] sm:$0xff] %vm992, 0.0
      %1019 = vst.msk [vmem:[#allocation2 + $0xd0] sm:$0xff] %vm992, 0.0
      %1020 = vst.msk [vmem:[#allocation2 + $0xd8] sm:$0xff] %vm992, 0.0
      %1021 = vst.msk [vmem:[#allocation2 + $0xe0] sm:$0xff] %vm992, 0.0
      %1022 = vst.msk [vmem:[#allocation2 + $0xe8] sm:$0xff] %vm992, 0.0
      %1023 = vst.msk [vmem:[#allocation2 + $0xf0] sm:$0xff] %vm992, 0.0
      %1024 = vst.msk [vmem:[#allocation2 + $0xf8] sm:$0xff] %vm992, 0.0
      %1025 = vst.msk [vmem:[#allocation2 + $0x100] sm:$0xff] %vm992, 0.0
      %1026 = vst.msk [vmem:[#allocation2 + $0x108] sm:$0xff] %vm992, 0.0
      %1027 = vst.msk [vmem:[#allocation2 + $0x110] sm:$0xff] %vm992, 0.0
      %1028 = vst.msk [vmem:[#allocation2 + $0x118] sm:$0xff] %vm992, 0.0
      %1029 = vst.msk [vmem:[#allocation2 + $0x120] sm:$0xff] %vm992, 0.0
      %1030 = vst.msk [vmem:[#allocation2 + $0x128] sm:$0xff] %vm992, 0.0
      %1031 = vst.msk [vmem:[#allocation2 + $0x130] sm:$0xff] %vm992, 0.0
      %1032 = vst.msk [vmem:[#allocation2 + $0x138] sm:$0xff] %vm992, 0.0
      %1033 = vst.msk [vmem:[#allocation2 + $0x140] sm:$0xff] %vm992, 0.0
      %1034 = vst.msk [vmem:[#allocation2 + $0x148] sm:$0xff] %vm992, 0.0
      %1035 = vst.msk [vmem:[#allocation2 + $0x150] sm:$0xff] %vm992, 0.0
      %1036 = vst.msk [vmem:[#allocation2 + $0x158] sm:$0xff] %vm992, 0.0
      %1037 = vst.msk [vmem:[#allocation2 + $0x160] sm:$0xff] %vm992, 0.0
      %1038 = vst.msk [vmem:[#allocation2 + $0x168] sm:$0xff] %vm992, 0.0
      %1039 = vst.msk [vmem:[#allocation2 + $0x170] sm:$0xff] %vm992, 0.0
      %1040 = vst.msk [vmem:[#allocation2 + $0x178] sm:$0xff] %vm992, 0.0
      %1041 = vst.msk [vmem:[#allocation2 + $0x180] sm:$0xff] %vm992, 0.0
      %1042 = vst.msk [vmem:[#allocation2 + $0x188] sm:$0xff] %vm992, 0.0
      %1043 = vst.msk [vmem:[#allocation2 + $0x190] sm:$0xff] %vm992, 0.0
      %1044 = vst.msk [vmem:[#allocation2 + $0x198] sm:$0xff] %vm992, 0.0
      %1045 = vst.msk [vmem:[#allocation2 + $0x1a0] sm:$0xff] %vm992, 0.0
      %1046 = vst.msk [vmem:[#allocation2 + $0x1a8] sm:$0xff] %vm992, 0.0
      %1047 = vst.msk [vmem:[#allocation2 + $0x1b0] sm:$0xff] %vm992, 0.0
      %1048 = vst.msk [vmem:[#allocation2 + $0x1b8] sm:$0xff] %vm992, 0.0
      %1049 = vst.msk [vmem:[#allocation2 + $0x1c0] sm:$0xff] %vm992, 0.0
      %1050 = vst.msk [vmem:[#allocation2 + $0x1c8] sm:$0xff] %vm992, 0.0
      %1051 = vst.msk [vmem:[#allocation2 + $0x1d0] sm:$0xff] %vm992, 0.0
      %1052 = vst.msk [vmem:[#allocation2 + $0x1d8] sm:$0xff] %vm992, 0.0
      %1053 = vst.msk [vmem:[#allocation2 + $0x1e0] sm:$0xff] %vm992, 0.0
      %1054 = vst.msk [vmem:[#allocation2 + $0x1e8] sm:$0xff] %vm992, 0.0
      %1055 = vst.msk [vmem:[#allocation2 + $0x1f0] sm:$0xff] %vm992, 0.0
      %1056 = vst.msk [vmem:[#allocation2 + $0x1f8] sm:$0xff] %vm992, 0.0
      %1057 = vst.msk [vmem:[#allocation2 + $0x200] sm:$0xff] %vm992, 0.0
      %1058 = vst.msk [vmem:[#allocation2 + $0x208] sm:$0xff] %vm992, 0.0
      %1059 = vst.msk [vmem:[#allocation2 + $0x210] sm:$0xff] %vm992, 0.0
      %1060 = vst.msk [vmem:[#allocation2 + $0x218] sm:$0xff] %vm992, 0.0
      %1061 = vst.msk [vmem:[#allocation2 + $0x220] sm:$0xff] %vm992, 0.0
      %1062 = vst.msk [vmem:[#allocation2 + $0x228] sm:$0xff] %vm992, 0.0
      %1063 = vst.msk [vmem:[#allocation2 + $0x230] sm:$0xff] %vm992, 0.0
      %1064 = vst.msk [vmem:[#allocation2 + $0x238] sm:$0xff] %vm992, 0.0
      %1065 = vst.msk [vmem:[#allocation2 + $0x240] sm:$0xff] %vm992, 0.0
      %1066 = vst.msk [vmem:[#allocation2 + $0x248] sm:$0xff] %vm992, 0.0
      %1067 = vst.msk [vmem:[#allocation2 + $0x250] sm:$0xff] %vm992, 0.0
      %1068 = vst.msk [vmem:[#allocation2 + $0x258] sm:$0xff] %vm992, 0.0
      %1069 = vst.msk [vmem:[#allocation2 + $0x260] sm:$0xff] %vm992, 0.0
      %1070 = vst.msk [vmem:[#allocation2 + $0x268] sm:$0xff] %vm992, 0.0
      %1071 = vst.msk [vmem:[#allocation2 + $0x270] sm:$0xff] %vm992, 0.0
      %1072 = vst.msk [vmem:[#allocation2 + $0x278] sm:$0xff] %vm992, 0.0
      %1073 = vst.msk [vmem:[#allocation2 + $0x280] sm:$0xff] %vm992, 0.0
      %1074 = vst.msk [vmem:[#allocation2 + $0x288] sm:$0xff] %vm992, 0.0
      %1075 = vst.msk [vmem:[#allocation2 + $0x290] sm:$0xff] %vm992, 0.0
      %1076 = vst.msk [vmem:[#allocation2 + $0x298] sm:$0xff] %vm992, 0.0
      %1077 = vst.msk [vmem:[#allocation2 + $0x2a0] sm:$0xff] %vm992, 0.0
      %1078 = vst.msk [vmem:[#allocation2 + $0x2a8] sm:$0xff] %vm992, 0.0
      %1079 = vst.msk [vmem:[#allocation2 + $0x2b0] sm:$0xff] %vm992, 0.0
      %1080 = vst.msk [vmem:[#allocation2 + $0x2b8] sm:$0xff] %vm992, 0.0
      %1081 = vst.msk [vmem:[#allocation2 + $0x2c0] sm:$0xff] %vm992, 0.0
      %1082 = vst.msk [vmem:[#allocation2 + $0x2c8] sm:$0xff] %vm992, 0.0
      %1083 = vst.msk [vmem:[#allocation2 + $0x2d0] sm:$0xff] %vm992, 0.0
      %1084 = vst.msk [vmem:[#allocation2 + $0x2d8] sm:$0xff] %vm992, 0.0
      %1085 = vst.msk [vmem:[#allocation2 + $0x2e0] sm:$0xff] %vm992, 0.0
      %1086 = vst.msk [vmem:[#allocation2 + $0x2e8] sm:$0xff] %vm992, 0.0
      %1087 = vst.msk [vmem:[#allocation2 + $0x2f0] sm:$0xff] %vm992, 0.0
      %1088 = vst.msk [vmem:[#allocation2 + $0x2f8] sm:$0xff] %vm992, 0.0
      %1089 = vst.msk [vmem:[#allocation2 + $0x300] sm:$0xff] %vm992, 0.0
      %1090 = vst.msk [vmem:[#allocation2 + $0x308] sm:$0xff] %vm992, 0.0
      %1091 = vst.msk [vmem:[#allocation2 + $0x310] sm:$0xff] %vm992, 0.0
      %1092 = vst.msk [vmem:[#allocation2 + $0x318] sm:$0xff] %vm992, 0.0
      %1093 = vst.msk [vmem:[#allocation2 + $0x320] sm:$0xff] %vm992, 0.0
      %1094 = vst.msk [vmem:[#allocation2 + $0x328] sm:$0xff] %vm992, 0.0
      %1095 = vst.msk [vmem:[#allocation2 + $0x330] sm:$0xff] %vm992, 0.0
      %1096 = vst.msk [vmem:[#allocation2 + $0x338] sm:$0xff] %vm992, 0.0
      %1097 = vst.msk [vmem:[#allocation2 + $0x340] sm:$0xff] %vm992, 0.0
      %1098 = vst.msk [vmem:[#allocation2 + $0x348] sm:$0xff] %vm992, 0.0
      %1099 = vst.msk [vmem:[#allocation2 + $0x350] sm:$0xff] %vm992, 0.0
      %1100 = vst.msk [vmem:[#allocation2 + $0x358] sm:$0xff] %vm992, 0.0
      %1101 = vst.msk [vmem:[#allocation2 + $0x360] sm:$0xff] %vm992, 0.0
      %1102 = vst.msk [vmem:[#allocation2 + $0x368] sm:$0xff] %vm992, 0.0
      %1103 = vst.msk [vmem:[#allocation2 + $0x370] sm:$0xff] %vm992, 0.0
      %1104 = vst.msk [vmem:[#allocation2 + $0x378] sm:$0xff] %vm992, 0.0
      %1105 = vst.msk [vmem:[#allocation2 + $0x380] sm:$0xff] %vm992, 0.0
      %1106 = vst.msk [vmem:[#allocation2 + $0x388] sm:$0xff] %vm992, 0.0
      %1107 = vst.msk [vmem:[#allocation2 + $0x390] sm:$0xff] %vm992, 0.0
      %1108 = vst.msk [vmem:[#allocation2 + $0x398] sm:$0xff] %vm992, 0.0
      %1109 = vst.msk [vmem:[#allocation2 + $0x3a0] sm:$0xff] %vm992, 0.0
      %1110 = vst.msk [vmem:[#allocation2 + $0x3a8] sm:$0xff] %vm992, 0.0
      %1111 = vst.msk [vmem:[#allocation2 + $0x3b0] sm:$0xff] %vm992, 0.0
      %1112 = vst.msk [vmem:[#allocation2 + $0x3b8] sm:$0xff] %vm992, 0.0
      %1113 = vst.msk [vmem:[#allocation2 + $0x3c0] sm:$0xff] %vm992, 0.0
      %1114 = vst.msk [vmem:[#allocation2 + $0x3c8] sm:$0xff] %vm992, 0.0
      %1115 = vst.msk [vmem:[#allocation2 + $0x3d0] sm:$0xff] %vm992, 0.0
      %1116 = vst.msk [vmem:[#allocation2 + $0x3d8] sm:$0xff] %vm992, 0.0
      %1117 = vst.msk [vmem:[#allocation2 + $0x3e0] sm:$0xff] %vm992, 0.0
      %1118 = vst.msk [vmem:[#allocation2 + $0x3e8] sm:$0xff] %vm992, 0.0
      %1119 = vst.msk [vmem:[#allocation2 + $0x3f0] sm:$0xff] %vm992, 0.0
      %1120 = vst.msk [vmem:[#allocation2 + $0x3f8] sm:$0xff] %vm992, 0.0
      %s1121 = scalar_lea.vmem [#allocation2], 256
      %1122 = vst.msk [vmem:[%s1121 + $0x8] sm:$0xff] %vm992, %v960
      %1123 = vst.msk [vmem:[%s1121 + $0x10] sm:$0xff] %vm992, %v961
      %1124 = vst.msk [vmem:[%s1121 + $0x28] sm:$0xff] %vm992, %v962
      %1125 = vst.msk [vmem:[%s1121 + $0x30] sm:$0xff] %vm992, %v963
      %1126 = vst.msk [vmem:[%s1121 + $0x48] sm:$0xff] %vm992, %v964
      %1127 = vst.msk [vmem:[%s1121 + $0x50] sm:$0xff] %vm992, %v965
      %1128 = vst.msk [vmem:[%s1121 + $0x68] sm:$0xff] %vm992, %v966
      %1129 = vst.msk [vmem:[%s1121 + $0x70] sm:$0xff] %vm992, %v967
      %1130 = vst.msk [vmem:[%s1121 + $0x88] sm:$0xff] %vm992, %v968
      %1131 = vst.msk [vmem:[%s1121 + $0x90] sm:$0xff] %vm992, %v969
      %1132 = vst.msk [vmem:[%s1121 + $0xa8] sm:$0xff] %vm992, %v970
      %1133 = vst.msk [vmem:[%s1121 + $0xb0] sm:$0xff] %vm992, %v971
      %1134 = vst.msk [vmem:[%s1121 + $0xc8] sm:$0xff] %vm992, %v972
      %1135 = vst.msk [vmem:[%s1121 + $0xd0] sm:$0xff] %vm992, %v973
      %1136 = vst.msk [vmem:[%s1121 + $0xe8] sm:$0xff] %vm992, %v974
      %1137 = vst.msk [vmem:[%s1121 + $0xf0] sm:$0xff] %vm992, %v975
      %1138 = vst.msk [vmem:[%s1121 + $0x108] sm:$0xff] %vm992, %v976
      %1139 = vst.msk [vmem:[%s1121 + $0x110] sm:$0xff] %vm992, %v977
      %1140 = vst.msk [vmem:[%s1121 + $0x128] sm:$0xff] %vm992, %v978
      %1141 = vst.msk [vmem:[%s1121 + $0x130] sm:$0xff] %vm992, %v979
      %1142 = vst.msk [vmem:[%s1121 + $0x148] sm:$0xff] %vm992, %v980
      %1143 = vst.msk [vmem:[%s1121 + $0x150] sm:$0xff] %vm992, %v981
      %1144 = vst.msk [vmem:[%s1121 + $0x168] sm:$0xff] %vm992, %v982
      %1145 = vst.msk [vmem:[%s1121 + $0x170] sm:$0xff] %vm992, %v983
      %1146 = vst.msk [vmem:[%s1121 + $0x188] sm:$0xff] %vm992, %v984
      %1147 = vst.msk [vmem:[%s1121 + $0x190] sm:$0xff] %vm992, %v985
      %1148 = vst.msk [vmem:[%s1121 + $0x1a8] sm:$0xff] %vm992, %v986
      %1149 = vst.msk [vmem:[%s1121 + $0x1b0] sm:$0xff] %vm992, %v987
      %1150 = vst.msk [vmem:[%s1121 + $0x1c8] sm:$0xff] %vm992, %v988
      %1151 = vst.msk [vmem:[%s1121 + $0x1d0] sm:$0xff] %vm992, %v989
      %1152 = vst.msk [vmem:[%s1121 + $0x1e8] sm:$0xff] %vm992, %v990
      %1153 = vst.msk [vmem:[%s1121 + $0x1f0] sm:$0xff] %vm992, %v991
      %v1154 = vld [vmem:[#allocation2 + $0xc0] sm:$0xff]
      %v1155 = vld [vmem:[#allocation2 + $0xc8] sm:$0xff]
      %v1156 = vld [vmem:[#allocation2 + $0xd0] sm:$0xff]
      %v1157 = vld [vmem:[#allocation2 + $0xd8] sm:$0xff]
      %v1158 = vld [vmem:[#allocation2 + $0xe0] sm:$0xff]
      %v1159 = vld [vmem:[#allocation2 + $0xe8] sm:$0xff]
      %v1160 = vld [vmem:[#allocation2 + $0xf0] sm:$0xff]
      %v1161 = vld [vmem:[#allocation2 + $0xf8] sm:$0xff]
      %v1162 = vld [vmem:[#allocation2 + $0x100] sm:$0xff]
      %v1163 = vld [vmem:[#allocation2 + $0x108] sm:$0xff]
      %v1164 = vld [vmem:[#allocation2 + $0x110] sm:$0xff]
      %v1165 = vld [vmem:[#allocation2 + $0x118] sm:$0xff]
      %v1166 = vld [vmem:[#allocation2 + $0x120] sm:$0xff]
      %v1167 = vld [vmem:[#allocation2 + $0x128] sm:$0xff]
      %v1168 = vld [vmem:[#allocation2 + $0x130] sm:$0xff]
      %v1169 = vld [vmem:[#allocation2 + $0x138] sm:$0xff]
      %v1170 = vld [vmem:[#allocation2 + $0x140] sm:$0xff]
      %v1171 = vld [vmem:[#allocation2 + $0x148] sm:$0xff]
      %v1172 = vld [vmem:[#allocation2 + $0x150] sm:$0xff]
      %v1173 = vld [vmem:[#allocation2 + $0x158] sm:$0xff]
      %v1174 = vld [vmem:[#allocation2 + $0x160] sm:$0xff]
      %v1175 = vld [vmem:[#allocation2 + $0x168] sm:$0xff]
      %v1176 = vld [vmem:[#allocation2 + $0x170] sm:$0xff]
      %v1177 = vld [vmem:[#allocation2 + $0x178] sm:$0xff]
      %v1178 = vld [vmem:[#allocation2 + $0x180] sm:$0xff]
      %v1179 = vld [vmem:[#allocation2 + $0x188] sm:$0xff]
      %v1180 = vld [vmem:[#allocation2 + $0x190] sm:$0xff]
      %v1181 = vld [vmem:[#allocation2 + $0x198] sm:$0xff]
      %v1182 = vld [vmem:[#allocation2 + $0x1a0] sm:$0xff]
      %v1183 = vld [vmem:[#allocation2 + $0x1a8] sm:$0xff]
      %v1184 = vld [vmem:[#allocation2 + $0x1b0] sm:$0xff]
      %v1185 = vld [vmem:[#allocation2 + $0x1b8] sm:$0xff]
      %v1186 = vld [vmem:[#allocation2 + $0x1c0] sm:$0xff]
      %v1187 = vld [vmem:[#allocation2 + $0x1c8] sm:$0xff]
      %v1188 = vld [vmem:[#allocation2 + $0x1d0] sm:$0xff]
      %v1189 = vld [vmem:[#allocation2 + $0x1d8] sm:$0xff]
      %v1190 = vld [vmem:[#allocation2 + $0x1e0] sm:$0xff]
      %v1191 = vld [vmem:[#allocation2 + $0x1e8] sm:$0xff]
      %v1192 = vld [vmem:[#allocation2 + $0x1f0] sm:$0xff]
      %v1193 = vld [vmem:[#allocation2 + $0x1f8] sm:$0xff]
      %v1194 = vld [vmem:[#allocation2 + $0x200] sm:$0xff]
      %v1195 = vld [vmem:[#allocation2 + $0x208] sm:$0xff]
      %v1196 = vld [vmem:[#allocation2 + $0x210] sm:$0xff]
      %v1197 = vld [vmem:[#allocation2 + $0x218] sm:$0xff]
      %v1198 = vld [vmem:[#allocation2 + $0x220] sm:$0xff]
      %v1199 = vld [vmem:[#allocation2 + $0x228] sm:$0xff]
      %v1200 = vld [vmem:[#allocation2 + $0x230] sm:$0xff]
      %v1201 = vld [vmem:[#allocation2 + $0x238] sm:$0xff]
      %v1202 = vld [vmem:[#allocation2 + $0x240] sm:$0xff]
      %v1203 = vld [vmem:[#allocation2 + $0x248] sm:$0xff]
      %v1204 = vld [vmem:[#allocation2 + $0x250] sm:$0xff]
      %v1205 = vld [vmem:[#allocation2 + $0x258] sm:$0xff]
      %v1206 = vld [vmem:[#allocation2 + $0x260] sm:$0xff]
      %v1207 = vld [vmem:[#allocation2 + $0x268] sm:$0xff]
      %v1208 = vld [vmem:[#allocation2 + $0x270] sm:$0xff]
      %v1209 = vld [vmem:[#allocation2 + $0x278] sm:$0xff]
      %v1210 = vld [vmem:[#allocation2 + $0x280] sm:$0xff]
      %v1211 = vld [vmem:[#allocation2 + $0x288] sm:$0xff]
      %v1212 = vld [vmem:[#allocation2 + $0x290] sm:$0xff]
      %v1213 = vld [vmem:[#allocation2 + $0x298] sm:$0xff]
      %v1214 = vld [vmem:[#allocation2 + $0x2a0] sm:$0xff]
      %v1215 = vld [vmem:[#allocation2 + $0x2a8] sm:$0xff]
      %v1216 = vld [vmem:[#allocation2 + $0x2b0] sm:$0xff]
      %v1217 = vld [vmem:[#allocation2 + $0x2b8] sm:$0xff]
      %v1218 = vld [vmem:[#allocation2 + $0x2c0] sm:$0xff]
      %v1219 = vld [vmem:[#allocation2 + $0x2c8] sm:$0xff]
      %v1220 = vld [vmem:[#allocation2 + $0x2d0] sm:$0xff]
      %v1221 = vld [vmem:[#allocation2 + $0x2d8] sm:$0xff]
      %v1222 = vld [vmem:[#allocation2 + $0x2e0] sm:$0xff]
      %v1223 = vld [vmem:[#allocation2 + $0x2e8] sm:$0xff]
      %v1224 = vld [vmem:[#allocation2 + $0x2f0] sm:$0xff]
      %v1225 = vld [vmem:[#allocation2 + $0x2f8] sm:$0xff]
      %v1226 = vld [vmem:[#allocation2 + $0x300] sm:$0xff]
      %v1227 = vld [vmem:[#allocation2 + $0x308] sm:$0xff]
      %v1228 = vld [vmem:[#allocation2 + $0x310] sm:$0xff]
      %v1229 = vld [vmem:[#allocation2 + $0x318] sm:$0xff]
      %v1230 = vld [vmem:[#allocation2 + $0x320] sm:$0xff]
      %v1231 = vld [vmem:[#allocation2 + $0x328] sm:$0xff]
      %v1232 = vld [vmem:[#allocation2 + $0x330] sm:$0xff]
      %v1233 = vld [vmem:[#allocation2 + $0x338] sm:$0xff]
      %v1234 = vld [vmem:[%s4] sm:$0x7]
      %v1235 = vld [vmem:[%s4 + $0x4] sm:$0x7]
      %v1236 = vld [vmem:[%s4 + $0x8] sm:$0x7]
      %v1237 = vlaneseq
      %v1238 = vshrl.u32 %v1237, 7
      %v1239 = vsub.s32 0, %v1238
      %v1240 = vrot.slane %v1234, %v1239
      %v1241 = vmul.f32 %v1158, %v1240
      %v1242 = vmul.f32 %v1159, %v1240
      %v1243 = vmul.f32 %v1160, %v1240
      %v1244 = vmul.f32 %v1162, %v1240
      %v1245 = vmul.f32 %v1163, %v1240
      %v1246 = vmul.f32 %v1164, %v1240
      %v1247 = vmul.f32 %v1166, %v1240
      %v1248 = vmul.f32 %v1167, %v1240
      %v1249 = vmul.f32 %v1168, %v1240
      %v1250 = vmul.f32 %v1170, %v1240
      %v1251 = vmul.f32 %v1171, %v1240
      %v1252 = vmul.f32 %v1172, %v1240
      %v1253 = vmul.f32 %v1174, %v1240
      %v1254 = vmul.f32 %v1175, %v1240
      %v1255 = vmul.f32 %v1176, %v1240
      %v1256 = vmul.f32 %v1178, %v1240
      %v1257 = vmul.f32 %v1179, %v1240
      %v1258 = vmul.f32 %v1180, %v1240
      %v1259 = vmul.f32 %v1182, %v1240
      %v1260 = vmul.f32 %v1183, %v1240
      %v1261 = vmul.f32 %v1184, %v1240
      %v1262 = vmul.f32 %v1186, %v1240
      %v1263 = vmul.f32 %v1187, %v1240
      %v1264 = vmul.f32 %v1188, %v1240
      %v1265 = vmul.f32 %v1190, %v1240
      %v1266 = vmul.f32 %v1191, %v1240
      %v1267 = vmul.f32 %v1192, %v1240
      %v1268 = vmul.f32 %v1194, %v1240
      %v1269 = vmul.f32 %v1195, %v1240
      %v1270 = vmul.f32 %v1196, %v1240
      %v1271 = vmul.f32 %v1198, %v1240
      %v1272 = vmul.f32 %v1199, %v1240
      %v1273 = vmul.f32 %v1200, %v1240
      %v1274 = vmul.f32 %v1202, %v1240
      %v1275 = vmul.f32 %v1203, %v1240
      %v1276 = vmul.f32 %v1204, %v1240
      %v1277 = vmul.f32 %v1206, %v1240
      %v1278 = vmul.f32 %v1207, %v1240
      %v1279 = vmul.f32 %v1208, %v1240
      %v1280 = vmul.f32 %v1210, %v1240
      %v1281 = vmul.f32 %v1211, %v1240
      %v1282 = vmul.f32 %v1212, %v1240
      %v1283 = vmul.f32 %v1214, %v1240
      %v1284 = vmul.f32 %v1215, %v1240
      %v1285 = vmul.f32 %v1216, %v1240
      %v1286 = vmul.f32 %v1218, %v1240
      %v1287 = vmul.f32 %v1219, %v1240
      %v1288 = vmul.f32 %v1220, %v1240
      %v1289 = vadd.f32 %v1241, 0.0
      %v1290 = vadd.f32 %v1242, 0.0
      %v1291 = vadd.f32 %v1243, 0.0
      %v1292 = vadd.f32 %v1244, 0.0
      %v1293 = vadd.f32 %v1245, 0.0
      %v1294 = vadd.f32 %v1246, 0.0
      %v1295 = vadd.f32 %v1247, 0.0
      %v1296 = vadd.f32 %v1248, 0.0
      %v1297 = vadd.f32 %v1249, 0.0
      %v1298 = vadd.f32 %v1250, 0.0
      %v1299 = vadd.f32 %v1251, 0.0
      %v1300 = vadd.f32 %v1252, 0.0
      %v1301 = vadd.f32 %v1253, 0.0
      %v1302 = vadd.f32 %v1254, 0.0
      %v1303 = vadd.f32 %v1255, 0.0
      %v1304 = vadd.f32 %v1256, 0.0
      %v1305 = vadd.f32 %v1257, 0.0
      %v1306 = vadd.f32 %v1258, 0.0
      %v1307 = vadd.f32 %v1259, 0.0
      %v1308 = vadd.f32 %v1260, 0.0
      %v1309 = vadd.f32 %v1261, 0.0
      %v1310 = vadd.f32 %v1262, 0.0
      %v1311 = vadd.f32 %v1263, 0.0
      %v1312 = vadd.f32 %v1264, 0.0
      %v1313 = vadd.f32 %v1265, 0.0
      %v1314 = vadd.f32 %v1266, 0.0
      %v1315 = vadd.f32 %v1267, 0.0
      %v1316 = vadd.f32 %v1268, 0.0
      %v1317 = vadd.f32 %v1269, 0.0
      %v1318 = vadd.f32 %v1270, 0.0
      %v1319 = vadd.f32 %v1271, 0.0
      %v1320 = vadd.f32 %v1272, 0.0
      %v1321 = vadd.f32 %v1273, 0.0
      %v1322 = vadd.f32 %v1274, 0.0
      %v1323 = vadd.f32 %v1275, 0.0
      %v1324 = vadd.f32 %v1276, 0.0
      %v1325 = vadd.f32 %v1277, 0.0
      %v1326 = vadd.f32 %v1278, 0.0
      %v1327 = vadd.f32 %v1279, 0.0
      %v1328 = vadd.f32 %v1280, 0.0
      %v1329 = vadd.f32 %v1281, 0.0
      %v1330 = vadd.f32 %v1282, 0.0
      %v1331 = vadd.f32 %v1283, 0.0
      %v1332 = vadd.f32 %v1284, 0.0
      %v1333 = vadd.f32 %v1285, 0.0
      %v1334 = vadd.f32 %v1286, 0.0
      %v1335 = vadd.f32 %v1287, 0.0
      %v1336 = vadd.f32 %v1288, 0.0
      %v1337 = vlaneseq
      %v1338 = vshrl.u32 %v1337, 7
      %v1339 = vsub.s32 1, %v1338
      %v1340 = vrot.slane %v1234, %v1339
      %v1341 = vmul.f32 %v1159, %v1340
      %v1342 = vmul.f32 %v1160, %v1340
      %v1343 = vmul.f32 %v1163, %v1340
      %v1344 = vmul.f32 %v1164, %v1340
      %v1345 = vmul.f32 %v1167, %v1340
      %v1346 = vmul.f32 %v1168, %v1340
      %v1347 = vmul.f32 %v1171, %v1340
      %v1348 = vmul.f32 %v1172, %v1340
      %v1349 = vmul.f32 %v1175, %v1340
      %v1350 = vmul.f32 %v1176, %v1340
      %v1351 = vmul.f32 %v1179, %v1340
      %v1352 = vmul.f32 %v1180, %v1340
      %v1353 = vmul.f32 %v1183, %v1340
      %v1354 = vmul.f32 %v1184, %v1340
      %v1355 = vmul.f32 %v1187, %v1340
      %v1356 = vmul.f32 %v1188, %v1340
      %v1357 = vmul.f32 %v1191, %v1340
      %v1358 = vmul.f32 %v1192, %v1340
      %v1359 = vmul.f32 %v1195, %v1340
      %v1360 = vmul.f32 %v1196, %v1340
      %v1361 = vmul.f32 %v1199, %v1340
      %v1362 = vmul.f32 %v1200, %v1340
      %v1363 = vmul.f32 %v1203, %v1340
      %v1364 = vmul.f32 %v1204, %v1340
      %v1365 = vmul.f32 %v1207, %v1340
      %v1366 = vmul.f32 %v1208, %v1340
      %v1367 = vmul.f32 %v1211, %v1340
      %v1368 = vmul.f32 %v1212, %v1340
      %v1369 = vmul.f32 %v1215, %v1340
      %v1370 = vmul.f32 %v1216, %v1340
      %v1371 = vmul.f32 %v1219, %v1340
      %v1372 = vmul.f32 %v1220, %v1340
      %vm1405 = vcmask 1046528
      %v1406 = vrot.slane %v1341, 1
      %v1407 = vrot.slane %v1342, 1
      %v1408 = vsel %vm1405, %v1406, %v1407
      %v1409 = vrot.slane %v1343, 1
      %v1410 = vrot.slane %v1344, 1
      %v1411 = vsel %vm1405, %v1409, %v1410
      %v1412 = vrot.slane %v1345, 1
      %v1413 = vrot.slane %v1346, 1
      %v1414 = vsel %vm1405, %v1412, %v1413
      %v1415 = vrot.slane %v1347, 1
      %v1416 = vrot.slane %v1348, 1
      %v1417 = vsel %vm1405, %v1415, %v1416
      %v1418 = vrot.slane %v1349, 1
      %v1419 = vrot.slane %v1350, 1
      %v1420 = vsel %vm1405, %v1418, %v1419
      %v1421 = vrot.slane %v1351, 1
      %v1422 = vrot.slane %v1352, 1
      %v1423 = vsel %vm1405, %v1421, %v1422
      %v1424 = vrot.slane %v1353, 1
      %v1425 = vrot.slane %v1354, 1
      %v1426 = vsel %vm1405, %v1424, %v1425
      %v1427 = vrot.slane %v1355, 1
      %v1428 = vrot.slane %v1356, 1
      %v1429 = vsel %vm1405, %v1427, %v1428
      %v1430 = vrot.slane %v1357, 1
      %v1431 = vrot.slane %v1358, 1
      %v1432 = vsel %vm1405, %v1430, %v1431
      %v1433 = vrot.slane %v1359, 1
      %v1434 = vrot.slane %v1360, 1
      %v1435 = vsel %vm1405, %v1433, %v1434
      %v1436 = vrot.slane %v1361, 1
      %v1437 = vrot.slane %v1362, 1
      %v1438 = vsel %vm1405, %v1436, %v1437
      %v1439 = vrot.slane %v1363, 1
      %v1440 = vrot.slane %v1364, 1
      %v1441 = vsel %vm1405, %v1439, %v1440
      %v1442 = vrot.slane %v1365, 1
      %v1443 = vrot.slane %v1366, 1
      %v1444 = vsel %vm1405, %v1442, %v1443
      %v1445 = vrot.slane %v1367, 1
      %v1446 = vrot.slane %v1368, 1
      %v1447 = vsel %vm1405, %v1445, %v1446
      %v1448 = vrot.slane %v1369, 1
      %v1449 = vrot.slane %v1370, 1
      %v1450 = vsel %vm1405, %v1448, %v1449
      %v1451 = vrot.slane %v1371, 1
      %v1452 = vrot.slane %v1372, 1
      %v1453 = vsel %vm1405, %v1451, %v1452
      %v1502 = vadd.f32 %v1289, %v1406
      %v1503 = vadd.f32 %v1290, %v1408
      %v1504 = vadd.f32 %v1291, %v1407
      %v1505 = vadd.f32 %v1292, %v1409
      %v1506 = vadd.f32 %v1293, %v1411
      %v1507 = vadd.f32 %v1294, %v1410
      %v1508 = vadd.f32 %v1295, %v1412
      %v1509 = vadd.f32 %v1296, %v1414
      %v1510 = vadd.f32 %v1297, %v1413
      %v1511 = vadd.f32 %v1298, %v1415
      %v1512 = vadd.f32 %v1299, %v1417
      %v1513 = vadd.f32 %v1300, %v1416
      %v1514 = vadd.f32 %v1301, %v1418
      %v1515 = vadd.f32 %v1302, %v1420
      %v1516 = vadd.f32 %v1303, %v1419
      %v1517 = vadd.f32 %v1304, %v1421
      %v1518 = vadd.f32 %v1305, %v1423
      %v1519 = vadd.f32 %v1306, %v1422
      %v1520 = vadd.f32 %v1307, %v1424
      %v1521 = vadd.f32 %v1308, %v1426
      %v1522 = vadd.f32 %v1309, %v1425
      %v1523 = vadd.f32 %v1310, %v1427
      %v1524 = vadd.f32 %v1311, %v1429
      %v1525 = vadd.f32 %v1312, %v1428
      %v1526 = vadd.f32 %v1313, %v1430
      %v1527 = vadd.f32 %v1314, %v1432
      %v1528 = vadd.f32 %v1315, %v1431
      %v1529 = vadd.f32 %v1316, %v1433
      %v1530 = vadd.f32 %v1317, %v1435
      %v1531 = vadd.f32 %v1318, %v1434
      %v1532 = vadd.f32 %v1319, %v1436
      %v1533 = vadd.f32 %v1320, %v1438
      %v1534 = vadd.f32 %v1321, %v1437
      %v1535 = vadd.f32 %v1322, %v1439
      %v1536 = vadd.f32 %v1323, %v1441
      %v1537 = vadd.f32 %v1324, %v1440
      %v1538 = vadd.f32 %v1325, %v1442
      %v1539 = vadd.f32 %v1326, %v1444
      %v1540 = vadd.f32 %v1327, %v1443
      %v1541 = vadd.f32 %v1328, %v1445
      %v1542 = vadd.f32 %v1329, %v1447
      %v1543 = vadd.f32 %v1330, %v1446
      %v1544 = vadd.f32 %v1331, %v1448
      %v1545 = vadd.f32 %v1332, %v1450
      %v1546 = vadd.f32 %v1333, %v1449
      %v1547 = vadd.f32 %v1334, %v1451
      %v1548 = vadd.f32 %v1335, %v1453
      %v1549 = vadd.f32 %v1336, %v1452
      %v1550 = vlaneseq
      %v1551 = vshrl.u32 %v1550, 7
      %v1552 = vsub.s32 2, %v1551
      %v1553 = vrot.slane %v1234, %v1552
      %v1554 = vmul.f32 %v1159, %v1553
      %v1555 = vmul.f32 %v1160, %v1553
      %v1556 = vmul.f32 %v1161, %v1553
      %v1557 = vmul.f32 %v1163, %v1553
      %v1558 = vmul.f32 %v1164, %v1553
      %v1559 = vmul.f32 %v1165, %v1553
      %v1560 = vmul.f32 %v1167, %v1553
      %v1561 = vmul.f32 %v1168, %v1553
      %v1562 = vmul.f32 %v1169, %v1553
      %v1563 = vmul.f32 %v1171, %v1553
      %v1564 = vmul.f32 %v1172, %v1553
      %v1565 = vmul.f32 %v1173, %v1553
      %v1566 = vmul.f32 %v1175, %v1553
      %v1567 = vmul.f32 %v1176, %v1553
      %v1568 = vmul.f32 %v1177, %v1553
      %v1569 = vmul.f32 %v1179, %v1553
      %v1570 = vmul.f32 %v1180, %v1553
      %v1571 = vmul.f32 %v1181, %v1553
      %v1572 = vmul.f32 %v1183, %v1553
      %v1573 = vmul.f32 %v1184, %v1553
      %v1574 = vmul.f32 %v1185, %v1553
      %v1575 = vmul.f32 %v1187, %v1553
      %v1576 = vmul.f32 %v1188, %v1553
      %v1577 = vmul.f32 %v1189, %v1553
      %v1578 = vmul.f32 %v1191, %v1553
      %v1579 = vmul.f32 %v1192, %v1553
      %v1580 = vmul.f32 %v1193, %v1553
      %v1581 = vmul.f32 %v1195, %v1553
      %v1582 = vmul.f32 %v1196, %v1553
      %v1583 = vmul.f32 %v1197, %v1553
      %v1584 = vmul.f32 %v1199, %v1553
      %v1585 = vmul.f32 %v1200, %v1553
      %v1586 = vmul.f32 %v1201, %v1553
      %v1587 = vmul.f32 %v1203, %v1553
      %v1588 = vmul.f32 %v1204, %v1553
      %v1589 = vmul.f32 %v1205, %v1553
      %v1590 = vmul.f32 %v1207, %v1553
      %v1591 = vmul.f32 %v1208, %v1553
      %v1592 = vmul.f32 %v1209, %v1553
      %v1593 = vmul.f32 %v1211, %v1553
      %v1594 = vmul.f32 %v1212, %v1553
      %v1595 = vmul.f32 %v1213, %v1553
      %v1596 = vmul.f32 %v1215, %v1553
      %v1597 = vmul.f32 %v1216, %v1553
      %v1598 = vmul.f32 %v1217, %v1553
      %v1599 = vmul.f32 %v1219, %v1553
      %v1600 = vmul.f32 %v1220, %v1553
      %v1601 = vmul.f32 %v1221, %v1553
      %vm1650 = vcmask 1045504
      %v1651 = vrot.slane %v1554, 2
      %v1652 = vrot.slane %v1555, 2
      %v1653 = vsel %vm1650, %v1651, %v1652
      %v1654 = vrot.slane %v1556, 2
      %v1655 = vsel %vm1650, %v1652, %v1654
      %v1656 = vrot.slane %v1557, 2
      %v1657 = vrot.slane %v1558, 2
      %v1658 = vsel %vm1650, %v1656, %v1657
      %v1659 = vrot.slane %v1559, 2
      %v1660 = vsel %vm1650, %v1657, %v1659
      %v1661 = vrot.slane %v1560, 2
      %v1662 = vrot.slane %v1561, 2
      %v1663 = vsel %vm1650, %v1661, %v1662
      %v1664 = vrot.slane %v1562, 2
      %v1665 = vsel %vm1650, %v1662, %v1664
      %v1666 = vrot.slane %v1563, 2
      %v1667 = vrot.slane %v1564, 2
      %v1668 = vsel %vm1650, %v1666, %v1667
      %v1669 = vrot.slane %v1565, 2
      %v1670 = vsel %vm1650, %v1667, %v1669
      %v1671 = vrot.slane %v1566, 2
      %v1672 = vrot.slane %v1567, 2
      %v1673 = vsel %vm1650, %v1671, %v1672
      %v1674 = vrot.slane %v1568, 2
      %v1675 = vsel %vm1650, %v1672, %v1674
      %v1676 = vrot.slane %v1569, 2
      %v1677 = vrot.slane %v1570, 2
      %v1678 = vsel %vm1650, %v1676, %v1677
      %v1679 = vrot.slane %v1571, 2
      %v1680 = vsel %vm1650, %v1677, %v1679
      %v1681 = vrot.slane %v1572, 2
      %v1682 = vrot.slane %v1573, 2
      %v1683 = vsel %vm1650, %v1681, %v1682
      %v1684 = vrot.slane %v1574, 2
      %v1685 = vsel %vm1650, %v1682, %v1684
      %v1686 = vrot.slane %v1575, 2
      %v1687 = vrot.slane %v1576, 2
      %v1688 = vsel %vm1650, %v1686, %v1687
      %v1689 = vrot.slane %v1577, 2
      %v1690 = vsel %vm1650, %v1687, %v1689
      %v1691 = vrot.slane %v1578, 2
      %v1692 = vrot.slane %v1579, 2
      %v1693 = vsel %vm1650, %v1691, %v1692
      %v1694 = vrot.slane %v1580, 2
      %v1695 = vsel %vm1650, %v1692, %v1694
      %v1696 = vrot.slane %v1581, 2
      %v1697 = vrot.slane %v1582, 2
      %v1698 = vsel %vm1650, %v1696, %v1697
      %v1699 = vrot.slane %v1583, 2
      %v1700 = vsel %vm1650, %v1697, %v1699
      %v1701 = vrot.slane %v1584, 2
      %v1702 = vrot.slane %v1585, 2
      %v1703 = vsel %vm1650, %v1701, %v1702
      %v1704 = vrot.slane %v1586, 2
      %v1705 = vsel %vm1650, %v1702, %v1704
      %v1706 = vrot.slane %v1587, 2
      %v1707 = vrot.slane %v1588, 2
      %v1708 = vsel %vm1650, %v1706, %v1707
      %v1709 = vrot.slane %v1589, 2
      %v1710 = vsel %vm1650, %v1707, %v1709
      %v1711 = vrot.slane %v1590, 2
      %v1712 = vrot.slane %v1591, 2
      %v1713 = vsel %vm1650, %v1711, %v1712
      %v1714 = vrot.slane %v1592, 2
      %v1715 = vsel %vm1650, %v1712, %v1714
      %v1716 = vrot.slane %v1593, 2
      %v1717 = vrot.slane %v1594, 2
      %v1718 = vsel %vm1650, %v1716, %v1717
      %v1719 = vrot.slane %v1595, 2
      %v1720 = vsel %vm1650, %v1717, %v1719
      %v1721 = vrot.slane %v1596, 2
      %v1722 = vrot.slane %v1597, 2
      %v1723 = vsel %vm1650, %v1721, %v1722
      %v1724 = vrot.slane %v1598, 2
      %v1725 = vsel %vm1650, %v1722, %v1724
      %v1726 = vrot.slane %v1599, 2
      %v1727 = vrot.slane %v1600, 2
      %v1728 = vsel %vm1650, %v1726, %v1727
      %v1729 = vrot.slane %v1601, 2
      %v1730 = vsel %vm1650, %v1727, %v1729
      %v1779 = vadd.f32 %v1502, %v1651
      %v1780 = vadd.f32 %v1503, %v1653
      %v1781 = vadd.f32 %v1504, %v1655
      %v1782 = vadd.f32 %v1505, %v1656
      %v1783 = vadd.f32 %v1506, %v1658
      %v1784 = vadd.f32 %v1507, %v1660
      %v1785 = vadd.f32 %v1508, %v1661
      %v1786 = vadd.f32 %v1509, %v1663
      %v1787 = vadd.f32 %v1510, %v1665
      %v1788 = vadd.f32 %v1511, %v1666
      %v1789 = vadd.f32 %v1512, %v1668
      %v1790 = vadd.f32 %v1513, %v1670
      %v1791 = vadd.f32 %v1514, %v1671
      %v1792 = vadd.f32 %v1515, %v1673
      %v1793 = vadd.f32 %v1516, %v1675
      %v1794 = vadd.f32 %v1517, %v1676
      %v1795 = vadd.f32 %v1518, %v1678
      %v1796 = vadd.f32 %v1519, %v1680
      %v1797 = vadd.f32 %v1520, %v1681
      %v1798 = vadd.f32 %v1521, %v1683
      %v1799 = vadd.f32 %v1522, %v1685
      %v1800 = vadd.f32 %v1523, %v1686
      %v1801 = vadd.f32 %v1524, %v1688
      %v1802 = vadd.f32 %v1525, %v1690
      %v1803 = vadd.f32 %v1526, %v1691
      %v1804 = vadd.f32 %v1527, %v1693
      %v1805 = vadd.f32 %v1528, %v1695
      %v1806 = vadd.f32 %v1529, %v1696
      %v1807 = vadd.f32 %v1530, %v1698
      %v1808 = vadd.f32 %v1531, %v1700
      %v1809 = vadd.f32 %v1532, %v1701
      %v1810 = vadd.f32 %v1533, %v1703
      %v1811 = vadd.f32 %v1534, %v1705
      %v1812 = vadd.f32 %v1535, %v1706
      %v1813 = vadd.f32 %v1536, %v1708
      %v1814 = vadd.f32 %v1537, %v1710
      %v1815 = vadd.f32 %v1538, %v1711
      %v1816 = vadd.f32 %v1539, %v1713
      %v1817 = vadd.f32 %v1540, %v1715
      %v1818 = vadd.f32 %v1541, %v1716
      %v1819 = vadd.f32 %v1542, %v1718
      %v1820 = vadd.f32 %v1543, %v1720
      %v1821 = vadd.f32 %v1544, %v1721
      %v1822 = vadd.f32 %v1545, %v1723
      %v1823 = vadd.f32 %v1546, %v1725
      %v1824 = vadd.f32 %v1547, %v1726
      %v1825 = vadd.f32 %v1548, %v1728
      %v1826 = vadd.f32 %v1549, %v1730
      %v1827 = vlaneseq
      %v1828 = vshrl.u32 %v1827, 7
      %v1829 = vsub.s32 0, %v1828
      %v1830 = vrot.slane %v1235, %v1829
      %v1831 = vmul.f32 %v1162, %v1830
      %v1832 = vmul.f32 %v1163, %v1830
      %v1833 = vmul.f32 %v1164, %v1830
      %v1834 = vmul.f32 %v1166, %v1830
      %v1835 = vmul.f32 %v1167, %v1830
      %v1836 = vmul.f32 %v1168, %v1830
      %v1837 = vmul.f32 %v1170, %v1830
      %v1838 = vmul.f32 %v1171, %v1830
      %v1839 = vmul.f32 %v1172, %v1830
      %v1840 = vmul.f32 %v1174, %v1830
      %v1841 = vmul.f32 %v1175, %v1830
      %v1842 = vmul.f32 %v1176, %v1830
      %v1843 = vmul.f32 %v1178, %v1830
      %v1844 = vmul.f32 %v1179, %v1830
      %v1845 = vmul.f32 %v1180, %v1830
      %v1846 = vmul.f32 %v1182, %v1830
      %v1847 = vmul.f32 %v1183, %v1830
      %v1848 = vmul.f32 %v1184, %v1830
      %v1849 = vmul.f32 %v1186, %v1830
      %v1850 = vmul.f32 %v1187, %v1830
      %v1851 = vmul.f32 %v1188, %v1830
      %v1852 = vmul.f32 %v1190, %v1830
      %v1853 = vmul.f32 %v1191, %v1830
      %v1854 = vmul.f32 %v1192, %v1830
      %v1855 = vmul.f32 %v1194, %v1830
      %v1856 = vmul.f32 %v1195, %v1830
      %v1857 = vmul.f32 %v1196, %v1830
      %v1858 = vmul.f32 %v1198, %v1830
      %v1859 = vmul.f32 %v1199, %v1830
      %v1860 = vmul.f32 %v1200, %v1830
      %v1861 = vmul.f32 %v1202, %v1830
      %v1862 = vmul.f32 %v1203, %v1830
      %v1863 = vmul.f32 %v1204, %v1830
      %v1864 = vmul.f32 %v1206, %v1830
      %v1865 = vmul.f32 %v1207, %v1830
      %v1866 = vmul.f32 %v1208, %v1830
      %v1867 = vmul.f32 %v1210, %v1830
      %v1868 = vmul.f32 %v1211, %v1830
      %v1869 = vmul.f32 %v1212, %v1830
      %v1870 = vmul.f32 %v1214, %v1830
      %v1871 = vmul.f32 %v1215, %v1830
      %v1872 = vmul.f32 %v1216, %v1830
      %v1873 = vmul.f32 %v1218, %v1830
      %v1874 = vmul.f32 %v1219, %v1830
      %v1875 = vmul.f32 %v1220, %v1830
      %v1876 = vmul.f32 %v1222, %v1830
      %v1877 = vmul.f32 %v1223, %v1830
      %v1878 = vmul.f32 %v1224, %v1830
      %v1879 = vadd.f32 %v1779, %v1831
      %v1880 = vadd.f32 %v1780, %v1832
      %v1881 = vadd.f32 %v1781, %v1833
      %v1882 = vadd.f32 %v1782, %v1834
      %v1883 = vadd.f32 %v1783, %v1835
      %v1884 = vadd.f32 %v1784, %v1836
      %v1885 = vadd.f32 %v1785, %v1837
      %v1886 = vadd.f32 %v1786, %v1838
      %v1887 = vadd.f32 %v1787, %v1839
      %v1888 = vadd.f32 %v1788, %v1840
      %v1889 = vadd.f32 %v1789, %v1841
      %v1890 = vadd.f32 %v1790, %v1842
      %v1891 = vadd.f32 %v1791, %v1843
      %v1892 = vadd.f32 %v1792, %v1844
      %v1893 = vadd.f32 %v1793, %v1845
      %v1894 = vadd.f32 %v1794, %v1846
      %v1895 = vadd.f32 %v1795, %v1847
      %v1896 = vadd.f32 %v1796, %v1848
      %v1897 = vadd.f32 %v1797, %v1849
      %v1898 = vadd.f32 %v1798, %v1850
      %v1899 = vadd.f32 %v1799, %v1851
      %v1900 = vadd.f32 %v1800, %v1852
      %v1901 = vadd.f32 %v1801, %v1853
      %v1902 = vadd.f32 %v1802, %v1854
      %v1903 = vadd.f32 %v1803, %v1855
      %v1904 = vadd.f32 %v1804, %v1856
      %v1905 = vadd.f32 %v1805, %v1857
      %v1906 = vadd.f32 %v1806, %v1858
      %v1907 = vadd.f32 %v1807, %v1859
      %v1908 = vadd.f32 %v1808, %v1860
      %v1909 = vadd.f32 %v1809, %v1861
      %v1910 = vadd.f32 %v1810, %v1862
      %v1911 = vadd.f32 %v1811, %v1863
      %v1912 = vadd.f32 %v1812, %v1864
      %v1913 = vadd.f32 %v1813, %v1865
      %v1914 = vadd.f32 %v1814, %v1866
      %v1915 = vadd.f32 %v1815, %v1867
      %v1916 = vadd.f32 %v1816, %v1868
      %v1917 = vadd.f32 %v1817, %v1869
      %v1918 = vadd.f32 %v1818, %v1870
      %v1919 = vadd.f32 %v1819, %v1871
      %v1920 = vadd.f32 %v1820, %v1872
      %v1921 = vadd.f32 %v1821, %v1873
      %v1922 = vadd.f32 %v1822, %v1874
      %v1923 = vadd.f32 %v1823, %v1875
      %v1924 = vadd.f32 %v1824, %v1876
      %v1925 = vadd.f32 %v1825, %v1877
      %v1926 = vadd.f32 %v1826, %v1878
      %v1927 = vlaneseq
      %v1928 = vshrl.u32 %v1927, 7
      %v1929 = vsub.s32 1, %v1928
      %v1930 = vrot.slane %v1235, %v1929
      %v1931 = vmul.f32 %v1163, %v1930
      %v1932 = vmul.f32 %v1164, %v1930
      %v1933 = vmul.f32 %v1167, %v1930
      %v1934 = vmul.f32 %v1168, %v1930
      %v1935 = vmul.f32 %v1171, %v1930
      %v1936 = vmul.f32 %v1172, %v1930
      %v1937 = vmul.f32 %v1175, %v1930
      %v1938 = vmul.f32 %v1176, %v1930
      %v1939 = vmul.f32 %v1179, %v1930
      %v1940 = vmul.f32 %v1180, %v1930
      %v1941 = vmul.f32 %v1183, %v1930
      %v1942 = vmul.f32 %v1184, %v1930
      %v1943 = vmul.f32 %v1187, %v1930
      %v1944 = vmul.f32 %v1188, %v1930
      %v1945 = vmul.f32 %v1191, %v1930
      %v1946 = vmul.f32 %v1192, %v1930
      %v1947 = vmul.f32 %v1195, %v1930
      %v1948 = vmul.f32 %v1196, %v1930
      %v1949 = vmul.f32 %v1199, %v1930
      %v1950 = vmul.f32 %v1200, %v1930
      %v1951 = vmul.f32 %v1203, %v1930
      %v1952 = vmul.f32 %v1204, %v1930
      %v1953 = vmul.f32 %v1207, %v1930
      %v1954 = vmul.f32 %v1208, %v1930
      %v1955 = vmul.f32 %v1211, %v1930
      %v1956 = vmul.f32 %v1212, %v1930
      %v1957 = vmul.f32 %v1215, %v1930
      %v1958 = vmul.f32 %v1216, %v1930
      %v1959 = vmul.f32 %v1219, %v1930
      %v1960 = vmul.f32 %v1220, %v1930
      %v1961 = vmul.f32 %v1223, %v1930
      %v1962 = vmul.f32 %v1224, %v1930
      %v1995 = vrot.slane %v1931, 1
      %v1996 = vrot.slane %v1932, 1
      %v1997 = vsel %vm1405, %v1995, %v1996
      %v1998 = vrot.slane %v1933, 1
      %v1999 = vrot.slane %v1934, 1
      %v2000 = vsel %vm1405, %v1998, %v1999
      %v2001 = vrot.slane %v1935, 1
      %v2002 = vrot.slane %v1936, 1
      %v2003 = vsel %vm1405, %v2001, %v2002
      %v2004 = vrot.slane %v1937, 1
      %v2005 = vrot.slane %v1938, 1
      %v2006 = vsel %vm1405, %v2004, %v2005
      %v2007 = vrot.slane %v1939, 1
      %v2008 = vrot.slane %v1940, 1
      %v2009 = vsel %vm1405, %v2007, %v2008
      %v2010 = vrot.slane %v1941, 1
      %v2011 = vrot.slane %v1942, 1
      %v2012 = vsel %vm1405, %v2010, %v2011
      %v2013 = vrot.slane %v1943, 1
      %v2014 = vrot.slane %v1944, 1
      %v2015 = vsel %vm1405, %v2013, %v2014
      %v2016 = vrot.slane %v1945, 1
      %v2017 = vrot.slane %v1946, 1
      %v2018 = vsel %vm1405, %v2016, %v2017
      %v2019 = vrot.slane %v1947, 1
      %v2020 = vrot.slane %v1948, 1
      %v2021 = vsel %vm1405, %v2019, %v2020
      %v2022 = vrot.slane %v1949, 1
      %v2023 = vrot.slane %v1950, 1
      %v2024 = vsel %vm1405, %v2022, %v2023
      %v2025 = vrot.slane %v1951, 1
      %v2026 = vrot.slane %v1952, 1
      %v2027 = vsel %vm1405, %v2025, %v2026
      %v2028 = vrot.slane %v1953, 1
      %v2029 = vrot.slane %v1954, 1
      %v2030 = vsel %vm1405, %v2028, %v2029
      %v2031 = vrot.slane %v1955, 1
      %v2032 = vrot.slane %v1956, 1
      %v2033 = vsel %vm1405, %v2031, %v2032
      %v2034 = vrot.slane %v1957, 1
      %v2035 = vrot.slane %v1958, 1
      %v2036 = vsel %vm1405, %v2034, %v2035
      %v2037 = vrot.slane %v1959, 1
      %v2038 = vrot.slane %v1960, 1
      %v2039 = vsel %vm1405, %v2037, %v2038
      %v2040 = vrot.slane %v1961, 1
      %v2041 = vrot.slane %v1962, 1
      %v2042 = vsel %vm1405, %v2040, %v2041
      %v2091 = vadd.f32 %v1879, %v1995
      %v2092 = vadd.f32 %v1880, %v1997
      %v2093 = vadd.f32 %v1881, %v1996
      %v2094 = vadd.f32 %v1882, %v1998
      %v2095 = vadd.f32 %v1883, %v2000
      %v2096 = vadd.f32 %v1884, %v1999
      %v2097 = vadd.f32 %v1885, %v2001
      %v2098 = vadd.f32 %v1886, %v2003
      %v2099 = vadd.f32 %v1887, %v2002
      %v2100 = vadd.f32 %v1888, %v2004
      %v2101 = vadd.f32 %v1889, %v2006
      %v2102 = vadd.f32 %v1890, %v2005
      %v2103 = vadd.f32 %v1891, %v2007
      %v2104 = vadd.f32 %v1892, %v2009
      %v2105 = vadd.f32 %v1893, %v2008
      %v2106 = vadd.f32 %v1894, %v2010
      %v2107 = vadd.f32 %v1895, %v2012
      %v2108 = vadd.f32 %v1896, %v2011
      %v2109 = vadd.f32 %v1897, %v2013
      %v2110 = vadd.f32 %v1898, %v2015
      %v2111 = vadd.f32 %v1899, %v2014
      %v2112 = vadd.f32 %v1900, %v2016
      %v2113 = vadd.f32 %v1901, %v2018
      %v2114 = vadd.f32 %v1902, %v2017
      %v2115 = vadd.f32 %v1903, %v2019
      %v2116 = vadd.f32 %v1904, %v2021
      %v2117 = vadd.f32 %v1905, %v2020
      %v2118 = vadd.f32 %v1906, %v2022
      %v2119 = vadd.f32 %v1907, %v2024
      %v2120 = vadd.f32 %v1908, %v2023
      %v2121 = vadd.f32 %v1909, %v2025
      %v2122 = vadd.f32 %v1910, %v2027
      %v2123 = vadd.f32 %v1911, %v2026
      %v2124 = vadd.f32 %v1912, %v2028
      %v2125 = vadd.f32 %v1913, %v2030
      %v2126 = vadd.f32 %v1914, %v2029
      %v2127 = vadd.f32 %v1915, %v2031
      %v2128 = vadd.f32 %v1916, %v2033
      %v2129 = vadd.f32 %v1917, %v2032
      %v2130 = vadd.f32 %v1918, %v2034
      %v2131 = vadd.f32 %v1919, %v2036
      %v2132 = vadd.f32 %v1920, %v2035
      %v2133 = vadd.f32 %v1921, %v2037
      %v2134 = vadd.f32 %v1922, %v2039
      %v2135 = vadd.f32 %v1923, %v2038
      %v2136 = vadd.f32 %v1924, %v2040
      %v2137 = vadd.f32 %v1925, %v2042
      %v2138 = vadd.f32 %v1926, %v2041
      %v2139 = vlaneseq
      %v2140 = vshrl.u32 %v2139, 7
      %v2141 = vsub.s32 2, %v2140
      %v2142 = vrot.slane %v1235, %v2141
      %v2143 = vmul.f32 %v1163, %v2142
      %v2144 = vmul.f32 %v1164, %v2142
      %v2145 = vmul.f32 %v1165, %v2142
      %v2146 = vmul.f32 %v1167, %v2142
      %v2147 = vmul.f32 %v1168, %v2142
      %v2148 = vmul.f32 %v1169, %v2142
      %v2149 = vmul.f32 %v1171, %v2142
      %v2150 = vmul.f32 %v1172, %v2142
      %v2151 = vmul.f32 %v1173, %v2142
      %v2152 = vmul.f32 %v1175, %v2142
      %v2153 = vmul.f32 %v1176, %v2142
      %v2154 = vmul.f32 %v1177, %v2142
      %v2155 = vmul.f32 %v1179, %v2142
      %v2156 = vmul.f32 %v1180, %v2142
      %v2157 = vmul.f32 %v1181, %v2142
      %v2158 = vmul.f32 %v1183, %v2142
      %v2159 = vmul.f32 %v1184, %v2142
      %v2160 = vmul.f32 %v1185, %v2142
      %v2161 = vmul.f32 %v1187, %v2142
      %v2162 = vmul.f32 %v1188, %v2142
      %v2163 = vmul.f32 %v1189, %v2142
      %v2164 = vmul.f32 %v1191, %v2142
      %v2165 = vmul.f32 %v1192, %v2142
      %v2166 = vmul.f32 %v1193, %v2142
      %v2167 = vmul.f32 %v1195, %v2142
      %v2168 = vmul.f32 %v1196, %v2142
      %v2169 = vmul.f32 %v1197, %v2142
      %v2170 = vmul.f32 %v1199, %v2142
      %v2171 = vmul.f32 %v1200, %v2142
      %v2172 = vmul.f32 %v1201, %v2142
      %v2173 = vmul.f32 %v1203, %v2142
      %v2174 = vmul.f32 %v1204, %v2142
      %v2175 = vmul.f32 %v1205, %v2142
      %v2176 = vmul.f32 %v1207, %v2142
      %v2177 = vmul.f32 %v1208, %v2142
      %v2178 = vmul.f32 %v1209, %v2142
      %v2179 = vmul.f32 %v1211, %v2142
      %v2180 = vmul.f32 %v1212, %v2142
      %v2181 = vmul.f32 %v1213, %v2142
      %v2182 = vmul.f32 %v1215, %v2142
      %v2183 = vmul.f32 %v1216, %v2142
      %v2184 = vmul.f32 %v1217, %v2142
      %v2185 = vmul.f32 %v1219, %v2142
      %v2186 = vmul.f32 %v1220, %v2142
      %v2187 = vmul.f32 %v1221, %v2142
      %v2188 = vmul.f32 %v1223, %v2142
      %v2189 = vmul.f32 %v1224, %v2142
      %v2190 = vmul.f32 %v1225, %v2142
      %v2239 = vrot.slane %v2143, 2
      %v2240 = vrot.slane %v2144, 2
      %v2241 = vsel %vm1650, %v2239, %v2240
      %v2242 = vrot.slane %v2145, 2
      %v2243 = vsel %vm1650, %v2240, %v2242
      %v2244 = vrot.slane %v2146, 2
      %v2245 = vrot.slane %v2147, 2
      %v2246 = vsel %vm1650, %v2244, %v2245
      %v2247 = vrot.slane %v2148, 2
      %v2248 = vsel %vm1650, %v2245, %v2247
      %v2249 = vrot.slane %v2149, 2
      %v2250 = vrot.slane %v2150, 2
      %v2251 = vsel %vm1650, %v2249, %v2250
      %v2252 = vrot.slane %v2151, 2
      %v2253 = vsel %vm1650, %v2250, %v2252
      %v2254 = vrot.slane %v2152, 2
      %v2255 = vrot.slane %v2153, 2
      %v2256 = vsel %vm1650, %v2254, %v2255
      %v2257 = vrot.slane %v2154, 2
      %v2258 = vsel %vm1650, %v2255, %v2257
      %v2259 = vrot.slane %v2155, 2
      %v2260 = vrot.slane %v2156, 2
      %v2261 = vsel %vm1650, %v2259, %v2260
      %v2262 = vrot.slane %v2157, 2
      %v2263 = vsel %vm1650, %v2260, %v2262
      %v2264 = vrot.slane %v2158, 2
      %v2265 = vrot.slane %v2159, 2
      %v2266 = vsel %vm1650, %v2264, %v2265
      %v2267 = vrot.slane %v2160, 2
      %v2268 = vsel %vm1650, %v2265, %v2267
      %v2269 = vrot.slane %v2161, 2
      %v2270 = vrot.slane %v2162, 2
      %v2271 = vsel %vm1650, %v2269, %v2270
      %v2272 = vrot.slane %v2163, 2
      %v2273 = vsel %vm1650, %v2270, %v2272
      %v2274 = vrot.slane %v2164, 2
      %v2275 = vrot.slane %v2165, 2
      %v2276 = vsel %vm1650, %v2274, %v2275
      %v2277 = vrot.slane %v2166, 2
      %v2278 = vsel %vm1650, %v2275, %v2277
      %v2279 = vrot.slane %v2167, 2
      %v2280 = vrot.slane %v2168, 2
      %v2281 = vsel %vm1650, %v2279, %v2280
      %v2282 = vrot.slane %v2169, 2
      %v2283 = vsel %vm1650, %v2280, %v2282
      %v2284 = vrot.slane %v2170, 2
      %v2285 = vrot.slane %v2171, 2
      %v2286 = vsel %vm1650, %v2284, %v2285
      %v2287 = vrot.slane %v2172, 2
      %v2288 = vsel %vm1650, %v2285, %v2287
      %v2289 = vrot.slane %v2173, 2
      %v2290 = vrot.slane %v2174, 2
      %v2291 = vsel %vm1650, %v2289, %v2290
      %v2292 = vrot.slane %v2175, 2
      %v2293 = vsel %vm1650, %v2290, %v2292
      %v2294 = vrot.slane %v2176, 2
      %v2295 = vrot.slane %v2177, 2
      %v2296 = vsel %vm1650, %v2294, %v2295
      %v2297 = vrot.slane %v2178, 2
      %v2298 = vsel %vm1650, %v2295, %v2297
      %v2299 = vrot.slane %v2179, 2
      %v2300 = vrot.slane %v2180, 2
      %v2301 = vsel %vm1650, %v2299, %v2300
      %v2302 = vrot.slane %v2181, 2
      %v2303 = vsel %vm1650, %v2300, %v2302
      %v2304 = vrot.slane %v2182, 2
      %v2305 = vrot.slane %v2183, 2
      %v2306 = vsel %vm1650, %v2304, %v2305
      %v2307 = vrot.slane %v2184, 2
      %v2308 = vsel %vm1650, %v2305, %v2307
      %v2309 = vrot.slane %v2185, 2
      %v2310 = vrot.slane %v2186, 2
      %v2311 = vsel %vm1650, %v2309, %v2310
      %v2312 = vrot.slane %v2187, 2
      %v2313 = vsel %vm1650, %v2310, %v2312
      %v2314 = vrot.slane %v2188, 2
      %v2315 = vrot.slane %v2189, 2
      %v2316 = vsel %vm1650, %v2314, %v2315
      %v2317 = vrot.slane %v2190, 2
      %v2318 = vsel %vm1650, %v2315, %v2317
      %v2367 = vadd.f32 %v2091, %v2239
      %v2368 = vadd.f32 %v2092, %v2241
      %v2369 = vadd.f32 %v2093, %v2243
      %v2370 = vadd.f32 %v2094, %v2244
      %v2371 = vadd.f32 %v2095, %v2246
      %v2372 = vadd.f32 %v2096, %v2248
      %v2373 = vadd.f32 %v2097, %v2249
      %v2374 = vadd.f32 %v2098, %v2251
      %v2375 = vadd.f32 %v2099, %v2253
      %v2376 = vadd.f32 %v2100, %v2254
      %v2377 = vadd.f32 %v2101, %v2256
      %v2378 = vadd.f32 %v2102, %v2258
      %v2379 = vadd.f32 %v2103, %v2259
      %v2380 = vadd.f32 %v2104, %v2261
      %v2381 = vadd.f32 %v2105, %v2263
      %v2382 = vadd.f32 %v2106, %v2264
      %v2383 = vadd.f32 %v2107, %v2266
      %v2384 = vadd.f32 %v2108, %v2268
      %v2385 = vadd.f32 %v2109, %v2269
      %v2386 = vadd.f32 %v2110, %v2271
      %v2387 = vadd.f32 %v2111, %v2273
      %v2388 = vadd.f32 %v2112, %v2274
      %v2389 = vadd.f32 %v2113, %v2276
      %v2390 = vadd.f32 %v2114, %v2278
      %v2391 = vadd.f32 %v2115, %v2279
      %v2392 = vadd.f32 %v2116, %v2281
      %v2393 = vadd.f32 %v2117, %v2283
      %v2394 = vadd.f32 %v2118, %v2284
      %v2395 = vadd.f32 %v2119, %v2286
      %v2396 = vadd.f32 %v2120, %v2288
      %v2397 = vadd.f32 %v2121, %v2289
      %v2398 = vadd.f32 %v2122, %v2291
      %v2399 = vadd.f32 %v2123, %v2293
      %v2400 = vadd.f32 %v2124, %v2294
      %v2401 = vadd.f32 %v2125, %v2296
      %v2402 = vadd.f32 %v2126, %v2298
      %v2403 = vadd.f32 %v2127, %v2299
      %v2404 = vadd.f32 %v2128, %v2301
      %v2405 = vadd.f32 %v2129, %v2303
      %v2406 = vadd.f32 %v2130, %v2304
      %v2407 = vadd.f32 %v2131, %v2306
      %v2408 = vadd.f32 %v2132, %v2308
      %v2409 = vadd.f32 %v2133, %v2309
      %v2410 = vadd.f32 %v2134, %v2311
      %v2411 = vadd.f32 %v2135, %v2313
      %v2412 = vadd.f32 %v2136, %v2314
      %v2413 = vadd.f32 %v2137, %v2316
      %v2414 = vadd.f32 %v2138, %v2318
      %v2415 = vlaneseq
      %v2416 = vshrl.u32 %v2415, 7
      %v2417 = vsub.s32 0, %v2416
      %v2418 = vrot.slane %v1236, %v2417
      %v2419 = vmul.f32 %v1166, %v2418
      %v2420 = vmul.f32 %v1167, %v2418
      %v2421 = vmul.f32 %v1168, %v2418
      %v2422 = vmul.f32 %v1170, %v2418
      %v2423 = vmul.f32 %v1171, %v2418
      %v2424 = vmul.f32 %v1172, %v2418
      %v2425 = vmul.f32 %v1174, %v2418
      %v2426 = vmul.f32 %v1175, %v2418
      %v2427 = vmul.f32 %v1176, %v2418
      %v2428 = vmul.f32 %v1178, %v2418
      %v2429 = vmul.f32 %v1179, %v2418
      %v2430 = vmul.f32 %v1180, %v2418
      %v2431 = vmul.f32 %v1182, %v2418
      %v2432 = vmul.f32 %v1183, %v2418
      %v2433 = vmul.f32 %v1184, %v2418
      %v2434 = vmul.f32 %v1186, %v2418
      %v2435 = vmul.f32 %v1187, %v2418
      %v2436 = vmul.f32 %v1188, %v2418
      %v2437 = vmul.f32 %v1190, %v2418
      %v2438 = vmul.f32 %v1191, %v2418
      %v2439 = vmul.f32 %v1192, %v2418
      %v2440 = vmul.f32 %v1194, %v2418
      %v2441 = vmul.f32 %v1195, %v2418
      %v2442 = vmul.f32 %v1196, %v2418
      %v2443 = vmul.f32 %v1198, %v2418
      %v2444 = vmul.f32 %v1199, %v2418
      %v2445 = vmul.f32 %v1200, %v2418
      %v2446 = vmul.f32 %v1202, %v2418
      %v2447 = vmul.f32 %v1203, %v2418
      %v2448 = vmul.f32 %v1204, %v2418
      %v2449 = vmul.f32 %v1206, %v2418
      %v2450 = vmul.f32 %v1207, %v2418
      %v2451 = vmul.f32 %v1208, %v2418
      %v2452 = vmul.f32 %v1210, %v2418
      %v2453 = vmul.f32 %v1211, %v2418
      %v2454 = vmul.f32 %v1212, %v2418
      %v2455 = vmul.f32 %v1214, %v2418
      %v2456 = vmul.f32 %v1215, %v2418
      %v2457 = vmul.f32 %v1216, %v2418
      %v2458 = vmul.f32 %v1218, %v2418
      %v2459 = vmul.f32 %v1219, %v2418
      %v2460 = vmul.f32 %v1220, %v2418
      %v2461 = vmul.f32 %v1222, %v2418
      %v2462 = vmul.f32 %v1223, %v2418
      %v2463 = vmul.f32 %v1224, %v2418
      %v2464 = vmul.f32 %v1226, %v2418
      %v2465 = vmul.f32 %v1227, %v2418
      %v2466 = vmul.f32 %v1228, %v2418
      %v2467 = vadd.f32 %v2367, %v2419
      %v2468 = vadd.f32 %v2368, %v2420
      %v2469 = vadd.f32 %v2369, %v2421
      %v2470 = vadd.f32 %v2370, %v2422
      %v2471 = vadd.f32 %v2371, %v2423
      %v2472 = vadd.f32 %v2372, %v2424
      %v2473 = vadd.f32 %v2373, %v2425
      %v2474 = vadd.f32 %v2374, %v2426
      %v2475 = vadd.f32 %v2375, %v2427
      %v2476 = vadd.f32 %v2376, %v2428
      %v2477 = vadd.f32 %v2377, %v2429
      %v2478 = vadd.f32 %v2378, %v2430
      %v2479 = vadd.f32 %v2379, %v2431
      %v2480 = vadd.f32 %v2380, %v2432
      %v2481 = vadd.f32 %v2381, %v2433
      %v2482 = vadd.f32 %v2382, %v2434
      %v2483 = vadd.f32 %v2383, %v2435
      %v2484 = vadd.f32 %v2384, %v2436
      %v2485 = vadd.f32 %v2385, %v2437
      %v2486 = vadd.f32 %v2386, %v2438
      %v2487 = vadd.f32 %v2387, %v2439
      %v2488 = vadd.f32 %v2388, %v2440
      %v2489 = vadd.f32 %v2389, %v2441
      %v2490 = vadd.f32 %v2390, %v2442
      %v2491 = vadd.f32 %v2391, %v2443
      %v2492 = vadd.f32 %v2392, %v2444
      %v2493 = vadd.f32 %v2393, %v2445
      %v2494 = vadd.f32 %v2394, %v2446
      %v2495 = vadd.f32 %v2395, %v2447
      %v2496 = vadd.f32 %v2396, %v2448
      %v2497 = vadd.f32 %v2397, %v2449
      %v2498 = vadd.f32 %v2398, %v2450
      %v2499 = vadd.f32 %v2399, %v2451
      %v2500 = vadd.f32 %v2400, %v2452
      %v2501 = vadd.f32 %v2401, %v2453
      %v2502 = vadd.f32 %v2402, %v2454
      %v2503 = vadd.f32 %v2403, %v2455
      %v2504 = vadd.f32 %v2404, %v2456
      %v2505 = vadd.f32 %v2405, %v2457
      %v2506 = vadd.f32 %v2406, %v2458
      %v2507 = vadd.f32 %v2407, %v2459
      %v2508 = vadd.f32 %v2408, %v2460
      %v2509 = vadd.f32 %v2409, %v2461
      %v2510 = vadd.f32 %v2410, %v2462
      %v2511 = vadd.f32 %v2411, %v2463
      %v2512 = vadd.f32 %v2412, %v2464
      %v2513 = vadd.f32 %v2413, %v2465
      %v2514 = vadd.f32 %v2414, %v2466
      %v2515 = vlaneseq
      %v2516 = vshrl.u32 %v2515, 7
      %v2517 = vsub.s32 1, %v2516
      %v2518 = vrot.slane %v1236, %v2517
      %v2519 = vmul.f32 %v1167, %v2518
      %v2520 = vmul.f32 %v1168, %v2518
      %v2521 = vmul.f32 %v1171, %v2518
      %v2522 = vmul.f32 %v1172, %v2518
      %v2523 = vmul.f32 %v1175, %v2518
      %v2524 = vmul.f32 %v1176, %v2518
      %v2525 = vmul.f32 %v1179, %v2518
      %v2526 = vmul.f32 %v1180, %v2518
      %v2527 = vmul.f32 %v1183, %v2518
      %v2528 = vmul.f32 %v1184, %v2518
      %v2529 = vmul.f32 %v1187, %v2518
      %v2530 = vmul.f32 %v1188, %v2518
      %v2531 = vmul.f32 %v1191, %v2518
      %v2532 = vmul.f32 %v1192, %v2518
      %v2533 = vmul.f32 %v1195, %v2518
      %v2534 = vmul.f32 %v1196, %v2518
      %v2535 = vmul.f32 %v1199, %v2518
      %v2536 = vmul.f32 %v1200, %v2518
      %v2537 = vmul.f32 %v1203, %v2518
      %v2538 = vmul.f32 %v1204, %v2518
      %v2539 = vmul.f32 %v1207, %v2518
      %v2540 = vmul.f32 %v1208, %v2518
      %v2541 = vmul.f32 %v1211, %v2518
      %v2542 = vmul.f32 %v1212, %v2518
      %v2543 = vmul.f32 %v1215, %v2518
      %v2544 = vmul.f32 %v1216, %v2518
      %v2545 = vmul.f32 %v1219, %v2518
      %v2546 = vmul.f32 %v1220, %v2518
      %v2547 = vmul.f32 %v1223, %v2518
      %v2548 = vmul.f32 %v1224, %v2518
      %v2549 = vmul.f32 %v1227, %v2518
      %v2550 = vmul.f32 %v1228, %v2518
      %v2583 = vrot.slane %v2519, 1
      %v2584 = vrot.slane %v2520, 1
      %v2585 = vsel %vm1405, %v2583, %v2584
      %v2586 = vrot.slane %v2521, 1
      %v2587 = vrot.slane %v2522, 1
      %v2588 = vsel %vm1405, %v2586, %v2587
      %v2589 = vrot.slane %v2523, 1
      %v2590 = vrot.slane %v2524, 1
      %v2591 = vsel %vm1405, %v2589, %v2590
      %v2592 = vrot.slane %v2525, 1
      %v2593 = vrot.slane %v2526, 1
      %v2594 = vsel %vm1405, %v2592, %v2593
      %v2595 = vrot.slane %v2527, 1
      %v2596 = vrot.slane %v2528, 1
      %v2597 = vsel %vm1405, %v2595, %v2596
      %v2598 = vrot.slane %v2529, 1
      %v2599 = vrot.slane %v2530, 1
      %v2600 = vsel %vm1405, %v2598, %v2599
      %v2601 = vrot.slane %v2531, 1
      %v2602 = vrot.slane %v2532, 1
      %v2603 = vsel %vm1405, %v2601, %v2602
      %v2604 = vrot.slane %v2533, 1
      %v2605 = vrot.slane %v2534, 1
      %v2606 = vsel %vm1405, %v2604, %v2605
      %v2607 = vrot.slane %v2535, 1
      %v2608 = vrot.slane %v2536, 1
      %v2609 = vsel %vm1405, %v2607, %v2608
      %v2610 = vrot.slane %v2537, 1
      %v2611 = vrot.slane %v2538, 1
      %v2612 = vsel %vm1405, %v2610, %v2611
      %v2613 = vrot.slane %v2539, 1
      %v2614 = vrot.slane %v2540, 1
      %v2615 = vsel %vm1405, %v2613, %v2614
      %v2616 = vrot.slane %v2541, 1
      %v2617 = vrot.slane %v2542, 1
      %v2618 = vsel %vm1405, %v2616, %v2617
      %v2619 = vrot.slane %v2543, 1
      %v2620 = vrot.slane %v2544, 1
      %v2621 = vsel %vm1405, %v2619, %v2620
      %v2622 = vrot.slane %v2545, 1
      %v2623 = vrot.slane %v2546, 1
      %v2624 = vsel %vm1405, %v2622, %v2623
      %v2625 = vrot.slane %v2547, 1
      %v2626 = vrot.slane %v2548, 1
      %v2627 = vsel %vm1405, %v2625, %v2626
      %v2628 = vrot.slane %v2549, 1
      %v2629 = vrot.slane %v2550, 1
      %v2630 = vsel %vm1405, %v2628, %v2629
      %v2679 = vadd.f32 %v2467, %v2583
      %v2680 = vadd.f32 %v2468, %v2585
      %v2681 = vadd.f32 %v2469, %v2584
      %v2682 = vadd.f32 %v2470, %v2586
      %v2683 = vadd.f32 %v2471, %v2588
      %v2684 = vadd.f32 %v2472, %v2587
      %v2685 = vadd.f32 %v2473, %v2589
      %v2686 = vadd.f32 %v2474, %v2591
      %v2687 = vadd.f32 %v2475, %v2590
      %v2688 = vadd.f32 %v2476, %v2592
      %v2689 = vadd.f32 %v2477, %v2594
      %v2690 = vadd.f32 %v2478, %v2593
      %v2691 = vadd.f32 %v2479, %v2595
      %v2692 = vadd.f32 %v2480, %v2597
      %v2693 = vadd.f32 %v2481, %v2596
      %v2694 = vadd.f32 %v2482, %v2598
      %v2695 = vadd.f32 %v2483, %v2600
      %v2696 = vadd.f32 %v2484, %v2599
      %v2697 = vadd.f32 %v2485, %v2601
      %v2698 = vadd.f32 %v2486, %v2603
      %v2699 = vadd.f32 %v2487, %v2602
      %v2700 = vadd.f32 %v2488, %v2604
      %v2701 = vadd.f32 %v2489, %v2606
      %v2702 = vadd.f32 %v2490, %v2605
      %v2703 = vadd.f32 %v2491, %v2607
      %v2704 = vadd.f32 %v2492, %v2609
      %v2705 = vadd.f32 %v2493, %v2608
      %v2706 = vadd.f32 %v2494, %v2610
      %v2707 = vadd.f32 %v2495, %v2612
      %v2708 = vadd.f32 %v2496, %v2611
      %v2709 = vadd.f32 %v2497, %v2613
      %v2710 = vadd.f32 %v2498, %v2615
      %v2711 = vadd.f32 %v2499, %v2614
      %v2712 = vadd.f32 %v2500, %v2616
      %v2713 = vadd.f32 %v2501, %v2618
      %v2714 = vadd.f32 %v2502, %v2617
      %v2715 = vadd.f32 %v2503, %v2619
      %v2716 = vadd.f32 %v2504, %v2621
      %v2717 = vadd.f32 %v2505, %v2620
      %v2718 = vadd.f32 %v2506, %v2622
      %v2719 = vadd.f32 %v2507, %v2624
      %v2720 = vadd.f32 %v2508, %v2623
      %v2721 = vadd.f32 %v2509, %v2625
      %v2722 = vadd.f32 %v2510, %v2627
      %v2723 = vadd.f32 %v2511, %v2626
      %v2724 = vadd.f32 %v2512, %v2628
      %v2725 = vadd.f32 %v2513, %v2630
      %v2726 = vadd.f32 %v2514, %v2629
      %v2727 = vlaneseq
      %v2728 = vshrl.u32 %v2727, 7
      %v2729 = vsub.s32 2, %v2728
      %v2730 = vrot.slane %v1236, %v2729
      %v2731 = vmul.f32 %v1167, %v2730
      %v2732 = vmul.f32 %v1168, %v2730
      %v2733 = vmul.f32 %v1169, %v2730
      %v2734 = vmul.f32 %v1171, %v2730
      %v2735 = vmul.f32 %v1172, %v2730
      %v2736 = vmul.f32 %v1173, %v2730
      %v2737 = vmul.f32 %v1175, %v2730
      %v2738 = vmul.f32 %v1176, %v2730
      %v2739 = vmul.f32 %v1177, %v2730
      %v2740 = vmul.f32 %v1179, %v2730
      %v2741 = vmul.f32 %v1180, %v2730
      %v2742 = vmul.f32 %v1181, %v2730
      %v2743 = vmul.f32 %v1183, %v2730
      %v2744 = vmul.f32 %v1184, %v2730
      %v2745 = vmul.f32 %v1185, %v2730
      %v2746 = vmul.f32 %v1187, %v2730
      %v2747 = vmul.f32 %v1188, %v2730
      %v2748 = vmul.f32 %v1189, %v2730
      %v2749 = vmul.f32 %v1191, %v2730
      %v2750 = vmul.f32 %v1192, %v2730
      %v2751 = vmul.f32 %v1193, %v2730
      %v2752 = vmul.f32 %v1195, %v2730
      %v2753 = vmul.f32 %v1196, %v2730
      %v2754 = vmul.f32 %v1197, %v2730
      %v2755 = vmul.f32 %v1199, %v2730
      %v2756 = vmul.f32 %v1200, %v2730
      %v2757 = vmul.f32 %v1201, %v2730
      %v2758 = vmul.f32 %v1203, %v2730
      %v2759 = vmul.f32 %v1204, %v2730
      %v2760 = vmul.f32 %v1205, %v2730
      %v2761 = vmul.f32 %v1207, %v2730
      %v2762 = vmul.f32 %v1208, %v2730
      %v2763 = vmul.f32 %v1209, %v2730
      %v2764 = vmul.f32 %v1211, %v2730
      %v2765 = vmul.f32 %v1212, %v2730
      %v2766 = vmul.f32 %v1213, %v2730
      %v2767 = vmul.f32 %v1215, %v2730
      %v2768 = vmul.f32 %v1216, %v2730
      %v2769 = vmul.f32 %v1217, %v2730
      %v2770 = vmul.f32 %v1219, %v2730
      %v2771 = vmul.f32 %v1220, %v2730
      %v2772 = vmul.f32 %v1221, %v2730
      %v2773 = vmul.f32 %v1223, %v2730
      %v2774 = vmul.f32 %v1224, %v2730
      %v2775 = vmul.f32 %v1225, %v2730
      %v2776 = vmul.f32 %v1227, %v2730
      %v2777 = vmul.f32 %v1228, %v2730
      %v2778 = vmul.f32 %v1229, %v2730
      %v2827 = vrot.slane %v2731, 2
      %v2828 = vrot.slane %v2732, 2
      %v2829 = vsel %vm1650, %v2827, %v2828
      %v2830 = vrot.slane %v2733, 2
      %v2831 = vsel %vm1650, %v2828, %v2830
      %v2832 = vrot.slane %v2734, 2
      %v2833 = vrot.slane %v2735, 2
      %v2834 = vsel %vm1650, %v2832, %v2833
      %v2835 = vrot.slane %v2736, 2
      %v2836 = vsel %vm1650, %v2833, %v2835
      %v2837 = vrot.slane %v2737, 2
      %v2838 = vrot.slane %v2738, 2
      %v2839 = vsel %vm1650, %v2837, %v2838
      %v2840 = vrot.slane %v2739, 2
      %v2841 = vsel %vm1650, %v2838, %v2840
      %v2842 = vrot.slane %v2740, 2
      %v2843 = vrot.slane %v2741, 2
      %v2844 = vsel %vm1650, %v2842, %v2843
      %v2845 = vrot.slane %v2742, 2
      %v2846 = vsel %vm1650, %v2843, %v2845
      %v2847 = vrot.slane %v2743, 2
      %v2848 = vrot.slane %v2744, 2
      %v2849 = vsel %vm1650, %v2847, %v2848
      %v2850 = vrot.slane %v2745, 2
      %v2851 = vsel %vm1650, %v2848, %v2850
      %v2852 = vrot.slane %v2746, 2
      %v2853 = vrot.slane %v2747, 2
      %v2854 = vsel %vm1650, %v2852, %v2853
      %v2855 = vrot.slane %v2748, 2
      %v2856 = vsel %vm1650, %v2853, %v2855
      %v2857 = vrot.slane %v2749, 2
      %v2858 = vrot.slane %v2750, 2
      %v2859 = vsel %vm1650, %v2857, %v2858
      %v2860 = vrot.slane %v2751, 2
      %v2861 = vsel %vm1650, %v2858, %v2860
      %v2862 = vrot.slane %v2752, 2
      %v2863 = vrot.slane %v2753, 2
      %v2864 = vsel %vm1650, %v2862, %v2863
      %v2865 = vrot.slane %v2754, 2
      %v2866 = vsel %vm1650, %v2863, %v2865
      %v2867 = vrot.slane %v2755, 2
      %v2868 = vrot.slane %v2756, 2
      %v2869 = vsel %vm1650, %v2867, %v2868
      %v2870 = vrot.slane %v2757, 2
      %v2871 = vsel %vm1650, %v2868, %v2870
      %v2872 = vrot.slane %v2758, 2
      %v2873 = vrot.slane %v2759, 2
      %v2874 = vsel %vm1650, %v2872, %v2873
      %v2875 = vrot.slane %v2760, 2
      %v2876 = vsel %vm1650, %v2873, %v2875
      %v2877 = vrot.slane %v2761, 2
      %v2878 = vrot.slane %v2762, 2
      %v2879 = vsel %vm1650, %v2877, %v2878
      %v2880 = vrot.slane %v2763, 2
      %v2881 = vsel %vm1650, %v2878, %v2880
      %v2882 = vrot.slane %v2764, 2
      %v2883 = vrot.slane %v2765, 2
      %v2884 = vsel %vm1650, %v2882, %v2883
      %v2885 = vrot.slane %v2766, 2
      %v2886 = vsel %vm1650, %v2883, %v2885
      %v2887 = vrot.slane %v2767, 2
      %v2888 = vrot.slane %v2768, 2
      %v2889 = vsel %vm1650, %v2887, %v2888
      %v2890 = vrot.slane %v2769, 2
      %v2891 = vsel %vm1650, %v2888, %v2890
      %v2892 = vrot.slane %v2770, 2
      %v2893 = vrot.slane %v2771, 2
      %v2894 = vsel %vm1650, %v2892, %v2893
      %v2895 = vrot.slane %v2772, 2
      %v2896 = vsel %vm1650, %v2893, %v2895
      %v2897 = vrot.slane %v2773, 2
      %v2898 = vrot.slane %v2774, 2
      %v2899 = vsel %vm1650, %v2897, %v2898
      %v2900 = vrot.slane %v2775, 2
      %v2901 = vsel %vm1650, %v2898, %v2900
      %v2902 = vrot.slane %v2776, 2
      %v2903 = vrot.slane %v2777, 2
      %v2904 = vsel %vm1650, %v2902, %v2903
      %v2905 = vrot.slane %v2778, 2
      %v2906 = vsel %vm1650, %v2903, %v2905
      %v2955 = vadd.f32 %v2679, %v2827
      %v2956 = vadd.f32 %v2680, %v2829
      %v2957 = vadd.f32 %v2681, %v2831
      %v2958 = vadd.f32 %v2682, %v2832
      %v2959 = vadd.f32 %v2683, %v2834
      %v2960 = vadd.f32 %v2684, %v2836
      %v2961 = vadd.f32 %v2685, %v2837
      %v2962 = vadd.f32 %v2686, %v2839
      %v2963 = vadd.f32 %v2687, %v2841
      %v2964 = vadd.f32 %v2688, %v2842
      %v2965 = vadd.f32 %v2689, %v2844
      %v2966 = vadd.f32 %v2690, %v2846
      %v2967 = vadd.f32 %v2691, %v2847
      %v2968 = vadd.f32 %v2692, %v2849
      %v2969 = vadd.f32 %v2693, %v2851
      %v2970 = vadd.f32 %v2694, %v2852
      %v2971 = vadd.f32 %v2695, %v2854
      %v2972 = vadd.f32 %v2696, %v2856
      %v2973 = vadd.f32 %v2697, %v2857
      %v2974 = vadd.f32 %v2698, %v2859
      %v2975 = vadd.f32 %v2699, %v2861
      %v2976 = vadd.f32 %v2700, %v2862
      %v2977 = vadd.f32 %v2701, %v2864
      %v2978 = vadd.f32 %v2702, %v2866
      %v2979 = vadd.f32 %v2703, %v2867
      %v2980 = vadd.f32 %v2704, %v2869
      %v2981 = vadd.f32 %v2705, %v2871
      %v2982 = vadd.f32 %v2706, %v2872
      %v2983 = vadd.f32 %v2707, %v2874
      %v2984 = vadd.f32 %v2708, %v2876
      %v2985 = vadd.f32 %v2709, %v2877
      %v2986 = vadd.f32 %v2710, %v2879
      %v2987 = vadd.f32 %v2711, %v2881
      %v2988 = vadd.f32 %v2712, %v2882
      %v2989 = vadd.f32 %v2713, %v2884
      %v2990 = vadd.f32 %v2714, %v2886
      %v2991 = vadd.f32 %v2715, %v2887
      %v2992 = vadd.f32 %v2716, %v2889
      %v2993 = vadd.f32 %v2717, %v2891
      %v2994 = vadd.f32 %v2718, %v2892
      %v2995 = vadd.f32 %v2719, %v2894
      %v2996 = vadd.f32 %v2720, %v2896
      %v2997 = vadd.f32 %v2721, %v2897
      %v2998 = vadd.f32 %v2722, %v2899
      %v2999 = vadd.f32 %v2723, %v2901
      %v3000 = vadd.f32 %v2724, %v2902
      %v3001 = vadd.f32 %v2725, %v2904
      %v3002 = vadd.f32 %v2726, %v2906
      %v3003 = vld [vmem:[%s6] sm:$0x1]
      %v3005 = vlaneseq
      %v3006 = vshrl.u32 %v3005, 7
      %v3007 = vsub.s32 0, %v3006
      %v3008 = vrot.slane %v3003, %v3007
      %v3010 = vmul.f32 %v2955, %v3008
      %v3011 = vmul.f32 %v2956, %v3008
      %v3012 = vmul.f32 %v2957, %v3008
      %v3013 = vmul.f32 %v2958, %v3008
      %v3014 = vmul.f32 %v2959, %v3008
      %v3015 = vmul.f32 %v2960, %v3008
      %v3016 = vmul.f32 %v2961, %v3008
      %v3017 = vmul.f32 %v2962, %v3008
      %v3018 = vmul.f32 %v2963, %v3008
      %v3019 = vmul.f32 %v2964, %v3008
      %v3020 = vmul.f32 %v2965, %v3008
      %v3021 = vmul.f32 %v2966, %v3008
      %v3022 = vmul.f32 %v2967, %v3008
      %v3023 = vmul.f32 %v2968, %v3008
      %v3024 = vmul.f32 %v2969, %v3008
      %v3025 = vmul.f32 %v2970, %v3008
      %v3026 = vmul.f32 %v2971, %v3008
      %v3027 = vmul.f32 %v2972, %v3008
      %v3028 = vmul.f32 %v2973, %v3008
      %v3029 = vmul.f32 %v2974, %v3008
      %v3030 = vmul.f32 %v2975, %v3008
      %v3031 = vmul.f32 %v2976, %v3008
      %v3032 = vmul.f32 %v2977, %v3008
      %v3033 = vmul.f32 %v2978, %v3008
      %v3034 = vmul.f32 %v2979, %v3008
      %v3035 = vmul.f32 %v2980, %v3008
      %v3036 = vmul.f32 %v2981, %v3008
      %v3037 = vmul.f32 %v2982, %v3008
      %v3038 = vmul.f32 %v2983, %v3008
      %v3039 = vmul.f32 %v2984, %v3008
      %v3040 = vmul.f32 %v2985, %v3008
      %v3041 = vmul.f32 %v2986, %v3008
      %v3042 = vmul.f32 %v2987, %v3008
      %v3043 = vmul.f32 %v2988, %v3008
      %v3044 = vmul.f32 %v2989, %v3008
      %v3045 = vmul.f32 %v2990, %v3008
      %v3046 = vmul.f32 %v2991, %v3008
      %v3047 = vmul.f32 %v2992, %v3008
      %v3048 = vmul.f32 %v2993, %v3008
      %v3049 = vmul.f32 %v2994, %v3008
      %v3050 = vmul.f32 %v2995, %v3008
      %v3051 = vmul.f32 %v2996, %v3008
      %v3052 = vmul.f32 %v2997, %v3008
      %v3053 = vmul.f32 %v2998, %v3008
      %v3054 = vmul.f32 %v2999, %v3008
      %v3055 = vmul.f32 %v3000, %v3008
      %v3056 = vmul.f32 %v3001, %v3008
      %v3057 = vmul.f32 %v3002, %v3008
      %v3058 = vld [vmem:[%s7] sm:$0x1]
      %v3060 = vlaneseq
      %v3061 = vshrl.u32 %v3060, 7
      %v3062 = vsub.s32 0, %v3061
      %v3063 = vrot.slane %v3058, %v3062
      %v3065 = vadd.f32 %v3010, %v3063
      %v3066 = vadd.f32 %v3011, %v3063
      %v3067 = vadd.f32 %v3012, %v3063
      %v3068 = vadd.f32 %v3013, %v3063
      %v3069 = vadd.f32 %v3014, %v3063
      %v3070 = vadd.f32 %v3015, %v3063
      %v3071 = vadd.f32 %v3016, %v3063
      %v3072 = vadd.f32 %v3017, %v3063
      %v3073 = vadd.f32 %v3018, %v3063
      %v3074 = vadd.f32 %v3019, %v3063
      %v3075 = vadd.f32 %v3020, %v3063
      %v3076 = vadd.f32 %v3021, %v3063
      %v3077 = vadd.f32 %v3022, %v3063
      %v3078 = vadd.f32 %v3023, %v3063
      %v3079 = vadd.f32 %v3024, %v3063
      %v3080 = vadd.f32 %v3025, %v3063
      %v3081 = vadd.f32 %v3026, %v3063
      %v3082 = vadd.f32 %v3027, %v3063
      %v3083 = vadd.f32 %v3028, %v3063
      %v3084 = vadd.f32 %v3029, %v3063
      %v3085 = vadd.f32 %v3030, %v3063
      %v3086 = vadd.f32 %v3031, %v3063
      %v3087 = vadd.f32 %v3032, %v3063
      %v3088 = vadd.f32 %v3033, %v3063
      %v3089 = vadd.f32 %v3034, %v3063
      %v3090 = vadd.f32 %v3035, %v3063
      %v3091 = vadd.f32 %v3036, %v3063
      %v3092 = vadd.f32 %v3037, %v3063
      %v3093 = vadd.f32 %v3038, %v3063
      %v3094 = vadd.f32 %v3039, %v3063
      %v3095 = vadd.f32 %v3040, %v3063
      %v3096 = vadd.f32 %v3041, %v3063
      %v3097 = vadd.f32 %v3042, %v3063
      %v3098 = vadd.f32 %v3043, %v3063
      %v3099 = vadd.f32 %v3044, %v3063
      %v3100 = vadd.f32 %v3045, %v3063
      %v3101 = vadd.f32 %v3046, %v3063
      %v3102 = vadd.f32 %v3047, %v3063
      %v3103 = vadd.f32 %v3048, %v3063
      %v3104 = vadd.f32 %v3049, %v3063
      %v3105 = vadd.f32 %v3050, %v3063
      %v3106 = vadd.f32 %v3051, %v3063
      %v3107 = vadd.f32 %v3052, %v3063
      %v3108 = vadd.f32 %v3053, %v3063
      %v3109 = vadd.f32 %v3054, %v3063
      %v3110 = vadd.f32 %v3055, %v3063
      %v3111 = vadd.f32 %v3056, %v3063
      %v3112 = vadd.f32 %v3057, %v3063
      %v3113 = vmax.f32 %v3065, 0.0
      %v3114 = vmax.f32 %v3066, 0.0
      %v3115 = vmax.f32 %v3067, 0.0
      %v3116 = vmax.f32 %v3068, 0.0
      %v3117 = vmax.f32 %v3069, 0.0
      %v3118 = vmax.f32 %v3070, 0.0
      %v3119 = vmax.f32 %v3071, 0.0
      %v3120 = vmax.f32 %v3072, 0.0
      %v3121 = vmax.f32 %v3073, 0.0
      %v3122 = vmax.f32 %v3074, 0.0
      %v3123 = vmax.f32 %v3075, 0.0
      %v3124 = vmax.f32 %v3076, 0.0
      %v3125 = vmax.f32 %v3077, 0.0
      %v3126 = vmax.f32 %v3078, 0.0
      %v3127 = vmax.f32 %v3079, 0.0
      %v3128 = vmax.f32 %v3080, 0.0
      %v3129 = vmax.f32 %v3081, 0.0
      %v3130 = vmax.f32 %v3082, 0.0
      %v3131 = vmax.f32 %v3083, 0.0
      %v3132 = vmax.f32 %v3084, 0.0
      %v3133 = vmax.f32 %v3085, 0.0
      %v3134 = vmax.f32 %v3086, 0.0
      %v3135 = vmax.f32 %v3087, 0.0
      %v3136 = vmax.f32 %v3088, 0.0
      %v3137 = vmax.f32 %v3089, 0.0
      %v3138 = vmax.f32 %v3090, 0.0
      %v3139 = vmax.f32 %v3091, 0.0
      %v3140 = vmax.f32 %v3092, 0.0
      %v3141 = vmax.f32 %v3093, 0.0
      %v3142 = vmax.f32 %v3094, 0.0
      %v3143 = vmax.f32 %v3095, 0.0
      %v3144 = vmax.f32 %v3096, 0.0
      %v3145 = vmax.f32 %v3097, 0.0
      %v3146 = vmax.f32 %v3098, 0.0
      %v3147 = vmax.f32 %v3099, 0.0
      %v3148 = vmax.f32 %v3100, 0.0
      %v3149 = vmax.f32 %v3101, 0.0
      %v3150 = vmax.f32 %v3102, 0.0
      %v3151 = vmax.f32 %v3103, 0.0
      %v3152 = vmax.f32 %v3104, 0.0
      %v3153 = vmax.f32 %v3105, 0.0
      %v3154 = vmax.f32 %v3106, 0.0
      %v3155 = vmax.f32 %v3107, 0.0
      %v3156 = vmax.f32 %v3108, 0.0
      %v3157 = vmax.f32 %v3109, 0.0
      %v3158 = vmax.f32 %v3110, 0.0
      %v3159 = vmax.f32 %v3111, 0.0
      %v3160 = vmax.f32 %v3112, 0.0
      %v3161 = vmin.f32 %v3113, 6.0
      %v3162 = vmin.f32 %v3114, 6.0
      %v3163 = vmin.f32 %v3115, 6.0
      %v3164 = vmin.f32 %v3116, 6.0
      %v3165 = vmin.f32 %v3117, 6.0
      %v3166 = vmin.f32 %v3118, 6.0
      %v3167 = vmin.f32 %v3119, 6.0
      %v3168 = vmin.f32 %v3120, 6.0
      %v3169 = vmin.f32 %v3121, 6.0
      %v3170 = vmin.f32 %v3122, 6.0
      %v3171 = vmin.f32 %v3123, 6.0
      %v3172 = vmin.f32 %v3124, 6.0
      %v3173 = vmin.f32 %v3125, 6.0
      %v3174 = vmin.f32 %v3126, 6.0
      %v3175 = vmin.f32 %v3127, 6.0
      %v3176 = vmin.f32 %v3128, 6.0
      %v3177 = vmin.f32 %v3129, 6.0
      %v3178 = vmin.f32 %v3130, 6.0
      %v3179 = vmin.f32 %v3131, 6.0
      %v3180 = vmin.f32 %v3132, 6.0
      %v3181 = vmin.f32 %v3133, 6.0
      %v3182 = vmin.f32 %v3134, 6.0
      %v3183 = vmin.f32 %v3135, 6.0
      %v3184 = vmin.f32 %v3136, 6.0
      %v3185 = vmin.f32 %v3137, 6.0
      %v3186 = vmin.f32 %v3138, 6.0
      %v3187 = vmin.f32 %v3139, 6.0
      %v3188 = vmin.f32 %v3140, 6.0
      %v3189 = vmin.f32 %v3141, 6.0
      %v3190 = vmin.f32 %v3142, 6.0
      %v3191 = vmin.f32 %v3143, 6.0
      %v3192 = vmin.f32 %v3144, 6.0
      %v3193 = vmin.f32 %v3145, 6.0
      %v3194 = vmin.f32 %v3146, 6.0
      %v3195 = vmin.f32 %v3147, 6.0
      %v3196 = vmin.f32 %v3148, 6.0
      %v3197 = vmin.f32 %v3149, 6.0
      %v3198 = vmin.f32 %v3150, 6.0
      %v3199 = vmin.f32 %v3151, 6.0
      %v3200 = vmin.f32 %v3152, 6.0
      %v3201 = vmin.f32 %v3153, 6.0
      %v3202 = vmin.f32 %v3154, 6.0
      %v3203 = vmin.f32 %v3155, 6.0
      %v3204 = vmin.f32 %v3156, 6.0
      %v3205 = vmin.f32 %v3157, 6.0
      %v3206 = vmin.f32 %v3158, 6.0
      %v3207 = vmin.f32 %v3159, 6.0
      %v3208 = vmin.f32 %v3160, 6.0
      %vm3209 = vcmask 64519
      %3210 = vst.msk [vmem:[#allocation3 - $0x7] sm:$0x80] %vm3209, %v3161
      %3211 = vst.msk [vmem:[#allocation3 + $0x1] sm:$0xff] %vm528, %v3162
      %vm3212 = vcmask 63488
      %3213 = vst.msk [vmem:[#allocation3 + $0x9] sm:$0x7f] %vm3212, %v3163
      %3214 = vst.msk [vmem:[#allocation3 + $0x9] sm:$0x80] %vm3209, %v3164
      %3215 = vst.msk [vmem:[#allocation3 + $0x11] sm:$0xff] %vm528, %v3165
      %3216 = vst.msk [vmem:[#allocation3 + $0x19] sm:$0x7f] %vm3212, %v3166
      %3217 = vst.msk [vmem:[#allocation3 + $0x19] sm:$0x80] %vm3209, %v3167
      %3218 = vst.msk [vmem:[#allocation3 + $0x21] sm:$0xff] %vm528, %v3168
      %3219 = vst.msk [vmem:[#allocation3 + $0x29] sm:$0x7f] %vm3212, %v3169
      %3220 = vst.msk [vmem:[#allocation3 + $0x29] sm:$0x80] %vm3209, %v3170
      %3221 = vst.msk [vmem:[#allocation3 + $0x31] sm:$0xff] %vm528, %v3171
      %3222 = vst.msk [vmem:[#allocation3 + $0x39] sm:$0x7f] %vm3212, %v3172
      %3223 = vst.msk [vmem:[#allocation3 + $0x39] sm:$0x80] %vm3209, %v3173
      %3224 = vst.msk [vmem:[#allocation3 + $0x41] sm:$0xff] %vm528, %v3174
      %3225 = vst.msk [vmem:[#allocation3 + $0x49] sm:$0x7f] %vm3212, %v3175
      %3226 = vst.msk [vmem:[#allocation3 + $0x49] sm:$0x80] %vm3209, %v3176
      %3227 = vst.msk [vmem:[#allocation3 + $0x51] sm:$0xff] %vm528, %v3177
      %3228 = vst.msk [vmem:[#allocation3 + $0x59] sm:$0x7f] %vm3212, %v3178
      %3229 = vst.msk [vmem:[#allocation3 + $0x59] sm:$0x80] %vm3209, %v3179
      %3230 = vst.msk [vmem:[#allocation3 + $0x61] sm:$0xff] %vm528, %v3180
      %3231 = vst.msk [vmem:[#allocation3 + $0x69] sm:$0x7f] %vm3212, %v3181
      %3232 = vst.msk [vmem:[#allocation3 + $0x69] sm:$0x80] %vm3209, %v3182
      %3233 = vst.msk [vmem:[#allocation3 + $0x71] sm:$0xff] %vm528, %v3183
      %3234 = vst.msk [vmem:[#allocation3 + $0x79] sm:$0x7f] %vm3212, %v3184
      %3235 = vst.msk [vmem:[#allocation3 + $0x79] sm:$0x80] %vm3209, %v3185
      %3236 = vst.msk [vmem:[#allocation3 + $0x81] sm:$0xff] %vm528, %v3186
      %3237 = vst.msk [vmem:[#allocation3 + $0x89] sm:$0x7f] %vm3212, %v3187
      %3238 = vst.msk [vmem:[#allocation3 + $0x89] sm:$0x80] %vm3209, %v3188
      %3239 = vst.msk [vmem:[#allocation3 + $0x91] sm:$0xff] %vm528, %v3189
      %3240 = vst.msk [vmem:[#allocation3 + $0x99] sm:$0x7f] %vm3212, %v3190
      %3241 = vst.msk [vmem:[#allocation3 + $0x99] sm:$0x80] %vm3209, %v3191
      %3242 = vst.msk [vmem:[#allocation3 + $0xa1] sm:$0xff] %vm528, %v3192
      %3243 = vst.msk [vmem:[#allocation3 + $0xa9] sm:$0x7f] %vm3212, %v3193
      %3244 = vst.msk [vmem:[#allocation3 + $0xa9] sm:$0x80] %vm3209, %v3194
      %3245 = vst.msk [vmem:[#allocation3 + $0xb1] sm:$0xff] %vm528, %v3195
      %3246 = vst.msk [vmem:[#allocation3 + $0xb9] sm:$0x7f] %vm3212, %v3196
      %3247 = vst.msk [vmem:[#allocation3 + $0xb9] sm:$0x80] %vm3209, %v3197
      %3248 = vst.msk [vmem:[#allocation3 + $0xc1] sm:$0xff] %vm528, %v3198
      %3249 = vst.msk [vmem:[#allocation3 + $0xc9] sm:$0x7f] %vm3212, %v3199
      %3250 = vst.msk [vmem:[#allocation3 + $0xc9] sm:$0x80] %vm3209, %v3200
      %3251 = vst.msk [vmem:[#allocation3 + $0xd1] sm:$0xff] %vm528, %v3201
      %3252 = vst.msk [vmem:[#allocation3 + $0xd9] sm:$0x7f] %vm3212, %v3202
      %3253 = vst.msk [vmem:[#allocation3 + $0xd9] sm:$0x80] %vm3209, %v3203
      %3254 = vst.msk [vmem:[#allocation3 + $0xe1] sm:$0xff] %vm528, %v3204
      %3255 = vst.msk [vmem:[#allocation3 + $0xe9] sm:$0x7f] %vm3212, %v3205
      %3256 = vst.msk [vmem:[#allocation3 + $0xe9] sm:$0x80] %vm3209, %v3206
      %3257 = vst.msk [vmem:[#allocation3 + $0xf1] sm:$0xff] %vm528, %v3207
      %3258 = vst.msk [vmem:[#allocation3 + $0xf9] sm:$0x7f] %vm3212, %v3208
      %v3259 = vld [vmem:[%s5] sm:$0x1f]
      %v3260 = vld [vmem:[%s5 + $0x8] sm:$0x1f]
      %v3261 = vld [vmem:[%s5 + $0x10] sm:$0x1f]
      %v3262 = vld [vmem:[%s5 + $0x18] sm:$0x1f]
      %v3263 = vld [vmem:[%s5 + $0x20] sm:$0x1f]
      %v3264 = vlaneseq
      %v3265 = vshrl.u32 %v3264, 7
      %v3266 = vsub.s32 0, %v3265
      %v3267 = vrot.slane %v3259, %v3266
      %3269 = vrot.lane.b32.xlu0 %v3267, 8
      %v3270 = vpop.permute.xlu0 %3269
      %v3272 = vmul.f32 %v1154, %v3270
      %v3273 = vmul.f32 %v1155, %v3270
      %v3274 = vmul.f32 %v1156, %v3270
      %v3275 = vmul.f32 %v1158, %v3270
      %v3276 = vmul.f32 %v1159, %v3270
      %v3277 = vmul.f32 %v1160, %v3270
      %v3278 = vmul.f32 %v1162, %v3270
      %v3279 = vmul.f32 %v1163, %v3270
      %v3280 = vmul.f32 %v1164, %v3270
      %v3281 = vmul.f32 %v1166, %v3270
      %v3282 = vmul.f32 %v1167, %v3270
      %v3283 = vmul.f32 %v1168, %v3270
      %v3284 = vmul.f32 %v1170, %v3270
      %v3285 = vmul.f32 %v1171, %v3270
      %v3286 = vmul.f32 %v1172, %v3270
      %v3287 = vmul.f32 %v1174, %v3270
      %v3288 = vmul.f32 %v1175, %v3270
      %v3289 = vmul.f32 %v1176, %v3270
      %v3290 = vmul.f32 %v1178, %v3270
      %v3291 = vmul.f32 %v1179, %v3270
      %v3292 = vmul.f32 %v1180, %v3270
      %v3293 = vmul.f32 %v1182, %v3270
      %v3294 = vmul.f32 %v1183, %v3270
      %v3295 = vmul.f32 %v1184, %v3270
      %v3296 = vmul.f32 %v1186, %v3270
      %v3297 = vmul.f32 %v1187, %v3270
      %v3298 = vmul.f32 %v1188, %v3270
      %v3299 = vmul.f32 %v1190, %v3270
      %v3300 = vmul.f32 %v1191, %v3270
      %v3301 = vmul.f32 %v1192, %v3270
      %v3302 = vmul.f32 %v1194, %v3270
      %v3303 = vmul.f32 %v1195, %v3270
      %v3304 = vmul.f32 %v1196, %v3270
      %v3305 = vmul.f32 %v1198, %v3270
      %v3306 = vmul.f32 %v1199, %v3270
      %v3307 = vmul.f32 %v1200, %v3270
      %v3308 = vmul.f32 %v1202, %v3270
      %v3309 = vmul.f32 %v1203, %v3270
      %v3310 = vmul.f32 %v1204, %v3270
      %v3311 = vmul.f32 %v1206, %v3270
      %v3312 = vmul.f32 %v1207, %v3270
      %v3313 = vmul.f32 %v1208, %v3270
      %v3314 = vmul.f32 %v1210, %v3270
      %v3315 = vmul.f32 %v1211, %v3270
      %v3316 = vmul.f32 %v1212, %v3270
      %v3317 = vmul.f32 %v1214, %v3270
      %v3318 = vmul.f32 %v1215, %v3270
      %v3319 = vmul.f32 %v1216, %v3270
      %v3320 = vadd.f32 %v3272, 0.0
      %v3321 = vadd.f32 %v3273, 0.0
      %v3322 = vadd.f32 %v3274, 0.0
      %v3323 = vadd.f32 %v3275, 0.0
      %v3324 = vadd.f32 %v3276, 0.0
      %v3325 = vadd.f32 %v3277, 0.0
      %v3326 = vadd.f32 %v3278, 0.0
      %v3327 = vadd.f32 %v3279, 0.0
      %v3328 = vadd.f32 %v3280, 0.0
      %v3329 = vadd.f32 %v3281, 0.0
      %v3330 = vadd.f32 %v3282, 0.0
      %v3331 = vadd.f32 %v3283, 0.0
      %v3332 = vadd.f32 %v3284, 0.0
      %v3333 = vadd.f32 %v3285, 0.0
      %v3334 = vadd.f32 %v3286, 0.0
      %v3335 = vadd.f32 %v3287, 0.0
      %v3336 = vadd.f32 %v3288, 0.0
      %v3337 = vadd.f32 %v3289, 0.0
      %v3338 = vadd.f32 %v3290, 0.0
      %v3339 = vadd.f32 %v3291, 0.0
      %v3340 = vadd.f32 %v3292, 0.0
      %v3341 = vadd.f32 %v3293, 0.0
      %v3342 = vadd.f32 %v3294, 0.0
      %v3343 = vadd.f32 %v3295, 0.0
      %v3344 = vadd.f32 %v3296, 0.0
      %v3345 = vadd.f32 %v3297, 0.0
      %v3346 = vadd.f32 %v3298, 0.0
      %v3347 = vadd.f32 %v3299, 0.0
      %v3348 = vadd.f32 %v3300, 0.0
      %v3349 = vadd.f32 %v3301, 0.0
      %v3350 = vadd.f32 %v3302, 0.0
      %v3351 = vadd.f32 %v3303, 0.0
      %v3352 = vadd.f32 %v3304, 0.0
      %v3353 = vadd.f32 %v3305, 0.0
      %v3354 = vadd.f32 %v3306, 0.0
      %v3355 = vadd.f32 %v3307, 0.0
      %v3356 = vadd.f32 %v3308, 0.0
      %v3357 = vadd.f32 %v3309, 0.0
      %v3358 = vadd.f32 %v3310, 0.0
      %v3359 = vadd.f32 %v3311, 0.0
      %v3360 = vadd.f32 %v3312, 0.0
      %v3361 = vadd.f32 %v3313, 0.0
      %v3362 = vadd.f32 %v3314, 0.0
      %v3363 = vadd.f32 %v3315, 0.0
      %v3364 = vadd.f32 %v3316, 0.0
      %v3365 = vadd.f32 %v3317, 0.0
      %v3366 = vadd.f32 %v3318, 0.0
      %v3367 = vadd.f32 %v3319, 0.0
      %v3368 = vlaneseq
      %v3369 = vshrl.u32 %v3368, 7
      %v3370 = vsub.s32 1, %v3369
      %v3371 = vrot.slane %v3259, %v3370
      %3373 = vrot.lane.b32.xlu0 %v3371, 8
      %v3374 = vpop.permute.xlu0 %3373
      %v3376 = vmul.f32 %v1154, %v3374
      %v3377 = vmul.f32 %v1155, %v3374
      %v3378 = vmul.f32 %v1156, %v3374
      %v3379 = vmul.f32 %v1158, %v3374
      %v3380 = vmul.f32 %v1159, %v3374
      %v3381 = vmul.f32 %v1160, %v3374
      %v3382 = vmul.f32 %v1162, %v3374
      %v3383 = vmul.f32 %v1163, %v3374
      %v3384 = vmul.f32 %v1164, %v3374
      %v3385 = vmul.f32 %v1166, %v3374
      %v3386 = vmul.f32 %v1167, %v3374
      %v3387 = vmul.f32 %v1168, %v3374
      %v3388 = vmul.f32 %v1170, %v3374
      %v3389 = vmul.f32 %v1171, %v3374
      %v3390 = vmul.f32 %v1172, %v3374
      %v3391 = vmul.f32 %v1174, %v3374
      %v3392 = vmul.f32 %v1175, %v3374
      %v3393 = vmul.f32 %v1176, %v3374
      %v3394 = vmul.f32 %v1178, %v3374
      %v3395 = vmul.f32 %v1179, %v3374
      %v3396 = vmul.f32 %v1180, %v3374
      %v3397 = vmul.f32 %v1182, %v3374
      %v3398 = vmul.f32 %v1183, %v3374
      %v3399 = vmul.f32 %v1184, %v3374
      %v3400 = vmul.f32 %v1186, %v3374
      %v3401 = vmul.f32 %v1187, %v3374
      %v3402 = vmul.f32 %v1188, %v3374
      %v3403 = vmul.f32 %v1190, %v3374
      %v3404 = vmul.f32 %v1191, %v3374
      %v3405 = vmul.f32 %v1192, %v3374
      %v3406 = vmul.f32 %v1194, %v3374
      %v3407 = vmul.f32 %v1195, %v3374
      %v3408 = vmul.f32 %v1196, %v3374
      %v3409 = vmul.f32 %v1198, %v3374
      %v3410 = vmul.f32 %v1199, %v3374
      %v3411 = vmul.f32 %v1200, %v3374
      %v3412 = vmul.f32 %v1202, %v3374
      %v3413 = vmul.f32 %v1203, %v3374
      %v3414 = vmul.f32 %v1204, %v3374
      %v3415 = vmul.f32 %v1206, %v3374
      %v3416 = vmul.f32 %v1207, %v3374
      %v3417 = vmul.f32 %v1208, %v3374
      %v3418 = vmul.f32 %v1210, %v3374
      %v3419 = vmul.f32 %v1211, %v3374
      %v3420 = vmul.f32 %v1212, %v3374
      %v3421 = vmul.f32 %v1214, %v3374
      %v3422 = vmul.f32 %v1215, %v3374
      %v3423 = vmul.f32 %v1216, %v3374
      %v3472 = vrot.slane %v3376, 1
      %v3473 = vrot.slane %v3377, 1
      %v3474 = vsel %vm1405, %v3472, %v3473
      %v3475 = vrot.slane %v3378, 1
      %v3476 = vsel %vm1405, %v3473, %v3475
      %v3477 = vrot.slane %v3379, 1
      %v3478 = vrot.slane %v3380, 1
      %v3479 = vsel %vm1405, %v3477, %v3478
      %v3480 = vrot.slane %v3381, 1
      %v3481 = vsel %vm1405, %v3478, %v3480
      %v3482 = vrot.slane %v3382, 1
      %v3483 = vrot.slane %v3383, 1
      %v3484 = vsel %vm1405, %v3482, %v3483
      %v3485 = vrot.slane %v3384, 1
      %v3486 = vsel %vm1405, %v3483, %v3485
      %v3487 = vrot.slane %v3385, 1
      %v3488 = vrot.slane %v3386, 1
      %v3489 = vsel %vm1405, %v3487, %v3488
      %v3490 = vrot.slane %v3387, 1
      %v3491 = vsel %vm1405, %v3488, %v3490
      %v3492 = vrot.slane %v3388, 1
      %v3493 = vrot.slane %v3389, 1
      %v3494 = vsel %vm1405, %v3492, %v3493
      %v3495 = vrot.slane %v3390, 1
      %v3496 = vsel %vm1405, %v3493, %v3495
      %v3497 = vrot.slane %v3391, 1
      %v3498 = vrot.slane %v3392, 1
      %v3499 = vsel %vm1405, %v3497, %v3498
      %v3500 = vrot.slane %v3393, 1
      %v3501 = vsel %vm1405, %v3498, %v3500
      %v3502 = vrot.slane %v3394, 1
      %v3503 = vrot.slane %v3395, 1
      %v3504 = vsel %vm1405, %v3502, %v3503
      %v3505 = vrot.slane %v3396, 1
      %v3506 = vsel %vm1405, %v3503, %v3505
      %v3507 = vrot.slane %v3397, 1
      %v3508 = vrot.slane %v3398, 1
      %v3509 = vsel %vm1405, %v3507, %v3508
      %v3510 = vrot.slane %v3399, 1
      %v3511 = vsel %vm1405, %v3508, %v3510
      %v3512 = vrot.slane %v3400, 1
      %v3513 = vrot.slane %v3401, 1
      %v3514 = vsel %vm1405, %v3512, %v3513
      %v3515 = vrot.slane %v3402, 1
      %v3516 = vsel %vm1405, %v3513, %v3515
      %v3517 = vrot.slane %v3403, 1
      %v3518 = vrot.slane %v3404, 1
      %v3519 = vsel %vm1405, %v3517, %v3518
      %v3520 = vrot.slane %v3405, 1
      %v3521 = vsel %vm1405, %v3518, %v3520
      %v3522 = vrot.slane %v3406, 1
      %v3523 = vrot.slane %v3407, 1
      %v3524 = vsel %vm1405, %v3522, %v3523
      %v3525 = vrot.slane %v3408, 1
      %v3526 = vsel %vm1405, %v3523, %v3525
      %v3527 = vrot.slane %v3409, 1
      %v3528 = vrot.slane %v3410, 1
      %v3529 = vsel %vm1405, %v3527, %v3528
      %v3530 = vrot.slane %v3411, 1
      %v3531 = vsel %vm1405, %v3528, %v3530
      %v3532 = vrot.slane %v3412, 1
      %v3533 = vrot.slane %v3413, 1
      %v3534 = vsel %vm1405, %v3532, %v3533
      %v3535 = vrot.slane %v3414, 1
      %v3536 = vsel %vm1405, %v3533, %v3535
      %v3537 = vrot.slane %v3415, 1
      %v3538 = vrot.slane %v3416, 1
      %v3539 = vsel %vm1405, %v3537, %v3538
      %v3540 = vrot.slane %v3417, 1
      %v3541 = vsel %vm1405, %v3538, %v3540
      %v3542 = vrot.slane %v3418, 1
      %v3543 = vrot.slane %v3419, 1
      %v3544 = vsel %vm1405, %v3542, %v3543
      %v3545 = vrot.slane %v3420, 1
      %v3546 = vsel %vm1405, %v3543, %v3545
      %v3547 = vrot.slane %v3421, 1
      %v3548 = vrot.slane %v3422, 1
      %v3549 = vsel %vm1405, %v3547, %v3548
      %v3550 = vrot.slane %v3423, 1
      %v3551 = vsel %vm1405, %v3548, %v3550
      %v3600 = vadd.f32 %v3320, %v3474
      %v3601 = vadd.f32 %v3321, %v3476
      %v3602 = vadd.f32 %v3322, %v3475
      %v3603 = vadd.f32 %v3323, %v3479
      %v3604 = vadd.f32 %v3324, %v3481
      %v3605 = vadd.f32 %v3325, %v3480
      %v3606 = vadd.f32 %v3326, %v3484
      %v3607 = vadd.f32 %v3327, %v3486
      %v3608 = vadd.f32 %v3328, %v3485
      %v3609 = vadd.f32 %v3329, %v3489
      %v3610 = vadd.f32 %v3330, %v3491
      %v3611 = vadd.f32 %v3331, %v3490
      %v3612 = vadd.f32 %v3332, %v3494
      %v3613 = vadd.f32 %v3333, %v3496
      %v3614 = vadd.f32 %v3334, %v3495
      %v3615 = vadd.f32 %v3335, %v3499
      %v3616 = vadd.f32 %v3336, %v3501
      %v3617 = vadd.f32 %v3337, %v3500
      %v3618 = vadd.f32 %v3338, %v3504
      %v3619 = vadd.f32 %v3339, %v3506
      %v3620 = vadd.f32 %v3340, %v3505
      %v3621 = vadd.f32 %v3341, %v3509
      %v3622 = vadd.f32 %v3342, %v3511
      %v3623 = vadd.f32 %v3343, %v3510
      %v3624 = vadd.f32 %v3344, %v3514
      %v3625 = vadd.f32 %v3345, %v3516
      %v3626 = vadd.f32 %v3346, %v3515
      %v3627 = vadd.f32 %v3347, %v3519
      %v3628 = vadd.f32 %v3348, %v3521
      %v3629 = vadd.f32 %v3349, %v3520
      %v3630 = vadd.f32 %v3350, %v3524
      %v3631 = vadd.f32 %v3351, %v3526
      %v3632 = vadd.f32 %v3352, %v3525
      %v3633 = vadd.f32 %v3353, %v3529
      %v3634 = vadd.f32 %v3354, %v3531
      %v3635 = vadd.f32 %v3355, %v3530
      %v3636 = vadd.f32 %v3356, %v3534
      %v3637 = vadd.f32 %v3357, %v3536
      %v3638 = vadd.f32 %v3358, %v3535
      %v3639 = vadd.f32 %v3359, %v3539
      %v3640 = vadd.f32 %v3360, %v3541
      %v3641 = vadd.f32 %v3361, %v3540
      %v3642 = vadd.f32 %v3362, %v3544
      %v3643 = vadd.f32 %v3363, %v3546
      %v3644 = vadd.f32 %v3364, %v3545
      %v3645 = vadd.f32 %v3365, %v3549
      %v3646 = vadd.f32 %v3366, %v3551
      %v3647 = vadd.f32 %v3367, %v3550
      %v3648 = vlaneseq
      %v3649 = vshrl.u32 %v3648, 7
      %v3650 = vsub.s32 2, %v3649
      %v3651 = vrot.slane %v3259, %v3650
      %3653 = vrot.lane.b32.xlu0 %v3651, 8
      %v3654 = vpop.permute.xlu0 %3653
      %v3656 = vmul.f32 %v1155, %v3654
      %v3657 = vmul.f32 %v1156, %v3654
      %v3658 = vmul.f32 %v1159, %v3654
      %v3659 = vmul.f32 %v1160, %v3654
      %v3660 = vmul.f32 %v1163, %v3654
      %v3661 = vmul.f32 %v1164, %v3654
      %v3662 = vmul.f32 %v1167, %v3654
      %v3663 = vmul.f32 %v1168, %v3654
      %v3664 = vmul.f32 %v1171, %v3654
      %v3665 = vmul.f32 %v1172, %v3654
      %v3666 = vmul.f32 %v1175, %v3654
      %v3667 = vmul.f32 %v1176, %v3654
      %v3668 = vmul.f32 %v1179, %v3654
      %v3669 = vmul.f32 %v1180, %v3654
      %v3670 = vmul.f32 %v1183, %v3654
      %v3671 = vmul.f32 %v1184, %v3654
      %v3672 = vmul.f32 %v1187, %v3654
      %v3673 = vmul.f32 %v1188, %v3654
      %v3674 = vmul.f32 %v1191, %v3654
      %v3675 = vmul.f32 %v1192, %v3654
      %v3676 = vmul.f32 %v1195, %v3654
      %v3677 = vmul.f32 %v1196, %v3654
      %v3678 = vmul.f32 %v1199, %v3654
      %v3679 = vmul.f32 %v1200, %v3654
      %v3680 = vmul.f32 %v1203, %v3654
      %v3681 = vmul.f32 %v1204, %v3654
      %v3682 = vmul.f32 %v1207, %v3654
      %v3683 = vmul.f32 %v1208, %v3654
      %v3684 = vmul.f32 %v1211, %v3654
      %v3685 = vmul.f32 %v1212, %v3654
      %v3686 = vmul.f32 %v1215, %v3654
      %v3687 = vmul.f32 %v1216, %v3654
      %v3720 = vrot.slane %v3656, 2
      %v3721 = vrot.slane %v3657, 2
      %v3722 = vsel %vm1650, %v3720, %v3721
      %v3723 = vrot.slane %v3658, 2
      %v3724 = vrot.slane %v3659, 2
      %v3725 = vsel %vm1650, %v3723, %v3724
      %v3726 = vrot.slane %v3660, 2
      %v3727 = vrot.slane %v3661, 2
      %v3728 = vsel %vm1650, %v3726, %v3727
      %v3729 = vrot.slane %v3662, 2
      %v3730 = vrot.slane %v3663, 2
      %v3731 = vsel %vm1650, %v3729, %v3730
      %v3732 = vrot.slane %v3664, 2
      %v3733 = vrot.slane %v3665, 2
      %v3734 = vsel %vm1650, %v3732, %v3733
      %v3735 = vrot.slane %v3666, 2
      %v3736 = vrot.slane %v3667, 2
      %v3737 = vsel %vm1650, %v3735, %v3736
      %v3738 = vrot.slane %v3668, 2
      %v3739 = vrot.slane %v3669, 2
      %v3740 = vsel %vm1650, %v3738, %v3739
      %v3741 = vrot.slane %v3670, 2
      %v3742 = vrot.slane %v3671, 2
      %v3743 = vsel %vm1650, %v3741, %v3742
      %v3744 = vrot.slane %v3672, 2
      %v3745 = vrot.slane %v3673, 2
      %v3746 = vsel %vm1650, %v3744, %v3745
      %v3747 = vrot.slane %v3674, 2
      %v3748 = vrot.slane %v3675, 2
      %v3749 = vsel %vm1650, %v3747, %v3748
      %v3750 = vrot.slane %v3676, 2
      %v3751 = vrot.slane %v3677, 2
      %v3752 = vsel %vm1650, %v3750, %v3751
      %v3753 = vrot.slane %v3678, 2
      %v3754 = vrot.slane %v3679, 2
      %v3755 = vsel %vm1650, %v3753, %v3754
      %v3756 = vrot.slane %v3680, 2
      %v3757 = vrot.slane %v3681, 2
      %v3758 = vsel %vm1650, %v3756, %v3757
      %v3759 = vrot.slane %v3682, 2
      %v3760 = vrot.slane %v3683, 2
      %v3761 = vsel %vm1650, %v3759, %v3760
      %v3762 = vrot.slane %v3684, 2
      %v3763 = vrot.slane %v3685, 2
      %v3764 = vsel %vm1650, %v3762, %v3763
      %v3765 = vrot.slane %v3686, 2
      %v3766 = vrot.slane %v3687, 2
      %v3767 = vsel %vm1650, %v3765, %v3766
      %v3816 = vadd.f32 %v3600, %v3720
      %v3817 = vadd.f32 %v3601, %v3722
      %v3818 = vadd.f32 %v3602, %v3721
      %v3819 = vadd.f32 %v3603, %v3723
      %v3820 = vadd.f32 %v3604, %v3725
      %v3821 = vadd.f32 %v3605, %v3724
      %v3822 = vadd.f32 %v3606, %v3726
      %v3823 = vadd.f32 %v3607, %v3728
      %v3824 = vadd.f32 %v3608, %v3727
      %v3825 = vadd.f32 %v3609, %v3729
      %v3826 = vadd.f32 %v3610, %v3731
      %v3827 = vadd.f32 %v3611, %v3730
      %v3828 = vadd.f32 %v3612, %v3732
      %v3829 = vadd.f32 %v3613, %v3734
      %v3830 = vadd.f32 %v3614, %v3733
      %v3831 = vadd.f32 %v3615, %v3735
      %v3832 = vadd.f32 %v3616, %v3737
      %v3833 = vadd.f32 %v3617, %v3736
      %v3834 = vadd.f32 %v3618, %v3738
      %v3835 = vadd.f32 %v3619, %v3740
      %v3836 = vadd.f32 %v3620, %v3739
      %v3837 = vadd.f32 %v3621, %v3741
      %v3838 = vadd.f32 %v3622, %v3743
      %v3839 = vadd.f32 %v3623, %v3742
      %v3840 = vadd.f32 %v3624, %v3744
      %v3841 = vadd.f32 %v3625, %v3746
      %v3842 = vadd.f32 %v3626, %v3745
      %v3843 = vadd.f32 %v3627, %v3747
      %v3844 = vadd.f32 %v3628, %v3749
      %v3845 = vadd.f32 %v3629, %v3748
      %v3846 = vadd.f32 %v3630, %v3750
      %v3847 = vadd.f32 %v3631, %v3752
      %v3848 = vadd.f32 %v3632, %v3751
      %v3849 = vadd.f32 %v3633, %v3753
      %v3850 = vadd.f32 %v3634, %v3755
      %v3851 = vadd.f32 %v3635, %v3754
      %v3852 = vadd.f32 %v3636, %v3756
      %v3853 = vadd.f32 %v3637, %v3758
      %v3854 = vadd.f32 %v3638, %v3757
      %v3855 = vadd.f32 %v3639, %v3759
      %v3856 = vadd.f32 %v3640, %v3761
      %v3857 = vadd.f32 %v3641, %v3760
      %v3858 = vadd.f32 %v3642, %v3762
      %v3859 = vadd.f32 %v3643, %v3764
      %v3860 = vadd.f32 %v3644, %v3763
      %v3861 = vadd.f32 %v3645, %v3765
      %v3862 = vadd.f32 %v3646, %v3767
      %v3863 = vadd.f32 %v3647, %v3766
      %v3864 = vlaneseq
      %v3865 = vshrl.u32 %v3864, 7
      %v3866 = vsub.s32 3, %v3865
      %v3867 = vrot.slane %v3259, %v3866
      %3869 = vrot.lane.b32.xlu0 %v3867, 8
      %v3870 = vpop.permute.xlu0 %3869
      %v3872 = vmul.f32 %v1155, %v3870
      %v3873 = vmul.f32 %v1156, %v3870
      %v3874 = vmul.f32 %v1157, %v3870
      %v3875 = vmul.f32 %v1159, %v3870
      %v3876 = vmul.f32 %v1160, %v3870
      %v3877 = vmul.f32 %v1161, %v3870
      %v3878 = vmul.f32 %v1163, %v3870
      %v3879 = vmul.f32 %v1164, %v3870
      %v3880 = vmul.f32 %v1165, %v3870
      %v3881 = vmul.f32 %v1167, %v3870
      %v3882 = vmul.f32 %v1168, %v3870
      %v3883 = vmul.f32 %v1169, %v3870
      %v3884 = vmul.f32 %v1171, %v3870
      %v3885 = vmul.f32 %v1172, %v3870
      %v3886 = vmul.f32 %v1173, %v3870
      %v3887 = vmul.f32 %v1175, %v3870
      %v3888 = vmul.f32 %v1176, %v3870
      %v3889 = vmul.f32 %v1177, %v3870
      %v3890 = vmul.f32 %v1179, %v3870
      %v3891 = vmul.f32 %v1180, %v3870
      %v3892 = vmul.f32 %v1181, %v3870
      %v3893 = vmul.f32 %v1183, %v3870
      %v3894 = vmul.f32 %v1184, %v3870
      %v3895 = vmul.f32 %v1185, %v3870
      %v3896 = vmul.f32 %v1187, %v3870
      %v3897 = vmul.f32 %v1188, %v3870
      %v3898 = vmul.f32 %v1189, %v3870
      %v3899 = vmul.f32 %v1191, %v3870
      %v3900 = vmul.f32 %v1192, %v3870
      %v3901 = vmul.f32 %v1193, %v3870
      %v3902 = vmul.f32 %v1195, %v3870
      %v3903 = vmul.f32 %v1196, %v3870
      %v3904 = vmul.f32 %v1197, %v3870
      %v3905 = vmul.f32 %v1199, %v3870
      %v3906 = vmul.f32 %v1200, %v3870
      %v3907 = vmul.f32 %v1201, %v3870
      %v3908 = vmul.f32 %v1203, %v3870
      %v3909 = vmul.f32 %v1204, %v3870
      %v3910 = vmul.f32 %v1205, %v3870
      %v3911 = vmul.f32 %v1207, %v3870
      %v3912 = vmul.f32 %v1208, %v3870
      %v3913 = vmul.f32 %v1209, %v3870
      %v3914 = vmul.f32 %v1211, %v3870
      %v3915 = vmul.f32 %v1212, %v3870
      %v3916 = vmul.f32 %v1213, %v3870
      %v3917 = vmul.f32 %v1215, %v3870
      %v3918 = vmul.f32 %v1216, %v3870
      %v3919 = vmul.f32 %v1217, %v3870
      %vm3968 = vcmask 1044480
      %v3969 = vrot.slane %v3872, 3
      %v3970 = vrot.slane %v3873, 3
      %v3971 = vsel %vm3968, %v3969, %v3970
      %v3972 = vrot.slane %v3874, 3
      %v3973 = vsel %vm3968, %v3970, %v3972
      %v3974 = vrot.slane %v3875, 3
      %v3975 = vrot.slane %v3876, 3
      %v3976 = vsel %vm3968, %v3974, %v3975
      %v3977 = vrot.slane %v3877, 3
      %v3978 = vsel %vm3968, %v3975, %v3977
      %v3979 = vrot.slane %v3878, 3
      %v3980 = vrot.slane %v3879, 3
      %v3981 = vsel %vm3968, %v3979, %v3980
      %v3982 = vrot.slane %v3880, 3
      %v3983 = vsel %vm3968, %v3980, %v3982
      %v3984 = vrot.slane %v3881, 3
      %v3985 = vrot.slane %v3882, 3
      %v3986 = vsel %vm3968, %v3984, %v3985
      %v3987 = vrot.slane %v3883, 3
      %v3988 = vsel %vm3968, %v3985, %v3987
      %v3989 = vrot.slane %v3884, 3
      %v3990 = vrot.slane %v3885, 3
      %v3991 = vsel %vm3968, %v3989, %v3990
      %v3992 = vrot.slane %v3886, 3
      %v3993 = vsel %vm3968, %v3990, %v3992
      %v3994 = vrot.slane %v3887, 3
      %v3995 = vrot.slane %v3888, 3
      %v3996 = vsel %vm3968, %v3994, %v3995
      %v3997 = vrot.slane %v3889, 3
      %v3998 = vsel %vm3968, %v3995, %v3997
      %v3999 = vrot.slane %v3890, 3
      %v4000 = vrot.slane %v3891, 3
      %v4001 = vsel %vm3968, %v3999, %v4000
      %v4002 = vrot.slane %v3892, 3
      %v4003 = vsel %vm3968, %v4000, %v4002
      %v4004 = vrot.slane %v3893, 3
      %v4005 = vrot.slane %v3894, 3
      %v4006 = vsel %vm3968, %v4004, %v4005
      %v4007 = vrot.slane %v3895, 3
      %v4008 = vsel %vm3968, %v4005, %v4007
      %v4009 = vrot.slane %v3896, 3
      %v4010 = vrot.slane %v3897, 3
      %v4011 = vsel %vm3968, %v4009, %v4010
      %v4012 = vrot.slane %v3898, 3
      %v4013 = vsel %vm3968, %v4010, %v4012
      %v4014 = vrot.slane %v3899, 3
      %v4015 = vrot.slane %v3900, 3
      %v4016 = vsel %vm3968, %v4014, %v4015
      %v4017 = vrot.slane %v3901, 3
      %v4018 = vsel %vm3968, %v4015, %v4017
      %v4019 = vrot.slane %v3902, 3
      %v4020 = vrot.slane %v3903, 3
      %v4021 = vsel %vm3968, %v4019, %v4020
      %v4022 = vrot.slane %v3904, 3
      %v4023 = vsel %vm3968, %v4020, %v4022
      %v4024 = vrot.slane %v3905, 3
      %v4025 = vrot.slane %v3906, 3
      %v4026 = vsel %vm3968, %v4024, %v4025
      %v4027 = vrot.slane %v3907, 3
      %v4028 = vsel %vm3968, %v4025, %v4027
      %v4029 = vrot.slane %v3908, 3
      %v4030 = vrot.slane %v3909, 3
      %v4031 = vsel %vm3968, %v4029, %v4030
      %v4032 = vrot.slane %v3910, 3
      %v4033 = vsel %vm3968, %v4030, %v4032
      %v4034 = vrot.slane %v3911, 3
      %v4035 = vrot.slane %v3912, 3
      %v4036 = vsel %vm3968, %v4034, %v4035
      %v4037 = vrot.slane %v3913, 3
      %v4038 = vsel %vm3968, %v4035, %v4037
      %v4039 = vrot.slane %v3914, 3
      %v4040 = vrot.slane %v3915, 3
      %v4041 = vsel %vm3968, %v4039, %v4040
      %v4042 = vrot.slane %v3916, 3
      %v4043 = vsel %vm3968, %v4040, %v4042
      %v4044 = vrot.slane %v3917, 3
      %v4045 = vrot.slane %v3918, 3
      %v4046 = vsel %vm3968, %v4044, %v4045
      %v4047 = vrot.slane %v3919, 3
      %v4048 = vsel %vm3968, %v4045, %v4047
      %v4097 = vadd.f32 %v3816, %v3969
      %v4098 = vadd.f32 %v3817, %v3971
      %v4099 = vadd.f32 %v3818, %v3973
      %v4100 = vadd.f32 %v3819, %v3974
      %v4101 = vadd.f32 %v3820, %v3976
      %v4102 = vadd.f32 %v3821, %v3978
      %v4103 = vadd.f32 %v3822, %v3979
      %v4104 = vadd.f32 %v3823, %v3981
      %v4105 = vadd.f32 %v3824, %v3983
      %v4106 = vadd.f32 %v3825, %v3984
      %v4107 = vadd.f32 %v3826, %v3986
      %v4108 = vadd.f32 %v3827, %v3988
      %v4109 = vadd.f32 %v3828, %v3989
      %v4110 = vadd.f32 %v3829, %v3991
      %v4111 = vadd.f32 %v3830, %v3993
      %v4112 = vadd.f32 %v3831, %v3994
      %v4113 = vadd.f32 %v3832, %v3996
      %v4114 = vadd.f32 %v3833, %v3998
      %v4115 = vadd.f32 %v3834, %v3999
      %v4116 = vadd.f32 %v3835, %v4001
      %v4117 = vadd.f32 %v3836, %v4003
      %v4118 = vadd.f32 %v3837, %v4004
      %v4119 = vadd.f32 %v3838, %v4006
      %v4120 = vadd.f32 %v3839, %v4008
      %v4121 = vadd.f32 %v3840, %v4009
      %v4122 = vadd.f32 %v3841, %v4011
      %v4123 = vadd.f32 %v3842, %v4013
      %v4124 = vadd.f32 %v3843, %v4014
      %v4125 = vadd.f32 %v3844, %v4016
      %v4126 = vadd.f32 %v3845, %v4018
      %v4127 = vadd.f32 %v3846, %v4019
      %v4128 = vadd.f32 %v3847, %v4021
      %v4129 = vadd.f32 %v3848, %v4023
      %v4130 = vadd.f32 %v3849, %v4024
      %v4131 = vadd.f32 %v3850, %v4026
      %v4132 = vadd.f32 %v3851, %v4028
      %v4133 = vadd.f32 %v3852, %v4029
      %v4134 = vadd.f32 %v3853, %v4031
      %v4135 = vadd.f32 %v3854, %v4033
      %v4136 = vadd.f32 %v3855, %v4034
      %v4137 = vadd.f32 %v3856, %v4036
      %v4138 = vadd.f32 %v3857, %v4038
      %v4139 = vadd.f32 %v3858, %v4039
      %v4140 = vadd.f32 %v3859, %v4041
      %v4141 = vadd.f32 %v3860, %v4043
      %v4142 = vadd.f32 %v3861, %v4044
      %v4143 = vadd.f32 %v3862, %v4046
      %v4144 = vadd.f32 %v3863, %v4048
      %v4145 = vlaneseq
      %v4146 = vshrl.u32 %v4145, 7
      %v4147 = vsub.s32 4, %v4146
      %v4148 = vrot.slane %v3259, %v4147
      %4150 = vrot.lane.b32.xlu0 %v4148, 8
      %v4151 = vpop.permute.xlu0 %4150
      %v4153 = vmul.f32 %v1155, %v4151
      %v4154 = vmul.f32 %v1156, %v4151
      %v4155 = vmul.f32 %v1157, %v4151
      %v4156 = vmul.f32 %v1159, %v4151
      %v4157 = vmul.f32 %v1160, %v4151
      %v4158 = vmul.f32 %v1161, %v4151
      %v4159 = vmul.f32 %v1163, %v4151
      %v4160 = vmul.f32 %v1164, %v4151
      %v4161 = vmul.f32 %v1165, %v4151
      %v4162 = vmul.f32 %v1167, %v4151
      %v4163 = vmul.f32 %v1168, %v4151
      %v4164 = vmul.f32 %v1169, %v4151
      %v4165 = vmul.f32 %v1171, %v4151
      %v4166 = vmul.f32 %v1172, %v4151
      %v4167 = vmul.f32 %v1173, %v4151
      %v4168 = vmul.f32 %v1175, %v4151
      %v4169 = vmul.f32 %v1176, %v4151
      %v4170 = vmul.f32 %v1177, %v4151
      %v4171 = vmul.f32 %v1179, %v4151
      %v4172 = vmul.f32 %v1180, %v4151
      %v4173 = vmul.f32 %v1181, %v4151
      %v4174 = vmul.f32 %v1183, %v4151
      %v4175 = vmul.f32 %v1184, %v4151
      %v4176 = vmul.f32 %v1185, %v4151
      %v4177 = vmul.f32 %v1187, %v4151
      %v4178 = vmul.f32 %v1188, %v4151
      %v4179 = vmul.f32 %v1189, %v4151
      %v4180 = vmul.f32 %v1191, %v4151
      %v4181 = vmul.f32 %v1192, %v4151
      %v4182 = vmul.f32 %v1193, %v4151
      %v4183 = vmul.f32 %v1195, %v4151
      %v4184 = vmul.f32 %v1196, %v4151
      %v4185 = vmul.f32 %v1197, %v4151
      %v4186 = vmul.f32 %v1199, %v4151
      %v4187 = vmul.f32 %v1200, %v4151
      %v4188 = vmul.f32 %v1201, %v4151
      %v4189 = vmul.f32 %v1203, %v4151
      %v4190 = vmul.f32 %v1204, %v4151
      %v4191 = vmul.f32 %v1205, %v4151
      %v4192 = vmul.f32 %v1207, %v4151
      %v4193 = vmul.f32 %v1208, %v4151
      %v4194 = vmul.f32 %v1209, %v4151
      %v4195 = vmul.f32 %v1211, %v4151
      %v4196 = vmul.f32 %v1212, %v4151
      %v4197 = vmul.f32 %v1213, %v4151
      %v4198 = vmul.f32 %v1215, %v4151
      %v4199 = vmul.f32 %v1216, %v4151
      %v4200 = vmul.f32 %v1217, %v4151
      %vm4249 = vcmask 1043456
      %v4250 = vrot.slane %v4153, 4
      %v4251 = vrot.slane %v4154, 4
      %v4252 = vsel %vm4249, %v4250, %v4251
      %v4253 = vrot.slane %v4155, 4
      %v4254 = vsel %vm4249, %v4251, %v4253
      %v4255 = vrot.slane %v4156, 4
      %v4256 = vrot.slane %v4157, 4
      %v4257 = vsel %vm4249, %v4255, %v4256
      %v4258 = vrot.slane %v4158, 4
      %v4259 = vsel %vm4249, %v4256, %v4258
      %v4260 = vrot.slane %v4159, 4
      %v4261 = vrot.slane %v4160, 4
      %v4262 = vsel %vm4249, %v4260, %v4261
      %v4263 = vrot.slane %v4161, 4
      %v4264 = vsel %vm4249, %v4261, %v4263
      %v4265 = vrot.slane %v4162, 4
      %v4266 = vrot.slane %v4163, 4
      %v4267 = vsel %vm4249, %v4265, %v4266
      %v4268 = vrot.slane %v4164, 4
      %v4269 = vsel %vm4249, %v4266, %v4268
      %v4270 = vrot.slane %v4165, 4
      %v4271 = vrot.slane %v4166, 4
      %v4272 = vsel %vm4249, %v4270, %v4271
      %v4273 = vrot.slane %v4167, 4
      %v4274 = vsel %vm4249, %v4271, %v4273
      %v4275 = vrot.slane %v4168, 4
      %v4276 = vrot.slane %v4169, 4
      %v4277 = vsel %vm4249, %v4275, %v4276
      %v4278 = vrot.slane %v4170, 4
      %v4279 = vsel %vm4249, %v4276, %v4278
      %v4280 = vrot.slane %v4171, 4
      %v4281 = vrot.slane %v4172, 4
      %v4282 = vsel %vm4249, %v4280, %v4281
      %v4283 = vrot.slane %v4173, 4
      %v4284 = vsel %vm4249, %v4281, %v4283
      %v4285 = vrot.slane %v4174, 4
      %v4286 = vrot.slane %v4175, 4
      %v4287 = vsel %vm4249, %v4285, %v4286
      %v4288 = vrot.slane %v4176, 4
      %v4289 = vsel %vm4249, %v4286, %v4288
      %v4290 = vrot.slane %v4177, 4
      %v4291 = vrot.slane %v4178, 4
      %v4292 = vsel %vm4249, %v4290, %v4291
      %v4293 = vrot.slane %v4179, 4
      %v4294 = vsel %vm4249, %v4291, %v4293
      %v4295 = vrot.slane %v4180, 4
      %v4296 = vrot.slane %v4181, 4
      %v4297 = vsel %vm4249, %v4295, %v4296
      %v4298 = vrot.slane %v4182, 4
      %v4299 = vsel %vm4249, %v4296, %v4298
      %v4300 = vrot.slane %v4183, 4
      %v4301 = vrot.slane %v4184, 4
      %v4302 = vsel %vm4249, %v4300, %v4301
      %v4303 = vrot.slane %v4185, 4
      %v4304 = vsel %vm4249, %v4301, %v4303
      %v4305 = vrot.slane %v4186, 4
      %v4306 = vrot.slane %v4187, 4
      %v4307 = vsel %vm4249, %v4305, %v4306
      %v4308 = vrot.slane %v4188, 4
      %v4309 = vsel %vm4249, %v4306, %v4308
      %v4310 = vrot.slane %v4189, 4
      %v4311 = vrot.slane %v4190, 4
      %v4312 = vsel %vm4249, %v4310, %v4311
      %v4313 = vrot.slane %v4191, 4
      %v4314 = vsel %vm4249, %v4311, %v4313
      %v4315 = vrot.slane %v4192, 4
      %v4316 = vrot.slane %v4193, 4
      %v4317 = vsel %vm4249, %v4315, %v4316
      %v4318 = vrot.slane %v4194, 4
      %v4319 = vsel %vm4249, %v4316, %v4318
      %v4320 = vrot.slane %v4195, 4
      %v4321 = vrot.slane %v4196, 4
      %v4322 = vsel %vm4249, %v4320, %v4321
      %v4323 = vrot.slane %v4197, 4
      %v4324 = vsel %vm4249, %v4321, %v4323
      %v4325 = vrot.slane %v4198, 4
      %v4326 = vrot.slane %v4199, 4
      %v4327 = vsel %vm4249, %v4325, %v4326
      %v4328 = vrot.slane %v4200, 4
      %v4329 = vsel %vm4249, %v4326, %v4328
      %v4378 = vadd.f32 %v4097, %v4250
      %v4379 = vadd.f32 %v4098, %v4252
      %v4380 = vadd.f32 %v4099, %v4254
      %v4381 = vadd.f32 %v4100, %v4255
      %v4382 = vadd.f32 %v4101, %v4257
      %v4383 = vadd.f32 %v4102, %v4259
      %v4384 = vadd.f32 %v4103, %v4260
      %v4385 = vadd.f32 %v4104, %v4262
      %v4386 = vadd.f32 %v4105, %v4264
      %v4387 = vadd.f32 %v4106, %v4265
      %v4388 = vadd.f32 %v4107, %v4267
      %v4389 = vadd.f32 %v4108, %v4269
      %v4390 = vadd.f32 %v4109, %v4270
      %v4391 = vadd.f32 %v4110, %v4272
      %v4392 = vadd.f32 %v4111, %v4274
      %v4393 = vadd.f32 %v4112, %v4275
      %v4394 = vadd.f32 %v4113, %v4277
      %v4395 = vadd.f32 %v4114, %v4279
      %v4396 = vadd.f32 %v4115, %v4280
      %v4397 = vadd.f32 %v4116, %v4282
      %v4398 = vadd.f32 %v4117, %v4284
      %v4399 = vadd.f32 %v4118, %v4285
      %v4400 = vadd.f32 %v4119, %v4287
      %v4401 = vadd.f32 %v4120, %v4289
      %v4402 = vadd.f32 %v4121, %v4290
      %v4403 = vadd.f32 %v4122, %v4292
      %v4404 = vadd.f32 %v4123, %v4294
      %v4405 = vadd.f32 %v4124, %v4295
      %v4406 = vadd.f32 %v4125, %v4297
      %v4407 = vadd.f32 %v4126, %v4299
      %v4408 = vadd.f32 %v4127, %v4300
      %v4409 = vadd.f32 %v4128, %v4302
      %v4410 = vadd.f32 %v4129, %v4304
      %v4411 = vadd.f32 %v4130, %v4305
      %v4412 = vadd.f32 %v4131, %v4307
      %v4413 = vadd.f32 %v4132, %v4309
      %v4414 = vadd.f32 %v4133, %v4310
      %v4415 = vadd.f32 %v4134, %v4312
      %v4416 = vadd.f32 %v4135, %v4314
      %v4417 = vadd.f32 %v4136, %v4315
      %v4418 = vadd.f32 %v4137, %v4317
      %v4419 = vadd.f32 %v4138, %v4319
      %v4420 = vadd.f32 %v4139, %v4320
      %v4421 = vadd.f32 %v4140, %v4322
      %v4422 = vadd.f32 %v4141, %v4324
      %v4423 = vadd.f32 %v4142, %v4325
      %v4424 = vadd.f32 %v4143, %v4327
      %v4425 = vadd.f32 %v4144, %v4329
      %v4426 = vlaneseq
      %v4427 = vshrl.u32 %v4426, 7
      %v4428 = vsub.s32 0, %v4427
      %v4429 = vrot.slane %v3260, %v4428
      %4431 = vrot.lane.b32.xlu0 %v4429, 8
      %v4432 = vpop.permute.xlu0 %4431
      %v4434 = vmul.f32 %v1158, %v4432
      %v4435 = vmul.f32 %v1159, %v4432
      %v4436 = vmul.f32 %v1160, %v4432
      %v4437 = vmul.f32 %v1162, %v4432
      %v4438 = vmul.f32 %v1163, %v4432
      %v4439 = vmul.f32 %v1164, %v4432
      %v4440 = vmul.f32 %v1166, %v4432
      %v4441 = vmul.f32 %v1167, %v4432
      %v4442 = vmul.f32 %v1168, %v4432
      %v4443 = vmul.f32 %v1170, %v4432
      %v4444 = vmul.f32 %v1171, %v4432
      %v4445 = vmul.f32 %v1172, %v4432
      %v4446 = vmul.f32 %v1174, %v4432
      %v4447 = vmul.f32 %v1175, %v4432
      %v4448 = vmul.f32 %v1176, %v4432
      %v4449 = vmul.f32 %v1178, %v4432
      %v4450 = vmul.f32 %v1179, %v4432
      %v4451 = vmul.f32 %v1180, %v4432
      %v4452 = vmul.f32 %v1182, %v4432
      %v4453 = vmul.f32 %v1183, %v4432
      %v4454 = vmul.f32 %v1184, %v4432
      %v4455 = vmul.f32 %v1186, %v4432
      %v4456 = vmul.f32 %v1187, %v4432
      %v4457 = vmul.f32 %v1188, %v4432
      %v4458 = vmul.f32 %v1190, %v4432
      %v4459 = vmul.f32 %v1191, %v4432
      %v4460 = vmul.f32 %v1192, %v4432
      %v4461 = vmul.f32 %v1194, %v4432
      %v4462 = vmul.f32 %v1195, %v4432
      %v4463 = vmul.f32 %v1196, %v4432
      %v4464 = vmul.f32 %v1198, %v4432
      %v4465 = vmul.f32 %v1199, %v4432
      %v4466 = vmul.f32 %v1200, %v4432
      %v4467 = vmul.f32 %v1202, %v4432
      %v4468 = vmul.f32 %v1203, %v4432
      %v4469 = vmul.f32 %v1204, %v4432
      %v4470 = vmul.f32 %v1206, %v4432
      %v4471 = vmul.f32 %v1207, %v4432
      %v4472 = vmul.f32 %v1208, %v4432
      %v4473 = vmul.f32 %v1210, %v4432
      %v4474 = vmul.f32 %v1211, %v4432
      %v4475 = vmul.f32 %v1212, %v4432
      %v4476 = vmul.f32 %v1214, %v4432
      %v4477 = vmul.f32 %v1215, %v4432
      %v4478 = vmul.f32 %v1216, %v4432
      %v4479 = vmul.f32 %v1218, %v4432
      %v4480 = vmul.f32 %v1219, %v4432
      %v4481 = vmul.f32 %v1220, %v4432
      %v4482 = vadd.f32 %v4378, %v4434
      %v4483 = vadd.f32 %v4379, %v4435
      %v4484 = vadd.f32 %v4380, %v4436
      %v4485 = vadd.f32 %v4381, %v4437
      %v4486 = vadd.f32 %v4382, %v4438
      %v4487 = vadd.f32 %v4383, %v4439
      %v4488 = vadd.f32 %v4384, %v4440
      %v4489 = vadd.f32 %v4385, %v4441
      %v4490 = vadd.f32 %v4386, %v4442
      %v4491 = vadd.f32 %v4387, %v4443
      %v4492 = vadd.f32 %v4388, %v4444
      %v4493 = vadd.f32 %v4389, %v4445
      %v4494 = vadd.f32 %v4390, %v4446
      %v4495 = vadd.f32 %v4391, %v4447
      %v4496 = vadd.f32 %v4392, %v4448
      %v4497 = vadd.f32 %v4393, %v4449
      %v4498 = vadd.f32 %v4394, %v4450
      %v4499 = vadd.f32 %v4395, %v4451
      %v4500 = vadd.f32 %v4396, %v4452
      %v4501 = vadd.f32 %v4397, %v4453
      %v4502 = vadd.f32 %v4398, %v4454
      %v4503 = vadd.f32 %v4399, %v4455
      %v4504 = vadd.f32 %v4400, %v4456
      %v4505 = vadd.f32 %v4401, %v4457
      %v4506 = vadd.f32 %v4402, %v4458
      %v4507 = vadd.f32 %v4403, %v4459
      %v4508 = vadd.f32 %v4404, %v4460
      %v4509 = vadd.f32 %v4405, %v4461
      %v4510 = vadd.f32 %v4406, %v4462
      %v4511 = vadd.f32 %v4407, %v4463
      %v4512 = vadd.f32 %v4408, %v4464
      %v4513 = vadd.f32 %v4409, %v4465
      %v4514 = vadd.f32 %v4410, %v4466
      %v4515 = vadd.f32 %v4411, %v4467
      %v4516 = vadd.f32 %v4412, %v4468
      %v4517 = vadd.f32 %v4413, %v4469
      %v4518 = vadd.f32 %v4414, %v4470
      %v4519 = vadd.f32 %v4415, %v4471
      %v4520 = vadd.f32 %v4416, %v4472
      %v4521 = vadd.f32 %v4417, %v4473
      %v4522 = vadd.f32 %v4418, %v4474
      %v4523 = vadd.f32 %v4419, %v4475
      %v4524 = vadd.f32 %v4420, %v4476
      %v4525 = vadd.f32 %v4421, %v4477
      %v4526 = vadd.f32 %v4422, %v4478
      %v4527 = vadd.f32 %v4423, %v4479
      %v4528 = vadd.f32 %v4424, %v4480
      %v4529 = vadd.f32 %v4425, %v4481
      %v4530 = vlaneseq
      %v4531 = vshrl.u32 %v4530, 7
      %v4532 = vsub.s32 1, %v4531
      %v4533 = vrot.slane %v3260, %v4532
      %4535 = vrot.lane.b32.xlu0 %v4533, 8
      %v4536 = vpop.permute.xlu0 %4535
      %v4538 = vmul.f32 %v1158, %v4536
      %v4539 = vmul.f32 %v1159, %v4536
      %v4540 = vmul.f32 %v1160, %v4536
      %v4541 = vmul.f32 %v1162, %v4536
      %v4542 = vmul.f32 %v1163, %v4536
      %v4543 = vmul.f32 %v1164, %v4536
      %v4544 = vmul.f32 %v1166, %v4536
      %v4545 = vmul.f32 %v1167, %v4536
      %v4546 = vmul.f32 %v1168, %v4536
      %v4547 = vmul.f32 %v1170, %v4536
      %v4548 = vmul.f32 %v1171, %v4536
      %v4549 = vmul.f32 %v1172, %v4536
      %v4550 = vmul.f32 %v1174, %v4536
      %v4551 = vmul.f32 %v1175, %v4536
      %v4552 = vmul.f32 %v1176, %v4536
      %v4553 = vmul.f32 %v1178, %v4536
      %v4554 = vmul.f32 %v1179, %v4536
      %v4555 = vmul.f32 %v1180, %v4536
      %v4556 = vmul.f32 %v1182, %v4536
      %v4557 = vmul.f32 %v1183, %v4536
      %v4558 = vmul.f32 %v1184, %v4536
      %v4559 = vmul.f32 %v1186, %v4536
      %v4560 = vmul.f32 %v1187, %v4536
      %v4561 = vmul.f32 %v1188, %v4536
      %v4562 = vmul.f32 %v1190, %v4536
      %v4563 = vmul.f32 %v1191, %v4536
      %v4564 = vmul.f32 %v1192, %v4536
      %v4565 = vmul.f32 %v1194, %v4536
      %v4566 = vmul.f32 %v1195, %v4536
      %v4567 = vmul.f32 %v1196, %v4536
      %v4568 = vmul.f32 %v1198, %v4536
      %v4569 = vmul.f32 %v1199, %v4536
      %v4570 = vmul.f32 %v1200, %v4536
      %v4571 = vmul.f32 %v1202, %v4536
      %v4572 = vmul.f32 %v1203, %v4536
      %v4573 = vmul.f32 %v1204, %v4536
      %v4574 = vmul.f32 %v1206, %v4536
      %v4575 = vmul.f32 %v1207, %v4536
      %v4576 = vmul.f32 %v1208, %v4536
      %v4577 = vmul.f32 %v1210, %v4536
      %v4578 = vmul.f32 %v1211, %v4536
      %v4579 = vmul.f32 %v1212, %v4536
      %v4580 = vmul.f32 %v1214, %v4536
      %v4581 = vmul.f32 %v1215, %v4536
      %v4582 = vmul.f32 %v1216, %v4536
      %v4583 = vmul.f32 %v1218, %v4536
      %v4584 = vmul.f32 %v1219, %v4536
      %v4585 = vmul.f32 %v1220, %v4536
      %v4634 = vrot.slane %v4538, 1
      %v4635 = vrot.slane %v4539, 1
      %v4636 = vsel %vm1405, %v4634, %v4635
      %v4637 = vrot.slane %v4540, 1
      %v4638 = vsel %vm1405, %v4635, %v4637
      %v4639 = vrot.slane %v4541, 1
      %v4640 = vrot.slane %v4542, 1
      %v4641 = vsel %vm1405, %v4639, %v4640
      %v4642 = vrot.slane %v4543, 1
      %v4643 = vsel %vm1405, %v4640, %v4642
      %v4644 = vrot.slane %v4544, 1
      %v4645 = vrot.slane %v4545, 1
      %v4646 = vsel %vm1405, %v4644, %v4645
      %v4647 = vrot.slane %v4546, 1
      %v4648 = vsel %vm1405, %v4645, %v4647
      %v4649 = vrot.slane %v4547, 1
      %v4650 = vrot.slane %v4548, 1
      %v4651 = vsel %vm1405, %v4649, %v4650
      %v4652 = vrot.slane %v4549, 1
      %v4653 = vsel %vm1405, %v4650, %v4652
      %v4654 = vrot.slane %v4550, 1
      %v4655 = vrot.slane %v4551, 1
      %v4656 = vsel %vm1405, %v4654, %v4655
      %v4657 = vrot.slane %v4552, 1
      %v4658 = vsel %vm1405, %v4655, %v4657
      %v4659 = vrot.slane %v4553, 1
      %v4660 = vrot.slane %v4554, 1
      %v4661 = vsel %vm1405, %v4659, %v4660
      %v4662 = vrot.slane %v4555, 1
      %v4663 = vsel %vm1405, %v4660, %v4662
      %v4664 = vrot.slane %v4556, 1
      %v4665 = vrot.slane %v4557, 1
      %v4666 = vsel %vm1405, %v4664, %v4665
      %v4667 = vrot.slane %v4558, 1
      %v4668 = vsel %vm1405, %v4665, %v4667
      %v4669 = vrot.slane %v4559, 1
      %v4670 = vrot.slane %v4560, 1
      %v4671 = vsel %vm1405, %v4669, %v4670
      %v4672 = vrot.slane %v4561, 1
      %v4673 = vsel %vm1405, %v4670, %v4672
      %v4674 = vrot.slane %v4562, 1
      %v4675 = vrot.slane %v4563, 1
      %v4676 = vsel %vm1405, %v4674, %v4675
      %v4677 = vrot.slane %v4564, 1
      %v4678 = vsel %vm1405, %v4675, %v4677
      %v4679 = vrot.slane %v4565, 1
      %v4680 = vrot.slane %v4566, 1
      %v4681 = vsel %vm1405, %v4679, %v4680
      %v4682 = vrot.slane %v4567, 1
      %v4683 = vsel %vm1405, %v4680, %v4682
      %v4684 = vrot.slane %v4568, 1
      %v4685 = vrot.slane %v4569, 1
      %v4686 = vsel %vm1405, %v4684, %v4685
      %v4687 = vrot.slane %v4570, 1
      %v4688 = vsel %vm1405, %v4685, %v4687
      %v4689 = vrot.slane %v4571, 1
      %v4690 = vrot.slane %v4572, 1
      %v4691 = vsel %vm1405, %v4689, %v4690
      %v4692 = vrot.slane %v4573, 1
      %v4693 = vsel %vm1405, %v4690, %v4692
      %v4694 = vrot.slane %v4574, 1
      %v4695 = vrot.slane %v4575, 1
      %v4696 = vsel %vm1405, %v4694, %v4695
      %v4697 = vrot.slane %v4576, 1
      %v4698 = vsel %vm1405, %v4695, %v4697
      %v4699 = vrot.slane %v4577, 1
      %v4700 = vrot.slane %v4578, 1
      %v4701 = vsel %vm1405, %v4699, %v4700
      %v4702 = vrot.slane %v4579, 1
      %v4703 = vsel %vm1405, %v4700, %v4702
      %v4704 = vrot.slane %v4580, 1
      %v4705 = vrot.slane %v4581, 1
      %v4706 = vsel %vm1405, %v4704, %v4705
      %v4707 = vrot.slane %v4582, 1
      %v4708 = vsel %vm1405, %v4705, %v4707
      %v4709 = vrot.slane %v4583, 1
      %v4710 = vrot.slane %v4584, 1
      %v4711 = vsel %vm1405, %v4709, %v4710
      %v4712 = vrot.slane %v4585, 1
      %v4713 = vsel %vm1405, %v4710, %v4712
      %v4762 = vadd.f32 %v4482, %v4636
      %v4763 = vadd.f32 %v4483, %v4638
      %v4764 = vadd.f32 %v4484, %v4637
      %v4765 = vadd.f32 %v4485, %v4641
      %v4766 = vadd.f32 %v4486, %v4643
      %v4767 = vadd.f32 %v4487, %v4642
      %v4768 = vadd.f32 %v4488, %v4646
      %v4769 = vadd.f32 %v4489, %v4648
      %v4770 = vadd.f32 %v4490, %v4647
      %v4771 = vadd.f32 %v4491, %v4651
      %v4772 = vadd.f32 %v4492, %v4653
      %v4773 = vadd.f32 %v4493, %v4652
      %v4774 = vadd.f32 %v4494, %v4656
      %v4775 = vadd.f32 %v4495, %v4658
      %v4776 = vadd.f32 %v4496, %v4657
      %v4777 = vadd.f32 %v4497, %v4661
      %v4778 = vadd.f32 %v4498, %v4663
      %v4779 = vadd.f32 %v4499, %v4662
      %v4780 = vadd.f32 %v4500, %v4666
      %v4781 = vadd.f32 %v4501, %v4668
      %v4782 = vadd.f32 %v4502, %v4667
      %v4783 = vadd.f32 %v4503, %v4671
      %v4784 = vadd.f32 %v4504, %v4673
      %v4785 = vadd.f32 %v4505, %v4672
      %v4786 = vadd.f32 %v4506, %v4676
      %v4787 = vadd.f32 %v4507, %v4678
      %v4788 = vadd.f32 %v4508, %v4677
      %v4789 = vadd.f32 %v4509, %v4681
      %v4790 = vadd.f32 %v4510, %v4683
      %v4791 = vadd.f32 %v4511, %v4682
      %v4792 = vadd.f32 %v4512, %v4686
      %v4793 = vadd.f32 %v4513, %v4688
      %v4794 = vadd.f32 %v4514, %v4687
      %v4795 = vadd.f32 %v4515, %v4691
      %v4796 = vadd.f32 %v4516, %v4693
      %v4797 = vadd.f32 %v4517, %v4692
      %v4798 = vadd.f32 %v4518, %v4696
      %v4799 = vadd.f32 %v4519, %v4698
      %v4800 = vadd.f32 %v4520, %v4697
      %v4801 = vadd.f32 %v4521, %v4701
      %v4802 = vadd.f32 %v4522, %v4703
      %v4803 = vadd.f32 %v4523, %v4702
      %v4804 = vadd.f32 %v4524, %v4706
      %v4805 = vadd.f32 %v4525, %v4708
      %v4806 = vadd.f32 %v4526, %v4707
      %v4807 = vadd.f32 %v4527, %v4711
      %v4808 = vadd.f32 %v4528, %v4713
      %v4809 = vadd.f32 %v4529, %v4712
      %v4810 = vlaneseq
      %v4811 = vshrl.u32 %v4810, 7
      %v4812 = vsub.s32 2, %v4811
      %v4813 = vrot.slane %v3260, %v4812
      %4815 = vrot.lane.b32.xlu0 %v4813, 8
      %v4816 = vpop.permute.xlu0 %4815
      %v4818 = vmul.f32 %v1159, %v4816
      %v4819 = vmul.f32 %v1160, %v4816
      %v4820 = vmul.f32 %v1163, %v4816
      %v4821 = vmul.f32 %v1164, %v4816
      %v4822 = vmul.f32 %v1167, %v4816
      %v4823 = vmul.f32 %v1168, %v4816
      %v4824 = vmul.f32 %v1171, %v4816
      %v4825 = vmul.f32 %v1172, %v4816
      %v4826 = vmul.f32 %v1175, %v4816
      %v4827 = vmul.f32 %v1176, %v4816
      %v4828 = vmul.f32 %v1179, %v4816
      %v4829 = vmul.f32 %v1180, %v4816
      %v4830 = vmul.f32 %v1183, %v4816
      %v4831 = vmul.f32 %v1184, %v4816
      %v4832 = vmul.f32 %v1187, %v4816
      %v4833 = vmul.f32 %v1188, %v4816
      %v4834 = vmul.f32 %v1191, %v4816
      %v4835 = vmul.f32 %v1192, %v4816
      %v4836 = vmul.f32 %v1195, %v4816
      %v4837 = vmul.f32 %v1196, %v4816
      %v4838 = vmul.f32 %v1199, %v4816
      %v4839 = vmul.f32 %v1200, %v4816
      %v4840 = vmul.f32 %v1203, %v4816
      %v4841 = vmul.f32 %v1204, %v4816
      %v4842 = vmul.f32 %v1207, %v4816
      %v4843 = vmul.f32 %v1208, %v4816
      %v4844 = vmul.f32 %v1211, %v4816
      %v4845 = vmul.f32 %v1212, %v4816
      %v4846 = vmul.f32 %v1215, %v4816
      %v4847 = vmul.f32 %v1216, %v4816
      %v4848 = vmul.f32 %v1219, %v4816
      %v4849 = vmul.f32 %v1220, %v4816
      %v4882 = vrot.slane %v4818, 2
      %v4883 = vrot.slane %v4819, 2
      %v4884 = vsel %vm1650, %v4882, %v4883
      %v4885 = vrot.slane %v4820, 2
      %v4886 = vrot.slane %v4821, 2
      %v4887 = vsel %vm1650, %v4885, %v4886
      %v4888 = vrot.slane %v4822, 2
      %v4889 = vrot.slane %v4823, 2
      %v4890 = vsel %vm1650, %v4888, %v4889
      %v4891 = vrot.slane %v4824, 2
      %v4892 = vrot.slane %v4825, 2
      %v4893 = vsel %vm1650, %v4891, %v4892
      %v4894 = vrot.slane %v4826, 2
      %v4895 = vrot.slane %v4827, 2
      %v4896 = vsel %vm1650, %v4894, %v4895
      %v4897 = vrot.slane %v4828, 2
      %v4898 = vrot.slane %v4829, 2
      %v4899 = vsel %vm1650, %v4897, %v4898
      %v4900 = vrot.slane %v4830, 2
      %v4901 = vrot.slane %v4831, 2
      %v4902 = vsel %vm1650, %v4900, %v4901
      %v4903 = vrot.slane %v4832, 2
      %v4904 = vrot.slane %v4833, 2
      %v4905 = vsel %vm1650, %v4903, %v4904
      %v4906 = vrot.slane %v4834, 2
      %v4907 = vrot.slane %v4835, 2
      %v4908 = vsel %vm1650, %v4906, %v4907
      %v4909 = vrot.slane %v4836, 2
      %v4910 = vrot.slane %v4837, 2
      %v4911 = vsel %vm1650, %v4909, %v4910
      %v4912 = vrot.slane %v4838, 2
      %v4913 = vrot.slane %v4839, 2
      %v4914 = vsel %vm1650, %v4912, %v4913
      %v4915 = vrot.slane %v4840, 2
      %v4916 = vrot.slane %v4841, 2
      %v4917 = vsel %vm1650, %v4915, %v4916
      %v4918 = vrot.slane %v4842, 2
      %v4919 = vrot.slane %v4843, 2
      %v4920 = vsel %vm1650, %v4918, %v4919
      %v4921 = vrot.slane %v4844, 2
      %v4922 = vrot.slane %v4845, 2
      %v4923 = vsel %vm1650, %v4921, %v4922
      %v4924 = vrot.slane %v4846, 2
      %v4925 = vrot.slane %v4847, 2
      %v4926 = vsel %vm1650, %v4924, %v4925
      %v4927 = vrot.slane %v4848, 2
      %v4928 = vrot.slane %v4849, 2
      %v4929 = vsel %vm1650, %v4927, %v4928
      %v4978 = vadd.f32 %v4762, %v4882
      %v4979 = vadd.f32 %v4763, %v4884
      %v4980 = vadd.f32 %v4764, %v4883
      %v4981 = vadd.f32 %v4765, %v4885
      %v4982 = vadd.f32 %v4766, %v4887
      %v4983 = vadd.f32 %v4767, %v4886
      %v4984 = vadd.f32 %v4768, %v4888
      %v4985 = vadd.f32 %v4769, %v4890
      %v4986 = vadd.f32 %v4770, %v4889
      %v4987 = vadd.f32 %v4771, %v4891
      %v4988 = vadd.f32 %v4772, %v4893
      %v4989 = vadd.f32 %v4773, %v4892
      %v4990 = vadd.f32 %v4774, %v4894
      %v4991 = vadd.f32 %v4775, %v4896
      %v4992 = vadd.f32 %v4776, %v4895
      %v4993 = vadd.f32 %v4777, %v4897
      %v4994 = vadd.f32 %v4778, %v4899
      %v4995 = vadd.f32 %v4779, %v4898
      %v4996 = vadd.f32 %v4780, %v4900
      %v4997 = vadd.f32 %v4781, %v4902
      %v4998 = vadd.f32 %v4782, %v4901
      %v4999 = vadd.f32 %v4783, %v4903
      %v5000 = vadd.f32 %v4784, %v4905
      %v5001 = vadd.f32 %v4785, %v4904
      %v5002 = vadd.f32 %v4786, %v4906
      %v5003 = vadd.f32 %v4787, %v4908
      %v5004 = vadd.f32 %v4788, %v4907
      %v5005 = vadd.f32 %v4789, %v4909
      %v5006 = vadd.f32 %v4790, %v4911
      %v5007 = vadd.f32 %v4791, %v4910
      %v5008 = vadd.f32 %v4792, %v4912
      %v5009 = vadd.f32 %v4793, %v4914
      %v5010 = vadd.f32 %v4794, %v4913
      %v5011 = vadd.f32 %v4795, %v4915
      %v5012 = vadd.f32 %v4796, %v4917
      %v5013 = vadd.f32 %v4797, %v4916
      %v5014 = vadd.f32 %v4798, %v4918
      %v5015 = vadd.f32 %v4799, %v4920
      %v5016 = vadd.f32 %v4800, %v4919
      %v5017 = vadd.f32 %v4801, %v4921
      %v5018 = vadd.f32 %v4802, %v4923
      %v5019 = vadd.f32 %v4803, %v4922
      %v5020 = vadd.f32 %v4804, %v4924
      %v5021 = vadd.f32 %v4805, %v4926
      %v5022 = vadd.f32 %v4806, %v4925
      %v5023 = vadd.f32 %v4807, %v4927
      %v5024 = vadd.f32 %v4808, %v4929
      %v5025 = vadd.f32 %v4809, %v4928
      %v5026 = vlaneseq
      %v5027 = vshrl.u32 %v5026, 7
      %v5028 = vsub.s32 3, %v5027
      %v5029 = vrot.slane %v3260, %v5028
      %5031 = vrot.lane.b32.xlu0 %v5029, 8
      %v5032 = vpop.permute.xlu0 %5031
      %v5034 = vmul.f32 %v1159, %v5032
      %v5035 = vmul.f32 %v1160, %v5032
      %v5036 = vmul.f32 %v1161, %v5032
      %v5037 = vmul.f32 %v1163, %v5032
      %v5038 = vmul.f32 %v1164, %v5032
      %v5039 = vmul.f32 %v1165, %v5032
      %v5040 = vmul.f32 %v1167, %v5032
      %v5041 = vmul.f32 %v1168, %v5032
      %v5042 = vmul.f32 %v1169, %v5032
      %v5043 = vmul.f32 %v1171, %v5032
      %v5044 = vmul.f32 %v1172, %v5032
      %v5045 = vmul.f32 %v1173, %v5032
      %v5046 = vmul.f32 %v1175, %v5032
      %v5047 = vmul.f32 %v1176, %v5032
      %v5048 = vmul.f32 %v1177, %v5032
      %v5049 = vmul.f32 %v1179, %v5032
      %v5050 = vmul.f32 %v1180, %v5032
      %v5051 = vmul.f32 %v1181, %v5032
      %v5052 = vmul.f32 %v1183, %v5032
      %v5053 = vmul.f32 %v1184, %v5032
      %v5054 = vmul.f32 %v1185, %v5032
      %v5055 = vmul.f32 %v1187, %v5032
      %v5056 = vmul.f32 %v1188, %v5032
      %v5057 = vmul.f32 %v1189, %v5032
      %v5058 = vmul.f32 %v1191, %v5032
      %v5059 = vmul.f32 %v1192, %v5032
      %v5060 = vmul.f32 %v1193, %v5032
      %v5061 = vmul.f32 %v1195, %v5032
      %v5062 = vmul.f32 %v1196, %v5032
      %v5063 = vmul.f32 %v1197, %v5032
      %v5064 = vmul.f32 %v1199, %v5032
      %v5065 = vmul.f32 %v1200, %v5032
      %v5066 = vmul.f32 %v1201, %v5032
      %v5067 = vmul.f32 %v1203, %v5032
      %v5068 = vmul.f32 %v1204, %v5032
      %v5069 = vmul.f32 %v1205, %v5032
      %v5070 = vmul.f32 %v1207, %v5032
      %v5071 = vmul.f32 %v1208, %v5032
      %v5072 = vmul.f32 %v1209, %v5032
      %v5073 = vmul.f32 %v1211, %v5032
      %v5074 = vmul.f32 %v1212, %v5032
      %v5075 = vmul.f32 %v1213, %v5032
      %v5076 = vmul.f32 %v1215, %v5032
      %v5077 = vmul.f32 %v1216, %v5032
      %v5078 = vmul.f32 %v1217, %v5032
      %v5079 = vmul.f32 %v1219, %v5032
      %v5080 = vmul.f32 %v1220, %v5032
      %v5081 = vmul.f32 %v1221, %v5032
      %v5130 = vrot.slane %v5034, 3
      %v5131 = vrot.slane %v5035, 3
      %v5132 = vsel %vm3968, %v5130, %v5131
      %v5133 = vrot.slane %v5036, 3
      %v5134 = vsel %vm3968, %v5131, %v5133
      %v5135 = vrot.slane %v5037, 3
      %v5136 = vrot.slane %v5038, 3
      %v5137 = vsel %vm3968, %v5135, %v5136
      %v5138 = vrot.slane %v5039, 3
      %v5139 = vsel %vm3968, %v5136, %v5138
      %v5140 = vrot.slane %v5040, 3
      %v5141 = vrot.slane %v5041, 3
      %v5142 = vsel %vm3968, %v5140, %v5141
      %v5143 = vrot.slane %v5042, 3
      %v5144 = vsel %vm3968, %v5141, %v5143
      %v5145 = vrot.slane %v5043, 3
      %v5146 = vrot.slane %v5044, 3
      %v5147 = vsel %vm3968, %v5145, %v5146
      %v5148 = vrot.slane %v5045, 3
      %v5149 = vsel %vm3968, %v5146, %v5148
      %v5150 = vrot.slane %v5046, 3
      %v5151 = vrot.slane %v5047, 3
      %v5152 = vsel %vm3968, %v5150, %v5151
      %v5153 = vrot.slane %v5048, 3
      %v5154 = vsel %vm3968, %v5151, %v5153
      %v5155 = vrot.slane %v5049, 3
      %v5156 = vrot.slane %v5050, 3
      %v5157 = vsel %vm3968, %v5155, %v5156
      %v5158 = vrot.slane %v5051, 3
      %v5159 = vsel %vm3968, %v5156, %v5158
      %v5160 = vrot.slane %v5052, 3
      %v5161 = vrot.slane %v5053, 3
      %v5162 = vsel %vm3968, %v5160, %v5161
      %v5163 = vrot.slane %v5054, 3
      %v5164 = vsel %vm3968, %v5161, %v5163
      %v5165 = vrot.slane %v5055, 3
      %v5166 = vrot.slane %v5056, 3
      %v5167 = vsel %vm3968, %v5165, %v5166
      %v5168 = vrot.slane %v5057, 3
      %v5169 = vsel %vm3968, %v5166, %v5168
      %v5170 = vrot.slane %v5058, 3
      %v5171 = vrot.slane %v5059, 3
      %v5172 = vsel %vm3968, %v5170, %v5171
      %v5173 = vrot.slane %v5060, 3
      %v5174 = vsel %vm3968, %v5171, %v5173
      %v5175 = vrot.slane %v5061, 3
      %v5176 = vrot.slane %v5062, 3
      %v5177 = vsel %vm3968, %v5175, %v5176
      %v5178 = vrot.slane %v5063, 3
      %v5179 = vsel %vm3968, %v5176, %v5178
      %v5180 = vrot.slane %v5064, 3
      %v5181 = vrot.slane %v5065, 3
      %v5182 = vsel %vm3968, %v5180, %v5181
      %v5183 = vrot.slane %v5066, 3
      %v5184 = vsel %vm3968, %v5181, %v5183
      %v5185 = vrot.slane %v5067, 3
      %v5186 = vrot.slane %v5068, 3
      %v5187 = vsel %vm3968, %v5185, %v5186
      %v5188 = vrot.slane %v5069, 3
      %v5189 = vsel %vm3968, %v5186, %v5188
      %v5190 = vrot.slane %v5070, 3
      %v5191 = vrot.slane %v5071, 3
      %v5192 = vsel %vm3968, %v5190, %v5191
      %v5193 = vrot.slane %v5072, 3
      %v5194 = vsel %vm3968, %v5191, %v5193
      %v5195 = vrot.slane %v5073, 3
      %v5196 = vrot.slane %v5074, 3
      %v5197 = vsel %vm3968, %v5195, %v5196
      %v5198 = vrot.slane %v5075, 3
      %v5199 = vsel %vm3968, %v5196, %v5198
      %v5200 = vrot.slane %v5076, 3
      %v5201 = vrot.slane %v5077, 3
      %v5202 = vsel %vm3968, %v5200, %v5201
      %v5203 = vrot.slane %v5078, 3
      %v5204 = vsel %vm3968, %v5201, %v5203
      %v5205 = vrot.slane %v5079, 3
      %v5206 = vrot.slane %v5080, 3
      %v5207 = vsel %vm3968, %v5205, %v5206
      %v5208 = vrot.slane %v5081, 3
      %v5209 = vsel %vm3968, %v5206, %v5208
      %v5258 = vadd.f32 %v4978, %v5130
      %v5259 = vadd.f32 %v4979, %v5132
      %v5260 = vadd.f32 %v4980, %v5134
      %v5261 = vadd.f32 %v4981, %v5135
      %v5262 = vadd.f32 %v4982, %v5137
      %v5263 = vadd.f32 %v4983, %v5139
      %v5264 = vadd.f32 %v4984, %v5140
      %v5265 = vadd.f32 %v4985, %v5142
      %v5266 = vadd.f32 %v4986, %v5144
      %v5267 = vadd.f32 %v4987, %v5145
      %v5268 = vadd.f32 %v4988, %v5147
      %v5269 = vadd.f32 %v4989, %v5149
      %v5270 = vadd.f32 %v4990, %v5150
      %v5271 = vadd.f32 %v4991, %v5152
      %v5272 = vadd.f32 %v4992, %v5154
      %v5273 = vadd.f32 %v4993, %v5155
      %v5274 = vadd.f32 %v4994, %v5157
      %v5275 = vadd.f32 %v4995, %v5159
      %v5276 = vadd.f32 %v4996, %v5160
      %v5277 = vadd.f32 %v4997, %v5162
      %v5278 = vadd.f32 %v4998, %v5164
      %v5279 = vadd.f32 %v4999, %v5165
      %v5280 = vadd.f32 %v5000, %v5167
      %v5281 = vadd.f32 %v5001, %v5169
      %v5282 = vadd.f32 %v5002, %v5170
      %v5283 = vadd.f32 %v5003, %v5172
      %v5284 = vadd.f32 %v5004, %v5174
      %v5285 = vadd.f32 %v5005, %v5175
      %v5286 = vadd.f32 %v5006, %v5177
      %v5287 = vadd.f32 %v5007, %v5179
      %v5288 = vadd.f32 %v5008, %v5180
      %v5289 = vadd.f32 %v5009, %v5182
      %v5290 = vadd.f32 %v5010, %v5184
      %v5291 = vadd.f32 %v5011, %v5185
      %v5292 = vadd.f32 %v5012, %v5187
      %v5293 = vadd.f32 %v5013, %v5189
      %v5294 = vadd.f32 %v5014, %v5190
      %v5295 = vadd.f32 %v5015, %v5192
      %v5296 = vadd.f32 %v5016, %v5194
      %v5297 = vadd.f32 %v5017, %v5195
      %v5298 = vadd.f32 %v5018, %v5197
      %v5299 = vadd.f32 %v5019, %v5199
      %v5300 = vadd.f32 %v5020, %v5200
      %v5301 = vadd.f32 %v5021, %v5202
      %v5302 = vadd.f32 %v5022, %v5204
      %v5303 = vadd.f32 %v5023, %v5205
      %v5304 = vadd.f32 %v5024, %v5207
      %v5305 = vadd.f32 %v5025, %v5209
      %v5306 = vlaneseq
      %v5307 = vshrl.u32 %v5306, 7
      %v5308 = vsub.s32 4, %v5307
      %v5309 = vrot.slane %v3260, %v5308
      %5311 = vrot.lane.b32.xlu0 %v5309, 8
      %v5312 = vpop.permute.xlu0 %5311
      %v5314 = vmul.f32 %v1159, %v5312
      %v5315 = vmul.f32 %v1160, %v5312
      %v5316 = vmul.f32 %v1161, %v5312
      %v5317 = vmul.f32 %v1163, %v5312
      %v5318 = vmul.f32 %v1164, %v5312
      %v5319 = vmul.f32 %v1165, %v5312
      %v5320 = vmul.f32 %v1167, %v5312
      %v5321 = vmul.f32 %v1168, %v5312
      %v5322 = vmul.f32 %v1169, %v5312
      %v5323 = vmul.f32 %v1171, %v5312
      %v5324 = vmul.f32 %v1172, %v5312
      %v5325 = vmul.f32 %v1173, %v5312
      %v5326 = vmul.f32 %v1175, %v5312
      %v5327 = vmul.f32 %v1176, %v5312
      %v5328 = vmul.f32 %v1177, %v5312
      %v5329 = vmul.f32 %v1179, %v5312
      %v5330 = vmul.f32 %v1180, %v5312
      %v5331 = vmul.f32 %v1181, %v5312
      %v5332 = vmul.f32 %v1183, %v5312
      %v5333 = vmul.f32 %v1184, %v5312
      %v5334 = vmul.f32 %v1185, %v5312
      %v5335 = vmul.f32 %v1187, %v5312
      %v5336 = vmul.f32 %v1188, %v5312
      %v5337 = vmul.f32 %v1189, %v5312
      %v5338 = vmul.f32 %v1191, %v5312
      %v5339 = vmul.f32 %v1192, %v5312
      %v5340 = vmul.f32 %v1193, %v5312
      %v5341 = vmul.f32 %v1195, %v5312
      %v5342 = vmul.f32 %v1196, %v5312
      %v5343 = vmul.f32 %v1197, %v5312
      %v5344 = vmul.f32 %v1199, %v5312
      %v5345 = vmul.f32 %v1200, %v5312
      %v5346 = vmul.f32 %v1201, %v5312
      %v5347 = vmul.f32 %v1203, %v5312
      %v5348 = vmul.f32 %v1204, %v5312
      %v5349 = vmul.f32 %v1205, %v5312
      %v5350 = vmul.f32 %v1207, %v5312
      %v5351 = vmul.f32 %v1208, %v5312
      %v5352 = vmul.f32 %v1209, %v5312
      %v5353 = vmul.f32 %v1211, %v5312
      %v5354 = vmul.f32 %v1212, %v5312
      %v5355 = vmul.f32 %v1213, %v5312
      %v5356 = vmul.f32 %v1215, %v5312
      %v5357 = vmul.f32 %v1216, %v5312
      %v5358 = vmul.f32 %v1217, %v5312
      %v5359 = vmul.f32 %v1219, %v5312
      %v5360 = vmul.f32 %v1220, %v5312
      %v5361 = vmul.f32 %v1221, %v5312
      %v5410 = vrot.slane %v5314, 4
      %v5411 = vrot.slane %v5315, 4
      %v5412 = vsel %vm4249, %v5410, %v5411
      %v5413 = vrot.slane %v5316, 4
      %v5414 = vsel %vm4249, %v5411, %v5413
      %v5415 = vrot.slane %v5317, 4
      %v5416 = vrot.slane %v5318, 4
      %v5417 = vsel %vm4249, %v5415, %v5416
      %v5418 = vrot.slane %v5319, 4
      %v5419 = vsel %vm4249, %v5416, %v5418
      %v5420 = vrot.slane %v5320, 4
      %v5421 = vrot.slane %v5321, 4
      %v5422 = vsel %vm4249, %v5420, %v5421
      %v5423 = vrot.slane %v5322, 4
      %v5424 = vsel %vm4249, %v5421, %v5423
      %v5425 = vrot.slane %v5323, 4
      %v5426 = vrot.slane %v5324, 4
      %v5427 = vsel %vm4249, %v5425, %v5426
      %v5428 = vrot.slane %v5325, 4
      %v5429 = vsel %vm4249, %v5426, %v5428
      %v5430 = vrot.slane %v5326, 4
      %v5431 = vrot.slane %v5327, 4
      %v5432 = vsel %vm4249, %v5430, %v5431
      %v5433 = vrot.slane %v5328, 4
      %v5434 = vsel %vm4249, %v5431, %v5433
      %v5435 = vrot.slane %v5329, 4
      %v5436 = vrot.slane %v5330, 4
      %v5437 = vsel %vm4249, %v5435, %v5436
      %v5438 = vrot.slane %v5331, 4
      %v5439 = vsel %vm4249, %v5436, %v5438
      %v5440 = vrot.slane %v5332, 4
      %v5441 = vrot.slane %v5333, 4
      %v5442 = vsel %vm4249, %v5440, %v5441
      %v5443 = vrot.slane %v5334, 4
      %v5444 = vsel %vm4249, %v5441, %v5443
      %v5445 = vrot.slane %v5335, 4
      %v5446 = vrot.slane %v5336, 4
      %v5447 = vsel %vm4249, %v5445, %v5446
      %v5448 = vrot.slane %v5337, 4
      %v5449 = vsel %vm4249, %v5446, %v5448
      %v5450 = vrot.slane %v5338, 4
      %v5451 = vrot.slane %v5339, 4
      %v5452 = vsel %vm4249, %v5450, %v5451
      %v5453 = vrot.slane %v5340, 4
      %v5454 = vsel %vm4249, %v5451, %v5453
      %v5455 = vrot.slane %v5341, 4
      %v5456 = vrot.slane %v5342, 4
      %v5457 = vsel %vm4249, %v5455, %v5456
      %v5458 = vrot.slane %v5343, 4
      %v5459 = vsel %vm4249, %v5456, %v5458
      %v5460 = vrot.slane %v5344, 4
      %v5461 = vrot.slane %v5345, 4
      %v5462 = vsel %vm4249, %v5460, %v5461
      %v5463 = vrot.slane %v5346, 4
      %v5464 = vsel %vm4249, %v5461, %v5463
      %v5465 = vrot.slane %v5347, 4
      %v5466 = vrot.slane %v5348, 4
      %v5467 = vsel %vm4249, %v5465, %v5466
      %v5468 = vrot.slane %v5349, 4
      %v5469 = vsel %vm4249, %v5466, %v5468
      %v5470 = vrot.slane %v5350, 4
      %v5471 = vrot.slane %v5351, 4
      %v5472 = vsel %vm4249, %v5470, %v5471
      %v5473 = vrot.slane %v5352, 4
      %v5474 = vsel %vm4249, %v5471, %v5473
      %v5475 = vrot.slane %v5353, 4
      %v5476 = vrot.slane %v5354, 4
      %v5477 = vsel %vm4249, %v5475, %v5476
      %v5478 = vrot.slane %v5355, 4
      %v5479 = vsel %vm4249, %v5476, %v5478
      %v5480 = vrot.slane %v5356, 4
      %v5481 = vrot.slane %v5357, 4
      %v5482 = vsel %vm4249, %v5480, %v5481
      %v5483 = vrot.slane %v5358, 4
      %v5484 = vsel %vm4249, %v5481, %v5483
      %v5485 = vrot.slane %v5359, 4
      %v5486 = vrot.slane %v5360, 4
      %v5487 = vsel %vm4249, %v5485, %v5486
      %v5488 = vrot.slane %v5361, 4
      %v5489 = vsel %vm4249, %v5486, %v5488
      %v5538 = vadd.f32 %v5258, %v5410
      %v5539 = vadd.f32 %v5259, %v5412
      %v5540 = vadd.f32 %v5260, %v5414
      %v5541 = vadd.f32 %v5261, %v5415
      %v5542 = vadd.f32 %v5262, %v5417
      %v5543 = vadd.f32 %v5263, %v5419
      %v5544 = vadd.f32 %v5264, %v5420
      %v5545 = vadd.f32 %v5265, %v5422
      %v5546 = vadd.f32 %v5266, %v5424
      %v5547 = vadd.f32 %v5267, %v5425
      %v5548 = vadd.f32 %v5268, %v5427
      %v5549 = vadd.f32 %v5269, %v5429
      %v5550 = vadd.f32 %v5270, %v5430
      %v5551 = vadd.f32 %v5271, %v5432
      %v5552 = vadd.f32 %v5272, %v5434
      %v5553 = vadd.f32 %v5273, %v5435
      %v5554 = vadd.f32 %v5274, %v5437
      %v5555 = vadd.f32 %v5275, %v5439
      %v5556 = vadd.f32 %v5276, %v5440
      %v5557 = vadd.f32 %v5277, %v5442
      %v5558 = vadd.f32 %v5278, %v5444
      %v5559 = vadd.f32 %v5279, %v5445
      %v5560 = vadd.f32 %v5280, %v5447
      %v5561 = vadd.f32 %v5281, %v5449
      %v5562 = vadd.f32 %v5282, %v5450
      %v5563 = vadd.f32 %v5283, %v5452
      %v5564 = vadd.f32 %v5284, %v5454
      %v5565 = vadd.f32 %v5285, %v5455
      %v5566 = vadd.f32 %v5286, %v5457
      %v5567 = vadd.f32 %v5287, %v5459
      %v5568 = vadd.f32 %v5288, %v5460
      %v5569 = vadd.f32 %v5289, %v5462
      %v5570 = vadd.f32 %v5290, %v5464
      %v5571 = vadd.f32 %v5291, %v5465
      %v5572 = vadd.f32 %v5292, %v5467
      %v5573 = vadd.f32 %v5293, %v5469
      %v5574 = vadd.f32 %v5294, %v5470
      %v5575 = vadd.f32 %v5295, %v5472
      %v5576 = vadd.f32 %v5296, %v5474
      %v5577 = vadd.f32 %v5297, %v5475
      %v5578 = vadd.f32 %v5298, %v5477
      %v5579 = vadd.f32 %v5299, %v5479
      %v5580 = vadd.f32 %v5300, %v5480
      %v5581 = vadd.f32 %v5301, %v5482
      %v5582 = vadd.f32 %v5302, %v5484
      %v5583 = vadd.f32 %v5303, %v5485
      %v5584 = vadd.f32 %v5304, %v5487
      %v5585 = vadd.f32 %v5305, %v5489
      %v5586 = vlaneseq
      %v5587 = vshrl.u32 %v5586, 7
      %v5588 = vsub.s32 0, %v5587
      %v5589 = vrot.slane %v3261, %v5588
      %5591 = vrot.lane.b32.xlu0 %v5589, 8
      %v5592 = vpop.permute.xlu0 %5591
      %v5594 = vmul.f32 %v1162, %v5592
      %v5595 = vmul.f32 %v1163, %v5592
      %v5596 = vmul.f32 %v1164, %v5592
      %v5597 = vmul.f32 %v1166, %v5592
      %v5598 = vmul.f32 %v1167, %v5592
      %v5599 = vmul.f32 %v1168, %v5592
      %v5600 = vmul.f32 %v1170, %v5592
      %v5601 = vmul.f32 %v1171, %v5592
      %v5602 = vmul.f32 %v1172, %v5592
      %v5603 = vmul.f32 %v1174, %v5592
      %v5604 = vmul.f32 %v1175, %v5592
      %v5605 = vmul.f32 %v1176, %v5592
      %v5606 = vmul.f32 %v1178, %v5592
      %v5607 = vmul.f32 %v1179, %v5592
      %v5608 = vmul.f32 %v1180, %v5592
      %v5609 = vmul.f32 %v1182, %v5592
      %v5610 = vmul.f32 %v1183, %v5592
      %v5611 = vmul.f32 %v1184, %v5592
      %v5612 = vmul.f32 %v1186, %v5592
      %v5613 = vmul.f32 %v1187, %v5592
      %v5614 = vmul.f32 %v1188, %v5592
      %v5615 = vmul.f32 %v1190, %v5592
      %v5616 = vmul.f32 %v1191, %v5592
      %v5617 = vmul.f32 %v1192, %v5592
      %v5618 = vmul.f32 %v1194, %v5592
      %v5619 = vmul.f32 %v1195, %v5592
      %v5620 = vmul.f32 %v1196, %v5592
      %v5621 = vmul.f32 %v1198, %v5592
      %v5622 = vmul.f32 %v1199, %v5592
      %v5623 = vmul.f32 %v1200, %v5592
      %v5624 = vmul.f32 %v1202, %v5592
      %v5625 = vmul.f32 %v1203, %v5592
      %v5626 = vmul.f32 %v1204, %v5592
      %v5627 = vmul.f32 %v1206, %v5592
      %v5628 = vmul.f32 %v1207, %v5592
      %v5629 = vmul.f32 %v1208, %v5592
      %v5630 = vmul.f32 %v1210, %v5592
      %v5631 = vmul.f32 %v1211, %v5592
      %v5632 = vmul.f32 %v1212, %v5592
      %v5633 = vmul.f32 %v1214, %v5592
      %v5634 = vmul.f32 %v1215, %v5592
      %v5635 = vmul.f32 %v1216, %v5592
      %v5636 = vmul.f32 %v1218, %v5592
      %v5637 = vmul.f32 %v1219, %v5592
      %v5638 = vmul.f32 %v1220, %v5592
      %v5639 = vmul.f32 %v1222, %v5592
      %v5640 = vmul.f32 %v1223, %v5592
      %v5641 = vmul.f32 %v1224, %v5592
      %v5642 = vadd.f32 %v5538, %v5594
      %v5643 = vadd.f32 %v5539, %v5595
      %v5644 = vadd.f32 %v5540, %v5596
      %v5645 = vadd.f32 %v5541, %v5597
      %v5646 = vadd.f32 %v5542, %v5598
      %v5647 = vadd.f32 %v5543, %v5599
      %v5648 = vadd.f32 %v5544, %v5600
      %v5649 = vadd.f32 %v5545, %v5601
      %v5650 = vadd.f32 %v5546, %v5602
      %v5651 = vadd.f32 %v5547, %v5603
      %v5652 = vadd.f32 %v5548, %v5604
      %v5653 = vadd.f32 %v5549, %v5605
      %v5654 = vadd.f32 %v5550, %v5606
      %v5655 = vadd.f32 %v5551, %v5607
      %v5656 = vadd.f32 %v5552, %v5608
      %v5657 = vadd.f32 %v5553, %v5609
      %v5658 = vadd.f32 %v5554, %v5610
      %v5659 = vadd.f32 %v5555, %v5611
      %v5660 = vadd.f32 %v5556, %v5612
      %v5661 = vadd.f32 %v5557, %v5613
      %v5662 = vadd.f32 %v5558, %v5614
      %v5663 = vadd.f32 %v5559, %v5615
      %v5664 = vadd.f32 %v5560, %v5616
      %v5665 = vadd.f32 %v5561, %v5617
      %v5666 = vadd.f32 %v5562, %v5618
      %v5667 = vadd.f32 %v5563, %v5619
      %v5668 = vadd.f32 %v5564, %v5620
      %v5669 = vadd.f32 %v5565, %v5621
      %v5670 = vadd.f32 %v5566, %v5622
      %v5671 = vadd.f32 %v5567, %v5623
      %v5672 = vadd.f32 %v5568, %v5624
      %v5673 = vadd.f32 %v5569, %v5625
      %v5674 = vadd.f32 %v5570, %v5626
      %v5675 = vadd.f32 %v5571, %v5627
      %v5676 = vadd.f32 %v5572, %v5628
      %v5677 = vadd.f32 %v5573, %v5629
      %v5678 = vadd.f32 %v5574, %v5630
      %v5679 = vadd.f32 %v5575, %v5631
      %v5680 = vadd.f32 %v5576, %v5632
      %v5681 = vadd.f32 %v5577, %v5633
      %v5682 = vadd.f32 %v5578, %v5634
      %v5683 = vadd.f32 %v5579, %v5635
      %v5684 = vadd.f32 %v5580, %v5636
      %v5685 = vadd.f32 %v5581, %v5637
      %v5686 = vadd.f32 %v5582, %v5638
      %v5687 = vadd.f32 %v5583, %v5639
      %v5688 = vadd.f32 %v5584, %v5640
      %v5689 = vadd.f32 %v5585, %v5641
      %v5690 = vlaneseq
      %v5691 = vshrl.u32 %v5690, 7
      %v5692 = vsub.s32 1, %v5691
      %v5693 = vrot.slane %v3261, %v5692
      %5695 = vrot.lane.b32.xlu0 %v5693, 8
      %v5696 = vpop.permute.xlu0 %5695
      %v5698 = vmul.f32 %v1162, %v5696
      %v5699 = vmul.f32 %v1163, %v5696
      %v5700 = vmul.f32 %v1164, %v5696
      %v5701 = vmul.f32 %v1166, %v5696
      %v5702 = vmul.f32 %v1167, %v5696
      %v5703 = vmul.f32 %v1168, %v5696
      %v5704 = vmul.f32 %v1170, %v5696
      %v5705 = vmul.f32 %v1171, %v5696
      %v5706 = vmul.f32 %v1172, %v5696
      %v5707 = vmul.f32 %v1174, %v5696
      %v5708 = vmul.f32 %v1175, %v5696
      %v5709 = vmul.f32 %v1176, %v5696
      %v5710 = vmul.f32 %v1178, %v5696
      %v5711 = vmul.f32 %v1179, %v5696
      %v5712 = vmul.f32 %v1180, %v5696
      %v5713 = vmul.f32 %v1182, %v5696
      %v5714 = vmul.f32 %v1183, %v5696
      %v5715 = vmul.f32 %v1184, %v5696
      %v5716 = vmul.f32 %v1186, %v5696
      %v5717 = vmul.f32 %v1187, %v5696
      %v5718 = vmul.f32 %v1188, %v5696
      %v5719 = vmul.f32 %v1190, %v5696
      %v5720 = vmul.f32 %v1191, %v5696
      %v5721 = vmul.f32 %v1192, %v5696
      %v5722 = vmul.f32 %v1194, %v5696
      %v5723 = vmul.f32 %v1195, %v5696
      %v5724 = vmul.f32 %v1196, %v5696
      %v5725 = vmul.f32 %v1198, %v5696
      %v5726 = vmul.f32 %v1199, %v5696
      %v5727 = vmul.f32 %v1200, %v5696
      %v5728 = vmul.f32 %v1202, %v5696
      %v5729 = vmul.f32 %v1203, %v5696
      %v5730 = vmul.f32 %v1204, %v5696
      %v5731 = vmul.f32 %v1206, %v5696
      %v5732 = vmul.f32 %v1207, %v5696
      %v5733 = vmul.f32 %v1208, %v5696
      %v5734 = vmul.f32 %v1210, %v5696
      %v5735 = vmul.f32 %v1211, %v5696
      %v5736 = vmul.f32 %v1212, %v5696
      %v5737 = vmul.f32 %v1214, %v5696
      %v5738 = vmul.f32 %v1215, %v5696
      %v5739 = vmul.f32 %v1216, %v5696
      %v5740 = vmul.f32 %v1218, %v5696
      %v5741 = vmul.f32 %v1219, %v5696
      %v5742 = vmul.f32 %v1220, %v5696
      %v5743 = vmul.f32 %v1222, %v5696
      %v5744 = vmul.f32 %v1223, %v5696
      %v5745 = vmul.f32 %v1224, %v5696
      %v5794 = vrot.slane %v5698, 1
      %v5795 = vrot.slane %v5699, 1
      %v5796 = vsel %vm1405, %v5794, %v5795
      %v5797 = vrot.slane %v5700, 1
      %v5798 = vsel %vm1405, %v5795, %v5797
      %v5799 = vrot.slane %v5701, 1
      %v5800 = vrot.slane %v5702, 1
      %v5801 = vsel %vm1405, %v5799, %v5800
      %v5802 = vrot.slane %v5703, 1
      %v5803 = vsel %vm1405, %v5800, %v5802
      %v5804 = vrot.slane %v5704, 1
      %v5805 = vrot.slane %v5705, 1
      %v5806 = vsel %vm1405, %v5804, %v5805
      %v5807 = vrot.slane %v5706, 1
      %v5808 = vsel %vm1405, %v5805, %v5807
      %v5809 = vrot.slane %v5707, 1
      %v5810 = vrot.slane %v5708, 1
      %v5811 = vsel %vm1405, %v5809, %v5810
      %v5812 = vrot.slane %v5709, 1
      %v5813 = vsel %vm1405, %v5810, %v5812
      %v5814 = vrot.slane %v5710, 1
      %v5815 = vrot.slane %v5711, 1
      %v5816 = vsel %vm1405, %v5814, %v5815
      %v5817 = vrot.slane %v5712, 1
      %v5818 = vsel %vm1405, %v5815, %v5817
      %v5819 = vrot.slane %v5713, 1
      %v5820 = vrot.slane %v5714, 1
      %v5821 = vsel %vm1405, %v5819, %v5820
      %v5822 = vrot.slane %v5715, 1
      %v5823 = vsel %vm1405, %v5820, %v5822
      %v5824 = vrot.slane %v5716, 1
      %v5825 = vrot.slane %v5717, 1
      %v5826 = vsel %vm1405, %v5824, %v5825
      %v5827 = vrot.slane %v5718, 1
      %v5828 = vsel %vm1405, %v5825, %v5827
      %v5829 = vrot.slane %v5719, 1
      %v5830 = vrot.slane %v5720, 1
      %v5831 = vsel %vm1405, %v5829, %v5830
      %v5832 = vrot.slane %v5721, 1
      %v5833 = vsel %vm1405, %v5830, %v5832
      %v5834 = vrot.slane %v5722, 1
      %v5835 = vrot.slane %v5723, 1
      %v5836 = vsel %vm1405, %v5834, %v5835
      %v5837 = vrot.slane %v5724, 1
      %v5838 = vsel %vm1405, %v5835, %v5837
      %v5839 = vrot.slane %v5725, 1
      %v5840 = vrot.slane %v5726, 1
      %v5841 = vsel %vm1405, %v5839, %v5840
      %v5842 = vrot.slane %v5727, 1
      %v5843 = vsel %vm1405, %v5840, %v5842
      %v5844 = vrot.slane %v5728, 1
      %v5845 = vrot.slane %v5729, 1
      %v5846 = vsel %vm1405, %v5844, %v5845
      %v5847 = vrot.slane %v5730, 1
      %v5848 = vsel %vm1405, %v5845, %v5847
      %v5849 = vrot.slane %v5731, 1
      %v5850 = vrot.slane %v5732, 1
      %v5851 = vsel %vm1405, %v5849, %v5850
      %v5852 = vrot.slane %v5733, 1
      %v5853 = vsel %vm1405, %v5850, %v5852
      %v5854 = vrot.slane %v5734, 1
      %v5855 = vrot.slane %v5735, 1
      %v5856 = vsel %vm1405, %v5854, %v5855
      %v5857 = vrot.slane %v5736, 1
      %v5858 = vsel %vm1405, %v5855, %v5857
      %v5859 = vrot.slane %v5737, 1
      %v5860 = vrot.slane %v5738, 1
      %v5861 = vsel %vm1405, %v5859, %v5860
      %v5862 = vrot.slane %v5739, 1
      %v5863 = vsel %vm1405, %v5860, %v5862
      %v5864 = vrot.slane %v5740, 1
      %v5865 = vrot.slane %v5741, 1
      %v5866 = vsel %vm1405, %v5864, %v5865
      %v5867 = vrot.slane %v5742, 1
      %v5868 = vsel %vm1405, %v5865, %v5867
      %v5869 = vrot.slane %v5743, 1
      %v5870 = vrot.slane %v5744, 1
      %v5871 = vsel %vm1405, %v5869, %v5870
      %v5872 = vrot.slane %v5745, 1
      %v5873 = vsel %vm1405, %v5870, %v5872
      %v5922 = vadd.f32 %v5642, %v5796
      %v5923 = vadd.f32 %v5643, %v5798
      %v5924 = vadd.f32 %v5644, %v5797
      %v5925 = vadd.f32 %v5645, %v5801
      %v5926 = vadd.f32 %v5646, %v5803
      %v5927 = vadd.f32 %v5647, %v5802
      %v5928 = vadd.f32 %v5648, %v5806
      %v5929 = vadd.f32 %v5649, %v5808
      %v5930 = vadd.f32 %v5650, %v5807
      %v5931 = vadd.f32 %v5651, %v5811
      %v5932 = vadd.f32 %v5652, %v5813
      %v5933 = vadd.f32 %v5653, %v5812
      %v5934 = vadd.f32 %v5654, %v5816
      %v5935 = vadd.f32 %v5655, %v5818
      %v5936 = vadd.f32 %v5656, %v5817
      %v5937 = vadd.f32 %v5657, %v5821
      %v5938 = vadd.f32 %v5658, %v5823
      %v5939 = vadd.f32 %v5659, %v5822
      %v5940 = vadd.f32 %v5660, %v5826
      %v5941 = vadd.f32 %v5661, %v5828
      %v5942 = vadd.f32 %v5662, %v5827
      %v5943 = vadd.f32 %v5663, %v5831
      %v5944 = vadd.f32 %v5664, %v5833
      %v5945 = vadd.f32 %v5665, %v5832
      %v5946 = vadd.f32 %v5666, %v5836
      %v5947 = vadd.f32 %v5667, %v5838
      %v5948 = vadd.f32 %v5668, %v5837
      %v5949 = vadd.f32 %v5669, %v5841
      %v5950 = vadd.f32 %v5670, %v5843
      %v5951 = vadd.f32 %v5671, %v5842
      %v5952 = vadd.f32 %v5672, %v5846
      %v5953 = vadd.f32 %v5673, %v5848
      %v5954 = vadd.f32 %v5674, %v5847
      %v5955 = vadd.f32 %v5675, %v5851
      %v5956 = vadd.f32 %v5676, %v5853
      %v5957 = vadd.f32 %v5677, %v5852
      %v5958 = vadd.f32 %v5678, %v5856
      %v5959 = vadd.f32 %v5679, %v5858
      %v5960 = vadd.f32 %v5680, %v5857
      %v5961 = vadd.f32 %v5681, %v5861
      %v5962 = vadd.f32 %v5682, %v5863
      %v5963 = vadd.f32 %v5683, %v5862
      %v5964 = vadd.f32 %v5684, %v5866
      %v5965 = vadd.f32 %v5685, %v5868
      %v5966 = vadd.f32 %v5686, %v5867
      %v5967 = vadd.f32 %v5687, %v5871
      %v5968 = vadd.f32 %v5688, %v5873
      %v5969 = vadd.f32 %v5689, %v5872
      %v5970 = vlaneseq
      %v5971 = vshrl.u32 %v5970, 7
      %v5972 = vsub.s32 2, %v5971
      %v5973 = vrot.slane %v3261, %v5972
      %5975 = vrot.lane.b32.xlu0 %v5973, 8
      %v5976 = vpop.permute.xlu0 %5975
      %v5978 = vmul.f32 %v1163, %v5976
      %v5979 = vmul.f32 %v1164, %v5976
      %v5980 = vmul.f32 %v1167, %v5976
      %v5981 = vmul.f32 %v1168, %v5976
      %v5982 = vmul.f32 %v1171, %v5976
      %v5983 = vmul.f32 %v1172, %v5976
      %v5984 = vmul.f32 %v1175, %v5976
      %v5985 = vmul.f32 %v1176, %v5976
      %v5986 = vmul.f32 %v1179, %v5976
      %v5987 = vmul.f32 %v1180, %v5976
      %v5988 = vmul.f32 %v1183, %v5976
      %v5989 = vmul.f32 %v1184, %v5976
      %v5990 = vmul.f32 %v1187, %v5976
      %v5991 = vmul.f32 %v1188, %v5976
      %v5992 = vmul.f32 %v1191, %v5976
      %v5993 = vmul.f32 %v1192, %v5976
      %v5994 = vmul.f32 %v1195, %v5976
      %v5995 = vmul.f32 %v1196, %v5976
      %v5996 = vmul.f32 %v1199, %v5976
      %v5997 = vmul.f32 %v1200, %v5976
      %v5998 = vmul.f32 %v1203, %v5976
      %v5999 = vmul.f32 %v1204, %v5976
      %v6000 = vmul.f32 %v1207, %v5976
      %v6001 = vmul.f32 %v1208, %v5976
      %v6002 = vmul.f32 %v1211, %v5976
      %v6003 = vmul.f32 %v1212, %v5976
      %v6004 = vmul.f32 %v1215, %v5976
      %v6005 = vmul.f32 %v1216, %v5976
      %v6006 = vmul.f32 %v1219, %v5976
      %v6007 = vmul.f32 %v1220, %v5976
      %v6008 = vmul.f32 %v1223, %v5976
      %v6009 = vmul.f32 %v1224, %v5976
      %v6042 = vrot.slane %v5978, 2
      %v6043 = vrot.slane %v5979, 2
      %v6044 = vsel %vm1650, %v6042, %v6043
      %v6045 = vrot.slane %v5980, 2
      %v6046 = vrot.slane %v5981, 2
      %v6047 = vsel %vm1650, %v6045, %v6046
      %v6048 = vrot.slane %v5982, 2
      %v6049 = vrot.slane %v5983, 2
      %v6050 = vsel %vm1650, %v6048, %v6049
      %v6051 = vrot.slane %v5984, 2
      %v6052 = vrot.slane %v5985, 2
      %v6053 = vsel %vm1650, %v6051, %v6052
      %v6054 = vrot.slane %v5986, 2
      %v6055 = vrot.slane %v5987, 2
      %v6056 = vsel %vm1650, %v6054, %v6055
      %v6057 = vrot.slane %v5988, 2
      %v6058 = vrot.slane %v5989, 2
      %v6059 = vsel %vm1650, %v6057, %v6058
      %v6060 = vrot.slane %v5990, 2
      %v6061 = vrot.slane %v5991, 2
      %v6062 = vsel %vm1650, %v6060, %v6061
      %v6063 = vrot.slane %v5992, 2
      %v6064 = vrot.slane %v5993, 2
      %v6065 = vsel %vm1650, %v6063, %v6064
      %v6066 = vrot.slane %v5994, 2
      %v6067 = vrot.slane %v5995, 2
      %v6068 = vsel %vm1650, %v6066, %v6067
      %v6069 = vrot.slane %v5996, 2
      %v6070 = vrot.slane %v5997, 2
      %v6071 = vsel %vm1650, %v6069, %v6070
      %v6072 = vrot.slane %v5998, 2
      %v6073 = vrot.slane %v5999, 2
      %v6074 = vsel %vm1650, %v6072, %v6073
      %v6075 = vrot.slane %v6000, 2
      %v6076 = vrot.slane %v6001, 2
      %v6077 = vsel %vm1650, %v6075, %v6076
      %v6078 = vrot.slane %v6002, 2
      %v6079 = vrot.slane %v6003, 2
      %v6080 = vsel %vm1650, %v6078, %v6079
      %v6081 = vrot.slane %v6004, 2
      %v6082 = vrot.slane %v6005, 2
      %v6083 = vsel %vm1650, %v6081, %v6082
      %v6084 = vrot.slane %v6006, 2
      %v6085 = vrot.slane %v6007, 2
      %v6086 = vsel %vm1650, %v6084, %v6085
      %v6087 = vrot.slane %v6008, 2
      %v6088 = vrot.slane %v6009, 2
      %v6089 = vsel %vm1650, %v6087, %v6088
      %v6138 = vadd.f32 %v5922, %v6042
      %v6139 = vadd.f32 %v5923, %v6044
      %v6140 = vadd.f32 %v5924, %v6043
      %v6141 = vadd.f32 %v5925, %v6045
      %v6142 = vadd.f32 %v5926, %v6047
      %v6143 = vadd.f32 %v5927, %v6046
      %v6144 = vadd.f32 %v5928, %v6048
      %v6145 = vadd.f32 %v5929, %v6050
      %v6146 = vadd.f32 %v5930, %v6049
      %v6147 = vadd.f32 %v5931, %v6051
      %v6148 = vadd.f32 %v5932, %v6053
      %v6149 = vadd.f32 %v5933, %v6052
      %v6150 = vadd.f32 %v5934, %v6054
      %v6151 = vadd.f32 %v5935, %v6056
      %v6152 = vadd.f32 %v5936, %v6055
      %v6153 = vadd.f32 %v5937, %v6057
      %v6154 = vadd.f32 %v5938, %v6059
      %v6155 = vadd.f32 %v5939, %v6058
      %v6156 = vadd.f32 %v5940, %v6060
      %v6157 = vadd.f32 %v5941, %v6062
      %v6158 = vadd.f32 %v5942, %v6061
      %v6159 = vadd.f32 %v5943, %v6063
      %v6160 = vadd.f32 %v5944, %v6065
      %v6161 = vadd.f32 %v5945, %v6064
      %v6162 = vadd.f32 %v5946, %v6066
      %v6163 = vadd.f32 %v5947, %v6068
      %v6164 = vadd.f32 %v5948, %v6067
      %v6165 = vadd.f32 %v5949, %v6069
      %v6166 = vadd.f32 %v5950, %v6071
      %v6167 = vadd.f32 %v5951, %v6070
      %v6168 = vadd.f32 %v5952, %v6072
      %v6169 = vadd.f32 %v5953, %v6074
      %v6170 = vadd.f32 %v5954, %v6073
      %v6171 = vadd.f32 %v5955, %v6075
      %v6172 = vadd.f32 %v5956, %v6077
      %v6173 = vadd.f32 %v5957, %v6076
      %v6174 = vadd.f32 %v5958, %v6078
      %v6175 = vadd.f32 %v5959, %v6080
      %v6176 = vadd.f32 %v5960, %v6079
      %v6177 = vadd.f32 %v5961, %v6081
      %v6178 = vadd.f32 %v5962, %v6083
      %v6179 = vadd.f32 %v5963, %v6082
      %v6180 = vadd.f32 %v5964, %v6084
      %v6181 = vadd.f32 %v5965, %v6086
      %v6182 = vadd.f32 %v5966, %v6085
      %v6183 = vadd.f32 %v5967, %v6087
      %v6184 = vadd.f32 %v5968, %v6089
      %v6185 = vadd.f32 %v5969, %v6088
      %v6186 = vlaneseq
      %v6187 = vshrl.u32 %v6186, 7
      %v6188 = vsub.s32 3, %v6187
      %v6189 = vrot.slane %v3261, %v6188
      %6191 = vrot.lane.b32.xlu0 %v6189, 8
      %v6192 = vpop.permute.xlu0 %6191
      %v6194 = vmul.f32 %v1163, %v6192
      %v6195 = vmul.f32 %v1164, %v6192
      %v6196 = vmul.f32 %v1165, %v6192
      %v6197 = vmul.f32 %v1167, %v6192
      %v6198 = vmul.f32 %v1168, %v6192
      %v6199 = vmul.f32 %v1169, %v6192
      %v6200 = vmul.f32 %v1171, %v6192
      %v6201 = vmul.f32 %v1172, %v6192
      %v6202 = vmul.f32 %v1173, %v6192
      %v6203 = vmul.f32 %v1175, %v6192
      %v6204 = vmul.f32 %v1176, %v6192
      %v6205 = vmul.f32 %v1177, %v6192
      %v6206 = vmul.f32 %v1179, %v6192
      %v6207 = vmul.f32 %v1180, %v6192
      %v6208 = vmul.f32 %v1181, %v6192
      %v6209 = vmul.f32 %v1183, %v6192
      %v6210 = vmul.f32 %v1184, %v6192
      %v6211 = vmul.f32 %v1185, %v6192
      %v6212 = vmul.f32 %v1187, %v6192
      %v6213 = vmul.f32 %v1188, %v6192
      %v6214 = vmul.f32 %v1189, %v6192
      %v6215 = vmul.f32 %v1191, %v6192
      %v6216 = vmul.f32 %v1192, %v6192
      %v6217 = vmul.f32 %v1193, %v6192
      %v6218 = vmul.f32 %v1195, %v6192
      %v6219 = vmul.f32 %v1196, %v6192
      %v6220 = vmul.f32 %v1197, %v6192
      %v6221 = vmul.f32 %v1199, %v6192
      %v6222 = vmul.f32 %v1200, %v6192
      %v6223 = vmul.f32 %v1201, %v6192
      %v6224 = vmul.f32 %v1203, %v6192
      %v6225 = vmul.f32 %v1204, %v6192
      %v6226 = vmul.f32 %v1205, %v6192
      %v6227 = vmul.f32 %v1207, %v6192
      %v6228 = vmul.f32 %v1208, %v6192
      %v6229 = vmul.f32 %v1209, %v6192
      %v6230 = vmul.f32 %v1211, %v6192
      %v6231 = vmul.f32 %v1212, %v6192
      %v6232 = vmul.f32 %v1213, %v6192
      %v6233 = vmul.f32 %v1215, %v6192
      %v6234 = vmul.f32 %v1216, %v6192
      %v6235 = vmul.f32 %v1217, %v6192
      %v6236 = vmul.f32 %v1219, %v6192
      %v6237 = vmul.f32 %v1220, %v6192
      %v6238 = vmul.f32 %v1221, %v6192
      %v6239 = vmul.f32 %v1223, %v6192
      %v6240 = vmul.f32 %v1224, %v6192
      %v6241 = vmul.f32 %v1225, %v6192
      %v6290 = vrot.slane %v6194, 3
      %v6291 = vrot.slane %v6195, 3
      %v6292 = vsel %vm3968, %v6290, %v6291
      %v6293 = vrot.slane %v6196, 3
      %v6294 = vsel %vm3968, %v6291, %v6293
      %v6295 = vrot.slane %v6197, 3
      %v6296 = vrot.slane %v6198, 3
      %v6297 = vsel %vm3968, %v6295, %v6296
      %v6298 = vrot.slane %v6199, 3
      %v6299 = vsel %vm3968, %v6296, %v6298
      %v6300 = vrot.slane %v6200, 3
      %v6301 = vrot.slane %v6201, 3
      %v6302 = vsel %vm3968, %v6300, %v6301
      %v6303 = vrot.slane %v6202, 3
      %v6304 = vsel %vm3968, %v6301, %v6303
      %v6305 = vrot.slane %v6203, 3
      %v6306 = vrot.slane %v6204, 3
      %v6307 = vsel %vm3968, %v6305, %v6306
      %v6308 = vrot.slane %v6205, 3
      %v6309 = vsel %vm3968, %v6306, %v6308
      %v6310 = vrot.slane %v6206, 3
      %v6311 = vrot.slane %v6207, 3
      %v6312 = vsel %vm3968, %v6310, %v6311
      %v6313 = vrot.slane %v6208, 3
      %v6314 = vsel %vm3968, %v6311, %v6313
      %v6315 = vrot.slane %v6209, 3
      %v6316 = vrot.slane %v6210, 3
      %v6317 = vsel %vm3968, %v6315, %v6316
      %v6318 = vrot.slane %v6211, 3
      %v6319 = vsel %vm3968, %v6316, %v6318
      %v6320 = vrot.slane %v6212, 3
      %v6321 = vrot.slane %v6213, 3
      %v6322 = vsel %vm3968, %v6320, %v6321
      %v6323 = vrot.slane %v6214, 3
      %v6324 = vsel %vm3968, %v6321, %v6323
      %v6325 = vrot.slane %v6215, 3
      %v6326 = vrot.slane %v6216, 3
      %v6327 = vsel %vm3968, %v6325, %v6326
      %v6328 = vrot.slane %v6217, 3
      %v6329 = vsel %vm3968, %v6326, %v6328
      %v6330 = vrot.slane %v6218, 3
      %v6331 = vrot.slane %v6219, 3
      %v6332 = vsel %vm3968, %v6330, %v6331
      %v6333 = vrot.slane %v6220, 3
      %v6334 = vsel %vm3968, %v6331, %v6333
      %v6335 = vrot.slane %v6221, 3
      %v6336 = vrot.slane %v6222, 3
      %v6337 = vsel %vm3968, %v6335, %v6336
      %v6338 = vrot.slane %v6223, 3
      %v6339 = vsel %vm3968, %v6336, %v6338
      %v6340 = vrot.slane %v6224, 3
      %v6341 = vrot.slane %v6225, 3
      %v6342 = vsel %vm3968, %v6340, %v6341
      %v6343 = vrot.slane %v6226, 3
      %v6344 = vsel %vm3968, %v6341, %v6343
      %v6345 = vrot.slane %v6227, 3
      %v6346 = vrot.slane %v6228, 3
      %v6347 = vsel %vm3968, %v6345, %v6346
      %v6348 = vrot.slane %v6229, 3
      %v6349 = vsel %vm3968, %v6346, %v6348
      %v6350 = vrot.slane %v6230, 3
      %v6351 = vrot.slane %v6231, 3
      %v6352 = vsel %vm3968, %v6350, %v6351
      %v6353 = vrot.slane %v6232, 3
      %v6354 = vsel %vm3968, %v6351, %v6353
      %v6355 = vrot.slane %v6233, 3
      %v6356 = vrot.slane %v6234, 3
      %v6357 = vsel %vm3968, %v6355, %v6356
      %v6358 = vrot.slane %v6235, 3
      %v6359 = vsel %vm3968, %v6356, %v6358
      %v6360 = vrot.slane %v6236, 3
      %v6361 = vrot.slane %v6237, 3
      %v6362 = vsel %vm3968, %v6360, %v6361
      %v6363 = vrot.slane %v6238, 3
      %v6364 = vsel %vm3968, %v6361, %v6363
      %v6365 = vrot.slane %v6239, 3
      %v6366 = vrot.slane %v6240, 3
      %v6367 = vsel %vm3968, %v6365, %v6366
      %v6368 = vrot.slane %v6241, 3
      %v6369 = vsel %vm3968, %v6366, %v6368
      %v6418 = vadd.f32 %v6138, %v6290
      %v6419 = vadd.f32 %v6139, %v6292
      %v6420 = vadd.f32 %v6140, %v6294
      %v6421 = vadd.f32 %v6141, %v6295
      %v6422 = vadd.f32 %v6142, %v6297
      %v6423 = vadd.f32 %v6143, %v6299
      %v6424 = vadd.f32 %v6144, %v6300
      %v6425 = vadd.f32 %v6145, %v6302
      %v6426 = vadd.f32 %v6146, %v6304
      %v6427 = vadd.f32 %v6147, %v6305
      %v6428 = vadd.f32 %v6148, %v6307
      %v6429 = vadd.f32 %v6149, %v6309
      %v6430 = vadd.f32 %v6150, %v6310
      %v6431 = vadd.f32 %v6151, %v6312
      %v6432 = vadd.f32 %v6152, %v6314
      %v6433 = vadd.f32 %v6153, %v6315
      %v6434 = vadd.f32 %v6154, %v6317
      %v6435 = vadd.f32 %v6155, %v6319
      %v6436 = vadd.f32 %v6156, %v6320
      %v6437 = vadd.f32 %v6157, %v6322
      %v6438 = vadd.f32 %v6158, %v6324
      %v6439 = vadd.f32 %v6159, %v6325
      %v6440 = vadd.f32 %v6160, %v6327
      %v6441 = vadd.f32 %v6161, %v6329
      %v6442 = vadd.f32 %v6162, %v6330
      %v6443 = vadd.f32 %v6163, %v6332
      %v6444 = vadd.f32 %v6164, %v6334
      %v6445 = vadd.f32 %v6165, %v6335
      %v6446 = vadd.f32 %v6166, %v6337
      %v6447 = vadd.f32 %v6167, %v6339
      %v6448 = vadd.f32 %v6168, %v6340
      %v6449 = vadd.f32 %v6169, %v6342
      %v6450 = vadd.f32 %v6170, %v6344
      %v6451 = vadd.f32 %v6171, %v6345
      %v6452 = vadd.f32 %v6172, %v6347
      %v6453 = vadd.f32 %v6173, %v6349
      %v6454 = vadd.f32 %v6174, %v6350
      %v6455 = vadd.f32 %v6175, %v6352
      %v6456 = vadd.f32 %v6176, %v6354
      %v6457 = vadd.f32 %v6177, %v6355
      %v6458 = vadd.f32 %v6178, %v6357
      %v6459 = vadd.f32 %v6179, %v6359
      %v6460 = vadd.f32 %v6180, %v6360
      %v6461 = vadd.f32 %v6181, %v6362
      %v6462 = vadd.f32 %v6182, %v6364
      %v6463 = vadd.f32 %v6183, %v6365
      %v6464 = vadd.f32 %v6184, %v6367
      %v6465 = vadd.f32 %v6185, %v6369
      %v6466 = vlaneseq
      %v6467 = vshrl.u32 %v6466, 7
      %v6468 = vsub.s32 4, %v6467
      %v6469 = vrot.slane %v3261, %v6468
      %6471 = vrot.lane.b32.xlu0 %v6469, 8
      %v6472 = vpop.permute.xlu0 %6471
      %v6474 = vmul.f32 %v1163, %v6472
      %v6475 = vmul.f32 %v1164, %v6472
      %v6476 = vmul.f32 %v1165, %v6472
      %v6477 = vmul.f32 %v1167, %v6472
      %v6478 = vmul.f32 %v1168, %v6472
      %v6479 = vmul.f32 %v1169, %v6472
      %v6480 = vmul.f32 %v1171, %v6472
      %v6481 = vmul.f32 %v1172, %v6472
      %v6482 = vmul.f32 %v1173, %v6472
      %v6483 = vmul.f32 %v1175, %v6472
      %v6484 = vmul.f32 %v1176, %v6472
      %v6485 = vmul.f32 %v1177, %v6472
      %v6486 = vmul.f32 %v1179, %v6472
      %v6487 = vmul.f32 %v1180, %v6472
      %v6488 = vmul.f32 %v1181, %v6472
      %v6489 = vmul.f32 %v1183, %v6472
      %v6490 = vmul.f32 %v1184, %v6472
      %v6491 = vmul.f32 %v1185, %v6472
      %v6492 = vmul.f32 %v1187, %v6472
      %v6493 = vmul.f32 %v1188, %v6472
      %v6494 = vmul.f32 %v1189, %v6472
      %v6495 = vmul.f32 %v1191, %v6472
      %v6496 = vmul.f32 %v1192, %v6472
      %v6497 = vmul.f32 %v1193, %v6472
      %v6498 = vmul.f32 %v1195, %v6472
      %v6499 = vmul.f32 %v1196, %v6472
      %v6500 = vmul.f32 %v1197, %v6472
      %v6501 = vmul.f32 %v1199, %v6472
      %v6502 = vmul.f32 %v1200, %v6472
      %v6503 = vmul.f32 %v1201, %v6472
      %v6504 = vmul.f32 %v1203, %v6472
      %v6505 = vmul.f32 %v1204, %v6472
      %v6506 = vmul.f32 %v1205, %v6472
      %v6507 = vmul.f32 %v1207, %v6472
      %v6508 = vmul.f32 %v1208, %v6472
      %v6509 = vmul.f32 %v1209, %v6472
      %v6510 = vmul.f32 %v1211, %v6472
      %v6511 = vmul.f32 %v1212, %v6472
      %v6512 = vmul.f32 %v1213, %v6472
      %v6513 = vmul.f32 %v1215, %v6472
      %v6514 = vmul.f32 %v1216, %v6472
      %v6515 = vmul.f32 %v1217, %v6472
      %v6516 = vmul.f32 %v1219, %v6472
      %v6517 = vmul.f32 %v1220, %v6472
      %v6518 = vmul.f32 %v1221, %v6472
      %v6519 = vmul.f32 %v1223, %v6472
      %v6520 = vmul.f32 %v1224, %v6472
      %v6521 = vmul.f32 %v1225, %v6472
      %v6570 = vrot.slane %v6474, 4
      %v6571 = vrot.slane %v6475, 4
      %v6572 = vsel %vm4249, %v6570, %v6571
      %v6573 = vrot.slane %v6476, 4
      %v6574 = vsel %vm4249, %v6571, %v6573
      %v6575 = vrot.slane %v6477, 4
      %v6576 = vrot.slane %v6478, 4
      %v6577 = vsel %vm4249, %v6575, %v6576
      %v6578 = vrot.slane %v6479, 4
      %v6579 = vsel %vm4249, %v6576, %v6578
      %v6580 = vrot.slane %v6480, 4
      %v6581 = vrot.slane %v6481, 4
      %v6582 = vsel %vm4249, %v6580, %v6581
      %v6583 = vrot.slane %v6482, 4
      %v6584 = vsel %vm4249, %v6581, %v6583
      %v6585 = vrot.slane %v6483, 4
      %v6586 = vrot.slane %v6484, 4
      %v6587 = vsel %vm4249, %v6585, %v6586
      %v6588 = vrot.slane %v6485, 4
      %v6589 = vsel %vm4249, %v6586, %v6588
      %v6590 = vrot.slane %v6486, 4
      %v6591 = vrot.slane %v6487, 4
      %v6592 = vsel %vm4249, %v6590, %v6591
      %v6593 = vrot.slane %v6488, 4
      %v6594 = vsel %vm4249, %v6591, %v6593
      %v6595 = vrot.slane %v6489, 4
      %v6596 = vrot.slane %v6490, 4
      %v6597 = vsel %vm4249, %v6595, %v6596
      %v6598 = vrot.slane %v6491, 4
      %v6599 = vsel %vm4249, %v6596, %v6598
      %v6600 = vrot.slane %v6492, 4
      %v6601 = vrot.slane %v6493, 4
      %v6602 = vsel %vm4249, %v6600, %v6601
      %v6603 = vrot.slane %v6494, 4
      %v6604 = vsel %vm4249, %v6601, %v6603
      %v6605 = vrot.slane %v6495, 4
      %v6606 = vrot.slane %v6496, 4
      %v6607 = vsel %vm4249, %v6605, %v6606
      %v6608 = vrot.slane %v6497, 4
      %v6609 = vsel %vm4249, %v6606, %v6608
      %v6610 = vrot.slane %v6498, 4
      %v6611 = vrot.slane %v6499, 4
      %v6612 = vsel %vm4249, %v6610, %v6611
      %v6613 = vrot.slane %v6500, 4
      %v6614 = vsel %vm4249, %v6611, %v6613
      %v6615 = vrot.slane %v6501, 4
      %v6616 = vrot.slane %v6502, 4
      %v6617 = vsel %vm4249, %v6615, %v6616
      %v6618 = vrot.slane %v6503, 4
      %v6619 = vsel %vm4249, %v6616, %v6618
      %v6620 = vrot.slane %v6504, 4
      %v6621 = vrot.slane %v6505, 4
      %v6622 = vsel %vm4249, %v6620, %v6621
      %v6623 = vrot.slane %v6506, 4
      %v6624 = vsel %vm4249, %v6621, %v6623
      %v6625 = vrot.slane %v6507, 4
      %v6626 = vrot.slane %v6508, 4
      %v6627 = vsel %vm4249, %v6625, %v6626
      %v6628 = vrot.slane %v6509, 4
      %v6629 = vsel %vm4249, %v6626, %v6628
      %v6630 = vrot.slane %v6510, 4
      %v6631 = vrot.slane %v6511, 4
      %v6632 = vsel %vm4249, %v6630, %v6631
      %v6633 = vrot.slane %v6512, 4
      %v6634 = vsel %vm4249, %v6631, %v6633
      %v6635 = vrot.slane %v6513, 4
      %v6636 = vrot.slane %v6514, 4
      %v6637 = vsel %vm4249, %v6635, %v6636
      %v6638 = vrot.slane %v6515, 4
      %v6639 = vsel %vm4249, %v6636, %v6638
      %v6640 = vrot.slane %v6516, 4
      %v6641 = vrot.slane %v6517, 4
      %v6642 = vsel %vm4249, %v6640, %v6641
      %v6643 = vrot.slane %v6518, 4
      %v6644 = vsel %vm4249, %v6641, %v6643
      %v6645 = vrot.slane %v6519, 4
      %v6646 = vrot.slane %v6520, 4
      %v6647 = vsel %vm4249, %v6645, %v6646
      %v6648 = vrot.slane %v6521, 4
      %v6649 = vsel %vm4249, %v6646, %v6648
      %v6698 = vadd.f32 %v6418, %v6570
      %v6699 = vadd.f32 %v6419, %v6572
      %v6700 = vadd.f32 %v6420, %v6574
      %v6701 = vadd.f32 %v6421, %v6575
      %v6702 = vadd.f32 %v6422, %v6577
      %v6703 = vadd.f32 %v6423, %v6579
      %v6704 = vadd.f32 %v6424, %v6580
      %v6705 = vadd.f32 %v6425, %v6582
      %v6706 = vadd.f32 %v6426, %v6584
      %v6707 = vadd.f32 %v6427, %v6585
      %v6708 = vadd.f32 %v6428, %v6587
      %v6709 = vadd.f32 %v6429, %v6589
      %v6710 = vadd.f32 %v6430, %v6590
      %v6711 = vadd.f32 %v6431, %v6592
      %v6712 = vadd.f32 %v6432, %v6594
      %v6713 = vadd.f32 %v6433, %v6595
      %v6714 = vadd.f32 %v6434, %v6597
      %v6715 = vadd.f32 %v6435, %v6599
      %v6716 = vadd.f32 %v6436, %v6600
      %v6717 = vadd.f32 %v6437, %v6602
      %v6718 = vadd.f32 %v6438, %v6604
      %v6719 = vadd.f32 %v6439, %v6605
      %v6720 = vadd.f32 %v6440, %v6607
      %v6721 = vadd.f32 %v6441, %v6609
      %v6722 = vadd.f32 %v6442, %v6610
      %v6723 = vadd.f32 %v6443, %v6612
      %v6724 = vadd.f32 %v6444, %v6614
      %v6725 = vadd.f32 %v6445, %v6615
      %v6726 = vadd.f32 %v6446, %v6617
      %v6727 = vadd.f32 %v6447, %v6619
      %v6728 = vadd.f32 %v6448, %v6620
      %v6729 = vadd.f32 %v6449, %v6622
      %v6730 = vadd.f32 %v6450, %v6624
      %v6731 = vadd.f32 %v6451, %v6625
      %v6732 = vadd.f32 %v6452, %v6627
      %v6733 = vadd.f32 %v6453, %v6629
      %v6734 = vadd.f32 %v6454, %v6630
      %v6735 = vadd.f32 %v6455, %v6632
      %v6736 = vadd.f32 %v6456, %v6634
      %v6737 = vadd.f32 %v6457, %v6635
      %v6738 = vadd.f32 %v6458, %v6637
      %v6739 = vadd.f32 %v6459, %v6639
      %v6740 = vadd.f32 %v6460, %v6640
      %v6741 = vadd.f32 %v6461, %v6642
      %v6742 = vadd.f32 %v6462, %v6644
      %v6743 = vadd.f32 %v6463, %v6645
      %v6744 = vadd.f32 %v6464, %v6647
      %v6745 = vadd.f32 %v6465, %v6649
      %v6746 = vlaneseq
      %v6747 = vshrl.u32 %v6746, 7
      %v6748 = vsub.s32 0, %v6747
      %v6749 = vrot.slane %v3262, %v6748
      %6751 = vrot.lane.b32.xlu0 %v6749, 8
      %v6752 = vpop.permute.xlu0 %6751
      %v6754 = vmul.f32 %v1166, %v6752
      %v6755 = vmul.f32 %v1167, %v6752
      %v6756 = vmul.f32 %v1168, %v6752
      %v6757 = vmul.f32 %v1170, %v6752
      %v6758 = vmul.f32 %v1171, %v6752
      %v6759 = vmul.f32 %v1172, %v6752
      %v6760 = vmul.f32 %v1174, %v6752
      %v6761 = vmul.f32 %v1175, %v6752
      %v6762 = vmul.f32 %v1176, %v6752
      %v6763 = vmul.f32 %v1178, %v6752
      %v6764 = vmul.f32 %v1179, %v6752
      %v6765 = vmul.f32 %v1180, %v6752
      %v6766 = vmul.f32 %v1182, %v6752
      %v6767 = vmul.f32 %v1183, %v6752
      %v6768 = vmul.f32 %v1184, %v6752
      %v6769 = vmul.f32 %v1186, %v6752
      %v6770 = vmul.f32 %v1187, %v6752
      %v6771 = vmul.f32 %v1188, %v6752
      %v6772 = vmul.f32 %v1190, %v6752
      %v6773 = vmul.f32 %v1191, %v6752
      %v6774 = vmul.f32 %v1192, %v6752
      %v6775 = vmul.f32 %v1194, %v6752
      %v6776 = vmul.f32 %v1195, %v6752
      %v6777 = vmul.f32 %v1196, %v6752
      %v6778 = vmul.f32 %v1198, %v6752
      %v6779 = vmul.f32 %v1199, %v6752
      %v6780 = vmul.f32 %v1200, %v6752
      %v6781 = vmul.f32 %v1202, %v6752
      %v6782 = vmul.f32 %v1203, %v6752
      %v6783 = vmul.f32 %v1204, %v6752
      %v6784 = vmul.f32 %v1206, %v6752
      %v6785 = vmul.f32 %v1207, %v6752
      %v6786 = vmul.f32 %v1208, %v6752
      %v6787 = vmul.f32 %v1210, %v6752
      %v6788 = vmul.f32 %v1211, %v6752
      %v6789 = vmul.f32 %v1212, %v6752
      %v6790 = vmul.f32 %v1214, %v6752
      %v6791 = vmul.f32 %v1215, %v6752
      %v6792 = vmul.f32 %v1216, %v6752
      %v6793 = vmul.f32 %v1218, %v6752
      %v6794 = vmul.f32 %v1219, %v6752
      %v6795 = vmul.f32 %v1220, %v6752
      %v6796 = vmul.f32 %v1222, %v6752
      %v6797 = vmul.f32 %v1223, %v6752
      %v6798 = vmul.f32 %v1224, %v6752
      %v6799 = vmul.f32 %v1226, %v6752
      %v6800 = vmul.f32 %v1227, %v6752
      %v6801 = vmul.f32 %v1228, %v6752
      %v6802 = vadd.f32 %v6698, %v6754
      %v6803 = vadd.f32 %v6699, %v6755
      %v6804 = vadd.f32 %v6700, %v6756
      %v6805 = vadd.f32 %v6701, %v6757
      %v6806 = vadd.f32 %v6702, %v6758
      %v6807 = vadd.f32 %v6703, %v6759
      %v6808 = vadd.f32 %v6704, %v6760
      %v6809 = vadd.f32 %v6705, %v6761
      %v6810 = vadd.f32 %v6706, %v6762
      %v6811 = vadd.f32 %v6707, %v6763
      %v6812 = vadd.f32 %v6708, %v6764
      %v6813 = vadd.f32 %v6709, %v6765
      %v6814 = vadd.f32 %v6710, %v6766
      %v6815 = vadd.f32 %v6711, %v6767
      %v6816 = vadd.f32 %v6712, %v6768
      %v6817 = vadd.f32 %v6713, %v6769
      %v6818 = vadd.f32 %v6714, %v6770
      %v6819 = vadd.f32 %v6715, %v6771
      %v6820 = vadd.f32 %v6716, %v6772
      %v6821 = vadd.f32 %v6717, %v6773
      %v6822 = vadd.f32 %v6718, %v6774
      %v6823 = vadd.f32 %v6719, %v6775
      %v6824 = vadd.f32 %v6720, %v6776
      %v6825 = vadd.f32 %v6721, %v6777
      %v6826 = vadd.f32 %v6722, %v6778
      %v6827 = vadd.f32 %v6723, %v6779
      %v6828 = vadd.f32 %v6724, %v6780
      %v6829 = vadd.f32 %v6725, %v6781
      %v6830 = vadd.f32 %v6726, %v6782
      %v6831 = vadd.f32 %v6727, %v6783
      %v6832 = vadd.f32 %v6728, %v6784
      %v6833 = vadd.f32 %v6729, %v6785
      %v6834 = vadd.f32 %v6730, %v6786
      %v6835 = vadd.f32 %v6731, %v6787
      %v6836 = vadd.f32 %v6732, %v6788
      %v6837 = vadd.f32 %v6733, %v6789
      %v6838 = vadd.f32 %v6734, %v6790
      %v6839 = vadd.f32 %v6735, %v6791
      %v6840 = vadd.f32 %v6736, %v6792
      %v6841 = vadd.f32 %v6737, %v6793
      %v6842 = vadd.f32 %v6738, %v6794
      %v6843 = vadd.f32 %v6739, %v6795
      %v6844 = vadd.f32 %v6740, %v6796
      %v6845 = vadd.f32 %v6741, %v6797
      %v6846 = vadd.f32 %v6742, %v6798
      %v6847 = vadd.f32 %v6743, %v6799
      %v6848 = vadd.f32 %v6744, %v6800
      %v6849 = vadd.f32 %v6745, %v6801
      %v6850 = vlaneseq
      %v6851 = vshrl.u32 %v6850, 7
      %v6852 = vsub.s32 1, %v6851
      %v6853 = vrot.slane %v3262, %v6852
      %6855 = vrot.lane.b32.xlu0 %v6853, 8
      %v6856 = vpop.permute.xlu0 %6855
      %v6858 = vmul.f32 %v1166, %v6856
      %v6859 = vmul.f32 %v1167, %v6856
      %v6860 = vmul.f32 %v1168, %v6856
      %v6861 = vmul.f32 %v1170, %v6856
      %v6862 = vmul.f32 %v1171, %v6856
      %v6863 = vmul.f32 %v1172, %v6856
      %v6864 = vmul.f32 %v1174, %v6856
      %v6865 = vmul.f32 %v1175, %v6856
      %v6866 = vmul.f32 %v1176, %v6856
      %v6867 = vmul.f32 %v1178, %v6856
      %v6868 = vmul.f32 %v1179, %v6856
      %v6869 = vmul.f32 %v1180, %v6856
      %v6870 = vmul.f32 %v1182, %v6856
      %v6871 = vmul.f32 %v1183, %v6856
      %v6872 = vmul.f32 %v1184, %v6856
      %v6873 = vmul.f32 %v1186, %v6856
      %v6874 = vmul.f32 %v1187, %v6856
      %v6875 = vmul.f32 %v1188, %v6856
      %v6876 = vmul.f32 %v1190, %v6856
      %v6877 = vmul.f32 %v1191, %v6856
      %v6878 = vmul.f32 %v1192, %v6856
      %v6879 = vmul.f32 %v1194, %v6856
      %v6880 = vmul.f32 %v1195, %v6856
      %v6881 = vmul.f32 %v1196, %v6856
      %v6882 = vmul.f32 %v1198, %v6856
      %v6883 = vmul.f32 %v1199, %v6856
      %v6884 = vmul.f32 %v1200, %v6856
      %v6885 = vmul.f32 %v1202, %v6856
      %v6886 = vmul.f32 %v1203, %v6856
      %v6887 = vmul.f32 %v1204, %v6856
      %v6888 = vmul.f32 %v1206, %v6856
      %v6889 = vmul.f32 %v1207, %v6856
      %v6890 = vmul.f32 %v1208, %v6856
      %v6891 = vmul.f32 %v1210, %v6856
      %v6892 = vmul.f32 %v1211, %v6856
      %v6893 = vmul.f32 %v1212, %v6856
      %v6894 = vmul.f32 %v1214, %v6856
      %v6895 = vmul.f32 %v1215, %v6856
      %v6896 = vmul.f32 %v1216, %v6856
      %v6897 = vmul.f32 %v1218, %v6856
      %v6898 = vmul.f32 %v1219, %v6856
      %v6899 = vmul.f32 %v1220, %v6856
      %v6900 = vmul.f32 %v1222, %v6856
      %v6901 = vmul.f32 %v1223, %v6856
      %v6902 = vmul.f32 %v1224, %v6856
      %v6903 = vmul.f32 %v1226, %v6856
      %v6904 = vmul.f32 %v1227, %v6856
      %v6905 = vmul.f32 %v1228, %v6856
      %v6954 = vrot.slane %v6858, 1
      %v6955 = vrot.slane %v6859, 1
      %v6956 = vsel %vm1405, %v6954, %v6955
      %v6957 = vrot.slane %v6860, 1
      %v6958 = vsel %vm1405, %v6955, %v6957
      %v6959 = vrot.slane %v6861, 1
      %v6960 = vrot.slane %v6862, 1
      %v6961 = vsel %vm1405, %v6959, %v6960
      %v6962 = vrot.slane %v6863, 1
      %v6963 = vsel %vm1405, %v6960, %v6962
      %v6964 = vrot.slane %v6864, 1
      %v6965 = vrot.slane %v6865, 1
      %v6966 = vsel %vm1405, %v6964, %v6965
      %v6967 = vrot.slane %v6866, 1
      %v6968 = vsel %vm1405, %v6965, %v6967
      %v6969 = vrot.slane %v6867, 1
      %v6970 = vrot.slane %v6868, 1
      %v6971 = vsel %vm1405, %v6969, %v6970
      %v6972 = vrot.slane %v6869, 1
      %v6973 = vsel %vm1405, %v6970, %v6972
      %v6974 = vrot.slane %v6870, 1
      %v6975 = vrot.slane %v6871, 1
      %v6976 = vsel %vm1405, %v6974, %v6975
      %v6977 = vrot.slane %v6872, 1
      %v6978 = vsel %vm1405, %v6975, %v6977
      %v6979 = vrot.slane %v6873, 1
      %v6980 = vrot.slane %v6874, 1
      %v6981 = vsel %vm1405, %v6979, %v6980
      %v6982 = vrot.slane %v6875, 1
      %v6983 = vsel %vm1405, %v6980, %v6982
      %v6984 = vrot.slane %v6876, 1
      %v6985 = vrot.slane %v6877, 1
      %v6986 = vsel %vm1405, %v6984, %v6985
      %v6987 = vrot.slane %v6878, 1
      %v6988 = vsel %vm1405, %v6985, %v6987
      %v6989 = vrot.slane %v6879, 1
      %v6990 = vrot.slane %v6880, 1
      %v6991 = vsel %vm1405, %v6989, %v6990
      %v6992 = vrot.slane %v6881, 1
      %v6993 = vsel %vm1405, %v6990, %v6992
      %v6994 = vrot.slane %v6882, 1
      %v6995 = vrot.slane %v6883, 1
      %v6996 = vsel %vm1405, %v6994, %v6995
      %v6997 = vrot.slane %v6884, 1
      %v6998 = vsel %vm1405, %v6995, %v6997
      %v6999 = vrot.slane %v6885, 1
      %v7000 = vrot.slane %v6886, 1
      %v7001 = vsel %vm1405, %v6999, %v7000
      %v7002 = vrot.slane %v6887, 1
      %v7003 = vsel %vm1405, %v7000, %v7002
      %v7004 = vrot.slane %v6888, 1
      %v7005 = vrot.slane %v6889, 1
      %v7006 = vsel %vm1405, %v7004, %v7005
      %v7007 = vrot.slane %v6890, 1
      %v7008 = vsel %vm1405, %v7005, %v7007
      %v7009 = vrot.slane %v6891, 1
      %v7010 = vrot.slane %v6892, 1
      %v7011 = vsel %vm1405, %v7009, %v7010
      %v7012 = vrot.slane %v6893, 1
      %v7013 = vsel %vm1405, %v7010, %v7012
      %v7014 = vrot.slane %v6894, 1
      %v7015 = vrot.slane %v6895, 1
      %v7016 = vsel %vm1405, %v7014, %v7015
      %v7017 = vrot.slane %v6896, 1
      %v7018 = vsel %vm1405, %v7015, %v7017
      %v7019 = vrot.slane %v6897, 1
      %v7020 = vrot.slane %v6898, 1
      %v7021 = vsel %vm1405, %v7019, %v7020
      %v7022 = vrot.slane %v6899, 1
      %v7023 = vsel %vm1405, %v7020, %v7022
      %v7024 = vrot.slane %v6900, 1
      %v7025 = vrot.slane %v6901, 1
      %v7026 = vsel %vm1405, %v7024, %v7025
      %v7027 = vrot.slane %v6902, 1
      %v7028 = vsel %vm1405, %v7025, %v7027
      %v7029 = vrot.slane %v6903, 1
      %v7030 = vrot.slane %v6904, 1
      %v7031 = vsel %vm1405, %v7029, %v7030
      %v7032 = vrot.slane %v6905, 1
      %v7033 = vsel %vm1405, %v7030, %v7032
      %v7082 = vadd.f32 %v6802, %v6956
      %v7083 = vadd.f32 %v6803, %v6958
      %v7084 = vadd.f32 %v6804, %v6957
      %v7085 = vadd.f32 %v6805, %v6961
      %v7086 = vadd.f32 %v6806, %v6963
      %v7087 = vadd.f32 %v6807, %v6962
      %v7088 = vadd.f32 %v6808, %v6966
      %v7089 = vadd.f32 %v6809, %v6968
      %v7090 = vadd.f32 %v6810, %v6967
      %v7091 = vadd.f32 %v6811, %v6971
      %v7092 = vadd.f32 %v6812, %v6973
      %v7093 = vadd.f32 %v6813, %v6972
      %v7094 = vadd.f32 %v6814, %v6976
      %v7095 = vadd.f32 %v6815, %v6978
      %v7096 = vadd.f32 %v6816, %v6977
      %v7097 = vadd.f32 %v6817, %v6981
      %v7098 = vadd.f32 %v6818, %v6983
      %v7099 = vadd.f32 %v6819, %v6982
      %v7100 = vadd.f32 %v6820, %v6986
      %v7101 = vadd.f32 %v6821, %v6988
      %v7102 = vadd.f32 %v6822, %v6987
      %v7103 = vadd.f32 %v6823, %v6991
      %v7104 = vadd.f32 %v6824, %v6993
      %v7105 = vadd.f32 %v6825, %v6992
      %v7106 = vadd.f32 %v6826, %v6996
      %v7107 = vadd.f32 %v6827, %v6998
      %v7108 = vadd.f32 %v6828, %v6997
      %v7109 = vadd.f32 %v6829, %v7001
      %v7110 = vadd.f32 %v6830, %v7003
      %v7111 = vadd.f32 %v6831, %v7002
      %v7112 = vadd.f32 %v6832, %v7006
      %v7113 = vadd.f32 %v6833, %v7008
      %v7114 = vadd.f32 %v6834, %v7007
      %v7115 = vadd.f32 %v6835, %v7011
      %v7116 = vadd.f32 %v6836, %v7013
      %v7117 = vadd.f32 %v6837, %v7012
      %v7118 = vadd.f32 %v6838, %v7016
      %v7119 = vadd.f32 %v6839, %v7018
      %v7120 = vadd.f32 %v6840, %v7017
      %v7121 = vadd.f32 %v6841, %v7021
      %v7122 = vadd.f32 %v6842, %v7023
      %v7123 = vadd.f32 %v6843, %v7022
      %v7124 = vadd.f32 %v6844, %v7026
      %v7125 = vadd.f32 %v6845, %v7028
      %v7126 = vadd.f32 %v6846, %v7027
      %v7127 = vadd.f32 %v6847, %v7031
      %v7128 = vadd.f32 %v6848, %v7033
      %v7129 = vadd.f32 %v6849, %v7032
      %v7130 = vlaneseq
      %v7131 = vshrl.u32 %v7130, 7
      %v7132 = vsub.s32 2, %v7131
      %v7133 = vrot.slane %v3262, %v7132
      %7135 = vrot.lane.b32.xlu0 %v7133, 8
      %v7136 = vpop.permute.xlu0 %7135
      %v7138 = vmul.f32 %v1167, %v7136
      %v7139 = vmul.f32 %v1168, %v7136
      %v7140 = vmul.f32 %v1171, %v7136
      %v7141 = vmul.f32 %v1172, %v7136
      %v7142 = vmul.f32 %v1175, %v7136
      %v7143 = vmul.f32 %v1176, %v7136
      %v7144 = vmul.f32 %v1179, %v7136
      %v7145 = vmul.f32 %v1180, %v7136
      %v7146 = vmul.f32 %v1183, %v7136
      %v7147 = vmul.f32 %v1184, %v7136
      %v7148 = vmul.f32 %v1187, %v7136
      %v7149 = vmul.f32 %v1188, %v7136
      %v7150 = vmul.f32 %v1191, %v7136
      %v7151 = vmul.f32 %v1192, %v7136
      %v7152 = vmul.f32 %v1195, %v7136
      %v7153 = vmul.f32 %v1196, %v7136
      %v7154 = vmul.f32 %v1199, %v7136
      %v7155 = vmul.f32 %v1200, %v7136
      %v7156 = vmul.f32 %v1203, %v7136
      %v7157 = vmul.f32 %v1204, %v7136
      %v7158 = vmul.f32 %v1207, %v7136
      %v7159 = vmul.f32 %v1208, %v7136
      %v7160 = vmul.f32 %v1211, %v7136
      %v7161 = vmul.f32 %v1212, %v7136
      %v7162 = vmul.f32 %v1215, %v7136
      %v7163 = vmul.f32 %v1216, %v7136
      %v7164 = vmul.f32 %v1219, %v7136
      %v7165 = vmul.f32 %v1220, %v7136
      %v7166 = vmul.f32 %v1223, %v7136
      %v7167 = vmul.f32 %v1224, %v7136
      %v7168 = vmul.f32 %v1227, %v7136
      %v7169 = vmul.f32 %v1228, %v7136
      %v7202 = vrot.slane %v7138, 2
      %v7203 = vrot.slane %v7139, 2
      %v7204 = vsel %vm1650, %v7202, %v7203
      %v7205 = vrot.slane %v7140, 2
      %v7206 = vrot.slane %v7141, 2
      %v7207 = vsel %vm1650, %v7205, %v7206
      %v7208 = vrot.slane %v7142, 2
      %v7209 = vrot.slane %v7143, 2
      %v7210 = vsel %vm1650, %v7208, %v7209
      %v7211 = vrot.slane %v7144, 2
      %v7212 = vrot.slane %v7145, 2
      %v7213 = vsel %vm1650, %v7211, %v7212
      %v7214 = vrot.slane %v7146, 2
      %v7215 = vrot.slane %v7147, 2
      %v7216 = vsel %vm1650, %v7214, %v7215
      %v7217 = vrot.slane %v7148, 2
      %v7218 = vrot.slane %v7149, 2
      %v7219 = vsel %vm1650, %v7217, %v7218
      %v7220 = vrot.slane %v7150, 2
      %v7221 = vrot.slane %v7151, 2
      %v7222 = vsel %vm1650, %v7220, %v7221
      %v7223 = vrot.slane %v7152, 2
      %v7224 = vrot.slane %v7153, 2
      %v7225 = vsel %vm1650, %v7223, %v7224
      %v7226 = vrot.slane %v7154, 2
      %v7227 = vrot.slane %v7155, 2
      %v7228 = vsel %vm1650, %v7226, %v7227
      %v7229 = vrot.slane %v7156, 2
      %v7230 = vrot.slane %v7157, 2
      %v7231 = vsel %vm1650, %v7229, %v7230
      %v7232 = vrot.slane %v7158, 2
      %v7233 = vrot.slane %v7159, 2
      %v7234 = vsel %vm1650, %v7232, %v7233
      %v7235 = vrot.slane %v7160, 2
      %v7236 = vrot.slane %v7161, 2
      %v7237 = vsel %vm1650, %v7235, %v7236
      %v7238 = vrot.slane %v7162, 2
      %v7239 = vrot.slane %v7163, 2
      %v7240 = vsel %vm1650, %v7238, %v7239
      %v7241 = vrot.slane %v7164, 2
      %v7242 = vrot.slane %v7165, 2
      %v7243 = vsel %vm1650, %v7241, %v7242
      %v7244 = vrot.slane %v7166, 2
      %v7245 = vrot.slane %v7167, 2
      %v7246 = vsel %vm1650, %v7244, %v7245
      %v7247 = vrot.slane %v7168, 2
      %v7248 = vrot.slane %v7169, 2
      %v7249 = vsel %vm1650, %v7247, %v7248
      %v7298 = vadd.f32 %v7082, %v7202
      %v7299 = vadd.f32 %v7083, %v7204
      %v7300 = vadd.f32 %v7084, %v7203
      %v7301 = vadd.f32 %v7085, %v7205
      %v7302 = vadd.f32 %v7086, %v7207
      %v7303 = vadd.f32 %v7087, %v7206
      %v7304 = vadd.f32 %v7088, %v7208
      %v7305 = vadd.f32 %v7089, %v7210
      %v7306 = vadd.f32 %v7090, %v7209
      %v7307 = vadd.f32 %v7091, %v7211
      %v7308 = vadd.f32 %v7092, %v7213
      %v7309 = vadd.f32 %v7093, %v7212
      %v7310 = vadd.f32 %v7094, %v7214
      %v7311 = vadd.f32 %v7095, %v7216
      %v7312 = vadd.f32 %v7096, %v7215
      %v7313 = vadd.f32 %v7097, %v7217
      %v7314 = vadd.f32 %v7098, %v7219
      %v7315 = vadd.f32 %v7099, %v7218
      %v7316 = vadd.f32 %v7100, %v7220
      %v7317 = vadd.f32 %v7101, %v7222
      %v7318 = vadd.f32 %v7102, %v7221
      %v7319 = vadd.f32 %v7103, %v7223
      %v7320 = vadd.f32 %v7104, %v7225
      %v7321 = vadd.f32 %v7105, %v7224
      %v7322 = vadd.f32 %v7106, %v7226
      %v7323 = vadd.f32 %v7107, %v7228
      %v7324 = vadd.f32 %v7108, %v7227
      %v7325 = vadd.f32 %v7109, %v7229
      %v7326 = vadd.f32 %v7110, %v7231
      %v7327 = vadd.f32 %v7111, %v7230
      %v7328 = vadd.f32 %v7112, %v7232
      %v7329 = vadd.f32 %v7113, %v7234
      %v7330 = vadd.f32 %v7114, %v7233
      %v7331 = vadd.f32 %v7115, %v7235
      %v7332 = vadd.f32 %v7116, %v7237
      %v7333 = vadd.f32 %v7117, %v7236
      %v7334 = vadd.f32 %v7118, %v7238
      %v7335 = vadd.f32 %v7119, %v7240
      %v7336 = vadd.f32 %v7120, %v7239
      %v7337 = vadd.f32 %v7121, %v7241
      %v7338 = vadd.f32 %v7122, %v7243
      %v7339 = vadd.f32 %v7123, %v7242
      %v7340 = vadd.f32 %v7124, %v7244
      %v7341 = vadd.f32 %v7125, %v7246
      %v7342 = vadd.f32 %v7126, %v7245
      %v7343 = vadd.f32 %v7127, %v7247
      %v7344 = vadd.f32 %v7128, %v7249
      %v7345 = vadd.f32 %v7129, %v7248
      %v7346 = vlaneseq
      %v7347 = vshrl.u32 %v7346, 7
      %v7348 = vsub.s32 3, %v7347
      %v7349 = vrot.slane %v3262, %v7348
      %7351 = vrot.lane.b32.xlu0 %v7349, 8
      %v7352 = vpop.permute.xlu0 %7351
      %v7354 = vmul.f32 %v1167, %v7352
      %v7355 = vmul.f32 %v1168, %v7352
      %v7356 = vmul.f32 %v1169, %v7352
      %v7357 = vmul.f32 %v1171, %v7352
      %v7358 = vmul.f32 %v1172, %v7352
      %v7359 = vmul.f32 %v1173, %v7352
      %v7360 = vmul.f32 %v1175, %v7352
      %v7361 = vmul.f32 %v1176, %v7352
      %v7362 = vmul.f32 %v1177, %v7352
      %v7363 = vmul.f32 %v1179, %v7352
      %v7364 = vmul.f32 %v1180, %v7352
      %v7365 = vmul.f32 %v1181, %v7352
      %v7366 = vmul.f32 %v1183, %v7352
      %v7367 = vmul.f32 %v1184, %v7352
      %v7368 = vmul.f32 %v1185, %v7352
      %v7369 = vmul.f32 %v1187, %v7352
      %v7370 = vmul.f32 %v1188, %v7352
      %v7371 = vmul.f32 %v1189, %v7352
      %v7372 = vmul.f32 %v1191, %v7352
      %v7373 = vmul.f32 %v1192, %v7352
      %v7374 = vmul.f32 %v1193, %v7352
      %v7375 = vmul.f32 %v1195, %v7352
      %v7376 = vmul.f32 %v1196, %v7352
      %v7377 = vmul.f32 %v1197, %v7352
      %v7378 = vmul.f32 %v1199, %v7352
      %v7379 = vmul.f32 %v1200, %v7352
      %v7380 = vmul.f32 %v1201, %v7352
      %v7381 = vmul.f32 %v1203, %v7352
      %v7382 = vmul.f32 %v1204, %v7352
      %v7383 = vmul.f32 %v1205, %v7352
      %v7384 = vmul.f32 %v1207, %v7352
      %v7385 = vmul.f32 %v1208, %v7352
      %v7386 = vmul.f32 %v1209, %v7352
      %v7387 = vmul.f32 %v1211, %v7352
      %v7388 = vmul.f32 %v1212, %v7352
      %v7389 = vmul.f32 %v1213, %v7352
      %v7390 = vmul.f32 %v1215, %v7352
      %v7391 = vmul.f32 %v1216, %v7352
      %v7392 = vmul.f32 %v1217, %v7352
      %v7393 = vmul.f32 %v1219, %v7352
      %v7394 = vmul.f32 %v1220, %v7352
      %v7395 = vmul.f32 %v1221, %v7352
      %v7396 = vmul.f32 %v1223, %v7352
      %v7397 = vmul.f32 %v1224, %v7352
      %v7398 = vmul.f32 %v1225, %v7352
      %v7399 = vmul.f32 %v1227, %v7352
      %v7400 = vmul.f32 %v1228, %v7352
      %v7401 = vmul.f32 %v1229, %v7352
      %v7450 = vrot.slane %v7354, 3
      %v7451 = vrot.slane %v7355, 3
      %v7452 = vsel %vm3968, %v7450, %v7451
      %v7453 = vrot.slane %v7356, 3
      %v7454 = vsel %vm3968, %v7451, %v7453
      %v7455 = vrot.slane %v7357, 3
      %v7456 = vrot.slane %v7358, 3
      %v7457 = vsel %vm3968, %v7455, %v7456
      %v7458 = vrot.slane %v7359, 3
      %v7459 = vsel %vm3968, %v7456, %v7458
      %v7460 = vrot.slane %v7360, 3
      %v7461 = vrot.slane %v7361, 3
      %v7462 = vsel %vm3968, %v7460, %v7461
      %v7463 = vrot.slane %v7362, 3
      %v7464 = vsel %vm3968, %v7461, %v7463
      %v7465 = vrot.slane %v7363, 3
      %v7466 = vrot.slane %v7364, 3
      %v7467 = vsel %vm3968, %v7465, %v7466
      %v7468 = vrot.slane %v7365, 3
      %v7469 = vsel %vm3968, %v7466, %v7468
      %v7470 = vrot.slane %v7366, 3
      %v7471 = vrot.slane %v7367, 3
      %v7472 = vsel %vm3968, %v7470, %v7471
      %v7473 = vrot.slane %v7368, 3
      %v7474 = vsel %vm3968, %v7471, %v7473
      %v7475 = vrot.slane %v7369, 3
      %v7476 = vrot.slane %v7370, 3
      %v7477 = vsel %vm3968, %v7475, %v7476
      %v7478 = vrot.slane %v7371, 3
      %v7479 = vsel %vm3968, %v7476, %v7478
      %v7480 = vrot.slane %v7372, 3
      %v7481 = vrot.slane %v7373, 3
      %v7482 = vsel %vm3968, %v7480, %v7481
      %v7483 = vrot.slane %v7374, 3
      %v7484 = vsel %vm3968, %v7481, %v7483
      %v7485 = vrot.slane %v7375, 3
      %v7486 = vrot.slane %v7376, 3
      %v7487 = vsel %vm3968, %v7485, %v7486
      %v7488 = vrot.slane %v7377, 3
      %v7489 = vsel %vm3968, %v7486, %v7488
      %v7490 = vrot.slane %v7378, 3
      %v7491 = vrot.slane %v7379, 3
      %v7492 = vsel %vm3968, %v7490, %v7491
      %v7493 = vrot.slane %v7380, 3
      %v7494 = vsel %vm3968, %v7491, %v7493
      %v7495 = vrot.slane %v7381, 3
      %v7496 = vrot.slane %v7382, 3
      %v7497 = vsel %vm3968, %v7495, %v7496
      %v7498 = vrot.slane %v7383, 3
      %v7499 = vsel %vm3968, %v7496, %v7498
      %v7500 = vrot.slane %v7384, 3
      %v7501 = vrot.slane %v7385, 3
      %v7502 = vsel %vm3968, %v7500, %v7501
      %v7503 = vrot.slane %v7386, 3
      %v7504 = vsel %vm3968, %v7501, %v7503
      %v7505 = vrot.slane %v7387, 3
      %v7506 = vrot.slane %v7388, 3
      %v7507 = vsel %vm3968, %v7505, %v7506
      %v7508 = vrot.slane %v7389, 3
      %v7509 = vsel %vm3968, %v7506, %v7508
      %v7510 = vrot.slane %v7390, 3
      %v7511 = vrot.slane %v7391, 3
      %v7512 = vsel %vm3968, %v7510, %v7511
      %v7513 = vrot.slane %v7392, 3
      %v7514 = vsel %vm3968, %v7511, %v7513
      %v7515 = vrot.slane %v7393, 3
      %v7516 = vrot.slane %v7394, 3
      %v7517 = vsel %vm3968, %v7515, %v7516
      %v7518 = vrot.slane %v7395, 3
      %v7519 = vsel %vm3968, %v7516, %v7518
      %v7520 = vrot.slane %v7396, 3
      %v7521 = vrot.slane %v7397, 3
      %v7522 = vsel %vm3968, %v7520, %v7521
      %v7523 = vrot.slane %v7398, 3
      %v7524 = vsel %vm3968, %v7521, %v7523
      %v7525 = vrot.slane %v7399, 3
      %v7526 = vrot.slane %v7400, 3
      %v7527 = vsel %vm3968, %v7525, %v7526
      %v7528 = vrot.slane %v7401, 3
      %v7529 = vsel %vm3968, %v7526, %v7528
      %v7578 = vadd.f32 %v7298, %v7450
      %v7579 = vadd.f32 %v7299, %v7452
      %v7580 = vadd.f32 %v7300, %v7454
      %v7581 = vadd.f32 %v7301, %v7455
      %v7582 = vadd.f32 %v7302, %v7457
      %v7583 = vadd.f32 %v7303, %v7459
      %v7584 = vadd.f32 %v7304, %v7460
      %v7585 = vadd.f32 %v7305, %v7462
      %v7586 = vadd.f32 %v7306, %v7464
      %v7587 = vadd.f32 %v7307, %v7465
      %v7588 = vadd.f32 %v7308, %v7467
      %v7589 = vadd.f32 %v7309, %v7469
      %v7590 = vadd.f32 %v7310, %v7470
      %v7591 = vadd.f32 %v7311, %v7472
      %v7592 = vadd.f32 %v7312, %v7474
      %v7593 = vadd.f32 %v7313, %v7475
      %v7594 = vadd.f32 %v7314, %v7477
      %v7595 = vadd.f32 %v7315, %v7479
      %v7596 = vadd.f32 %v7316, %v7480
      %v7597 = vadd.f32 %v7317, %v7482
      %v7598 = vadd.f32 %v7318, %v7484
      %v7599 = vadd.f32 %v7319, %v7485
      %v7600 = vadd.f32 %v7320, %v7487
      %v7601 = vadd.f32 %v7321, %v7489
      %v7602 = vadd.f32 %v7322, %v7490
      %v7603 = vadd.f32 %v7323, %v7492
      %v7604 = vadd.f32 %v7324, %v7494
      %v7605 = vadd.f32 %v7325, %v7495
      %v7606 = vadd.f32 %v7326, %v7497
      %v7607 = vadd.f32 %v7327, %v7499
      %v7608 = vadd.f32 %v7328, %v7500
      %v7609 = vadd.f32 %v7329, %v7502
      %v7610 = vadd.f32 %v7330, %v7504
      %v7611 = vadd.f32 %v7331, %v7505
      %v7612 = vadd.f32 %v7332, %v7507
      %v7613 = vadd.f32 %v7333, %v7509
      %v7614 = vadd.f32 %v7334, %v7510
      %v7615 = vadd.f32 %v7335, %v7512
      %v7616 = vadd.f32 %v7336, %v7514
      %v7617 = vadd.f32 %v7337, %v7515
      %v7618 = vadd.f32 %v7338, %v7517
      %v7619 = vadd.f32 %v7339, %v7519
      %v7620 = vadd.f32 %v7340, %v7520
      %v7621 = vadd.f32 %v7341, %v7522
      %v7622 = vadd.f32 %v7342, %v7524
      %v7623 = vadd.f32 %v7343, %v7525
      %v7624 = vadd.f32 %v7344, %v7527
      %v7625 = vadd.f32 %v7345, %v7529
      %v7626 = vlaneseq
      %v7627 = vshrl.u32 %v7626, 7
      %v7628 = vsub.s32 4, %v7627
      %v7629 = vrot.slane %v3262, %v7628
      %7631 = vrot.lane.b32.xlu0 %v7629, 8
      %v7632 = vpop.permute.xlu0 %7631
      %v7634 = vmul.f32 %v1167, %v7632
      %v7635 = vmul.f32 %v1168, %v7632
      %v7636 = vmul.f32 %v1169, %v7632
      %v7637 = vmul.f32 %v1171, %v7632
      %v7638 = vmul.f32 %v1172, %v7632
      %v7639 = vmul.f32 %v1173, %v7632
      %v7640 = vmul.f32 %v1175, %v7632
      %v7641 = vmul.f32 %v1176, %v7632
      %v7642 = vmul.f32 %v1177, %v7632
      %v7643 = vmul.f32 %v1179, %v7632
      %v7644 = vmul.f32 %v1180, %v7632
      %v7645 = vmul.f32 %v1181, %v7632
      %v7646 = vmul.f32 %v1183, %v7632
      %v7647 = vmul.f32 %v1184, %v7632
      %v7648 = vmul.f32 %v1185, %v7632
      %v7649 = vmul.f32 %v1187, %v7632
      %v7650 = vmul.f32 %v1188, %v7632
      %v7651 = vmul.f32 %v1189, %v7632
      %v7652 = vmul.f32 %v1191, %v7632
      %v7653 = vmul.f32 %v1192, %v7632
      %v7654 = vmul.f32 %v1193, %v7632
      %v7655 = vmul.f32 %v1195, %v7632
      %v7656 = vmul.f32 %v1196, %v7632
      %v7657 = vmul.f32 %v1197, %v7632
      %v7658 = vmul.f32 %v1199, %v7632
      %v7659 = vmul.f32 %v1200, %v7632
      %v7660 = vmul.f32 %v1201, %v7632
      %v7661 = vmul.f32 %v1203, %v7632
      %v7662 = vmul.f32 %v1204, %v7632
      %v7663 = vmul.f32 %v1205, %v7632
      %v7664 = vmul.f32 %v1207, %v7632
      %v7665 = vmul.f32 %v1208, %v7632
      %v7666 = vmul.f32 %v1209, %v7632
      %v7667 = vmul.f32 %v1211, %v7632
      %v7668 = vmul.f32 %v1212, %v7632
      %v7669 = vmul.f32 %v1213, %v7632
      %v7670 = vmul.f32 %v1215, %v7632
      %v7671 = vmul.f32 %v1216, %v7632
      %v7672 = vmul.f32 %v1217, %v7632
      %v7673 = vmul.f32 %v1219, %v7632
      %v7674 = vmul.f32 %v1220, %v7632
      %v7675 = vmul.f32 %v1221, %v7632
      %v7676 = vmul.f32 %v1223, %v7632
      %v7677 = vmul.f32 %v1224, %v7632
      %v7678 = vmul.f32 %v1225, %v7632
      %v7679 = vmul.f32 %v1227, %v7632
      %v7680 = vmul.f32 %v1228, %v7632
      %v7681 = vmul.f32 %v1229, %v7632
      %v7730 = vrot.slane %v7634, 4
      %v7731 = vrot.slane %v7635, 4
      %v7732 = vsel %vm4249, %v7730, %v7731
      %v7733 = vrot.slane %v7636, 4
      %v7734 = vsel %vm4249, %v7731, %v7733
      %v7735 = vrot.slane %v7637, 4
      %v7736 = vrot.slane %v7638, 4
      %v7737 = vsel %vm4249, %v7735, %v7736
      %v7738 = vrot.slane %v7639, 4
      %v7739 = vsel %vm4249, %v7736, %v7738
      %v7740 = vrot.slane %v7640, 4
      %v7741 = vrot.slane %v7641, 4
      %v7742 = vsel %vm4249, %v7740, %v7741
      %v7743 = vrot.slane %v7642, 4
      %v7744 = vsel %vm4249, %v7741, %v7743
      %v7745 = vrot.slane %v7643, 4
      %v7746 = vrot.slane %v7644, 4
      %v7747 = vsel %vm4249, %v7745, %v7746
      %v7748 = vrot.slane %v7645, 4
      %v7749 = vsel %vm4249, %v7746, %v7748
      %v7750 = vrot.slane %v7646, 4
      %v7751 = vrot.slane %v7647, 4
      %v7752 = vsel %vm4249, %v7750, %v7751
      %v7753 = vrot.slane %v7648, 4
      %v7754 = vsel %vm4249, %v7751, %v7753
      %v7755 = vrot.slane %v7649, 4
      %v7756 = vrot.slane %v7650, 4
      %v7757 = vsel %vm4249, %v7755, %v7756
      %v7758 = vrot.slane %v7651, 4
      %v7759 = vsel %vm4249, %v7756, %v7758
      %v7760 = vrot.slane %v7652, 4
      %v7761 = vrot.slane %v7653, 4
      %v7762 = vsel %vm4249, %v7760, %v7761
      %v7763 = vrot.slane %v7654, 4
      %v7764 = vsel %vm4249, %v7761, %v7763
      %v7765 = vrot.slane %v7655, 4
      %v7766 = vrot.slane %v7656, 4
      %v7767 = vsel %vm4249, %v7765, %v7766
      %v7768 = vrot.slane %v7657, 4
      %v7769 = vsel %vm4249, %v7766, %v7768
      %v7770 = vrot.slane %v7658, 4
      %v7771 = vrot.slane %v7659, 4
      %v7772 = vsel %vm4249, %v7770, %v7771
      %v7773 = vrot.slane %v7660, 4
      %v7774 = vsel %vm4249, %v7771, %v7773
      %v7775 = vrot.slane %v7661, 4
      %v7776 = vrot.slane %v7662, 4
      %v7777 = vsel %vm4249, %v7775, %v7776
      %v7778 = vrot.slane %v7663, 4
      %v7779 = vsel %vm4249, %v7776, %v7778
      %v7780 = vrot.slane %v7664, 4
      %v7781 = vrot.slane %v7665, 4
      %v7782 = vsel %vm4249, %v7780, %v7781
      %v7783 = vrot.slane %v7666, 4
      %v7784 = vsel %vm4249, %v7781, %v7783
      %v7785 = vrot.slane %v7667, 4
      %v7786 = vrot.slane %v7668, 4
      %v7787 = vsel %vm4249, %v7785, %v7786
      %v7788 = vrot.slane %v7669, 4
      %v7789 = vsel %vm4249, %v7786, %v7788
      %v7790 = vrot.slane %v7670, 4
      %v7791 = vrot.slane %v7671, 4
      %v7792 = vsel %vm4249, %v7790, %v7791
      %v7793 = vrot.slane %v7672, 4
      %v7794 = vsel %vm4249, %v7791, %v7793
      %v7795 = vrot.slane %v7673, 4
      %v7796 = vrot.slane %v7674, 4
      %v7797 = vsel %vm4249, %v7795, %v7796
      %v7798 = vrot.slane %v7675, 4
      %v7799 = vsel %vm4249, %v7796, %v7798
      %v7800 = vrot.slane %v7676, 4
      %v7801 = vrot.slane %v7677, 4
      %v7802 = vsel %vm4249, %v7800, %v7801
      %v7803 = vrot.slane %v7678, 4
      %v7804 = vsel %vm4249, %v7801, %v7803
      %v7805 = vrot.slane %v7679, 4
      %v7806 = vrot.slane %v7680, 4
      %v7807 = vsel %vm4249, %v7805, %v7806
      %v7808 = vrot.slane %v7681, 4
      %v7809 = vsel %vm4249, %v7806, %v7808
      %v7858 = vadd.f32 %v7578, %v7730
      %v7859 = vadd.f32 %v7579, %v7732
      %v7860 = vadd.f32 %v7580, %v7734
      %v7861 = vadd.f32 %v7581, %v7735
      %v7862 = vadd.f32 %v7582, %v7737
      %v7863 = vadd.f32 %v7583, %v7739
      %v7864 = vadd.f32 %v7584, %v7740
      %v7865 = vadd.f32 %v7585, %v7742
      %v7866 = vadd.f32 %v7586, %v7744
      %v7867 = vadd.f32 %v7587, %v7745
      %v7868 = vadd.f32 %v7588, %v7747
      %v7869 = vadd.f32 %v7589, %v7749
      %v7870 = vadd.f32 %v7590, %v7750
      %v7871 = vadd.f32 %v7591, %v7752
      %v7872 = vadd.f32 %v7592, %v7754
      %v7873 = vadd.f32 %v7593, %v7755
      %v7874 = vadd.f32 %v7594, %v7757
      %v7875 = vadd.f32 %v7595, %v7759
      %v7876 = vadd.f32 %v7596, %v7760
      %v7877 = vadd.f32 %v7597, %v7762
      %v7878 = vadd.f32 %v7598, %v7764
      %v7879 = vadd.f32 %v7599, %v7765
      %v7880 = vadd.f32 %v7600, %v7767
      %v7881 = vadd.f32 %v7601, %v7769
      %v7882 = vadd.f32 %v7602, %v7770
      %v7883 = vadd.f32 %v7603, %v7772
      %v7884 = vadd.f32 %v7604, %v7774
      %v7885 = vadd.f32 %v7605, %v7775
      %v7886 = vadd.f32 %v7606, %v7777
      %v7887 = vadd.f32 %v7607, %v7779
      %v7888 = vadd.f32 %v7608, %v7780
      %v7889 = vadd.f32 %v7609, %v7782
      %v7890 = vadd.f32 %v7610, %v7784
      %v7891 = vadd.f32 %v7611, %v7785
      %v7892 = vadd.f32 %v7612, %v7787
      %v7893 = vadd.f32 %v7613, %v7789
      %v7894 = vadd.f32 %v7614, %v7790
      %v7895 = vadd.f32 %v7615, %v7792
      %v7896 = vadd.f32 %v7616, %v7794
      %v7897 = vadd.f32 %v7617, %v7795
      %v7898 = vadd.f32 %v7618, %v7797
      %v7899 = vadd.f32 %v7619, %v7799
      %v7900 = vadd.f32 %v7620, %v7800
      %v7901 = vadd.f32 %v7621, %v7802
      %v7902 = vadd.f32 %v7622, %v7804
      %v7903 = vadd.f32 %v7623, %v7805
      %v7904 = vadd.f32 %v7624, %v7807
      %v7905 = vadd.f32 %v7625, %v7809
      %v7906 = vlaneseq
      %v7907 = vshrl.u32 %v7906, 7
      %v7908 = vsub.s32 0, %v7907
      %v7909 = vrot.slane %v3263, %v7908
      %7911 = vrot.lane.b32.xlu0 %v7909, 8
      %v7912 = vpop.permute.xlu0 %7911
      %v7914 = vmul.f32 %v1170, %v7912
      %v7915 = vmul.f32 %v1171, %v7912
      %v7916 = vmul.f32 %v1172, %v7912
      %v7917 = vmul.f32 %v1174, %v7912
      %v7918 = vmul.f32 %v1175, %v7912
      %v7919 = vmul.f32 %v1176, %v7912
      %v7920 = vmul.f32 %v1178, %v7912
      %v7921 = vmul.f32 %v1179, %v7912
      %v7922 = vmul.f32 %v1180, %v7912
      %v7923 = vmul.f32 %v1182, %v7912
      %v7924 = vmul.f32 %v1183, %v7912
      %v7925 = vmul.f32 %v1184, %v7912
      %v7926 = vmul.f32 %v1186, %v7912
      %v7927 = vmul.f32 %v1187, %v7912
      %v7928 = vmul.f32 %v1188, %v7912
      %v7929 = vmul.f32 %v1190, %v7912
      %v7930 = vmul.f32 %v1191, %v7912
      %v7931 = vmul.f32 %v1192, %v7912
      %v7932 = vmul.f32 %v1194, %v7912
      %v7933 = vmul.f32 %v1195, %v7912
      %v7934 = vmul.f32 %v1196, %v7912
      %v7935 = vmul.f32 %v1198, %v7912
      %v7936 = vmul.f32 %v1199, %v7912
      %v7937 = vmul.f32 %v1200, %v7912
      %v7938 = vmul.f32 %v1202, %v7912
      %v7939 = vmul.f32 %v1203, %v7912
      %v7940 = vmul.f32 %v1204, %v7912
      %v7941 = vmul.f32 %v1206, %v7912
      %v7942 = vmul.f32 %v1207, %v7912
      %v7943 = vmul.f32 %v1208, %v7912
      %v7944 = vmul.f32 %v1210, %v7912
      %v7945 = vmul.f32 %v1211, %v7912
      %v7946 = vmul.f32 %v1212, %v7912
      %v7947 = vmul.f32 %v1214, %v7912
      %v7948 = vmul.f32 %v1215, %v7912
      %v7949 = vmul.f32 %v1216, %v7912
      %v7950 = vmul.f32 %v1218, %v7912
      %v7951 = vmul.f32 %v1219, %v7912
      %v7952 = vmul.f32 %v1220, %v7912
      %v7953 = vmul.f32 %v1222, %v7912
      %v7954 = vmul.f32 %v1223, %v7912
      %v7955 = vmul.f32 %v1224, %v7912
      %v7956 = vmul.f32 %v1226, %v7912
      %v7957 = vmul.f32 %v1227, %v7912
      %v7958 = vmul.f32 %v1228, %v7912
      %v7959 = vmul.f32 %v1230, %v7912
      %v7960 = vmul.f32 %v1231, %v7912
      %v7961 = vmul.f32 %v1232, %v7912
      %v7962 = vadd.f32 %v7858, %v7914
      %v7963 = vadd.f32 %v7859, %v7915
      %v7964 = vadd.f32 %v7860, %v7916
      %v7965 = vadd.f32 %v7861, %v7917
      %v7966 = vadd.f32 %v7862, %v7918
      %v7967 = vadd.f32 %v7863, %v7919
      %v7968 = vadd.f32 %v7864, %v7920
      %v7969 = vadd.f32 %v7865, %v7921
      %v7970 = vadd.f32 %v7866, %v7922
      %v7971 = vadd.f32 %v7867, %v7923
      %v7972 = vadd.f32 %v7868, %v7924
      %v7973 = vadd.f32 %v7869, %v7925
      %v7974 = vadd.f32 %v7870, %v7926
      %v7975 = vadd.f32 %v7871, %v7927
      %v7976 = vadd.f32 %v7872, %v7928
      %v7977 = vadd.f32 %v7873, %v7929
      %v7978 = vadd.f32 %v7874, %v7930
      %v7979 = vadd.f32 %v7875, %v7931
      %v7980 = vadd.f32 %v7876, %v7932
      %v7981 = vadd.f32 %v7877, %v7933
      %v7982 = vadd.f32 %v7878, %v7934
      %v7983 = vadd.f32 %v7879, %v7935
      %v7984 = vadd.f32 %v7880, %v7936
      %v7985 = vadd.f32 %v7881, %v7937
      %v7986 = vadd.f32 %v7882, %v7938
      %v7987 = vadd.f32 %v7883, %v7939
      %v7988 = vadd.f32 %v7884, %v7940
      %v7989 = vadd.f32 %v7885, %v7941
      %v7990 = vadd.f32 %v7886, %v7942
      %v7991 = vadd.f32 %v7887, %v7943
      %v7992 = vadd.f32 %v7888, %v7944
      %v7993 = vadd.f32 %v7889, %v7945
      %v7994 = vadd.f32 %v7890, %v7946
      %v7995 = vadd.f32 %v7891, %v7947
      %v7996 = vadd.f32 %v7892, %v7948
      %v7997 = vadd.f32 %v7893, %v7949
      %v7998 = vadd.f32 %v7894, %v7950
      %v7999 = vadd.f32 %v7895, %v7951
      %v8000 = vadd.f32 %v7896, %v7952
      %v8001 = vadd.f32 %v7897, %v7953
      %v8002 = vadd.f32 %v7898, %v7954
      %v8003 = vadd.f32 %v7899, %v7955
      %v8004 = vadd.f32 %v7900, %v7956
      %v8005 = vadd.f32 %v7901, %v7957
      %v8006 = vadd.f32 %v7902, %v7958
      %v8007 = vadd.f32 %v7903, %v7959
      %v8008 = vadd.f32 %v7904, %v7960
      %v8009 = vadd.f32 %v7905, %v7961
      %v8010 = vlaneseq
      %v8011 = vshrl.u32 %v8010, 7
      %v8012 = vsub.s32 1, %v8011
      %v8013 = vrot.slane %v3263, %v8012
      %8015 = vrot.lane.b32.xlu0 %v8013, 8
      %v8016 = vpop.permute.xlu0 %8015
      %v8018 = vmul.f32 %v1170, %v8016
      %v8019 = vmul.f32 %v1171, %v8016
      %v8020 = vmul.f32 %v1172, %v8016
      %v8021 = vmul.f32 %v1174, %v8016
      %v8022 = vmul.f32 %v1175, %v8016
      %v8023 = vmul.f32 %v1176, %v8016
      %v8024 = vmul.f32 %v1178, %v8016
      %v8025 = vmul.f32 %v1179, %v8016
      %v8026 = vmul.f32 %v1180, %v8016
      %v8027 = vmul.f32 %v1182, %v8016
      %v8028 = vmul.f32 %v1183, %v8016
      %v8029 = vmul.f32 %v1184, %v8016
      %v8030 = vmul.f32 %v1186, %v8016
      %v8031 = vmul.f32 %v1187, %v8016
      %v8032 = vmul.f32 %v1188, %v8016
      %v8033 = vmul.f32 %v1190, %v8016
      %v8034 = vmul.f32 %v1191, %v8016
      %v8035 = vmul.f32 %v1192, %v8016
      %v8036 = vmul.f32 %v1194, %v8016
      %v8037 = vmul.f32 %v1195, %v8016
      %v8038 = vmul.f32 %v1196, %v8016
      %v8039 = vmul.f32 %v1198, %v8016
      %v8040 = vmul.f32 %v1199, %v8016
      %v8041 = vmul.f32 %v1200, %v8016
      %v8042 = vmul.f32 %v1202, %v8016
      %v8043 = vmul.f32 %v1203, %v8016
      %v8044 = vmul.f32 %v1204, %v8016
      %v8045 = vmul.f32 %v1206, %v8016
      %v8046 = vmul.f32 %v1207, %v8016
      %v8047 = vmul.f32 %v1208, %v8016
      %v8048 = vmul.f32 %v1210, %v8016
      %v8049 = vmul.f32 %v1211, %v8016
      %v8050 = vmul.f32 %v1212, %v8016
      %v8051 = vmul.f32 %v1214, %v8016
      %v8052 = vmul.f32 %v1215, %v8016
      %v8053 = vmul.f32 %v1216, %v8016
      %v8054 = vmul.f32 %v1218, %v8016
      %v8055 = vmul.f32 %v1219, %v8016
      %v8056 = vmul.f32 %v1220, %v8016
      %v8057 = vmul.f32 %v1222, %v8016
      %v8058 = vmul.f32 %v1223, %v8016
      %v8059 = vmul.f32 %v1224, %v8016
      %v8060 = vmul.f32 %v1226, %v8016
      %v8061 = vmul.f32 %v1227, %v8016
      %v8062 = vmul.f32 %v1228, %v8016
      %v8063 = vmul.f32 %v1230, %v8016
      %v8064 = vmul.f32 %v1231, %v8016
      %v8065 = vmul.f32 %v1232, %v8016
      %v8114 = vrot.slane %v8018, 1
      %v8115 = vrot.slane %v8019, 1
      %v8116 = vsel %vm1405, %v8114, %v8115
      %v8117 = vrot.slane %v8020, 1
      %v8118 = vsel %vm1405, %v8115, %v8117
      %v8119 = vrot.slane %v8021, 1
      %v8120 = vrot.slane %v8022, 1
      %v8121 = vsel %vm1405, %v8119, %v8120
      %v8122 = vrot.slane %v8023, 1
      %v8123 = vsel %vm1405, %v8120, %v8122
      %v8124 = vrot.slane %v8024, 1
      %v8125 = vrot.slane %v8025, 1
      %v8126 = vsel %vm1405, %v8124, %v8125
      %v8127 = vrot.slane %v8026, 1
      %v8128 = vsel %vm1405, %v8125, %v8127
      %v8129 = vrot.slane %v8027, 1
      %v8130 = vrot.slane %v8028, 1
      %v8131 = vsel %vm1405, %v8129, %v8130
      %v8132 = vrot.slane %v8029, 1
      %v8133 = vsel %vm1405, %v8130, %v8132
      %v8134 = vrot.slane %v8030, 1
      %v8135 = vrot.slane %v8031, 1
      %v8136 = vsel %vm1405, %v8134, %v8135
      %v8137 = vrot.slane %v8032, 1
      %v8138 = vsel %vm1405, %v8135, %v8137
      %v8139 = vrot.slane %v8033, 1
      %v8140 = vrot.slane %v8034, 1
      %v8141 = vsel %vm1405, %v8139, %v8140
      %v8142 = vrot.slane %v8035, 1
      %v8143 = vsel %vm1405, %v8140, %v8142
      %v8144 = vrot.slane %v8036, 1
      %v8145 = vrot.slane %v8037, 1
      %v8146 = vsel %vm1405, %v8144, %v8145
      %v8147 = vrot.slane %v8038, 1
      %v8148 = vsel %vm1405, %v8145, %v8147
      %v8149 = vrot.slane %v8039, 1
      %v8150 = vrot.slane %v8040, 1
      %v8151 = vsel %vm1405, %v8149, %v8150
      %v8152 = vrot.slane %v8041, 1
      %v8153 = vsel %vm1405, %v8150, %v8152
      %v8154 = vrot.slane %v8042, 1
      %v8155 = vrot.slane %v8043, 1
      %v8156 = vsel %vm1405, %v8154, %v8155
      %v8157 = vrot.slane %v8044, 1
      %v8158 = vsel %vm1405, %v8155, %v8157
      %v8159 = vrot.slane %v8045, 1
      %v8160 = vrot.slane %v8046, 1
      %v8161 = vsel %vm1405, %v8159, %v8160
      %v8162 = vrot.slane %v8047, 1
      %v8163 = vsel %vm1405, %v8160, %v8162
      %v8164 = vrot.slane %v8048, 1
      %v8165 = vrot.slane %v8049, 1
      %v8166 = vsel %vm1405, %v8164, %v8165
      %v8167 = vrot.slane %v8050, 1
      %v8168 = vsel %vm1405, %v8165, %v8167
      %v8169 = vrot.slane %v8051, 1
      %v8170 = vrot.slane %v8052, 1
      %v8171 = vsel %vm1405, %v8169, %v8170
      %v8172 = vrot.slane %v8053, 1
      %v8173 = vsel %vm1405, %v8170, %v8172
      %v8174 = vrot.slane %v8054, 1
      %v8175 = vrot.slane %v8055, 1
      %v8176 = vsel %vm1405, %v8174, %v8175
      %v8177 = vrot.slane %v8056, 1
      %v8178 = vsel %vm1405, %v8175, %v8177
      %v8179 = vrot.slane %v8057, 1
      %v8180 = vrot.slane %v8058, 1
      %v8181 = vsel %vm1405, %v8179, %v8180
      %v8182 = vrot.slane %v8059, 1
      %v8183 = vsel %vm1405, %v8180, %v8182
      %v8184 = vrot.slane %v8060, 1
      %v8185 = vrot.slane %v8061, 1
      %v8186 = vsel %vm1405, %v8184, %v8185
      %v8187 = vrot.slane %v8062, 1
      %v8188 = vsel %vm1405, %v8185, %v8187
      %v8189 = vrot.slane %v8063, 1
      %v8190 = vrot.slane %v8064, 1
      %v8191 = vsel %vm1405, %v8189, %v8190
      %v8192 = vrot.slane %v8065, 1
      %v8193 = vsel %vm1405, %v8190, %v8192
      %v8242 = vadd.f32 %v7962, %v8116
      %v8243 = vadd.f32 %v7963, %v8118
      %v8244 = vadd.f32 %v7964, %v8117
      %v8245 = vadd.f32 %v7965, %v8121
      %v8246 = vadd.f32 %v7966, %v8123
      %v8247 = vadd.f32 %v7967, %v8122
      %v8248 = vadd.f32 %v7968, %v8126
      %v8249 = vadd.f32 %v7969, %v8128
      %v8250 = vadd.f32 %v7970, %v8127
      %v8251 = vadd.f32 %v7971, %v8131
      %v8252 = vadd.f32 %v7972, %v8133
      %v8253 = vadd.f32 %v7973, %v8132
      %v8254 = vadd.f32 %v7974, %v8136
      %v8255 = vadd.f32 %v7975, %v8138
      %v8256 = vadd.f32 %v7976, %v8137
      %v8257 = vadd.f32 %v7977, %v8141
      %v8258 = vadd.f32 %v7978, %v8143
      %v8259 = vadd.f32 %v7979, %v8142
      %v8260 = vadd.f32 %v7980, %v8146
      %v8261 = vadd.f32 %v7981, %v8148
      %v8262 = vadd.f32 %v7982, %v8147
      %v8263 = vadd.f32 %v7983, %v8151
      %v8264 = vadd.f32 %v7984, %v8153
      %v8265 = vadd.f32 %v7985, %v8152
      %v8266 = vadd.f32 %v7986, %v8156
      %v8267 = vadd.f32 %v7987, %v8158
      %v8268 = vadd.f32 %v7988, %v8157
      %v8269 = vadd.f32 %v7989, %v8161
      %v8270 = vadd.f32 %v7990, %v8163
      %v8271 = vadd.f32 %v7991, %v8162
      %v8272 = vadd.f32 %v7992, %v8166
      %v8273 = vadd.f32 %v7993, %v8168
      %v8274 = vadd.f32 %v7994, %v8167
      %v8275 = vadd.f32 %v7995, %v8171
      %v8276 = vadd.f32 %v7996, %v8173
      %v8277 = vadd.f32 %v7997, %v8172
      %v8278 = vadd.f32 %v7998, %v8176
      %v8279 = vadd.f32 %v7999, %v8178
      %v8280 = vadd.f32 %v8000, %v8177
      %v8281 = vadd.f32 %v8001, %v8181
      %v8282 = vadd.f32 %v8002, %v8183
      %v8283 = vadd.f32 %v8003, %v8182
      %v8284 = vadd.f32 %v8004, %v8186
      %v8285 = vadd.f32 %v8005, %v8188
      %v8286 = vadd.f32 %v8006, %v8187
      %v8287 = vadd.f32 %v8007, %v8191
      %v8288 = vadd.f32 %v8008, %v8193
      %v8289 = vadd.f32 %v8009, %v8192
      %v8290 = vlaneseq
      %v8291 = vshrl.u32 %v8290, 7
      %v8292 = vsub.s32 2, %v8291
      %v8293 = vrot.slane %v3263, %v8292
      %8295 = vrot.lane.b32.xlu0 %v8293, 8
      %v8296 = vpop.permute.xlu0 %8295
      %v8298 = vmul.f32 %v1171, %v8296
      %v8299 = vmul.f32 %v1172, %v8296
      %v8300 = vmul.f32 %v1175, %v8296
      %v8301 = vmul.f32 %v1176, %v8296
      %v8302 = vmul.f32 %v1179, %v8296
      %v8303 = vmul.f32 %v1180, %v8296
      %v8304 = vmul.f32 %v1183, %v8296
      %v8305 = vmul.f32 %v1184, %v8296
      %v8306 = vmul.f32 %v1187, %v8296
      %v8307 = vmul.f32 %v1188, %v8296
      %v8308 = vmul.f32 %v1191, %v8296
      %v8309 = vmul.f32 %v1192, %v8296
      %v8310 = vmul.f32 %v1195, %v8296
      %v8311 = vmul.f32 %v1196, %v8296
      %v8312 = vmul.f32 %v1199, %v8296
      %v8313 = vmul.f32 %v1200, %v8296
      %v8314 = vmul.f32 %v1203, %v8296
      %v8315 = vmul.f32 %v1204, %v8296
      %v8316 = vmul.f32 %v1207, %v8296
      %v8317 = vmul.f32 %v1208, %v8296
      %v8318 = vmul.f32 %v1211, %v8296
      %v8319 = vmul.f32 %v1212, %v8296
      %v8320 = vmul.f32 %v1215, %v8296
      %v8321 = vmul.f32 %v1216, %v8296
      %v8322 = vmul.f32 %v1219, %v8296
      %v8323 = vmul.f32 %v1220, %v8296
      %v8324 = vmul.f32 %v1223, %v8296
      %v8325 = vmul.f32 %v1224, %v8296
      %v8326 = vmul.f32 %v1227, %v8296
      %v8327 = vmul.f32 %v1228, %v8296
      %v8328 = vmul.f32 %v1231, %v8296
      %v8329 = vmul.f32 %v1232, %v8296
      %v8362 = vrot.slane %v8298, 2
      %v8363 = vrot.slane %v8299, 2
      %v8364 = vsel %vm1650, %v8362, %v8363
      %v8365 = vrot.slane %v8300, 2
      %v8366 = vrot.slane %v8301, 2
      %v8367 = vsel %vm1650, %v8365, %v8366
      %v8368 = vrot.slane %v8302, 2
      %v8369 = vrot.slane %v8303, 2
      %v8370 = vsel %vm1650, %v8368, %v8369
      %v8371 = vrot.slane %v8304, 2
      %v8372 = vrot.slane %v8305, 2
      %v8373 = vsel %vm1650, %v8371, %v8372
      %v8374 = vrot.slane %v8306, 2
      %v8375 = vrot.slane %v8307, 2
      %v8376 = vsel %vm1650, %v8374, %v8375
      %v8377 = vrot.slane %v8308, 2
      %v8378 = vrot.slane %v8309, 2
      %v8379 = vsel %vm1650, %v8377, %v8378
      %v8380 = vrot.slane %v8310, 2
      %v8381 = vrot.slane %v8311, 2
      %v8382 = vsel %vm1650, %v8380, %v8381
      %v8383 = vrot.slane %v8312, 2
      %v8384 = vrot.slane %v8313, 2
      %v8385 = vsel %vm1650, %v8383, %v8384
      %v8386 = vrot.slane %v8314, 2
      %v8387 = vrot.slane %v8315, 2
      %v8388 = vsel %vm1650, %v8386, %v8387
      %v8389 = vrot.slane %v8316, 2
      %v8390 = vrot.slane %v8317, 2
      %v8391 = vsel %vm1650, %v8389, %v8390
      %v8392 = vrot.slane %v8318, 2
      %v8393 = vrot.slane %v8319, 2
      %v8394 = vsel %vm1650, %v8392, %v8393
      %v8395 = vrot.slane %v8320, 2
      %v8396 = vrot.slane %v8321, 2
      %v8397 = vsel %vm1650, %v8395, %v8396
      %v8398 = vrot.slane %v8322, 2
      %v8399 = vrot.slane %v8323, 2
      %v8400 = vsel %vm1650, %v8398, %v8399
      %v8401 = vrot.slane %v8324, 2
      %v8402 = vrot.slane %v8325, 2
      %v8403 = vsel %vm1650, %v8401, %v8402
      %v8404 = vrot.slane %v8326, 2
      %v8405 = vrot.slane %v8327, 2
      %v8406 = vsel %vm1650, %v8404, %v8405
      %v8407 = vrot.slane %v8328, 2
      %v8408 = vrot.slane %v8329, 2
      %v8409 = vsel %vm1650, %v8407, %v8408
      %v8458 = vadd.f32 %v8242, %v8362
      %v8459 = vadd.f32 %v8243, %v8364
      %v8460 = vadd.f32 %v8244, %v8363
      %v8461 = vadd.f32 %v8245, %v8365
      %v8462 = vadd.f32 %v8246, %v8367
      %v8463 = vadd.f32 %v8247, %v8366
      %v8464 = vadd.f32 %v8248, %v8368
      %v8465 = vadd.f32 %v8249, %v8370
      %v8466 = vadd.f32 %v8250, %v8369
      %v8467 = vadd.f32 %v8251, %v8371
      %v8468 = vadd.f32 %v8252, %v8373
      %v8469 = vadd.f32 %v8253, %v8372
      %v8470 = vadd.f32 %v8254, %v8374
      %v8471 = vadd.f32 %v8255, %v8376
      %v8472 = vadd.f32 %v8256, %v8375
      %v8473 = vadd.f32 %v8257, %v8377
      %v8474 = vadd.f32 %v8258, %v8379
      %v8475 = vadd.f32 %v8259, %v8378
      %v8476 = vadd.f32 %v8260, %v8380
      %v8477 = vadd.f32 %v8261, %v8382
      %v8478 = vadd.f32 %v8262, %v8381
      %v8479 = vadd.f32 %v8263, %v8383
      %v8480 = vadd.f32 %v8264, %v8385
      %v8481 = vadd.f32 %v8265, %v8384
      %v8482 = vadd.f32 %v8266, %v8386
      %v8483 = vadd.f32 %v8267, %v8388
      %v8484 = vadd.f32 %v8268, %v8387
      %v8485 = vadd.f32 %v8269, %v8389
      %v8486 = vadd.f32 %v8270, %v8391
      %v8487 = vadd.f32 %v8271, %v8390
      %v8488 = vadd.f32 %v8272, %v8392
      %v8489 = vadd.f32 %v8273, %v8394
      %v8490 = vadd.f32 %v8274, %v8393
      %v8491 = vadd.f32 %v8275, %v8395
      %v8492 = vadd.f32 %v8276, %v8397
      %v8493 = vadd.f32 %v8277, %v8396
      %v8494 = vadd.f32 %v8278, %v8398
      %v8495 = vadd.f32 %v8279, %v8400
      %v8496 = vadd.f32 %v8280, %v8399
      %v8497 = vadd.f32 %v8281, %v8401
      %v8498 = vadd.f32 %v8282, %v8403
      %v8499 = vadd.f32 %v8283, %v8402
      %v8500 = vadd.f32 %v8284, %v8404
      %v8501 = vadd.f32 %v8285, %v8406
      %v8502 = vadd.f32 %v8286, %v8405
      %v8503 = vadd.f32 %v8287, %v8407
      %v8504 = vadd.f32 %v8288, %v8409
      %v8505 = vadd.f32 %v8289, %v8408
      %v8506 = vlaneseq
      %v8507 = vshrl.u32 %v8506, 7
      %v8508 = vsub.s32 3, %v8507
      %v8509 = vrot.slane %v3263, %v8508
      %8511 = vrot.lane.b32.xlu0 %v8509, 8
      %v8512 = vpop.permute.xlu0 %8511
      %v8514 = vmul.f32 %v1171, %v8512
      %v8515 = vmul.f32 %v1172, %v8512
      %v8516 = vmul.f32 %v1173, %v8512
      %v8517 = vmul.f32 %v1175, %v8512
      %v8518 = vmul.f32 %v1176, %v8512
      %v8519 = vmul.f32 %v1177, %v8512
      %v8520 = vmul.f32 %v1179, %v8512
      %v8521 = vmul.f32 %v1180, %v8512
      %v8522 = vmul.f32 %v1181, %v8512
      %v8523 = vmul.f32 %v1183, %v8512
      %v8524 = vmul.f32 %v1184, %v8512
      %v8525 = vmul.f32 %v1185, %v8512
      %v8526 = vmul.f32 %v1187, %v8512
      %v8527 = vmul.f32 %v1188, %v8512
      %v8528 = vmul.f32 %v1189, %v8512
      %v8529 = vmul.f32 %v1191, %v8512
      %v8530 = vmul.f32 %v1192, %v8512
      %v8531 = vmul.f32 %v1193, %v8512
      %v8532 = vmul.f32 %v1195, %v8512
      %v8533 = vmul.f32 %v1196, %v8512
      %v8534 = vmul.f32 %v1197, %v8512
      %v8535 = vmul.f32 %v1199, %v8512
      %v8536 = vmul.f32 %v1200, %v8512
      %v8537 = vmul.f32 %v1201, %v8512
      %v8538 = vmul.f32 %v1203, %v8512
      %v8539 = vmul.f32 %v1204, %v8512
      %v8540 = vmul.f32 %v1205, %v8512
      %v8541 = vmul.f32 %v1207, %v8512
      %v8542 = vmul.f32 %v1208, %v8512
      %v8543 = vmul.f32 %v1209, %v8512
      %v8544 = vmul.f32 %v1211, %v8512
      %v8545 = vmul.f32 %v1212, %v8512
      %v8546 = vmul.f32 %v1213, %v8512
      %v8547 = vmul.f32 %v1215, %v8512
      %v8548 = vmul.f32 %v1216, %v8512
      %v8549 = vmul.f32 %v1217, %v8512
      %v8550 = vmul.f32 %v1219, %v8512
      %v8551 = vmul.f32 %v1220, %v8512
      %v8552 = vmul.f32 %v1221, %v8512
      %v8553 = vmul.f32 %v1223, %v8512
      %v8554 = vmul.f32 %v1224, %v8512
      %v8555 = vmul.f32 %v1225, %v8512
      %v8556 = vmul.f32 %v1227, %v8512
      %v8557 = vmul.f32 %v1228, %v8512
      %v8558 = vmul.f32 %v1229, %v8512
      %v8559 = vmul.f32 %v1231, %v8512
      %v8560 = vmul.f32 %v1232, %v8512
      %v8561 = vmul.f32 %v1233, %v8512
      %v8610 = vrot.slane %v8514, 3
      %v8611 = vrot.slane %v8515, 3
      %v8612 = vsel %vm3968, %v8610, %v8611
      %v8613 = vrot.slane %v8516, 3
      %v8614 = vsel %vm3968, %v8611, %v8613
      %v8615 = vrot.slane %v8517, 3
      %v8616 = vrot.slane %v8518, 3
      %v8617 = vsel %vm3968, %v8615, %v8616
      %v8618 = vrot.slane %v8519, 3
      %v8619 = vsel %vm3968, %v8616, %v8618
      %v8620 = vrot.slane %v8520, 3
      %v8621 = vrot.slane %v8521, 3
      %v8622 = vsel %vm3968, %v8620, %v8621
      %v8623 = vrot.slane %v8522, 3
      %v8624 = vsel %vm3968, %v8621, %v8623
      %v8625 = vrot.slane %v8523, 3
      %v8626 = vrot.slane %v8524, 3
      %v8627 = vsel %vm3968, %v8625, %v8626
      %v8628 = vrot.slane %v8525, 3
      %v8629 = vsel %vm3968, %v8626, %v8628
      %v8630 = vrot.slane %v8526, 3
      %v8631 = vrot.slane %v8527, 3
      %v8632 = vsel %vm3968, %v8630, %v8631
      %v8633 = vrot.slane %v8528, 3
      %v8634 = vsel %vm3968, %v8631, %v8633
      %v8635 = vrot.slane %v8529, 3
      %v8636 = vrot.slane %v8530, 3
      %v8637 = vsel %vm3968, %v8635, %v8636
      %v8638 = vrot.slane %v8531, 3
      %v8639 = vsel %vm3968, %v8636, %v8638
      %v8640 = vrot.slane %v8532, 3
      %v8641 = vrot.slane %v8533, 3
      %v8642 = vsel %vm3968, %v8640, %v8641
      %v8643 = vrot.slane %v8534, 3
      %v8644 = vsel %vm3968, %v8641, %v8643
      %v8645 = vrot.slane %v8535, 3
      %v8646 = vrot.slane %v8536, 3
      %v8647 = vsel %vm3968, %v8645, %v8646
      %v8648 = vrot.slane %v8537, 3
      %v8649 = vsel %vm3968, %v8646, %v8648
      %v8650 = vrot.slane %v8538, 3
      %v8651 = vrot.slane %v8539, 3
      %v8652 = vsel %vm3968, %v8650, %v8651
      %v8653 = vrot.slane %v8540, 3
      %v8654 = vsel %vm3968, %v8651, %v8653
      %v8655 = vrot.slane %v8541, 3
      %v8656 = vrot.slane %v8542, 3
      %v8657 = vsel %vm3968, %v8655, %v8656
      %v8658 = vrot.slane %v8543, 3
      %v8659 = vsel %vm3968, %v8656, %v8658
      %v8660 = vrot.slane %v8544, 3
      %v8661 = vrot.slane %v8545, 3
      %v8662 = vsel %vm3968, %v8660, %v8661
      %v8663 = vrot.slane %v8546, 3
      %v8664 = vsel %vm3968, %v8661, %v8663
      %v8665 = vrot.slane %v8547, 3
      %v8666 = vrot.slane %v8548, 3
      %v8667 = vsel %vm3968, %v8665, %v8666
      %v8668 = vrot.slane %v8549, 3
      %v8669 = vsel %vm3968, %v8666, %v8668
      %v8670 = vrot.slane %v8550, 3
      %v8671 = vrot.slane %v8551, 3
      %v8672 = vsel %vm3968, %v8670, %v8671
      %v8673 = vrot.slane %v8552, 3
      %v8674 = vsel %vm3968, %v8671, %v8673
      %v8675 = vrot.slane %v8553, 3
      %v8676 = vrot.slane %v8554, 3
      %v8677 = vsel %vm3968, %v8675, %v8676
      %v8678 = vrot.slane %v8555, 3
      %v8679 = vsel %vm3968, %v8676, %v8678
      %v8680 = vrot.slane %v8556, 3
      %v8681 = vrot.slane %v8557, 3
      %v8682 = vsel %vm3968, %v8680, %v8681
      %v8683 = vrot.slane %v8558, 3
      %v8684 = vsel %vm3968, %v8681, %v8683
      %v8685 = vrot.slane %v8559, 3
      %v8686 = vrot.slane %v8560, 3
      %v8687 = vsel %vm3968, %v8685, %v8686
      %v8688 = vrot.slane %v8561, 3
      %v8689 = vsel %vm3968, %v8686, %v8688
      %v8738 = vadd.f32 %v8458, %v8610
      %v8739 = vadd.f32 %v8459, %v8612
      %v8740 = vadd.f32 %v8460, %v8614
      %v8741 = vadd.f32 %v8461, %v8615
      %v8742 = vadd.f32 %v8462, %v8617
      %v8743 = vadd.f32 %v8463, %v8619
      %v8744 = vadd.f32 %v8464, %v8620
      %v8745 = vadd.f32 %v8465, %v8622
      %v8746 = vadd.f32 %v8466, %v8624
      %v8747 = vadd.f32 %v8467, %v8625
      %v8748 = vadd.f32 %v8468, %v8627
      %v8749 = vadd.f32 %v8469, %v8629
      %v8750 = vadd.f32 %v8470, %v8630
      %v8751 = vadd.f32 %v8471, %v8632
      %v8752 = vadd.f32 %v8472, %v8634
      %v8753 = vadd.f32 %v8473, %v8635
      %v8754 = vadd.f32 %v8474, %v8637
      %v8755 = vadd.f32 %v8475, %v8639
      %v8756 = vadd.f32 %v8476, %v8640
      %v8757 = vadd.f32 %v8477, %v8642
      %v8758 = vadd.f32 %v8478, %v8644
      %v8759 = vadd.f32 %v8479, %v8645
      %v8760 = vadd.f32 %v8480, %v8647
      %v8761 = vadd.f32 %v8481, %v8649
      %v8762 = vadd.f32 %v8482, %v8650
      %v8763 = vadd.f32 %v8483, %v8652
      %v8764 = vadd.f32 %v8484, %v8654
      %v8765 = vadd.f32 %v8485, %v8655
      %v8766 = vadd.f32 %v8486, %v8657
      %v8767 = vadd.f32 %v8487, %v8659
      %v8768 = vadd.f32 %v8488, %v8660
      %v8769 = vadd.f32 %v8489, %v8662
      %v8770 = vadd.f32 %v8490, %v8664
      %v8771 = vadd.f32 %v8491, %v8665
      %v8772 = vadd.f32 %v8492, %v8667
      %v8773 = vadd.f32 %v8493, %v8669
      %v8774 = vadd.f32 %v8494, %v8670
      %v8775 = vadd.f32 %v8495, %v8672
      %v8776 = vadd.f32 %v8496, %v8674
      %v8777 = vadd.f32 %v8497, %v8675
      %v8778 = vadd.f32 %v8498, %v8677
      %v8779 = vadd.f32 %v8499, %v8679
      %v8780 = vadd.f32 %v8500, %v8680
      %v8781 = vadd.f32 %v8501, %v8682
      %v8782 = vadd.f32 %v8502, %v8684
      %v8783 = vadd.f32 %v8503, %v8685
      %v8784 = vadd.f32 %v8504, %v8687
      %v8785 = vadd.f32 %v8505, %v8689
      %v8786 = vlaneseq
      %v8787 = vshrl.u32 %v8786, 7
      %v8788 = vsub.s32 4, %v8787
      %v8789 = vrot.slane %v3263, %v8788
      %8791 = vrot.lane.b32.xlu0 %v8789, 8
      %v8792 = vpop.permute.xlu0 %8791
      %v8794 = vmul.f32 %v1171, %v8792
      %v8795 = vmul.f32 %v1172, %v8792
      %v8796 = vmul.f32 %v1173, %v8792
      %v8797 = vmul.f32 %v1175, %v8792
      %v8798 = vmul.f32 %v1176, %v8792
      %v8799 = vmul.f32 %v1177, %v8792
      %v8800 = vmul.f32 %v1179, %v8792
      %v8801 = vmul.f32 %v1180, %v8792
      %v8802 = vmul.f32 %v1181, %v8792
      %v8803 = vmul.f32 %v1183, %v8792
      %v8804 = vmul.f32 %v1184, %v8792
      %v8805 = vmul.f32 %v1185, %v8792
      %v8806 = vmul.f32 %v1187, %v8792
      %v8807 = vmul.f32 %v1188, %v8792
      %v8808 = vmul.f32 %v1189, %v8792
      %v8809 = vmul.f32 %v1191, %v8792
      %v8810 = vmul.f32 %v1192, %v8792
      %v8811 = vmul.f32 %v1193, %v8792
      %v8812 = vmul.f32 %v1195, %v8792
      %v8813 = vmul.f32 %v1196, %v8792
      %v8814 = vmul.f32 %v1197, %v8792
      %v8815 = vmul.f32 %v1199, %v8792
      %v8816 = vmul.f32 %v1200, %v8792
      %v8817 = vmul.f32 %v1201, %v8792
      %v8818 = vmul.f32 %v1203, %v8792
      %v8819 = vmul.f32 %v1204, %v8792
      %v8820 = vmul.f32 %v1205, %v8792
      %v8821 = vmul.f32 %v1207, %v8792
      %v8822 = vmul.f32 %v1208, %v8792
      %v8823 = vmul.f32 %v1209, %v8792
      %v8824 = vmul.f32 %v1211, %v8792
      %v8825 = vmul.f32 %v1212, %v8792
      %v8826 = vmul.f32 %v1213, %v8792
      %v8827 = vmul.f32 %v1215, %v8792
      %v8828 = vmul.f32 %v1216, %v8792
      %v8829 = vmul.f32 %v1217, %v8792
      %v8830 = vmul.f32 %v1219, %v8792
      %v8831 = vmul.f32 %v1220, %v8792
      %v8832 = vmul.f32 %v1221, %v8792
      %v8833 = vmul.f32 %v1223, %v8792
      %v8834 = vmul.f32 %v1224, %v8792
      %v8835 = vmul.f32 %v1225, %v8792
      %v8836 = vmul.f32 %v1227, %v8792
      %v8837 = vmul.f32 %v1228, %v8792
      %v8838 = vmul.f32 %v1229, %v8792
      %v8839 = vmul.f32 %v1231, %v8792
      %v8840 = vmul.f32 %v1232, %v8792
      %v8841 = vmul.f32 %v1233, %v8792
      %v8890 = vrot.slane %v8794, 4
      %v8891 = vrot.slane %v8795, 4
      %v8892 = vsel %vm4249, %v8890, %v8891
      %v8893 = vrot.slane %v8796, 4
      %v8894 = vsel %vm4249, %v8891, %v8893
      %v8895 = vrot.slane %v8797, 4
      %v8896 = vrot.slane %v8798, 4
      %v8897 = vsel %vm4249, %v8895, %v8896
      %v8898 = vrot.slane %v8799, 4
      %v8899 = vsel %vm4249, %v8896, %v8898
      %v8900 = vrot.slane %v8800, 4
      %v8901 = vrot.slane %v8801, 4
      %v8902 = vsel %vm4249, %v8900, %v8901
      %v8903 = vrot.slane %v8802, 4
      %v8904 = vsel %vm4249, %v8901, %v8903
      %v8905 = vrot.slane %v8803, 4
      %v8906 = vrot.slane %v8804, 4
      %v8907 = vsel %vm4249, %v8905, %v8906
      %v8908 = vrot.slane %v8805, 4
      %v8909 = vsel %vm4249, %v8906, %v8908
      %v8910 = vrot.slane %v8806, 4
      %v8911 = vrot.slane %v8807, 4
      %v8912 = vsel %vm4249, %v8910, %v8911
      %v8913 = vrot.slane %v8808, 4
      %v8914 = vsel %vm4249, %v8911, %v8913
      %v8915 = vrot.slane %v8809, 4
      %v8916 = vrot.slane %v8810, 4
      %v8917 = vsel %vm4249, %v8915, %v8916
      %v8918 = vrot.slane %v8811, 4
      %v8919 = vsel %vm4249, %v8916, %v8918
      %v8920 = vrot.slane %v8812, 4
      %v8921 = vrot.slane %v8813, 4
      %v8922 = vsel %vm4249, %v8920, %v8921
      %v8923 = vrot.slane %v8814, 4
      %v8924 = vsel %vm4249, %v8921, %v8923
      %v8925 = vrot.slane %v8815, 4
      %v8926 = vrot.slane %v8816, 4
      %v8927 = vsel %vm4249, %v8925, %v8926
      %v8928 = vrot.slane %v8817, 4
      %v8929 = vsel %vm4249, %v8926, %v8928
      %v8930 = vrot.slane %v8818, 4
      %v8931 = vrot.slane %v8819, 4
      %v8932 = vsel %vm4249, %v8930, %v8931
      %v8933 = vrot.slane %v8820, 4
      %v8934 = vsel %vm4249, %v8931, %v8933
      %v8935 = vrot.slane %v8821, 4
      %v8936 = vrot.slane %v8822, 4
      %v8937 = vsel %vm4249, %v8935, %v8936
      %v8938 = vrot.slane %v8823, 4
      %v8939 = vsel %vm4249, %v8936, %v8938
      %v8940 = vrot.slane %v8824, 4
      %v8941 = vrot.slane %v8825, 4
      %v8942 = vsel %vm4249, %v8940, %v8941
      %v8943 = vrot.slane %v8826, 4
      %v8944 = vsel %vm4249, %v8941, %v8943
      %v8945 = vrot.slane %v8827, 4
      %v8946 = vrot.slane %v8828, 4
      %v8947 = vsel %vm4249, %v8945, %v8946
      %v8948 = vrot.slane %v8829, 4
      %v8949 = vsel %vm4249, %v8946, %v8948
      %v8950 = vrot.slane %v8830, 4
      %v8951 = vrot.slane %v8831, 4
      %v8952 = vsel %vm4249, %v8950, %v8951
      %v8953 = vrot.slane %v8832, 4
      %v8954 = vsel %vm4249, %v8951, %v8953
      %v8955 = vrot.slane %v8833, 4
      %v8956 = vrot.slane %v8834, 4
      %v8957 = vsel %vm4249, %v8955, %v8956
      %v8958 = vrot.slane %v8835, 4
      %v8959 = vsel %vm4249, %v8956, %v8958
      %v8960 = vrot.slane %v8836, 4
      %v8961 = vrot.slane %v8837, 4
      %v8962 = vsel %vm4249, %v8960, %v8961
      %v8963 = vrot.slane %v8838, 4
      %v8964 = vsel %vm4249, %v8961, %v8963
      %v8965 = vrot.slane %v8839, 4
      %v8966 = vrot.slane %v8840, 4
      %v8967 = vsel %vm4249, %v8965, %v8966
      %v8968 = vrot.slane %v8841, 4
      %v8969 = vsel %vm4249, %v8966, %v8968
      %v9018 = vadd.f32 %v8738, %v8890
      %v9019 = vadd.f32 %v8739, %v8892
      %v9020 = vadd.f32 %v8740, %v8894
      %v9021 = vadd.f32 %v8741, %v8895
      %v9022 = vadd.f32 %v8742, %v8897
      %v9023 = vadd.f32 %v8743, %v8899
      %v9024 = vadd.f32 %v8744, %v8900
      %v9025 = vadd.f32 %v8745, %v8902
      %v9026 = vadd.f32 %v8746, %v8904
      %v9027 = vadd.f32 %v8747, %v8905
      %v9028 = vadd.f32 %v8748, %v8907
      %v9029 = vadd.f32 %v8749, %v8909
      %v9030 = vadd.f32 %v8750, %v8910
      %v9031 = vadd.f32 %v8751, %v8912
      %v9032 = vadd.f32 %v8752, %v8914
      %v9033 = vadd.f32 %v8753, %v8915
      %v9034 = vadd.f32 %v8754, %v8917
      %v9035 = vadd.f32 %v8755, %v8919
      %v9036 = vadd.f32 %v8756, %v8920
      %v9037 = vadd.f32 %v8757, %v8922
      %v9038 = vadd.f32 %v8758, %v8924
      %v9039 = vadd.f32 %v8759, %v8925
      %v9040 = vadd.f32 %v8760, %v8927
      %v9041 = vadd.f32 %v8761, %v8929
      %v9042 = vadd.f32 %v8762, %v8930
      %v9043 = vadd.f32 %v8763, %v8932
      %v9044 = vadd.f32 %v8764, %v8934
      %v9045 = vadd.f32 %v8765, %v8935
      %v9046 = vadd.f32 %v8766, %v8937
      %v9047 = vadd.f32 %v8767, %v8939
      %v9048 = vadd.f32 %v8768, %v8940
      %v9049 = vadd.f32 %v8769, %v8942
      %v9050 = vadd.f32 %v8770, %v8944
      %v9051 = vadd.f32 %v8771, %v8945
      %v9052 = vadd.f32 %v8772, %v8947
      %v9053 = vadd.f32 %v8773, %v8949
      %v9054 = vadd.f32 %v8774, %v8950
      %v9055 = vadd.f32 %v8775, %v8952
      %v9056 = vadd.f32 %v8776, %v8954
      %v9057 = vadd.f32 %v8777, %v8955
      %v9058 = vadd.f32 %v8778, %v8957
      %v9059 = vadd.f32 %v8779, %v8959
      %v9060 = vadd.f32 %v8780, %v8960
      %v9061 = vadd.f32 %v8781, %v8962
      %v9062 = vadd.f32 %v8782, %v8964
      %v9063 = vadd.f32 %v8783, %v8965
      %v9064 = vadd.f32 %v8784, %v8967
      %v9065 = vadd.f32 %v8785, %v8969
      %v9066 = vld [vmem:[%s6] sm:$0x1]
      %v9068 = vlaneseq
      %v9069 = vshrl.u32 %v9068, 7
      %v9070 = vsub.s32 0, %v9069
      %v9071 = vrot.slane %v9066, %v9070
      %v9073 = vmul.f32 %v9018, %v9071
      %v9074 = vmul.f32 %v9019, %v9071
      %v9075 = vmul.f32 %v9020, %v9071
      %v9076 = vmul.f32 %v9021, %v9071
      %v9077 = vmul.f32 %v9022, %v9071
      %v9078 = vmul.f32 %v9023, %v9071
      %v9079 = vmul.f32 %v9024, %v9071
      %v9080 = vmul.f32 %v9025, %v9071
      %v9081 = vmul.f32 %v9026, %v9071
      %v9082 = vmul.f32 %v9027, %v9071
      %v9083 = vmul.f32 %v9028, %v9071
      %v9084 = vmul.f32 %v9029, %v9071
      %v9085 = vmul.f32 %v9030, %v9071
      %v9086 = vmul.f32 %v9031, %v9071
      %v9087 = vmul.f32 %v9032, %v9071
      %v9088 = vmul.f32 %v9033, %v9071
      %v9089 = vmul.f32 %v9034, %v9071
      %v9090 = vmul.f32 %v9035, %v9071
      %v9091 = vmul.f32 %v9036, %v9071
      %v9092 = vmul.f32 %v9037, %v9071
      %v9093 = vmul.f32 %v9038, %v9071
      %v9094 = vmul.f32 %v9039, %v9071
      %v9095 = vmul.f32 %v9040, %v9071
      %v9096 = vmul.f32 %v9041, %v9071
      %v9097 = vmul.f32 %v9042, %v9071
      %v9098 = vmul.f32 %v9043, %v9071
      %v9099 = vmul.f32 %v9044, %v9071
      %v9100 = vmul.f32 %v9045, %v9071
      %v9101 = vmul.f32 %v9046, %v9071
      %v9102 = vmul.f32 %v9047, %v9071
      %v9103 = vmul.f32 %v9048, %v9071
      %v9104 = vmul.f32 %v9049, %v9071
      %v9105 = vmul.f32 %v9050, %v9071
      %v9106 = vmul.f32 %v9051, %v9071
      %v9107 = vmul.f32 %v9052, %v9071
      %v9108 = vmul.f32 %v9053, %v9071
      %v9109 = vmul.f32 %v9054, %v9071
      %v9110 = vmul.f32 %v9055, %v9071
      %v9111 = vmul.f32 %v9056, %v9071
      %v9112 = vmul.f32 %v9057, %v9071
      %v9113 = vmul.f32 %v9058, %v9071
      %v9114 = vmul.f32 %v9059, %v9071
      %v9115 = vmul.f32 %v9060, %v9071
      %v9116 = vmul.f32 %v9061, %v9071
      %v9117 = vmul.f32 %v9062, %v9071
      %v9118 = vmul.f32 %v9063, %v9071
      %v9119 = vmul.f32 %v9064, %v9071
      %v9120 = vmul.f32 %v9065, %v9071
      %v9121 = vld [vmem:[%s7] sm:$0x1]
      %v9123 = vlaneseq
      %v9124 = vshrl.u32 %v9123, 7
      %v9125 = vsub.s32 0, %v9124
      %v9126 = vrot.slane %v9121, %v9125
      %v9128 = vadd.f32 %v9073, %v9126
      %v9129 = vadd.f32 %v9074, %v9126
      %v9130 = vadd.f32 %v9075, %v9126
      %v9131 = vadd.f32 %v9076, %v9126
      %v9132 = vadd.f32 %v9077, %v9126
      %v9133 = vadd.f32 %v9078, %v9126
      %v9134 = vadd.f32 %v9079, %v9126
      %v9135 = vadd.f32 %v9080, %v9126
      %v9136 = vadd.f32 %v9081, %v9126
      %v9137 = vadd.f32 %v9082, %v9126
      %v9138 = vadd.f32 %v9083, %v9126
      %v9139 = vadd.f32 %v9084, %v9126
      %v9140 = vadd.f32 %v9085, %v9126
      %v9141 = vadd.f32 %v9086, %v9126
      %v9142 = vadd.f32 %v9087, %v9126
      %v9143 = vadd.f32 %v9088, %v9126
      %v9144 = vadd.f32 %v9089, %v9126
      %v9145 = vadd.f32 %v9090, %v9126
      %v9146 = vadd.f32 %v9091, %v9126
      %v9147 = vadd.f32 %v9092, %v9126
      %v9148 = vadd.f32 %v9093, %v9126
      %v9149 = vadd.f32 %v9094, %v9126
      %v9150 = vadd.f32 %v9095, %v9126
      %v9151 = vadd.f32 %v9096, %v9126
      %v9152 = vadd.f32 %v9097, %v9126
      %v9153 = vadd.f32 %v9098, %v9126
      %v9154 = vadd.f32 %v9099, %v9126
      %v9155 = vadd.f32 %v9100, %v9126
      %v9156 = vadd.f32 %v9101, %v9126
      %v9157 = vadd.f32 %v9102, %v9126
      %v9158 = vadd.f32 %v9103, %v9126
      %v9159 = vadd.f32 %v9104, %v9126
      %v9160 = vadd.f32 %v9105, %v9126
      %v9161 = vadd.f32 %v9106, %v9126
      %v9162 = vadd.f32 %v9107, %v9126
      %v9163 = vadd.f32 %v9108, %v9126
      %v9164 = vadd.f32 %v9109, %v9126
      %v9165 = vadd.f32 %v9110, %v9126
      %v9166 = vadd.f32 %v9111, %v9126
      %v9167 = vadd.f32 %v9112, %v9126
      %v9168 = vadd.f32 %v9113, %v9126
      %v9169 = vadd.f32 %v9114, %v9126
      %v9170 = vadd.f32 %v9115, %v9126
      %v9171 = vadd.f32 %v9116, %v9126
      %v9172 = vadd.f32 %v9117, %v9126
      %v9173 = vadd.f32 %v9118, %v9126
      %v9174 = vadd.f32 %v9119, %v9126
      %v9175 = vadd.f32 %v9120, %v9126
      %v9176 = vmax.f32 %v9128, 0.0
      %v9177 = vmax.f32 %v9129, 0.0
      %v9178 = vmax.f32 %v9130, 0.0
      %v9179 = vmax.f32 %v9131, 0.0
      %v9180 = vmax.f32 %v9132, 0.0
      %v9181 = vmax.f32 %v9133, 0.0
      %v9182 = vmax.f32 %v9134, 0.0
      %v9183 = vmax.f32 %v9135, 0.0
      %v9184 = vmax.f32 %v9136, 0.0
      %v9185 = vmax.f32 %v9137, 0.0
      %v9186 = vmax.f32 %v9138, 0.0
      %v9187 = vmax.f32 %v9139, 0.0
      %v9188 = vmax.f32 %v9140, 0.0
      %v9189 = vmax.f32 %v9141, 0.0
      %v9190 = vmax.f32 %v9142, 0.0
      %v9191 = vmax.f32 %v9143, 0.0
      %v9192 = vmax.f32 %v9144, 0.0
      %v9193 = vmax.f32 %v9145, 0.0
      %v9194 = vmax.f32 %v9146, 0.0
      %v9195 = vmax.f32 %v9147, 0.0
      %v9196 = vmax.f32 %v9148, 0.0
      %v9197 = vmax.f32 %v9149, 0.0
      %v9198 = vmax.f32 %v9150, 0.0
      %v9199 = vmax.f32 %v9151, 0.0
      %v9200 = vmax.f32 %v9152, 0.0
      %v9201 = vmax.f32 %v9153, 0.0
      %v9202 = vmax.f32 %v9154, 0.0
      %v9203 = vmax.f32 %v9155, 0.0
      %v9204 = vmax.f32 %v9156, 0.0
      %v9205 = vmax.f32 %v9157, 0.0
      %v9206 = vmax.f32 %v9158, 0.0
      %v9207 = vmax.f32 %v9159, 0.0
      %v9208 = vmax.f32 %v9160, 0.0
      %v9209 = vmax.f32 %v9161, 0.0
      %v9210 = vmax.f32 %v9162, 0.0
      %v9211 = vmax.f32 %v9163, 0.0
      %v9212 = vmax.f32 %v9164, 0.0
      %v9213 = vmax.f32 %v9165, 0.0
      %v9214 = vmax.f32 %v9166, 0.0
      %v9215 = vmax.f32 %v9167, 0.0
      %v9216 = vmax.f32 %v9168, 0.0
      %v9217 = vmax.f32 %v9169, 0.0
      %v9218 = vmax.f32 %v9170, 0.0
      %v9219 = vmax.f32 %v9171, 0.0
      %v9220 = vmax.f32 %v9172, 0.0
      %v9221 = vmax.f32 %v9173, 0.0
      %v9222 = vmax.f32 %v9174, 0.0
      %v9223 = vmax.f32 %v9175, 0.0
      %v9224 = vmin.f32 %v9176, 6.0
      %v9225 = vmin.f32 %v9177, 6.0
      %v9226 = vmin.f32 %v9178, 6.0
      %v9227 = vmin.f32 %v9179, 6.0
      %v9228 = vmin.f32 %v9180, 6.0
      %v9229 = vmin.f32 %v9181, 6.0
      %v9230 = vmin.f32 %v9182, 6.0
      %v9231 = vmin.f32 %v9183, 6.0
      %v9232 = vmin.f32 %v9184, 6.0
      %v9233 = vmin.f32 %v9185, 6.0
      %v9234 = vmin.f32 %v9186, 6.0
      %v9235 = vmin.f32 %v9187, 6.0
      %v9236 = vmin.f32 %v9188, 6.0
      %v9237 = vmin.f32 %v9189, 6.0
      %v9238 = vmin.f32 %v9190, 6.0
      %v9239 = vmin.f32 %v9191, 6.0
      %v9240 = vmin.f32 %v9192, 6.0
      %v9241 = vmin.f32 %v9193, 6.0
      %v9242 = vmin.f32 %v9194, 6.0
      %v9243 = vmin.f32 %v9195, 6.0
      %v9244 = vmin.f32 %v9196, 6.0
      %v9245 = vmin.f32 %v9197, 6.0
      %v9246 = vmin.f32 %v9198, 6.0
      %v9247 = vmin.f32 %v9199, 6.0
      %v9248 = vmin.f32 %v9200, 6.0
      %v9249 = vmin.f32 %v9201, 6.0
      %v9250 = vmin.f32 %v9202, 6.0
      %v9251 = vmin.f32 %v9203, 6.0
      %v9252 = vmin.f32 %v9204, 6.0
      %v9253 = vmin.f32 %v9205, 6.0
      %v9254 = vmin.f32 %v9206, 6.0
      %v9255 = vmin.f32 %v9207, 6.0
      %v9256 = vmin.f32 %v9208, 6.0
      %v9257 = vmin.f32 %v9209, 6.0
      %v9258 = vmin.f32 %v9210, 6.0
      %v9259 = vmin.f32 %v9211, 6.0
      %v9260 = vmin.f32 %v9212, 6.0
      %v9261 = vmin.f32 %v9213, 6.0
      %v9262 = vmin.f32 %v9214, 6.0
      %v9263 = vmin.f32 %v9215, 6.0
      %v9264 = vmin.f32 %v9216, 6.0
      %v9265 = vmin.f32 %v9217, 6.0
      %v9266 = vmin.f32 %v9218, 6.0
      %v9267 = vmin.f32 %v9219, 6.0
      %v9268 = vmin.f32 %v9220, 6.0
      %v9269 = vmin.f32 %v9221, 6.0
      %v9270 = vmin.f32 %v9222, 6.0
      %v9271 = vmin.f32 %v9223, 6.0
      %vm9272 = vcmask 130118
      %9273 = vst.msk [vmem:[#allocation3 - $0x6] sm:$0xc0] %vm9272, %v9224
      %vm9274 = vcmask 130112
      %9275 = vst.msk [vmem:[#allocation3 + $0x2] sm:$0xff] %vm9274, %v9225
      %vm9276 = vcmask 128064
      %9277 = vst.msk [vmem:[#allocation3 + $0xa] sm:$0x3f] %vm9276, %v9226
      %9278 = vst.msk [vmem:[#allocation3 + $0xa] sm:$0xc0] %vm9272, %v9227
      %9279 = vst.msk [vmem:[#allocation3 + $0x12] sm:$0xff] %vm9274, %v9228
      %9280 = vst.msk [vmem:[#allocation3 + $0x1a] sm:$0x3f] %vm9276, %v9229
      %9281 = vst.msk [vmem:[#allocation3 + $0x1a] sm:$0xc0] %vm9272, %v9230
      %9282 = vst.msk [vmem:[#allocation3 + $0x22] sm:$0xff] %vm9274, %v9231
      %9283 = vst.msk [vmem:[#allocation3 + $0x2a] sm:$0x3f] %vm9276, %v9232
      %9284 = vst.msk [vmem:[#allocation3 + $0x2a] sm:$0xc0] %vm9272, %v9233
      %9285 = vst.msk [vmem:[#allocation3 + $0x32] sm:$0xff] %vm9274, %v9234
      %9286 = vst.msk [vmem:[#allocation3 + $0x3a] sm:$0x3f] %vm9276, %v9235
      %9287 = vst.msk [vmem:[#allocation3 + $0x3a] sm:$0xc0] %vm9272, %v9236
      %9288 = vst.msk [vmem:[#allocation3 + $0x42] sm:$0xff] %vm9274, %v9237
      %9289 = vst.msk [vmem:[#allocation3 + $0x4a] sm:$0x3f] %vm9276, %v9238
      %9290 = vst.msk [vmem:[#allocation3 + $0x4a] sm:$0xc0] %vm9272, %v9239
      %9291 = vst.msk [vmem:[#allocation3 + $0x52] sm:$0xff] %vm9274, %v9240
      %9292 = vst.msk [vmem:[#allocation3 + $0x5a] sm:$0x3f] %vm9276, %v9241
      %9293 = vst.msk [vmem:[#allocation3 + $0x5a] sm:$0xc0] %vm9272, %v9242
      %9294 = vst.msk [vmem:[#allocation3 + $0x62] sm:$0xff] %vm9274, %v9243
      %9295 = vst.msk [vmem:[#allocation3 + $0x6a] sm:$0x3f] %vm9276, %v9244
      %9296 = vst.msk [vmem:[#allocation3 + $0x6a] sm:$0xc0] %vm9272, %v9245
      %9297 = vst.msk [vmem:[#allocation3 + $0x72] sm:$0xff] %vm9274, %v9246
      %9298 = vst.msk [vmem:[#allocation3 + $0x7a] sm:$0x3f] %vm9276, %v9247
      %9299 = vst.msk [vmem:[#allocation3 + $0x7a] sm:$0xc0] %vm9272, %v9248
      %9300 = vst.msk [vmem:[#allocation3 + $0x82] sm:$0xff] %vm9274, %v9249
      %9301 = vst.msk [vmem:[#allocation3 + $0x8a] sm:$0x3f] %vm9276, %v9250
      %9302 = vst.msk [vmem:[#allocation3 + $0x8a] sm:$0xc0] %vm9272, %v9251
      %9303 = vst.msk [vmem:[#allocation3 + $0x92] sm:$0xff] %vm9274, %v9252
      %9304 = vst.msk [vmem:[#allocation3 + $0x9a] sm:$0x3f] %vm9276, %v9253
      %9305 = vst.msk [vmem:[#allocation3 + $0x9a] sm:$0xc0] %vm9272, %v9254
      %9306 = vst.msk [vmem:[#allocation3 + $0xa2] sm:$0xff] %vm9274, %v9255
      %9307 = vst.msk [vmem:[#allocation3 + $0xaa] sm:$0x3f] %vm9276, %v9256
      %9308 = vst.msk [vmem:[#allocation3 + $0xaa] sm:$0xc0] %vm9272, %v9257
      %9309 = vst.msk [vmem:[#allocation3 + $0xb2] sm:$0xff] %vm9274, %v9258
      %9310 = vst.msk [vmem:[#allocation3 + $0xba] sm:$0x3f] %vm9276, %v9259
      %9311 = vst.msk [vmem:[#allocation3 + $0xba] sm:$0xc0] %vm9272, %v9260
      %9312 = vst.msk [vmem:[#allocation3 + $0xc2] sm:$0xff] %vm9274, %v9261
      %9313 = vst.msk [vmem:[#allocation3 + $0xca] sm:$0x3f] %vm9276, %v9262
      %9314 = vst.msk [vmem:[#allocation3 + $0xca] sm:$0xc0] %vm9272, %v9263
      %9315 = vst.msk [vmem:[#allocation3 + $0xd2] sm:$0xff] %vm9274, %v9264
      %9316 = vst.msk [vmem:[#allocation3 + $0xda] sm:$0x3f] %vm9276, %v9265
      %9317 = vst.msk [vmem:[#allocation3 + $0xda] sm:$0xc0] %vm9272, %v9266
      %9318 = vst.msk [vmem:[#allocation3 + $0xe2] sm:$0xff] %vm9274, %v9267
      %9319 = vst.msk [vmem:[#allocation3 + $0xea] sm:$0x3f] %vm9276, %v9268
      %9320 = vst.msk [vmem:[#allocation3 + $0xea] sm:$0xc0] %vm9272, %v9269
      %9321 = vst.msk [vmem:[#allocation3 + $0xf2] sm:$0xff] %vm9274, %v9270
      %9322 = vst.msk [vmem:[#allocation3 + $0xfa] sm:$0x3f] %vm9276, %v9271
      %v9323 = vld [vmem:[#allocation3] sm:$0xff]
      %v9324 = vld [vmem:[#allocation3 + $0x8] sm:$0xff]
      %v9325 = vld [vmem:[#allocation3 + $0x10] sm:$0xff]
      %v9326 = vld [vmem:[#allocation3 + $0x18] sm:$0xff]
      %v9327 = vld [vmem:[#allocation3 + $0x20] sm:$0xff]
      %v9328 = vld [vmem:[#allocation3 + $0x28] sm:$0xff]
      %v9329 = vld [vmem:[#allocation3 + $0x30] sm:$0xff]
      %v9330 = vld [vmem:[#allocation3 + $0x38] sm:$0xff]
      %v9331 = vld [vmem:[#allocation3 + $0x40] sm:$0xff]
      %v9332 = vld [vmem:[#allocation3 + $0x48] sm:$0xff]
      %v9333 = vld [vmem:[#allocation3 + $0x50] sm:$0xff]
      %v9334 = vld [vmem:[#allocation3 + $0x58] sm:$0xff]
      %v9335 = vld [vmem:[#allocation3 + $0x60] sm:$0xff]
      %v9336 = vld [vmem:[#allocation3 + $0x68] sm:$0xff]
      %v9337 = vld [vmem:[#allocation3 + $0x70] sm:$0xff]
      %v9338 = vld [vmem:[#allocation3 + $0x78] sm:$0xff]
      %v9339 = vld [vmem:[#allocation3 + $0x80] sm:$0xff]
      %v9340 = vld [vmem:[#allocation3 + $0x88] sm:$0xff]
      %v9341 = vld [vmem:[#allocation3 + $0x90] sm:$0xff]
      %v9342 = vld [vmem:[#allocation3 + $0x98] sm:$0xff]
      %v9343 = vld [vmem:[#allocation3 + $0xa0] sm:$0xff]
      %v9344 = vld [vmem:[#allocation3 + $0xa8] sm:$0xff]
      %v9345 = vld [vmem:[#allocation3 + $0xb0] sm:$0xff]
      %v9346 = vld [vmem:[#allocation3 + $0xb8] sm:$0xff]
      %v9347 = vld [vmem:[#allocation3 + $0xc0] sm:$0xff]
      %v9348 = vld [vmem:[#allocation3 + $0xc8] sm:$0xff]
      %v9349 = vld [vmem:[#allocation3 + $0xd0] sm:$0xff]
      %v9350 = vld [vmem:[#allocation3 + $0xd8] sm:$0xff]
      %v9351 = vld [vmem:[#allocation3 + $0xe0] sm:$0xff]
      %v9352 = vld [vmem:[#allocation3 + $0xe8] sm:$0xff]
      %v9353 = vld [vmem:[#allocation3 + $0xf0] sm:$0xff]
      %v9354 = vld [vmem:[#allocation3 + $0xf8] sm:$0xff]
      %v9355 = vsel %vm992, %v9323, 0.0
      %v9356 = vsel %vm992, %v9324, 0.0
      %v9357 = vadd.f32 %v9355, %v9356
      %v9358 = vsel %vm992, %v9325, 0.0
      %v9359 = vadd.f32 %v9357, %v9358
      %v9360 = vsel %vm992, %v9326, 0.0
      %v9361 = vadd.f32 %v9359, %v9360
      %v9362 = vsel %vm992, %v9327, 0.0
      %v9363 = vadd.f32 %v9361, %v9362
      %v9364 = vsel %vm992, %v9328, 0.0
      %v9365 = vadd.f32 %v9363, %v9364
      %v9366 = vsel %vm992, %v9329, 0.0
      %v9367 = vadd.f32 %v9365, %v9366
      %v9368 = vsel %vm992, %v9330, 0.0
      %v9369 = vadd.f32 %v9367, %v9368
      %v9370 = vsel %vm992, %v9331, 0.0
      %v9371 = vadd.f32 %v9369, %v9370
      %v9372 = vsel %vm992, %v9332, 0.0
      %v9373 = vadd.f32 %v9371, %v9372
      %v9374 = vsel %vm992, %v9333, 0.0
      %v9375 = vadd.f32 %v9373, %v9374
      %v9376 = vsel %vm992, %v9334, 0.0
      %v9377 = vadd.f32 %v9375, %v9376
      %v9378 = vsel %vm992, %v9335, 0.0
      %v9379 = vadd.f32 %v9377, %v9378
      %v9380 = vsel %vm992, %v9336, 0.0
      %v9381 = vadd.f32 %v9379, %v9380
      %v9382 = vsel %vm992, %v9337, 0.0
      %v9383 = vadd.f32 %v9381, %v9382
      %v9384 = vsel %vm992, %v9338, 0.0
      %v9385 = vadd.f32 %v9383, %v9384
      %v9386 = vsel %vm992, %v9339, 0.0
      %v9387 = vadd.f32 %v9385, %v9386
      %v9388 = vsel %vm992, %v9340, 0.0
      %v9389 = vadd.f32 %v9387, %v9388
      %v9390 = vsel %vm992, %v9341, 0.0
      %v9391 = vadd.f32 %v9389, %v9390
      %v9392 = vsel %vm992, %v9342, 0.0
      %v9393 = vadd.f32 %v9391, %v9392
      %v9394 = vsel %vm992, %v9343, 0.0
      %v9395 = vadd.f32 %v9393, %v9394
      %v9396 = vsel %vm992, %v9344, 0.0
      %v9397 = vadd.f32 %v9395, %v9396
      %v9398 = vsel %vm992, %v9345, 0.0
      %v9399 = vadd.f32 %v9397, %v9398
      %v9400 = vsel %vm992, %v9346, 0.0
      %v9401 = vadd.f32 %v9399, %v9400
      %v9402 = vsel %vm992, %v9347, 0.0
      %v9403 = vadd.f32 %v9401, %v9402
      %v9404 = vsel %vm992, %v9348, 0.0
      %v9405 = vadd.f32 %v9403, %v9404
      %v9406 = vsel %vm992, %v9349, 0.0
      %v9407 = vadd.f32 %v9405, %v9406
      %v9408 = vsel %vm992, %v9350, 0.0
      %v9409 = vadd.f32 %v9407, %v9408
      %v9410 = vsel %vm992, %v9351, 0.0
      %v9411 = vadd.f32 %v9409, %v9410
      %v9412 = vsel %vm992, %v9352, 0.0
      %v9413 = vadd.f32 %v9411, %v9412
      %v9414 = vsel %vm992, %v9353, 0.0
      %v9415 = vadd.f32 %v9413, %v9414
      %v9416 = vsel %vm992, %v9354, 0.0
      %v9417 = vadd.f32 %v9415, %v9416
      %v9418 = vrot.slane %v9417, 4
      %v9419 = vadd.f32 %v9417, %v9418
      %v9420 = vrot.slane %v9419, 2
      %v9421 = vadd.f32 %v9419, %v9420
      %v9422 = vrot.slane %v9421, 1
      %v9423 = vadd.f32 %v9421, %v9422
      %v9424 = vrcp.pop 256.0
      %v9425 = vmul.f32 %v9423, %v9424
      %v9426 = vld [vmem:[%s8] sm:$0xff]
      %v9427 = vld [vmem:[%s8 + $0x8] sm:$0xff]
      %v9428 = vld [vmem:[%s9] sm:$0x1]
      %v9430 = vsel %vm992, %v9425, 0
      %9432 = vmatprep.subr.mxu0 0.0
      %9433 = vmatpush1.msra.mxu0 0.0
      %9434 = vmatprep.subr.mxu0 0.0
      %9435 = vmatpush1.msra.mxu0 0.0
      %9436 = vmatprep.subr.mxu0 0.0
      %9437 = vmatpush1.msra.mxu0 0.0
      %9438 = vmatprep.subr.mxu0 0.0
      %9439 = vmatpush1.msra.mxu0 0.0
      %9440 = vmatprep.subr.mxu0 0.0
      %9441 = vmatpush1.msra.mxu0 0.0
      %9442 = vmatprep.subr.mxu0 0.0
      %9443 = vmatpush1.msra.mxu0 0.0
      %9444 = vmatprep.subr.mxu0 0.0
      %9445 = vmatpush1.msra.mxu0 0.0
      %9446 = vmatprep.subr.mxu0 0.0
      %9447 = vmatpush1.msra.mxu0 0.0
      %9448 = vmatprep.subr.mxu0 0.0
      %9449 = vmatpush1.msra.mxu0 0.0
      %9450 = vmatprep.subr.mxu0 0.0
      %9451 = vmatpush1.msra.mxu0 0.0
      %9452 = vmatprep.subr.mxu0 0.0
      %9453 = vmatpush1.msra.mxu0 0.0
      %9454 = vmatprep.subr.mxu0 0.0
      %9455 = vmatpush1.msra.mxu0 0.0
      %9456 = vmatprep.subr.mxu0 0.0
      %9457 = vmatpush1.msra.mxu0 0.0
      %9458 = vmatprep.subr.mxu0 0.0
      %9459 = vmatpush1.msra.mxu0 0.0
      %9460 = vmatprep.subr.mxu0 0.0
      %9461 = vmatpush1.msra.mxu0 %v9427
      %9462 = vmatprep.subr.mxu0 0.0
      %9463 = vmatpush1.msra.mxu0 %v9426
      %9464 = vmatprep.subr.mxu0 0.0
      %9465 = vmatpush2.msra.mxu0 0.0
      %9466 = vmatprep.subr.mxu0 0.0
      %9467 = vmatpush2.msra.mxu0 0.0
      %9468 = vmatprep.subr.mxu0 0.0
      %9469 = vmatpush2.msra.mxu0 0.0
      %9470 = vmatprep.subr.mxu0 0.0
      %9471 = vmatpush2.msra.mxu0 0.0
      %9472 = vmatprep.subr.mxu0 0.0
      %9473 = vmatpush2.msra.mxu0 0.0
      %9474 = vmatprep.subr.mxu0 0.0
      %9475 = vmatpush2.msra.mxu0 0.0
      %9476 = vmatprep.subr.mxu0 0.0
      %9477 = vmatpush2.msra.mxu0 0.0
      %9478 = vmatprep.subr.mxu0 0.0
      %9479 = vmatpush2.msra.mxu0 0.0
      %9480 = vmatprep.subr.mxu0 0.0
      %9481 = vmatpush2.msra.mxu0 0.0
      %9482 = vmatprep.subr.mxu0 0.0
      %9483 = vmatpush2.msra.mxu0 0.0
      %9484 = vmatprep.subr.mxu0 0.0
      %9485 = vmatpush2.msra.mxu0 0.0
      %9486 = vmatprep.subr.mxu0 0.0
      %9487 = vmatpush2.msra.mxu0 0.0
      %9488 = vmatprep.subr.mxu0 0.0
      %9489 = vmatpush2.msra.mxu0 0.0
      %9490 = vmatprep.subr.mxu0 0.0
      %9491 = vmatpush2.msra.mxu0 0.0
      %9492 = vmatprep.subr.mxu0 0.0
      %9493 = vmatpush2.msra.mxu0 0.0
      %9494 = vmatprep.subr.mxu0 0.0
      %9495 = vmatpush2.msra.mxu0 0.0
      %9496 = vmatprep.mubr.f32.mxu0 0.0
      %9497 = vmatmul.mubr.f32.gmra.mxu0 %v9430
      %v9498 = vpop.f32.mrf.mxu0
      %v9499 = vadd.f32 %v9428, %v9498
      %v9500 = vpop.f32.mrf.mxu0
      %9501 = vdwg.mxu0
      %v9502 = vmax.f32 %v9499, 0.0
      %v9503 = vld [vmem:[%s10] sm:$0xf]
      %v9504 = vld [vmem:[%s11] sm:$0x1]
      %vm9505 = vcmask 31744
      %v9507 = vsel %vm9505, %v9502, 0
      %v9510 = vsel %vm4249, %v9503, 0
      %9512 = vmatprep.subr.mxu0 0.0
      %9513 = vmatpush1.msra.mxu0 0.0
      %9514 = vmatprep.subr.mxu0 0.0
      %9515 = vmatpush1.msra.mxu0 0.0
      %9516 = vmatprep.subr.mxu0 0.0
      %9517 = vmatpush1.msra.mxu0 0.0
      %9518 = vmatprep.subr.mxu0 0.0
      %9519 = vmatpush1.msra.mxu0 0.0
      %9520 = vmatprep.subr.mxu0 0.0
      %9521 = vmatpush1.msra.mxu0 0.0
      %9522 = vmatprep.subr.mxu0 0.0
      %9523 = vmatpush1.msra.mxu0 0.0
      %9524 = vmatprep.subr.mxu0 0.0
      %9525 = vmatpush1.msra.mxu0 0.0
      %9526 = vmatprep.subr.mxu0 0.0
      %9527 = vmatpush1.msra.mxu0 0.0
      %9528 = vmatprep.subr.mxu0 0.0
      %9529 = vmatpush1.msra.mxu0 0.0
      %9530 = vmatprep.subr.mxu0 0.0
      %9531 = vmatpush1.msra.mxu0 0.0
      %9532 = vmatprep.subr.mxu0 0.0
      %9533 = vmatpush1.msra.mxu0 0.0
      %9534 = vmatprep.subr.mxu0 0.0
      %9535 = vmatpush1.msra.mxu0 0.0
      %9536 = vmatprep.subr.mxu0 0.0
      %9537 = vmatpush1.msra.mxu0 0.0
      %9538 = vmatprep.subr.mxu0 0.0
      %9539 = vmatpush1.msra.mxu0 0.0
      %9540 = vmatprep.subr.mxu0 0.0
      %9541 = vmatpush1.msra.mxu0 0.0
      %9542 = vmatprep.subr.mxu0 0.0
      %9543 = vmatpush1.msra.mxu0 %v9510
      %9544 = vmatprep.subr.mxu0 0.0
      %9545 = vmatpush2.msra.mxu0 0.0
      %9546 = vmatprep.subr.mxu0 0.0
      %9547 = vmatpush2.msra.mxu0 0.0
      %9548 = vmatprep.subr.mxu0 0.0
      %9549 = vmatpush2.msra.mxu0 0.0
      %9550 = vmatprep.subr.mxu0 0.0
      %9551 = vmatpush2.msra.mxu0 0.0
      %9552 = vmatprep.subr.mxu0 0.0
      %9553 = vmatpush2.msra.mxu0 0.0
      %9554 = vmatprep.subr.mxu0 0.0
      %9555 = vmatpush2.msra.mxu0 0.0
      %9556 = vmatprep.subr.mxu0 0.0
      %9557 = vmatpush2.msra.mxu0 0.0
      %9558 = vmatprep.subr.mxu0 0.0
      %9559 = vmatpush2.msra.mxu0 0.0
      %9560 = vmatprep.subr.mxu0 0.0
      %9561 = vmatpush2.msra.mxu0 0.0
      %9562 = vmatprep.subr.mxu0 0.0
      %9563 = vmatpush2.msra.mxu0 0.0
      %9564 = vmatprep.subr.mxu0 0.0
      %9565 = vmatpush2.msra.mxu0 0.0
      %9566 = vmatprep.subr.mxu0 0.0
      %9567 = vmatpush2.msra.mxu0 0.0
      %9568 = vmatprep.subr.mxu0 0.0
      %9569 = vmatpush2.msra.mxu0 0.0
      %9570 = vmatprep.subr.mxu0 0.0
      %9571 = vmatpush2.msra.mxu0 0.0
      %9572 = vmatprep.subr.mxu0 0.0
      %9573 = vmatpush2.msra.mxu0 0.0
      %9574 = vmatprep.subr.mxu0 0.0
      %9575 = vmatpush2.msra.mxu0 0.0
      %9576 = vmatprep.mubr.f32.mxu0 0.0
      %9577 = vmatmul.mubr.f32.gmra.mxu0 %v9507
      %v9578 = vpop.f32.mrf.mxu0
      %v9579 = vadd.f32 %v9504, %v9578
      %v9580 = vpop.f32.mrf.mxu0
      %9581 = vdwg.mxu0
      %v9582 = vadd.f32 %v9579, 3.0
      %v9583 = vmax.f32 %v9582, 0.0
      %v9584 = vmin.f32 %v9583, 6.0
      %v9585 = vmul.f32 %v9584, 0.16666667
      %v9586 = vlaneseq
      %v9587 = vshrl.u32 %v9586, 7
      %v9588 = vsub.s32 0, %v9587
      %v9589 = vrot.slane %v9585, %v9588
      %v9590 = vmul.f32 %v9323, %v9589
      %v9591 = vmul.f32 %v9324, %v9589
      %v9592 = vmul.f32 %v9325, %v9589
      %v9593 = vmul.f32 %v9326, %v9589
      %v9594 = vmul.f32 %v9327, %v9589
      %v9595 = vmul.f32 %v9328, %v9589
      %v9596 = vmul.f32 %v9329, %v9589
      %v9597 = vmul.f32 %v9330, %v9589
      %v9598 = vmul.f32 %v9331, %v9589
      %v9599 = vmul.f32 %v9332, %v9589
      %v9600 = vmul.f32 %v9333, %v9589
      %v9601 = vmul.f32 %v9334, %v9589
      %v9602 = vmul.f32 %v9335, %v9589
      %v9603 = vmul.f32 %v9336, %v9589
      %v9604 = vmul.f32 %v9337, %v9589
      %v9605 = vmul.f32 %v9338, %v9589
      %v9606 = vmul.f32 %v9339, %v9589
      %v9607 = vmul.f32 %v9340, %v9589
      %v9608 = vmul.f32 %v9341, %v9589
      %v9609 = vmul.f32 %v9342, %v9589
      %v9610 = vmul.f32 %v9343, %v9589
      %v9611 = vmul.f32 %v9344, %v9589
      %v9612 = vmul.f32 %v9345, %v9589
      %v9613 = vmul.f32 %v9346, %v9589
      %v9614 = vmul.f32 %v9347, %v9589
      %v9615 = vmul.f32 %v9348, %v9589
      %v9616 = vmul.f32 %v9349, %v9589
      %v9617 = vmul.f32 %v9350, %v9589
      %v9618 = vmul.f32 %v9351, %v9589
      %v9619 = vmul.f32 %v9352, %v9589
      %v9620 = vmul.f32 %v9353, %v9589
      %v9621 = vmul.f32 %v9354, %v9589
      %v9622 = vld [vmem:[%s12] sm:$0xff]
      %v9623 = vld [vmem:[%s12 + $0x8] sm:$0xff]
      %v9625 = vsel %vm992, %v9590, 0
      %v9628 = vsel %vm992, %v9591, 0
      %v9631 = vsel %vm992, %v9592, 0
      %v9634 = vsel %vm992, %v9593, 0
      %v9637 = vsel %vm992, %v9594, 0
      %v9640 = vsel %vm992, %v9595, 0
      %v9643 = vsel %vm992, %v9596, 0
      %v9646 = vsel %vm992, %v9597, 0
      %v9649 = vsel %vm992, %v9598, 0
      %v9652 = vsel %vm992, %v9599, 0
      %v9655 = vsel %vm992, %v9600, 0
      %v9658 = vsel %vm992, %v9601, 0
      %v9661 = vsel %vm992, %v9602, 0
      %v9664 = vsel %vm992, %v9603, 0
      %v9667 = vsel %vm992, %v9604, 0
      %v9670 = vsel %vm992, %v9605, 0
      %v9673 = vsel %vm992, %v9606, 0
      %v9676 = vsel %vm992, %v9607, 0
      %v9679 = vsel %vm992, %v9608, 0
      %v9682 = vsel %vm992, %v9609, 0
      %v9685 = vsel %vm992, %v9610, 0
      %v9688 = vsel %vm992, %v9611, 0
      %v9691 = vsel %vm992, %v9612, 0
      %v9694 = vsel %vm992, %v9613, 0
      %v9697 = vsel %vm992, %v9614, 0
      %v9700 = vsel %vm992, %v9615, 0
      %v9703 = vsel %vm992, %v9616, 0
      %v9706 = vsel %vm992, %v9617, 0
      %v9709 = vsel %vm992, %v9618, 0
      %v9712 = vsel %vm992, %v9619, 0
      %v9715 = vsel %vm992, %v9620, 0
      %v9718 = vsel %vm992, %v9621, 0
      %9720 = vmatprep.subr.mxu0 0.0
      %9721 = vmatpush1.msra.mxu0 0.0
      %9722 = vmatprep.subr.mxu0 0.0
      %9723 = vmatpush1.msra.mxu0 0.0
      %9724 = vmatprep.subr.mxu0 0.0
      %9725 = vmatpush1.msra.mxu0 0.0
      %9726 = vmatprep.subr.mxu0 0.0
      %9727 = vmatpush1.msra.mxu0 0.0
      %9728 = vmatprep.subr.mxu0 0.0
      %9729 = vmatpush1.msra.mxu0 0.0
      %9730 = vmatprep.subr.mxu0 0.0
      %9731 = vmatpush1.msra.mxu0 0.0
      %9732 = vmatprep.subr.mxu0 0.0
      %9733 = vmatpush1.msra.mxu0 0.0
      %9734 = vmatprep.subr.mxu0 0.0
      %9735 = vmatpush1.msra.mxu0 0.0
      %9736 = vmatprep.subr.mxu0 0.0
      %9737 = vmatpush1.msra.mxu0 0.0
      %9738 = vmatprep.subr.mxu0 0.0
      %9739 = vmatpush1.msra.mxu0 0.0
      %9740 = vmatprep.subr.mxu0 0.0
      %9741 = vmatpush1.msra.mxu0 0.0
      %9742 = vmatprep.subr.mxu0 0.0
      %9743 = vmatpush1.msra.mxu0 0.0
      %9744 = vmatprep.subr.mxu0 0.0
      %9745 = vmatpush1.msra.mxu0 0.0
      %9746 = vmatprep.subr.mxu0 0.0
      %9747 = vmatpush1.msra.mxu0 0.0
      %9748 = vmatprep.subr.mxu0 0.0
      %9749 = vmatpush1.msra.mxu0 %v9623
      %9750 = vmatprep.subr.mxu0 0.0
      %9751 = vmatpush1.msra.mxu0 %v9622
      %9752 = vmatprep.subr.mxu0 0.0
      %9753 = vmatpush2.msra.mxu0 0.0
      %9754 = vmatprep.subr.mxu0 0.0
      %9755 = vmatpush2.msra.mxu0 0.0
      %9756 = vmatprep.subr.mxu0 0.0
      %9757 = vmatpush2.msra.mxu0 0.0
      %9758 = vmatprep.subr.mxu0 0.0
      %9759 = vmatpush2.msra.mxu0 0.0
      %9760 = vmatprep.subr.mxu0 0.0
      %9761 = vmatpush2.msra.mxu0 0.0
      %9762 = vmatprep.subr.mxu0 0.0
      %9763 = vmatpush2.msra.mxu0 0.0
      %9764 = vmatprep.subr.mxu0 0.0
      %9765 = vmatpush2.msra.mxu0 0.0
      %9766 = vmatprep.subr.mxu0 0.0
      %9767 = vmatpush2.msra.mxu0 0.0
      %9768 = vmatprep.subr.mxu0 0.0
      %9769 = vmatpush2.msra.mxu0 0.0
      %9770 = vmatprep.subr.mxu0 0.0
      %9771 = vmatpush2.msra.mxu0 0.0
      %9772 = vmatprep.subr.mxu0 0.0
      %9773 = vmatpush2.msra.mxu0 0.0
      %9774 = vmatprep.subr.mxu0 0.0
      %9775 = vmatpush2.msra.mxu0 0.0
      %9776 = vmatprep.subr.mxu0 0.0
      %9777 = vmatpush2.msra.mxu0 0.0
      %9778 = vmatprep.subr.mxu0 0.0
      %9779 = vmatpush2.msra.mxu0 0.0
      %9780 = vmatprep.subr.mxu0 0.0
      %9781 = vmatpush2.msra.mxu0 0.0
      %9782 = vmatprep.subr.mxu0 0.0
      %9783 = vmatpush2.msra.mxu0 0.0
      %9784 = vmatprep.mubr.f32.mxu0 0.0
      %9785 = vmatmul.mubr.f32.gmra.mxu0 %v9625
      %v9786 = vpop.f32.mrf.mxu0
      %v9787 = vadd.f32 0.0, %v9786
      %v9788 = vpop.f32.mrf.mxu0
      %9789 = vmatprep.mubr.f32.mxu0 0.0
      %9790 = vmatmul.mubr.f32.gmra.mxu0 %v9628
      %v9791 = vpop.f32.mrf.mxu0
      %v9792 = vadd.f32 0.0, %v9791
      %v9793 = vpop.f32.mrf.mxu0
      %9794 = vmatprep.mubr.f32.mxu0 0.0
      %9795 = vmatmul.mubr.f32.gmra.mxu0 %v9631
      %v9796 = vpop.f32.mrf.mxu0
      %v9797 = vadd.f32 0.0, %v9796
      %v9798 = vpop.f32.mrf.mxu0
      %9799 = vmatprep.mubr.f32.mxu0 0.0
      %9800 = vmatmul.mubr.f32.gmra.mxu0 %v9634
      %v9801 = vpop.f32.mrf.mxu0
      %v9802 = vadd.f32 0.0, %v9801
      %v9803 = vpop.f32.mrf.mxu0
      %9804 = vmatprep.mubr.f32.mxu0 0.0
      %9805 = vmatmul.mubr.f32.gmra.mxu0 %v9637
      %v9806 = vpop.f32.mrf.mxu0
      %v9807 = vadd.f32 0.0, %v9806
      %v9808 = vpop.f32.mrf.mxu0
      %9809 = vmatprep.mubr.f32.mxu0 0.0
      %9810 = vmatmul.mubr.f32.gmra.mxu0 %v9640
      %v9811 = vpop.f32.mrf.mxu0
      %v9812 = vadd.f32 0.0, %v9811
      %v9813 = vpop.f32.mrf.mxu0
      %9814 = vmatprep.mubr.f32.mxu0 0.0
      %9815 = vmatmul.mubr.f32.gmra.mxu0 %v9643
      %v9816 = vpop.f32.mrf.mxu0
      %v9817 = vadd.f32 0.0, %v9816
      %v9818 = vpop.f32.mrf.mxu0
      %9819 = vmatprep.mubr.f32.mxu0 0.0
      %9820 = vmatmul.mubr.f32.gmra.mxu0 %v9646
      %v9821 = vpop.f32.mrf.mxu0
      %v9822 = vadd.f32 0.0, %v9821
      %v9823 = vpop.f32.mrf.mxu0
      %9824 = vmatprep.mubr.f32.mxu0 0.0
      %9825 = vmatmul.mubr.f32.gmra.mxu0 %v9649
      %v9826 = vpop.f32.mrf.mxu0
      %v9827 = vadd.f32 0.0, %v9826
      %v9828 = vpop.f32.mrf.mxu0
      %9829 = vmatprep.mubr.f32.mxu0 0.0
      %9830 = vmatmul.mubr.f32.gmra.mxu0 %v9652
      %v9831 = vpop.f32.mrf.mxu0
      %v9832 = vadd.f32 0.0, %v9831
      %v9833 = vpop.f32.mrf.mxu0
      %9834 = vmatprep.mubr.f32.mxu0 0.0
      %9835 = vmatmul.mubr.f32.gmra.mxu0 %v9655
      %v9836 = vpop.f32.mrf.mxu0
      %v9837 = vadd.f32 0.0, %v9836
      %v9838 = vpop.f32.mrf.mxu0
      %9839 = vmatprep.mubr.f32.mxu0 0.0
      %9840 = vmatmul.mubr.f32.gmra.mxu0 %v9658
      %v9841 = vpop.f32.mrf.mxu0
      %v9842 = vadd.f32 0.0, %v9841
      %v9843 = vpop.f32.mrf.mxu0
      %9844 = vmatprep.mubr.f32.mxu0 0.0
      %9845 = vmatmul.mubr.f32.gmra.mxu0 %v9661
      %v9846 = vpop.f32.mrf.mxu0
      %v9847 = vadd.f32 0.0, %v9846
      %v9848 = vpop.f32.mrf.mxu0
      %9849 = vmatprep.mubr.f32.mxu0 0.0
      %9850 = vmatmul.mubr.f32.gmra.mxu0 %v9664
      %v9851 = vpop.f32.mrf.mxu0
      %v9852 = vadd.f32 0.0, %v9851
      %v9853 = vpop.f32.mrf.mxu0
      %9854 = vmatprep.mubr.f32.mxu0 0.0
      %9855 = vmatmul.mubr.f32.gmra.mxu0 %v9667
      %v9856 = vpop.f32.mrf.mxu0
      %v9857 = vadd.f32 0.0, %v9856
      %v9858 = vpop.f32.mrf.mxu0
      %9859 = vmatprep.mubr.f32.mxu0 0.0
      %9860 = vmatmul.mubr.f32.gmra.mxu0 %v9670
      %v9861 = vpop.f32.mrf.mxu0
      %v9862 = vadd.f32 0.0, %v9861
      %v9863 = vpop.f32.mrf.mxu0
      %9864 = vmatprep.mubr.f32.mxu0 0.0
      %9865 = vmatmul.mubr.f32.gmra.mxu0 %v9673
      %v9866 = vpop.f32.mrf.mxu0
      %v9867 = vadd.f32 0.0, %v9866
      %v9868 = vpop.f32.mrf.mxu0
      %9869 = vmatprep.mubr.f32.mxu0 0.0
      %9870 = vmatmul.mubr.f32.gmra.mxu0 %v9676
      %v9871 = vpop.f32.mrf.mxu0
      %v9872 = vadd.f32 0.0, %v9871
      %v9873 = vpop.f32.mrf.mxu0
      %9874 = vmatprep.mubr.f32.mxu0 0.0
      %9875 = vmatmul.mubr.f32.gmra.mxu0 %v9679
      %v9876 = vpop.f32.mrf.mxu0
      %v9877 = vadd.f32 0.0, %v9876
      %v9878 = vpop.f32.mrf.mxu0
      %9879 = vmatprep.mubr.f32.mxu0 0.0
      %9880 = vmatmul.mubr.f32.gmra.mxu0 %v9682
      %v9881 = vpop.f32.mrf.mxu0
      %v9882 = vadd.f32 0.0, %v9881
      %v9883 = vpop.f32.mrf.mxu0
      %9884 = vmatprep.mubr.f32.mxu0 0.0
      %9885 = vmatmul.mubr.f32.gmra.mxu0 %v9685
      %v9886 = vpop.f32.mrf.mxu0
      %v9887 = vadd.f32 0.0, %v9886
      %v9888 = vpop.f32.mrf.mxu0
      %9889 = vmatprep.mubr.f32.mxu0 0.0
      %9890 = vmatmul.mubr.f32.gmra.mxu0 %v9688
      %v9891 = vpop.f32.mrf.mxu0
      %v9892 = vadd.f32 0.0, %v9891
      %v9893 = vpop.f32.mrf.mxu0
      %9894 = vmatprep.mubr.f32.mxu0 0.0
      %9895 = vmatmul.mubr.f32.gmra.mxu0 %v9691
      %v9896 = vpop.f32.mrf.mxu0
      %v9897 = vadd.f32 0.0, %v9896
      %v9898 = vpop.f32.mrf.mxu0
      %9899 = vmatprep.mubr.f32.mxu0 0.0
      %9900 = vmatmul.mubr.f32.gmra.mxu0 %v9694
      %v9901 = vpop.f32.mrf.mxu0
      %v9902 = vadd.f32 0.0, %v9901
      %v9903 = vpop.f32.mrf.mxu0
      %9904 = vmatprep.mubr.f32.mxu0 0.0
      %9905 = vmatmul.mubr.f32.gmra.mxu0 %v9697
      %v9906 = vpop.f32.mrf.mxu0
      %v9907 = vadd.f32 0.0, %v9906
      %v9908 = vpop.f32.mrf.mxu0
      %9909 = vmatprep.mubr.f32.mxu0 0.0
      %9910 = vmatmul.mubr.f32.gmra.mxu0 %v9700
      %v9911 = vpop.f32.mrf.mxu0
      %v9912 = vadd.f32 0.0, %v9911
      %v9913 = vpop.f32.mrf.mxu0
      %9914 = vmatprep.mubr.f32.mxu0 0.0
      %9915 = vmatmul.mubr.f32.gmra.mxu0 %v9703
      %v9916 = vpop.f32.mrf.mxu0
      %v9917 = vadd.f32 0.0, %v9916
      %v9918 = vpop.f32.mrf.mxu0
      %9919 = vmatprep.mubr.f32.mxu0 0.0
      %9920 = vmatmul.mubr.f32.gmra.mxu0 %v9706
      %v9921 = vpop.f32.mrf.mxu0
      %v9922 = vadd.f32 0.0, %v9921
      %v9923 = vpop.f32.mrf.mxu0
      %9924 = vmatprep.mubr.f32.mxu0 0.0
      %9925 = vmatmul.mubr.f32.gmra.mxu0 %v9709
      %v9926 = vpop.f32.mrf.mxu0
      %v9927 = vadd.f32 0.0, %v9926
      %v9928 = vpop.f32.mrf.mxu0
      %9929 = vmatprep.mubr.f32.mxu0 0.0
      %9930 = vmatmul.mubr.f32.gmra.mxu0 %v9712
      %v9931 = vpop.f32.mrf.mxu0
      %v9932 = vadd.f32 0.0, %v9931
      %v9933 = vpop.f32.mrf.mxu0
      %9934 = vmatprep.mubr.f32.mxu0 0.0
      %9935 = vmatmul.mubr.f32.gmra.mxu0 %v9715
      %v9936 = vpop.f32.mrf.mxu0
      %v9937 = vadd.f32 0.0, %v9936
      %v9938 = vpop.f32.mrf.mxu0
      %9939 = vmatprep.mubr.f32.mxu0 0.0
      %9940 = vmatmul.mubr.f32.gmra.mxu0 %v9718
      %v9941 = vpop.f32.mrf.mxu0
      %v9942 = vadd.f32 0.0, %v9941
      %v9943 = vpop.f32.mrf.mxu0
      %9944 = vdwg.mxu0
      %v9945 = vld [vmem:[%s13] sm:$0x1]
      %v9947 = vlaneseq
      %v9948 = vshrl.u32 %v9947, 7
      %v9949 = vsub.s32 0, %v9948
      %v9950 = vrot.slane %v9945, %v9949
      %v9952 = vmul.f32 %v9787, %v9950
      %v9953 = vmul.f32 %v9792, %v9950
      %v9954 = vmul.f32 %v9797, %v9950
      %v9955 = vmul.f32 %v9802, %v9950
      %v9956 = vmul.f32 %v9807, %v9950
      %v9957 = vmul.f32 %v9812, %v9950
      %v9958 = vmul.f32 %v9817, %v9950
      %v9959 = vmul.f32 %v9822, %v9950
      %v9960 = vmul.f32 %v9827, %v9950
      %v9961 = vmul.f32 %v9832, %v9950
      %v9962 = vmul.f32 %v9837, %v9950
      %v9963 = vmul.f32 %v9842, %v9950
      %v9964 = vmul.f32 %v9847, %v9950
      %v9965 = vmul.f32 %v9852, %v9950
      %v9966 = vmul.f32 %v9857, %v9950
      %v9967 = vmul.f32 %v9862, %v9950
      %v9968 = vmul.f32 %v9867, %v9950
      %v9969 = vmul.f32 %v9872, %v9950
      %v9970 = vmul.f32 %v9877, %v9950
      %v9971 = vmul.f32 %v9882, %v9950
      %v9972 = vmul.f32 %v9887, %v9950
      %v9973 = vmul.f32 %v9892, %v9950
      %v9974 = vmul.f32 %v9897, %v9950
      %v9975 = vmul.f32 %v9902, %v9950
      %v9976 = vmul.f32 %v9907, %v9950
      %v9977 = vmul.f32 %v9912, %v9950
      %v9978 = vmul.f32 %v9917, %v9950
      %v9979 = vmul.f32 %v9922, %v9950
      %v9980 = vmul.f32 %v9927, %v9950
      %v9981 = vmul.f32 %v9932, %v9950
      %v9982 = vmul.f32 %v9937, %v9950
      %v9983 = vmul.f32 %v9942, %v9950
      %v9984 = vld [vmem:[%s14] sm:$0x1]
      %v9986 = vlaneseq
      %v9987 = vshrl.u32 %v9986, 7
      %v9988 = vsub.s32 0, %v9987
      %v9989 = vrot.slane %v9984, %v9988
      %v9991 = vadd.f32 %v9952, %v9989
      %v9992 = vadd.f32 %v9953, %v9989
      %v9993 = vadd.f32 %v9954, %v9989
      %v9994 = vadd.f32 %v9955, %v9989
      %v9995 = vadd.f32 %v9956, %v9989
      %v9996 = vadd.f32 %v9957, %v9989
      %v9997 = vadd.f32 %v9958, %v9989
      %v9998 = vadd.f32 %v9959, %v9989
      %v9999 = vadd.f32 %v9960, %v9989
      %v10000 = vadd.f32 %v9961, %v9989
      %v10001 = vadd.f32 %v9962, %v9989
      %v10002 = vadd.f32 %v9963, %v9989
      %v10003 = vadd.f32 %v9964, %v9989
      %v10004 = vadd.f32 %v9965, %v9989
      %v10005 = vadd.f32 %v9966, %v9989
      %v10006 = vadd.f32 %v9967, %v9989
      %v10007 = vadd.f32 %v9968, %v9989
      %v10008 = vadd.f32 %v9969, %v9989
      %v10009 = vadd.f32 %v9970, %v9989
      %v10010 = vadd.f32 %v9971, %v9989
      %v10011 = vadd.f32 %v9972, %v9989
      %v10012 = vadd.f32 %v9973, %v9989
      %v10013 = vadd.f32 %v9974, %v9989
      %v10014 = vadd.f32 %v9975, %v9989
      %v10015 = vadd.f32 %v9976, %v9989
      %v10016 = vadd.f32 %v9977, %v9989
      %v10017 = vadd.f32 %v9978, %v9989
      %v10018 = vadd.f32 %v9979, %v9989
      %v10019 = vadd.f32 %v9980, %v9989
      %v10020 = vadd.f32 %v9981, %v9989
      %v10021 = vadd.f32 %v9982, %v9989
      %v10022 = vadd.f32 %v9983, %v9989
      %v10023 = vadd.f32 %v9991, %v495
      %v10024 = vadd.f32 %v9992, %v496
      %v10025 = vadd.f32 %v9993, %v497
      %v10026 = vadd.f32 %v9994, %v498
      %v10027 = vadd.f32 %v9995, %v499
      %v10028 = vadd.f32 %v9996, %v500
      %v10029 = vadd.f32 %v9997, %v501
      %v10030 = vadd.f32 %v9998, %v502
      %v10031 = vadd.f32 %v9999, %v503
      %v10032 = vadd.f32 %v10000, %v504
      %v10033 = vadd.f32 %v10001, %v505
      %v10034 = vadd.f32 %v10002, %v506
      %v10035 = vadd.f32 %v10003, %v507
      %v10036 = vadd.f32 %v10004, %v508
      %v10037 = vadd.f32 %v10005, %v509
      %v10038 = vadd.f32 %v10006, %v510
      %v10039 = vadd.f32 %v10007, %v511
      %v10040 = vadd.f32 %v10008, %v512
      %v10041 = vadd.f32 %v10009, %v513
      %v10042 = vadd.f32 %v10010, %v514
      %v10043 = vadd.f32 %v10011, %v515
      %v10044 = vadd.f32 %v10012, %v516
      %v10045 = vadd.f32 %v10013, %v517
      %v10046 = vadd.f32 %v10014, %v518
      %v10047 = vadd.f32 %v10015, %v519
      %v10048 = vadd.f32 %v10016, %v520
      %v10049 = vadd.f32 %v10017, %v521
      %v10050 = vadd.f32 %v10018, %v522
      %v10051 = vadd.f32 %v10019, %v523
      %v10052 = vadd.f32 %v10020, %v524
      %v10053 = vadd.f32 %v10021, %v525
      %v10054 = vadd.f32 %v10022, %v526
      %10055 = vst.msk [vmem:[%s494] sm:$0xff] %vm528, %v10023
      %10056 = vst.msk [vmem:[%s494 + $0x8] sm:$0xff] %vm528, %v10024
      %10057 = vst.msk [vmem:[%s494 + $0x10] sm:$0xff] %vm528, %v10025
      %10058 = vst.msk [vmem:[%s494 + $0x18] sm:$0xff] %vm528, %v10026
      %10059 = vst.msk [vmem:[%s494 + $0x20] sm:$0xff] %vm528, %v10027
      %10060 = vst.msk [vmem:[%s494 + $0x28] sm:$0xff] %vm528, %v10028
      %10061 = vst.msk [vmem:[%s494 + $0x30] sm:$0xff] %vm528, %v10029
      %10062 = vst.msk [vmem:[%s494 + $0x38] sm:$0xff] %vm528, %v10030
      %10063 = vst.msk [vmem:[%s494 + $0x40] sm:$0xff] %vm528, %v10031
      %10064 = vst.msk [vmem:[%s494 + $0x48] sm:$0xff] %vm528, %v10032
      %10065 = vst.msk [vmem:[%s494 + $0x50] sm:$0xff] %vm528, %v10033
      %10066 = vst.msk [vmem:[%s494 + $0x58] sm:$0xff] %vm528, %v10034
      %10067 = vst.msk [vmem:[%s494 + $0x60] sm:$0xff] %vm528, %v10035
      %10068 = vst.msk [vmem:[%s494 + $0x68] sm:$0xff] %vm528, %v10036
      %10069 = vst.msk [vmem:[%s494 + $0x70] sm:$0xff] %vm528, %v10037
      %10070 = vst.msk [vmem:[%s494 + $0x78] sm:$0xff] %vm528, %v10038
      %10071 = vst.msk [vmem:[%s494 + $0x80] sm:$0xff] %vm528, %v10039
      %10072 = vst.msk [vmem:[%s494 + $0x88] sm:$0xff] %vm528, %v10040
      %10073 = vst.msk [vmem:[%s494 + $0x90] sm:$0xff] %vm528, %v10041
      %10074 = vst.msk [vmem:[%s494 + $0x98] sm:$0xff] %vm528, %v10042
      %10075 = vst.msk [vmem:[%s494 + $0xa0] sm:$0xff] %vm528, %v10043
      %10076 = vst.msk [vmem:[%s494 + $0xa8] sm:$0xff] %vm528, %v10044
      %10077 = vst.msk [vmem:[%s494 + $0xb0] sm:$0xff] %vm528, %v10045
      %10078 = vst.msk [vmem:[%s494 + $0xb8] sm:$0xff] %vm528, %v10046
      %10079 = vst.msk [vmem:[%s494 + $0xc0] sm:$0xff] %vm528, %v10047
      %10080 = vst.msk [vmem:[%s494 + $0xc8] sm:$0xff] %vm528, %v10048
      %10081 = vst.msk [vmem:[%s494 + $0xd0] sm:$0xff] %vm528, %v10049
      %10082 = vst.msk [vmem:[%s494 + $0xd8] sm:$0xff] %vm528, %v10050
      %10083 = vst.msk [vmem:[%s494 + $0xe0] sm:$0xff] %vm528, %v10051
      %10084 = vst.msk [vmem:[%s494 + $0xe8] sm:$0xff] %vm528, %v10052
      %10085 = vst.msk [vmem:[%s494 + $0xf0] sm:$0xff] %vm528, %v10053
      %10086 = vst.msk [vmem:[%s494 + $0xf8] sm:$0xff] %vm528, %v10054
      %p10087 = scmp.lt.s32.totalorder %s26, 1
      %s10088 = scalar_select %p10087, %s26, 1
      %s10089 = smul.addr %s10088, 32
      %s10090 = smul.addr %s10089, 8
      %s10091 = scalar_lea.vmem %s15, %s10090
      // Predicated region
      $region81: #{tpu_custom_call.1} parent=79 // pred_check
        %p10092 = pneg %p364
      $region82: #{tpu_custom_call.1} parent=79 // pred_check_branch
        %10094 = sbr.rel (%p10092) target = $region84
      $region83: #{tpu_custom_call.1} parent=79 // pred_region
        _
      $region84: #{tpu_custom_call.1} parent=79 // pred_fallthru
        _
    $region80: #{tpu_custom_call.1} parent=5 // pred_fallthru
      _
    %p10095 = scmp.le.s32.totalorder 2, %s21
    // Predicated region
    $region85: #{tpu_custom_call.1} parent=5 // pred_check
      %p10096 = pneg %p10095
    $region86: #{tpu_custom_call.1} parent=5 // pred_check_branch
      %10098 = sbr.rel (%p10096) target = $region88
    $region87: #{tpu_custom_call.1} parent=5 // pred_region
      %s10099 = ssub.s32 %s21, 2
      // Predicated region
      $region89: #{tpu_custom_call.1} parent=87 // pred_check
        %p10100 = pneg %p370
      $region90: #{tpu_custom_call.1} parent=87 // pred_check_branch
        %10102 = sbr.rel (%p10100) target = $region92
      $region91: #{tpu_custom_call.1} parent=87 // pred_region
        %p10103 = scmp.lt.s32.totalorder %s27, 1
        %s10104 = scalar_select %p10103, %s27, 1
        %s10105 = smul.addr %s10104, 32
        %s10106 = smul.addr %s10105, 8
        %s10107 = scalar_lea.vmem %s15, %s10106
      $region92: #{tpu_custom_call.1} parent=87 // pred_fallthru
        _
    $region88: #{tpu_custom_call.1} parent=5 // pred_fallthru
      _
  $region6: #{tpu_custom_call.1} parent=0 // loop_footer
    %s25 = sadd.s32 1, %s21
  $region7: #{tpu_custom_call.1} parent=0 // loop_footer_branch
    %20 = sbr.rel target = $region3
  $region8: #{tpu_custom_call.1} parent=0 // loop_exit
    _

</llo_original>
